<compile_context>
chip_gen: v7x
topology: tpu7x:2x2x1
jax: 0.10.0
libtpu: 0.0.40
codegen_flags: <defaults>
</compile_context>

<pallas_src>
import jax
import jax.numpy as jnp
from jax.experimental import pallas as pl
from jax.experimental.pallas import tpu as pltpu


def _round_up(x, m):
    return (x + m - 1) // m * m


# ------------------------------ Pallas kernel ------------------------------ #
def _stage_conv_bn_relu_kernel(x00_ref, x01_ref, x10_ref, x11_ref,
                               w_ref, ss_ref, o_ref):
    """Fused 3x3 stride-2 conv + folded BatchNorm + ReLU for one batch image.

    x{pq}_ref: [1, Ho+1, Wo+1, Cin]   bf16 phase-(p,q) of the padded input
                                      (row parity p, column parity q).
    w_ref:     [9, Cin, Cout_pad]     bf16 conv taps, index = kh*3 + kw.
    ss_ref:    [2, Cout_pad]          f32  row0 = gamma/sqrt(var+eps),
                                           row1 = beta - mean*scale.
    o_ref:     [1, Ho, Wo, Cout_pad]  bf16 stage output (lane-dense, 128-pad).
    """
    _, Ho, Wo, Cout = o_ref.shape
    Cin = x00_ref.shape[3]
    phases = ((x00_ref, x01_ref), (x10_ref, x11_ref))

    w = w_ref[...]                                     # (9, Cin, Cout) bf16
    acc = jnp.zeros((Ho, Wo, Cout), jnp.float32)
    for i in range(3):                                 # kernel row tap
        for j in range(3):                             # kernel col tap
            xp = phases[i % 2][j % 2]
            r0, c0 = i // 2, j // 2
            tile = xp[0, r0:r0 + Ho, c0:c0 + Wo, :]    # (Ho, Wo, Cin) bf16
            w_t = jnp.broadcast_to(w[3 * i + j], (Ho, Cin, Cout))
            # Batched matmul (batch = output rows) -> MXU, f32 accumulation.
            acc = acc + jnp.einsum("hwc,hcn->hwn", tile, w_t,
                                   preferred_element_type=jnp.float32)
    scale = ss_ref[0, :]                               # (Cout,) f32
    shift = ss_ref[1, :]
    y = jnp.maximum(acc * scale + shift, 0.0)          # f32 epilogue
    o_ref[0] = y.astype(o_ref.dtype)


# ----------------------------- pallas_call glue ----------------------------- #
def _stage_pallas(phases, w9, ss, Ho, Wo):
    N, Ha, Wa, Cin = phases[0].shape
    _, _, Cout_pad = w9.shape

    out_shape = jax.ShapeDtypeStruct((N, Ho, Wo, Cout_pad), jnp.bfloat16)
    out_spec = pl.BlockSpec((1, Ho, Wo, Cout_pad), lambda n: (n, 0, 0, 0))
    phase_specs = [pl.BlockSpec((1, Ha, Wa, Cin), lambda n: (n, 0, 0, 0))
                   for _ in range(4)]

    # VMEM budget estimate (lane/sublane rounded; phase/output double-buffered).
    phase_blk = Ha * _round_up(Wa, 16) * _round_up(Cin, 128) * 2
    w_blk = 9 * _round_up(Cin, 16) * Cout_pad * 2
    ss_blk = 8 * Cout_pad * 4
    out_blk = Ho * _round_up(Wo, 16) * Cout_pad * 2
    acc_blk = Ho * _round_up(Wo, 8) * Cout_pad * 4
    est = 2 * (4 * phase_blk + out_blk) + 2 * (w_blk + ss_blk) + 4 * acc_blk
    try:
        vmem_cap = int(0.8 * pltpu.get_tpu_info().vmem_capacity_bytes)
    except Exception:
        vmem_cap = 48 * 1024 * 1024                    # v7x-safe default
    vmem_limit = int(min(vmem_cap, max(32 * 1024 * 1024, 4 * est)))

    cost = pl.CostEstimate(
        flops=2 * N * Ho * Wo * 9 * Cin * Cout_pad,
        transcendentals=0,
        bytes_accessed=(4 * N * Ha * Wa * Cin * 2 + 9 * Cin * Cout_pad * 2
                        + 2 * Cout_pad * 4 + N * Ho * Wo * Cout_pad * 2))

    def build(single_buffer_residents):
        kw = ({"pipeline_mode": pl.Buffered(1)} if single_buffer_residents else {})
        resident_specs = [
            pl.BlockSpec((9, Cin, Cout_pad), lambda n: (0, 0, 0), **kw),
            pl.BlockSpec((2, Cout_pad), lambda n: (0, 0), **kw),
        ]
        return pl.pallas_call(
            _stage_conv_bn_relu_kernel,
            out_shape=out_shape,
            grid_spec=pltpu.PrefetchScalarGridSpec(
                num_scalar_prefetch=0,
                grid=(N,),                              # >=2 (even) grid steps
                in_specs=phase_specs + resident_specs,
                out_specs=out_spec),
            compiler_params=pltpu.CompilerParams(
                dimension_semantics=("parallel",),
                vmem_limit_bytes=vmem_limit),
            cost_estimate=cost)

    args = (*phases, w9, ss)
    try:
        return build(True)(*args)
    except Exception:
        # Fallback if single-buffered (Buffered(1)) resident operands are not
        # supported by this jax / Mosaic version.
        return build(False)(*args)


def stage_forward_nhwc(x, w9, ss):
    """One stage, NHWC bf16 in/out (channels possibly zero-padded to 128)."""
    N, H, W, Cin = x.shape
    assert w9.shape[1] == Cin
    Ho = (H - 1) // 2 + 1                 # conv3x3, stride 2, pad 1
    Wo = (W - 1) // 2 + 1
    # Stride-2 phase decomposition of the zero-padded input: one cheap XLA
    # rearrangement pass instead of a 9x-duplicated im2col patch matrix.
    Hp, Wp = 2 * (Ho + 1), 2 * (Wo + 1)
    xp = jnp.pad(x, ((0, 0), (1, Hp - 1 - H), (1, Wp - 1 - W), (0, 0)))
    phases = [xp[:, p::2, q::2, :] for p in (0, 1) for q in (0, 1)]
    return _stage_pallas(phases, w9, ss, Ho, Wo)


def prepare_body_params(stages_params, cin_body):
    """Fold BN and reshape/pad/cast conv weights once (hoisted out of forward)."""
    prepped = []
    cin_carry = cin_body                  # channels (incl. padding) fed to stage
    for (w, gamma, beta, mean, var) in stages_params:
        cout, cin, kh, kw = w.shape
        assert (kh, kw) == (3, 3) and cin <= cin_carry
        cout_pad = _round_up(cout, 128)
        # torch [Cout, Cin, kh, kw] -> [kh*kw, Cin, Cout]; zero rows for the
        # carried (padded) input channels, zero cols for padded out channels.
        w9 = jnp.transpose(w, (2, 3, 1, 0)).reshape(kh * kw, cin, cout)
        w9 = jnp.pad(w9, ((0, 0), (0, cin_carry - cin), (0, cout_pad - cout)))
        w9 = w9.astype(jnp.bfloat16)
        eps = 1e-5
        scale = gamma / jnp.sqrt(var + eps)
        shift = beta - mean * scale
        ss = jnp.pad(jnp.stack([scale, shift]).astype(jnp.float32),
                     ((0, 0), (0, cout_pad - cout)))
        prepped.append((w9, ss, cout))
        cin_carry = cout_pad
    return prepped


def body_forward(x_nchw, prepped):
    """Body forward: NCHW f32 in / NCHW f32 out; bf16 NHWC (128-pad) internally."""
    x = jnp.transpose(x_nchw, (0, 2, 3, 1)).astype(jnp.bfloat16)
    for (w9, ss, _) in prepped:
        x = stage_forward_nhwc(x, w9, ss)
    cout_last = prepped[-1][2]
    x = x[..., :cout_last]                # drop carried channel padding once
    return jnp.transpose(x, (0, 3, 1, 2)).astype(jnp.float32)


# ------------------------------ reference / init ---------------------------- #
def _body_forward_ref(x_nchw, stages_params):
    """Pure-JAX f32 reference (lax conv) for validation."""
    y = x_nchw
    for (w, gamma, beta, mean, var) in stages_params:
        y = jax.lax.conv_general_dilated(
            y, w, window_strides=(2, 2), padding=((1, 1), (1, 1)),
            dimension_numbers=("NCHW", "OIHW", "NCHW"))
        eps = 1e-5
        scale = gamma / jnp.sqrt(var + eps)
        shift = beta - mean * scale
        y = jnp.maximum(y * scale[None, :, None, None]
                        + shift[None, :, None, None], 0.0)
    return y


def init_stage_params(key, cin, cout, k=3):
    kw_, kg, kb = jax.random.split(key, 3)
    fan_in = cin * k * k
    w = jax.random.normal(kw_, (cout, cin, k, k), jnp.float32) * (1.0 / fan_in) ** 0.5
    gamma = 1.0 + 0.1 * jax.random.normal(kg, (cout,), jnp.float32)
    beta = 0.1 * jax.random.normal(kb, (cout,), jnp.float32)
    mean = jnp.zeros((cout,), jnp.float32)
    var = jnp.ones((cout,), jnp.float32)
    return (w, gamma, beta, mean, var)


if __name__ == "__main__":
    key = jax.random.PRNGKey(0)
    kx, k1, k2 = jax.random.split(key, 3)

    # Input: NCHW, batch=2, channels=4, spatial=16x16
    x = jax.random.normal(kx, (2, 4, 16, 16), jnp.float32)

    # Body with two stages: 4 -> 8 channels (16 -> 8), 8 -> 16 channels (8 -> 4)
    stages_params = [
        init_stage_params(k1, 4, 8),
        init_stage_params(k2, 8, 16),
    ]
    prepped = prepare_body_params(stages_params, cin_body=4)

    out = jax.block_until_ready(body_forward(x, prepped))
    assert out.shape == (2, 16, 4, 4), out.shape
    assert bool(jnp.all(jnp.isfinite(out)))

    # Per-element validation against the f32 reference (bf16 matmul inputs).
    ref = jax.block_until_ready(_body_forward_ref(x, stages_params))
    err = jnp.abs(out - ref)
    tol = 0.05 * jnp.abs(ref) + 0.05
    assert bool(jnp.all(err <= tol)), float(jnp.max(err - tol))

    print("KERNEL_OK")
</pallas_src>

<mosaic_0001>
module attributes {stable_mosaic.version = 11 : i64} {
  func.func @_stage_conv_bn_relu_kernel(%arg0: i32, %arg1: memref<1x9x9x4xbf16, #tpu.memory_space<vmem>>, %arg2: memref<1x9x9x4xbf16, #tpu.memory_space<vmem>>, %arg3: memref<1x9x9x4xbf16, #tpu.memory_space<vmem>>, %arg4: memref<1x9x9x4xbf16, #tpu.memory_space<vmem>>, %arg5: memref<9x4x128xbf16, #tpu.memory_space<vmem>>, %arg6: memref<2x128xf32, #tpu.memory_space<vmem>>, %arg7: memref<1x8x8x128xbf16, #tpu.memory_space<vmem>>) attributes {dimension_semantics = [#tpu.dimension_semantics<parallel>], iteration_bounds = array<i64: 2>, scalar_prefetch = 0 : i64, scratch_operands = 0 : i64, tpu.core_type = #tpu.core_type<tc>, window_params = [{transform_indices = @transform_0, window_bounds = array<i64: 1, 9, 9, 4>}, {transform_indices = @transform_1, window_bounds = array<i64: 1, 9, 9, 4>}, {transform_indices = @transform_2, window_bounds = array<i64: 1, 9, 9, 4>}, {transform_indices = @transform_3, window_bounds = array<i64: 1, 9, 9, 4>}, {pipeline_mode = #tpu.pipeline_mode<synchronous>, transform_indices = @transform_4, window_bounds = array<i64: 9, 4, 128>}, {pipeline_mode = #tpu.pipeline_mode<synchronous>, transform_indices = @transform_5, window_bounds = array<i64: 2, 128>}, {transform_indices = @transform_6, window_bounds = array<i64: 1, 8, 8, 128>}]} {
    %c0 = arith.constant 0 : index
    %c0_0 = arith.constant 0 : index
    %c0_1 = arith.constant 0 : index
    %0 = vector.load %arg5[%c0, %c0_0, %c0_1] : memref<9x4x128xbf16, #tpu.memory_space<vmem>>, vector<9x4x128xbf16>
    %cst = arith.constant 0.000000e+00 : f32
    %1 = vector.broadcast %cst : f32 to vector<8x8x128xf32>
    %c0_2 = arith.constant 0 : index
    %c0_3 = arith.constant 0 : index
    %c0_4 = arith.constant 0 : index
    %c0_5 = arith.constant 0 : index
    %2 = vector.load %arg1[%c0_2, %c0_3, %c0_4, %c0_5] : memref<1x9x9x4xbf16, #tpu.memory_space<vmem>>, vector<1x8x8x4xbf16>
    %3 = vector.shape_cast %2 : vector<1x8x8x4xbf16> to vector<8x8x4xbf16>
    %4 = vector.extract_strided_slice %0 {offsets = [0, 0, 0], sizes = [1, 4, 128], strides = [1, 1, 1]} : vector<9x4x128xbf16> to vector<1x4x128xbf16>
    %5 = vector.shape_cast %4 : vector<1x4x128xbf16> to vector<4x128xbf16>
    %6 = vector.shape_cast %5 : vector<4x128xbf16> to vector<1x4x128xbf16>
    %7 = vector.broadcast %6 : vector<1x4x128xbf16> to vector<8x4x128xbf16>
    "tpu.trace_start"() <{level = 10 : i32, message = "hwc,hcn->hwn"}> : () -> ()
    %cst_6 = arith.constant dense<0.000000e+00> : vector<8x8x128xf32>
    %8 = tpu.matmul %3, %7, %cst_6 {dimension_numbers = #tpu.dot_dimension_numbers<[2], [1], [1], [2], [0, 0, 0, 1, 1, 2], [0], [0]>} : vector<8x8x4xbf16>, vector<8x4x128xbf16>, vector<8x8x128xf32> -> vector<8x8x128xf32>
    "tpu.trace_stop"() : () -> ()
    %9 = arith.addf %1, %8 : vector<8x8x128xf32>
    %c0_7 = arith.constant 0 : index
    %c0_8 = arith.constant 0 : index
    %c0_9 = arith.constant 0 : index
    %c0_10 = arith.constant 0 : index
    %10 = vector.load %arg2[%c0_7, %c0_8, %c0_9, %c0_10] : memref<1x9x9x4xbf16, #tpu.memory_space<vmem>>, vector<1x8x8x4xbf16>
    %11 = vector.shape_cast %10 : vector<1x8x8x4xbf16> to vector<8x8x4xbf16>
    %12 = vector.extract_strided_slice %0 {offsets = [1, 0, 0], sizes = [1, 4, 128], strides = [1, 1, 1]} : vector<9x4x128xbf16> to vector<1x4x128xbf16>
    %13 = vector.shape_cast %12 : vector<1x4x128xbf16> to vector<4x128xbf16>
    %14 = vector.shape_cast %13 : vector<4x128xbf16> to vector<1x4x128xbf16>
    %15 = vector.broadcast %14 : vector<1x4x128xbf16> to vector<8x4x128xbf16>
    "tpu.trace_start"() <{level = 10 : i32, message = "hwc,hcn->hwn"}> : () -> ()
    %cst_11 = arith.constant dense<0.000000e+00> : vector<8x8x128xf32>
    %16 = tpu.matmul %11, %15, %cst_11 {dimension_numbers = #tpu.dot_dimension_numbers<[2], [1], [1], [2], [0, 0, 0, 1, 1, 2], [0], [0]>} : vector<8x8x4xbf16>, vector<8x4x128xbf16>, vector<8x8x128xf32> -> vector<8x8x128xf32>
    "tpu.trace_stop"() : () -> ()
    %17 = arith.addf %9, %16 : vector<8x8x128xf32>
    %c0_12 = arith.constant 0 : index
    %c0_13 = arith.constant 0 : index
    %c1 = arith.constant 1 : index
    %c0_14 = arith.constant 0 : index
    %18 = vector.load %arg1[%c0_12, %c0_13, %c1, %c0_14] : memref<1x9x9x4xbf16, #tpu.memory_space<vmem>>, vector<1x8x8x4xbf16>
    %19 = vector.shape_cast %18 : vector<1x8x8x4xbf16> to vector<8x8x4xbf16>
    %20 = vector.extract_strided_slice %0 {offsets = [2, 0, 0], sizes = [1, 4, 128], strides = [1, 1, 1]} : vector<9x4x128xbf16> to vector<1x4x128xbf16>
    %21 = vector.shape_cast %20 : vector<1x4x128xbf16> to vector<4x128xbf16>
    %22 = vector.shape_cast %21 : vector<4x128xbf16> to vector<1x4x128xbf16>
    %23 = vector.broadcast %22 : vector<1x4x128xbf16> to vector<8x4x128xbf16>
    "tpu.trace_start"() <{level = 10 : i32, message = "hwc,hcn->hwn"}> : () -> ()
    %cst_15 = arith.constant dense<0.000000e+00> : vector<8x8x128xf32>
    %24 = tpu.matmul %19, %23, %cst_15 {dimension_numbers = #tpu.dot_dimension_numbers<[2], [1], [1], [2], [0, 0, 0, 1, 1, 2], [0], [0]>} : vector<8x8x4xbf16>, vector<8x4x128xbf16>, vector<8x8x128xf32> -> vector<8x8x128xf32>
    "tpu.trace_stop"() : () -> ()
    %25 = arith.addf %17, %24 : vector<8x8x128xf32>
    %c0_16 = arith.constant 0 : index
    %c0_17 = arith.constant 0 : index
    %c0_18 = arith.constant 0 : index
    %c0_19 = arith.constant 0 : index
    %26 = vector.load %arg3[%c0_16, %c0_17, %c0_18, %c0_19] : memref<1x9x9x4xbf16, #tpu.memory_space<vmem>>, vector<1x8x8x4xbf16>
    %27 = vector.shape_cast %26 : vector<1x8x8x4xbf16> to vector<8x8x4xbf16>
    %28 = vector.extract_strided_slice %0 {offsets = [3, 0, 0], sizes = [1, 4, 128], strides = [1, 1, 1]} : vector<9x4x128xbf16> to vector<1x4x128xbf16>
    %29 = vector.shape_cast %28 : vector<1x4x128xbf16> to vector<4x128xbf16>
    %30 = vector.shape_cast %29 : vector<4x128xbf16> to vector<1x4x128xbf16>
    %31 = vector.broadcast %30 : vector<1x4x128xbf16> to vector<8x4x128xbf16>
    "tpu.trace_start"() <{level = 10 : i32, message = "hwc,hcn->hwn"}> : () -> ()
    %cst_20 = arith.constant dense<0.000000e+00> : vector<8x8x128xf32>
    %32 = tpu.matmul %27, %31, %cst_20 {dimension_numbers = #tpu.dot_dimension_numbers<[2], [1], [1], [2], [0, 0, 0, 1, 1, 2], [0], [0]>} : vector<8x8x4xbf16>, vector<8x4x128xbf16>, vector<8x8x128xf32> -> vector<8x8x128xf32>
    "tpu.trace_stop"() : () -> ()
    %33 = arith.addf %25, %32 : vector<8x8x128xf32>
    %c0_21 = arith.constant 0 : index
    %c0_22 = arith.constant 0 : index
    %c0_23 = arith.constant 0 : index
    %c0_24 = arith.constant 0 : index
    %34 = vector.load %arg4[%c0_21, %c0_22, %c0_23, %c0_24] : memref<1x9x9x4xbf16, #tpu.memory_space<vmem>>, vector<1x8x8x4xbf16>
    %35 = vector.shape_cast %34 : vector<1x8x8x4xbf16> to vector<8x8x4xbf16>
    %36 = vector.extract_strided_slice %0 {offsets = [4, 0, 0], sizes = [1, 4, 128], strides = [1, 1, 1]} : vector<9x4x128xbf16> to vector<1x4x128xbf16>
    %37 = vector.shape_cast %36 : vector<1x4x128xbf16> to vector<4x128xbf16>
    %38 = vector.shape_cast %37 : vector<4x128xbf16> to vector<1x4x128xbf16>
    %39 = vector.broadcast %38 : vector<1x4x128xbf16> to vector<8x4x128xbf16>
    "tpu.trace_start"() <{level = 10 : i32, message = "hwc,hcn->hwn"}> : () -> ()
    %cst_25 = arith.constant dense<0.000000e+00> : vector<8x8x128xf32>
    %40 = tpu.matmul %35, %39, %cst_25 {dimension_numbers = #tpu.dot_dimension_numbers<[2], [1], [1], [2], [0, 0, 0, 1, 1, 2], [0], [0]>} : vector<8x8x4xbf16>, vector<8x4x128xbf16>, vector<8x8x128xf32> -> vector<8x8x128xf32>
    "tpu.trace_stop"() : () -> ()
    %41 = arith.addf %33, %40 : vector<8x8x128xf32>
    %c0_26 = arith.constant 0 : index
    %c0_27 = arith.constant 0 : index
    %c1_28 = arith.constant 1 : index
    %c0_29 = arith.constant 0 : index
    %42 = vector.load %arg3[%c0_26, %c0_27, %c1_28, %c0_29] : memref<1x9x9x4xbf16, #tpu.memory_space<vmem>>, vector<1x8x8x4xbf16>
    %43 = vector.shape_cast %42 : vector<1x8x8x4xbf16> to vector<8x8x4xbf16>
    %44 = vector.extract_strided_slice %0 {offsets = [5, 0, 0], sizes = [1, 4, 128], strides = [1, 1, 1]} : vector<9x4x128xbf16> to vector<1x4x128xbf16>
    %45 = vector.shape_cast %44 : vector<1x4x128xbf16> to vector<4x128xbf16>
    %46 = vector.shape_cast %45 : vector<4x128xbf16> to vector<1x4x128xbf16>
    %47 = vector.broadcast %46 : vector<1x4x128xbf16> to vector<8x4x128xbf16>
    "tpu.trace_start"() <{level = 10 : i32, message = "hwc,hcn->hwn"}> : () -> ()
    %cst_30 = arith.constant dense<0.000000e+00> : vector<8x8x128xf32>
    %48 = tpu.matmul %43, %47, %cst_30 {dimension_numbers = #tpu.dot_dimension_numbers<[2], [1], [1], [2], [0, 0, 0, 1, 1, 2], [0], [0]>} : vector<8x8x4xbf16>, vector<8x4x128xbf16>, vector<8x8x128xf32> -> vector<8x8x128xf32>
    "tpu.trace_stop"() : () -> ()
    %49 = arith.addf %41, %48 : vector<8x8x128xf32>
    %c0_31 = arith.constant 0 : index
    %c1_32 = arith.constant 1 : index
    %c0_33 = arith.constant 0 : index
    %c0_34 = arith.constant 0 : index
    %50 = vector.load %arg1[%c0_31, %c1_32, %c0_33, %c0_34] : memref<1x9x9x4xbf16, #tpu.memory_space<vmem>>, vector<1x8x8x4xbf16>
    %51 = vector.shape_cast %50 : vector<1x8x8x4xbf16> to vector<8x8x4xbf16>
    %52 = vector.extract_strided_slice %0 {offsets = [6, 0, 0], sizes = [1, 4, 128], strides = [1, 1, 1]} : vector<9x4x128xbf16> to vector<1x4x128xbf16>
    %53 = vector.shape_cast %52 : vector<1x4x128xbf16> to vector<4x128xbf16>
    %54 = vector.shape_cast %53 : vector<4x128xbf16> to vector<1x4x128xbf16>
    %55 = vector.broadcast %54 : vector<1x4x128xbf16> to vector<8x4x128xbf16>
    "tpu.trace_start"() <{level = 10 : i32, message = "hwc,hcn->hwn"}> : () -> ()
    %cst_35 = arith.constant dense<0.000000e+00> : vector<8x8x128xf32>
    %56 = tpu.matmul %51, %55, %cst_35 {dimension_numbers = #tpu.dot_dimension_numbers<[2], [1], [1], [2], [0, 0, 0, 1, 1, 2], [0], [0]>} : vector<8x8x4xbf16>, vector<8x4x128xbf16>, vector<8x8x128xf32> -> vector<8x8x128xf32>
    "tpu.trace_stop"() : () -> ()
    %57 = arith.addf %49, %56 : vector<8x8x128xf32>
    %c0_36 = arith.constant 0 : index
    %c1_37 = arith.constant 1 : index
    %c0_38 = arith.constant 0 : index
    %c0_39 = arith.constant 0 : index
    %58 = vector.load %arg2[%c0_36, %c1_37, %c0_38, %c0_39] : memref<1x9x9x4xbf16, #tpu.memory_space<vmem>>, vector<1x8x8x4xbf16>
    %59 = vector.shape_cast %58 : vector<1x8x8x4xbf16> to vector<8x8x4xbf16>
    %60 = vector.extract_strided_slice %0 {offsets = [7, 0, 0], sizes = [1, 4, 128], strides = [1, 1, 1]} : vector<9x4x128xbf16> to vector<1x4x128xbf16>
    %61 = vector.shape_cast %60 : vector<1x4x128xbf16> to vector<4x128xbf16>
    %62 = vector.shape_cast %61 : vector<4x128xbf16> to vector<1x4x128xbf16>
    %63 = vector.broadcast %62 : vector<1x4x128xbf16> to vector<8x4x128xbf16>
    "tpu.trace_start"() <{level = 10 : i32, message = "hwc,hcn->hwn"}> : () -> ()
    %cst_40 = arith.constant dense<0.000000e+00> : vector<8x8x128xf32>
    %64 = tpu.matmul %59, %63, %cst_40 {dimension_numbers = #tpu.dot_dimension_numbers<[2], [1], [1], [2], [0, 0, 0, 1, 1, 2], [0], [0]>} : vector<8x8x4xbf16>, vector<8x4x128xbf16>, vector<8x8x128xf32> -> vector<8x8x128xf32>
    "tpu.trace_stop"() : () -> ()
    %65 = arith.addf %57, %64 : vector<8x8x128xf32>
    %c0_41 = arith.constant 0 : index
    %c1_42 = arith.constant 1 : index
    %c1_43 = arith.constant 1 : index
    %c0_44 = arith.constant 0 : index
    %66 = vector.load %arg1[%c0_41, %c1_42, %c1_43, %c0_44] : memref<1x9x9x4xbf16, #tpu.memory_space<vmem>>, vector<1x8x8x4xbf16>
    %67 = vector.shape_cast %66 : vector<1x8x8x4xbf16> to vector<8x8x4xbf16>
    %68 = vector.extract_strided_slice %0 {offsets = [8, 0, 0], sizes = [1, 4, 128], strides = [1, 1, 1]} : vector<9x4x128xbf16> to vector<1x4x128xbf16>
    %69 = vector.shape_cast %68 : vector<1x4x128xbf16> to vector<4x128xbf16>
    %70 = vector.shape_cast %69 : vector<4x128xbf16> to vector<1x4x128xbf16>
    %71 = vector.broadcast %70 : vector<1x4x128xbf16> to vector<8x4x128xbf16>
    "tpu.trace_start"() <{level = 10 : i32, message = "hwc,hcn->hwn"}> : () -> ()
    %cst_45 = arith.constant dense<0.000000e+00> : vector<8x8x128xf32>
    %72 = tpu.matmul %67, %71, %cst_45 {dimension_numbers = #tpu.dot_dimension_numbers<[2], [1], [1], [2], [0, 0, 0, 1, 1, 2], [0], [0]>} : vector<8x8x4xbf16>, vector<8x4x128xbf16>, vector<8x8x128xf32> -> vector<8x8x128xf32>
    "tpu.trace_stop"() : () -> ()
    %73 = arith.addf %65, %72 : vector<8x8x128xf32>
    %c0_46 = arith.constant 0 : index
    %c0_47 = arith.constant 0 : index
    %74 = vector.load %arg6[%c0_46, %c0_47] : memref<2x128xf32, #tpu.memory_space<vmem>>, vector<1x128xf32>
    %75 = vector.shape_cast %74 : vector<1x128xf32> to vector<128xf32>
    %c1_48 = arith.constant 1 : index
    %c0_49 = arith.constant 0 : index
    %76 = vector.load %arg6[%c1_48, %c0_49] : memref<2x128xf32, #tpu.memory_space<vmem>>, vector<1x128xf32>
    %77 = vector.shape_cast %76 : vector<1x128xf32> to vector<128xf32>
    %78 = vector.shape_cast %75 : vector<128xf32> to vector<1x1x128xf32>
    %79 = vector.broadcast %78 : vector<1x1x128xf32> to vector<8x8x128xf32>
    %80 = arith.mulf %73, %79 : vector<8x8x128xf32>
    %81 = vector.shape_cast %77 : vector<128xf32> to vector<1x1x128xf32>
    %82 = vector.broadcast %81 : vector<1x1x128xf32> to vector<8x8x128xf32>
    %83 = arith.addf %80, %82 : vector<8x8x128xf32>
    %cst_50 = arith.constant 0.000000e+00 : f32
    %84 = vector.broadcast %cst_50 : f32 to vector<8x8x128xf32>
    %85 = arith.maximumf %83, %84 : vector<8x8x128xf32>
    %86 = arith.truncf %85 : vector<8x8x128xf32> to vector<8x8x128xbf16>
    %c0_51 = arith.constant 0 : index
    %c0_52 = arith.constant 0 : index
    %c0_53 = arith.constant 0 : index
    %c0_54 = arith.constant 0 : index
    %87 = vector.load %arg7[%c0_51, %c0_52, %c0_53, %c0_54] : memref<1x8x8x128xbf16, #tpu.memory_space<vmem>>, vector<1x8x8x128xbf16>
    %88 = vector.shape_cast %87 : vector<1x8x8x128xbf16> to vector<8x8x128xbf16>
    %89 = vector.shape_cast %86 : vector<8x8x128xbf16> to vector<1x8x8x128xbf16>
    tpu.vector_store %arg7[%c0_51, %c0_52, %c0_53, %c0_54], %89 {strides = array<i32>} : memref<1x8x8x128xbf16, #tpu.memory_space<vmem>>, vector<1x8x8x128xbf16>,
    return
  }
  func.func @transform_0(%arg0: i32) -> (i32, i32, i32, i32) {
    %c0_i32 = arith.constant 0 : i32
    %c0_i32_0 = arith.constant 0 : i32
    %c0_i32_1 = arith.constant 0 : i32
    %c0_i32_2 = arith.constant 0 : i32
    return %arg0, %c0_i32, %c0_i32_0, %c0_i32_1 : i32, i32, i32, i32
  }
  func.func @transform_1(%arg0: i32) -> (i32, i32, i32, i32) {
    %c0_i32 = arith.constant 0 : i32
    %c0_i32_0 = arith.constant 0 : i32
    %c0_i32_1 = arith.constant 0 : i32
    %c0_i32_2 = arith.constant 0 : i32
    return %arg0, %c0_i32, %c0_i32_0, %c0_i32_1 : i32, i32, i32, i32
  }
  func.func @transform_2(%arg0: i32) -> (i32, i32, i32, i32) {
    %c0_i32 = arith.constant 0 : i32
    %c0_i32_0 = arith.constant 0 : i32
    %c0_i32_1 = arith.constant 0 : i32
    %c0_i32_2 = arith.constant 0 : i32
    return %arg0, %c0_i32, %c0_i32_0, %c0_i32_1 : i32, i32, i32, i32
  }
  func.func @transform_3(%arg0: i32) -> (i32, i32, i32, i32) {
    %c0_i32 = arith.constant 0 : i32
    %c0_i32_0 = arith.constant 0 : i32
    %c0_i32_1 = arith.constant 0 : i32
    %c0_i32_2 = arith.constant 0 : i32
    return %arg0, %c0_i32, %c0_i32_0, %c0_i32_1 : i32, i32, i32, i32
  }
  func.func @transform_4(%arg0: i32) -> (i32, i32, i32) {
    %c0_i32 = arith.constant 0 : i32
    %c0_i32_0 = arith.constant 0 : i32
    %c0_i32_1 = arith.constant 0 : i32
    %c0_i32_2 = arith.constant 0 : i32
    return %c0_i32, %c0_i32_0, %c0_i32_1 : i32, i32, i32
  }
  func.func @transform_5(%arg0: i32) -> (i32, i32) {
    %c0_i32 = arith.constant 0 : i32
    %c0_i32_0 = arith.constant 0 : i32
    %c0_i32_1 = arith.constant 0 : i32
    return %c0_i32, %c0_i32_0 : i32, i32
  }
  func.func @transform_6(%arg0: i32) -> (i32, i32, i32, i32) {
    %c0_i32 = arith.constant 0 : i32
    %c0_i32_0 = arith.constant 0 : i32
    %c0_i32_1 = arith.constant 0 : i32
    %c0_i32_2 = arith.constant 0 : i32
    return %arg0, %c0_i32, %c0_i32_0, %c0_i32_1 : i32, i32, i32, i32
  }
}

module attributes {stable_mosaic.version = 11 : i64} {
  func.func @_stage_conv_bn_relu_kernel(%arg0: i32, %arg1: memref<1x9x9x4xbf16, #tpu.memory_space<vmem>>, %arg2: memref<1x9x9x4xbf16, #tpu.memory_space<vmem>>, %arg3: memref<1x9x9x4xbf16, #tpu.memory_space<vmem>>, %arg4: memref<1x9x9x4xbf16, #tpu.memory_space<vmem>>, %arg5: memref<9x4x128xbf16, #tpu.memory_space<vmem>>, %arg6: memref<2x128xf32, #tpu.memory_space<vmem>>, %arg7: memref<1x8x8x128xbf16, #tpu.memory_space<vmem>>) attributes {dimension_semantics = [#tpu.dimension_semantics<parallel>], iteration_bounds = array<i64: 2>, scalar_prefetch = 0 : i64, scratch_operands = 0 : i64, tpu.core_type = #tpu.core_type<tc>, window_params = [{transform_indices = @transform_0, window_bounds = array<i64: 1, 9, 9, 4>}, {transform_indices = @transform_1, window_bounds = array<i64: 1, 9, 9, 4>}, {transform_indices = @transform_2, window_bounds = array<i64: 1, 9, 9, 4>}, {transform_indices = @transform_3, window_bounds = array<i64: 1, 9, 9, 4>}, {pipeline_mode = #tpu.pipeline_mode<synchronous>, transform_indices = @transform_4, window_bounds = array<i64: 9, 4, 128>}, {pipeline_mode = #tpu.pipeline_mode<synchronous>, transform_indices = @transform_5, window_bounds = array<i64: 2, 128>}, {transform_indices = @transform_6, window_bounds = array<i64: 1, 8, 8, 128>}]} {
    %c0 = arith.constant 0 : index
    %c0_0 = arith.constant 0 : index
    %c0_1 = arith.constant 0 : index
    %0 = vector.load %arg5[%c0, %c0_0, %c0_1] : memref<9x4x128xbf16, #tpu.memory_space<vmem>>, vector<9x4x128xbf16>
    %cst = arith.constant 0.000000e+00 : f32
    %1 = vector.broadcast %cst : f32 to vector<8x8x128xf32>
    %c0_2 = arith.constant 0 : index
    %c0_3 = arith.constant 0 : index
    %c0_4 = arith.constant 0 : index
    %c0_5 = arith.constant 0 : index
    %2 = vector.load %arg1[%c0_2, %c0_3, %c0_4, %c0_5] : memref<1x9x9x4xbf16, #tpu.memory_space<vmem>>, vector<1x8x8x4xbf16>
    %3 = vector.shape_cast %2 : vector<1x8x8x4xbf16> to vector<8x8x4xbf16>
    %4 = vector.extract_strided_slice %0 {offsets = [0, 0, 0], sizes = [1, 4, 128], strides = [1, 1, 1]} : vector<9x4x128xbf16> to vector<1x4x128xbf16>
    %5 = vector.shape_cast %4 : vector<1x4x128xbf16> to vector<4x128xbf16>
    %6 = vector.shape_cast %5 : vector<4x128xbf16> to vector<1x4x128xbf16>
    %7 = vector.broadcast %6 : vector<1x4x128xbf16> to vector<8x4x128xbf16>
    "tpu.trace_start"() <{level = 10 : i32, message = "hwc,hcn->hwn"}> : () -> ()
    %cst_6 = arith.constant dense<0.000000e+00> : vector<8x8x128xf32>
    %8 = tpu.matmul %3, %7, %cst_6 {dimension_numbers = #tpu.dot_dimension_numbers<[2], [1], [1], [2], [0, 0, 0, 1, 1, 2], [0], [0]>} : vector<8x8x4xbf16>, vector<8x4x128xbf16>, vector<8x8x128xf32> -> vector<8x8x128xf32>
    "tpu.trace_stop"() : () -> ()
    %9 = arith.addf %1, %8 : vector<8x8x128xf32>
    %c0_7 = arith.constant 0 : index
    %c0_8 = arith.constant 0 : index
    %c0_9 = arith.constant 0 : index
    %c0_10 = arith.constant 0 : index
    %10 = vector.load %arg2[%c0_7, %c0_8, %c0_9, %c0_10] : memref<1x9x9x4xbf16, #tpu.memory_space<vmem>>, vector<1x8x8x4xbf16>
    %11 = vector.shape_cast %10 : vector<1x8x8x4xbf16> to vector<8x8x4xbf16>
    %12 = vector.extract_strided_slice %0 {offsets = [1, 0, 0], sizes = [1, 4, 128], strides = [1, 1, 1]} : vector<9x4x128xbf16> to vector<1x4x128xbf16>
    %13 = vector.shape_cast %12 : vector<1x4x128xbf16> to vector<4x128xbf16>
    %14 = vector.shape_cast %13 : vector<4x128xbf16> to vector<1x4x128xbf16>
    %15 = vector.broadcast %14 : vector<1x4x128xbf16> to vector<8x4x128xbf16>
    "tpu.trace_start"() <{level = 10 : i32, message = "hwc,hcn->hwn"}> : () -> ()
    %cst_11 = arith.constant dense<0.000000e+00> : vector<8x8x128xf32>
    %16 = tpu.matmul %11, %15, %cst_11 {dimension_numbers = #tpu.dot_dimension_numbers<[2], [1], [1], [2], [0, 0, 0, 1, 1, 2], [0], [0]>} : vector<8x8x4xbf16>, vector<8x4x128xbf16>, vector<8x8x128xf32> -> vector<8x8x128xf32>
    "tpu.trace_stop"() : () -> ()
    %17 = arith.addf %9, %16 : vector<8x8x128xf32>
    %c0_12 = arith.constant 0 : index
    %c0_13 = arith.constant 0 : index
    %c1 = arith.constant 1 : index
    %c0_14 = arith.constant 0 : index
    %18 = vector.load %arg1[%c0_12, %c0_13, %c1, %c0_14] : memref<1x9x9x4xbf16, #tpu.memory_space<vmem>>, vector<1x8x8x4xbf16>
    %19 = vector.shape_cast %18 : vector<1x8x8x4xbf16> to vector<8x8x4xbf16>
    %20 = vector.extract_strided_slice %0 {offsets = [2, 0, 0], sizes = [1, 4, 128], strides = [1, 1, 1]} : vector<9x4x128xbf16> to vector<1x4x128xbf16>
    %21 = vector.shape_cast %20 : vector<1x4x128xbf16> to vector<4x128xbf16>
    %22 = vector.shape_cast %21 : vector<4x128xbf16> to vector<1x4x128xbf16>
    %23 = vector.broadcast %22 : vector<1x4x128xbf16> to vector<8x4x128xbf16>
    "tpu.trace_start"() <{level = 10 : i32, message = "hwc,hcn->hwn"}> : () -> ()
    %cst_15 = arith.constant dense<0.000000e+00> : vector<8x8x128xf32>
    %24 = tpu.matmul %19, %23, %cst_15 {dimension_numbers = #tpu.dot_dimension_numbers<[2], [1], [1], [2], [0, 0, 0, 1, 1, 2], [0], [0]>} : vector<8x8x4xbf16>, vector<8x4x128xbf16>, vector<8x8x128xf32> -> vector<8x8x128xf32>
    "tpu.trace_stop"() : () -> ()
    %25 = arith.addf %17, %24 : vector<8x8x128xf32>
    %c0_16 = arith.constant 0 : index
    %c0_17 = arith.constant 0 : index
    %c0_18 = arith.constant 0 : index
    %c0_19 = arith.constant 0 : index
    %26 = vector.load %arg3[%c0_16, %c0_17, %c0_18, %c0_19] : memref<1x9x9x4xbf16, #tpu.memory_space<vmem>>, vector<1x8x8x4xbf16>
    %27 = vector.shape_cast %26 : vector<1x8x8x4xbf16> to vector<8x8x4xbf16>
    %28 = vector.extract_strided_slice %0 {offsets = [3, 0, 0], sizes = [1, 4, 128], strides = [1, 1, 1]} : vector<9x4x128xbf16> to vector<1x4x128xbf16>
    %29 = vector.shape_cast %28 : vector<1x4x128xbf16> to vector<4x128xbf16>
    %30 = vector.shape_cast %29 : vector<4x128xbf16> to vector<1x4x128xbf16>
    %31 = vector.broadcast %30 : vector<1x4x128xbf16> to vector<8x4x128xbf16>
    "tpu.trace_start"() <{level = 10 : i32, message = "hwc,hcn->hwn"}> : () -> ()
    %cst_20 = arith.constant dense<0.000000e+00> : vector<8x8x128xf32>
    %32 = tpu.matmul %27, %31, %cst_20 {dimension_numbers = #tpu.dot_dimension_numbers<[2], [1], [1], [2], [0, 0, 0, 1, 1, 2], [0], [0]>} : vector<8x8x4xbf16>, vector<8x4x128xbf16>, vector<8x8x128xf32> -> vector<8x8x128xf32>
    "tpu.trace_stop"() : () -> ()
    %33 = arith.addf %25, %32 : vector<8x8x128xf32>
    %c0_21 = arith.constant 0 : index
    %c0_22 = arith.constant 0 : index
    %c0_23 = arith.constant 0 : index
    %c0_24 = arith.constant 0 : index
    %34 = vector.load %arg4[%c0_21, %c0_22, %c0_23, %c0_24] : memref<1x9x9x4xbf16, #tpu.memory_space<vmem>>, vector<1x8x8x4xbf16>
    %35 = vector.shape_cast %34 : vector<1x8x8x4xbf16> to vector<8x8x4xbf16>
    %36 = vector.extract_strided_slice %0 {offsets = [4, 0, 0], sizes = [1, 4, 128], strides = [1, 1, 1]} : vector<9x4x128xbf16> to vector<1x4x128xbf16>
    %37 = vector.shape_cast %36 : vector<1x4x128xbf16> to vector<4x128xbf16>
    %38 = vector.shape_cast %37 : vector<4x128xbf16> to vector<1x4x128xbf16>
    %39 = vector.broadcast %38 : vector<1x4x128xbf16> to vector<8x4x128xbf16>
    "tpu.trace_start"() <{level = 10 : i32, message = "hwc,hcn->hwn"}> : () -> ()
    %cst_25 = arith.constant dense<0.000000e+00> : vector<8x8x128xf32>
    %40 = tpu.matmul %35, %39, %cst_25 {dimension_numbers = #tpu.dot_dimension_numbers<[2], [1], [1], [2], [0, 0, 0, 1, 1, 2], [0], [0]>} : vector<8x8x4xbf16>, vector<8x4x128xbf16>, vector<8x8x128xf32> -> vector<8x8x128xf32>
    "tpu.trace_stop"() : () -> ()
    %41 = arith.addf %33, %40 : vector<8x8x128xf32>
    %c0_26 = arith.constant 0 : index
    %c0_27 = arith.constant 0 : index
    %c1_28 = arith.constant 1 : index
    %c0_29 = arith.constant 0 : index
    %42 = vector.load %arg3[%c0_26, %c0_27, %c1_28, %c0_29] : memref<1x9x9x4xbf16, #tpu.memory_space<vmem>>, vector<1x8x8x4xbf16>
    %43 = vector.shape_cast %42 : vector<1x8x8x4xbf16> to vector<8x8x4xbf16>
    %44 = vector.extract_strided_slice %0 {offsets = [5, 0, 0], sizes = [1, 4, 128], strides = [1, 1, 1]} : vector<9x4x128xbf16> to vector<1x4x128xbf16>
    %45 = vector.shape_cast %44 : vector<1x4x128xbf16> to vector<4x128xbf16>
    %46 = vector.shape_cast %45 : vector<4x128xbf16> to vector<1x4x128xbf16>
    %47 = vector.broadcast %46 : vector<1x4x128xbf16> to vector<8x4x128xbf16>
    "tpu.trace_start"() <{level = 10 : i32, message = "hwc,hcn->hwn"}> : () -> ()
    %cst_30 = arith.constant dense<0.000000e+00> : vector<8x8x128xf32>
    %48 = tpu.matmul %43, %47, %cst_30 {dimension_numbers = #tpu.dot_dimension_numbers<[2], [1], [1], [2], [0, 0, 0, 1, 1, 2], [0], [0]>} : vector<8x8x4xbf16>, vector<8x4x128xbf16>, vector<8x8x128xf32> -> vector<8x8x128xf32>
    "tpu.trace_stop"() : () -> ()
    %49 = arith.addf %41, %48 : vector<8x8x128xf32>
    %c0_31 = arith.constant 0 : index
    %c1_32 = arith.constant 1 : index
    %c0_33 = arith.constant 0 : index
    %c0_34 = arith.constant 0 : index
    %50 = vector.load %arg1[%c0_31, %c1_32, %c0_33, %c0_34] : memref<1x9x9x4xbf16, #tpu.memory_space<vmem>>, vector<1x8x8x4xbf16>
    %51 = vector.shape_cast %50 : vector<1x8x8x4xbf16> to vector<8x8x4xbf16>
    %52 = vector.extract_strided_slice %0 {offsets = [6, 0, 0], sizes = [1, 4, 128], strides = [1, 1, 1]} : vector<9x4x128xbf16> to vector<1x4x128xbf16>
    %53 = vector.shape_cast %52 : vector<1x4x128xbf16> to vector<4x128xbf16>
    %54 = vector.shape_cast %53 : vector<4x128xbf16> to vector<1x4x128xbf16>
    %55 = vector.broadcast %54 : vector<1x4x128xbf16> to vector<8x4x128xbf16>
    "tpu.trace_start"() <{level = 10 : i32, message = "hwc,hcn->hwn"}> : () -> ()
    %cst_35 = arith.constant dense<0.000000e+00> : vector<8x8x128xf32>
    %56 = tpu.matmul %51, %55, %cst_35 {dimension_numbers = #tpu.dot_dimension_numbers<[2], [1], [1], [2], [0, 0, 0, 1, 1, 2], [0], [0]>} : vector<8x8x4xbf16>, vector<8x4x128xbf16>, vector<8x8x128xf32> -> vector<8x8x128xf32>
    "tpu.trace_stop"() : () -> ()
    %57 = arith.addf %49, %56 : vector<8x8x128xf32>
    %c0_36 = arith.constant 0 : index
    %c1_37 = arith.constant 1 : index
    %c0_38 = arith.constant 0 : index
    %c0_39 = arith.constant 0 : index
    %58 = vector.load %arg2[%c0_36, %c1_37, %c0_38, %c0_39] : memref<1x9x9x4xbf16, #tpu.memory_space<vmem>>, vector<1x8x8x4xbf16>
    %59 = vector.shape_cast %58 : vector<1x8x8x4xbf16> to vector<8x8x4xbf16>
    %60 = vector.extract_strided_slice %0 {offsets = [7, 0, 0], sizes = [1, 4, 128], strides = [1, 1, 1]} : vector<9x4x128xbf16> to vector<1x4x128xbf16>
    %61 = vector.shape_cast %60 : vector<1x4x128xbf16> to vector<4x128xbf16>
    %62 = vector.shape_cast %61 : vector<4x128xbf16> to vector<1x4x128xbf16>
    %63 = vector.broadcast %62 : vector<1x4x128xbf16> to vector<8x4x128xbf16>
    "tpu.trace_start"() <{level = 10 : i32, message = "hwc,hcn->hwn"}> : () -> ()
    %cst_40 = arith.constant dense<0.000000e+00> : vector<8x8x128xf32>
    %64 = tpu.matmul %59, %63, %cst_40 {dimension_numbers = #tpu.dot_dimension_numbers<[2], [1], [1], [2], [0, 0, 0, 1, 1, 2], [0], [0]>} : vector<8x8x4xbf16>, vector<8x4x128xbf16>, vector<8x8x128xf32> -> vector<8x8x128xf32>
    "tpu.trace_stop"() : () -> ()
    %65 = arith.addf %57, %64 : vector<8x8x128xf32>
    %c0_41 = arith.constant 0 : index
    %c1_42 = arith.constant 1 : index
    %c1_43 = arith.constant 1 : index
    %c0_44 = arith.constant 0 : index
    %66 = vector.load %arg1[%c0_41, %c1_42, %c1_43, %c0_44] : memref<1x9x9x4xbf16, #tpu.memory_space<vmem>>, vector<1x8x8x4xbf16>
    %67 = vector.shape_cast %66 : vector<1x8x8x4xbf16> to vector<8x8x4xbf16>
    %68 = vector.extract_strided_slice %0 {offsets = [8, 0, 0], sizes = [1, 4, 128], strides = [1, 1, 1]} : vector<9x4x128xbf16> to vector<1x4x128xbf16>
    %69 = vector.shape_cast %68 : vector<1x4x128xbf16> to vector<4x128xbf16>
    %70 = vector.shape_cast %69 : vector<4x128xbf16> to vector<1x4x128xbf16>
    %71 = vector.broadcast %70 : vector<1x4x128xbf16> to vector<8x4x128xbf16>
    "tpu.trace_start"() <{level = 10 : i32, message = "hwc,hcn->hwn"}> : () -> ()
    %cst_45 = arith.constant dense<0.000000e+00> : vector<8x8x128xf32>
    %72 = tpu.matmul %67, %71, %cst_45 {dimension_numbers = #tpu.dot_dimension_numbers<[2], [1], [1], [2], [0, 0, 0, 1, 1, 2], [0], [0]>} : vector<8x8x4xbf16>, vector<8x4x128xbf16>, vector<8x8x128xf32> -> vector<8x8x128xf32>
    "tpu.trace_stop"() : () -> ()
    %73 = arith.addf %65, %72 : vector<8x8x128xf32>
    %c0_46 = arith.constant 0 : index
    %c0_47 = arith.constant 0 : index
    %74 = vector.load %arg6[%c0_46, %c0_47] : memref<2x128xf32, #tpu.memory_space<vmem>>, vector<1x128xf32>
    %75 = vector.shape_cast %74 : vector<1x128xf32> to vector<128xf32>
    %c1_48 = arith.constant 1 : index
    %c0_49 = arith.constant 0 : index
    %76 = vector.load %arg6[%c1_48, %c0_49] : memref<2x128xf32, #tpu.memory_space<vmem>>, vector<1x128xf32>
    %77 = vector.shape_cast %76 : vector<1x128xf32> to vector<128xf32>
    %78 = vector.shape_cast %75 : vector<128xf32> to vector<1x1x128xf32>
    %79 = vector.broadcast %78 : vector<1x1x128xf32> to vector<8x8x128xf32>
    %80 = arith.mulf %73, %79 : vector<8x8x128xf32>
    %81 = vector.shape_cast %77 : vector<128xf32> to vector<1x1x128xf32>
    %82 = vector.broadcast %81 : vector<1x1x128xf32> to vector<8x8x128xf32>
    %83 = arith.addf %80, %82 : vector<8x8x128xf32>
    %cst_50 = arith.constant 0.000000e+00 : f32
    %84 = vector.broadcast %cst_50 : f32 to vector<8x8x128xf32>
    %85 = arith.maximumf %83, %84 : vector<8x8x128xf32>
    %86 = arith.truncf %85 : vector<8x8x128xf32> to vector<8x8x128xbf16>
    %c0_51 = arith.constant 0 : index
    %c0_52 = arith.constant 0 : index
    %c0_53 = arith.constant 0 : index
    %c0_54 = arith.constant 0 : index
    %87 = vector.load %arg7[%c0_51, %c0_52, %c0_53, %c0_54] : memref<1x8x8x128xbf16, #tpu.memory_space<vmem>>, vector<1x8x8x128xbf16>
    %88 = vector.shape_cast %87 : vector<1x8x8x128xbf16> to vector<8x8x128xbf16>
    %89 = vector.shape_cast %86 : vector<8x8x128xbf16> to vector<1x8x8x128xbf16>
    tpu.vector_store %arg7[%c0_51, %c0_52, %c0_53, %c0_54], %89 {strides = array<i32>} : memref<1x8x8x128xbf16, #tpu.memory_space<vmem>>, vector<1x8x8x128xbf16>,
    return
  }
  func.func @transform_0(%arg0: i32) -> (i32, i32, i32, i32) {
    %c0_i32 = arith.constant 0 : i32
    %c0_i32_0 = arith.constant 0 : i32
    %c0_i32_1 = arith.constant 0 : i32
    %c0_i32_2 = arith.constant 0 : i32
    return %arg0, %c0_i32, %c0_i32_0, %c0_i32_1 : i32, i32, i32, i32
  }
  func.func @transform_1(%arg0: i32) -> (i32, i32, i32, i32) {
    %c0_i32 = arith.constant 0 : i32
    %c0_i32_0 = arith.constant 0 : i32
    %c0_i32_1 = arith.constant 0 : i32
    %c0_i32_2 = arith.constant 0 : i32
    return %arg0, %c0_i32, %c0_i32_0, %c0_i32_1 : i32, i32, i32, i32
  }
  func.func @transform_2(%arg0: i32) -> (i32, i32, i32, i32) {
    %c0_i32 = arith.constant 0 : i32
    %c0_i32_0 = arith.constant 0 : i32
    %c0_i32_1 = arith.constant 0 : i32
    %c0_i32_2 = arith.constant 0 : i32
    return %arg0, %c0_i32, %c0_i32_0, %c0_i32_1 : i32, i32, i32, i32
  }
  func.func @transform_3(%arg0: i32) -> (i32, i32, i32, i32) {
    %c0_i32 = arith.constant 0 : i32
    %c0_i32_0 = arith.constant 0 : i32
    %c0_i32_1 = arith.constant 0 : i32
    %c0_i32_2 = arith.constant 0 : i32
    return %arg0, %c0_i32, %c0_i32_0, %c0_i32_1 : i32, i32, i32, i32
  }
  func.func @transform_4(%arg0: i32) -> (i32, i32, i32) {
    %c0_i32 = arith.constant 0 : i32
    %c0_i32_0 = arith.constant 0 : i32
    %c0_i32_1 = arith.constant 0 : i32
    %c0_i32_2 = arith.constant 0 : i32
    return %c0_i32, %c0_i32_0, %c0_i32_1 : i32, i32, i32
  }
  func.func @transform_5(%arg0: i32) -> (i32, i32) {
    %c0_i32 = arith.constant 0 : i32
    %c0_i32_0 = arith.constant 0 : i32
    %c0_i32_1 = arith.constant 0 : i32
    return %c0_i32, %c0_i32_0 : i32, i32
  }
  func.func @transform_6(%arg0: i32) -> (i32, i32, i32, i32) {
    %c0_i32 = arith.constant 0 : i32
    %c0_i32_0 = arith.constant 0 : i32
    %c0_i32_1 = arith.constant 0 : i32
    %c0_i32_2 = arith.constant 0 : i32
    return %arg0, %c0_i32, %c0_i32_0, %c0_i32_1 : i32, i32, i32, i32
  }
}

</mosaic_0001>

<llo_original>
// kernel: tpu_custom_call.1
$region0: #{tpu_custom_call.1}
  #allocation0 [shape = 'u32[]', space=smem, size = 0x4, offset = 0x4, fixed_abs, tag = 'smem constant byte address 0x4 - core index']
  #allocation1 [shape = 'u32[144,128]{1,0:T(1,128)}', space=vmem, size = 0x12000, scoped, tag = 'internal scratch']
  %s0 = inlined_call_operand.vmem [shape: bf16[2,9,9,4], index: 0, kind: input, shape index: {}]
  %s1 = inlined_call_operand.vmem [shape: bf16[2,9,9,4], index: 1, kind: input, shape index: {}]
  %s2 = inlined_call_operand.vmem [shape: bf16[2,9,9,4], index: 2, kind: input, shape index: {}]
  %s3 = inlined_call_operand.vmem [shape: bf16[2,9,9,4], index: 3, kind: input, shape index: {}]
  %s4 = inlined_call_operand.vmem [shape: bf16[9,4,128], index: 4, kind: input, shape index: {}]
  %s5 = inlined_call_operand.vmem [shape: f32[2,128], index: 5, kind: input, shape index: {}]
  %s6 = inlined_call_operand.hbm [shape: bf16[2,8,8,128], index: 6, kind: output, shape index: {}]
  %s7 = sld [smem:[#allocation0]]
  $region57: #{tpu_custom_call.1} parent=0
    _
  %s9 = ssub.s32 1, %s7
  %s10 = scalar_select 0, %s9, %s7
  $region1: #{tpu_custom_call.1} parent=0
    #allocation2 [shape = 'u8[32768]{0}', space=vmem, size = 0x8000, scoped, tag = 'output window, operand 0']
    #allocation3 [shape = 's32[2]{0}', space=sflag, size = 0x8, scoped, tag = 'scoped memory for tpu_custom_call.1']
    %11 = vsyncpa [#allocation3], 0
    %s12 = scalar_lea.sflag [#allocation3], 1
    %13 = vsyncpa %s12, 0
    loop: start=0, step=1, limit=4
    $region2: #{tpu_custom_call.1} parent=1 // loop_pre_header
      _
    $region3: #{tpu_custom_call.1} parent=1 // loop_header
      %s15 = sphi 0, %s19
      %p16 = scmp.ge.s32.totalorder %s15, 4
      %s25 = sphi 0, %s27
      %s28 = sphi 0, %s25
      %s29 = sphi 0, %s28
      %s45 = sphi 0, %s29
      %s51 = sphi 0, %s53
      %s54 = sphi 0, %s51
      %s55 = sphi 0, %s54
      %s71 = sphi 0, %s55
      %s77 = sphi 0, %s79
      %s80 = sphi 0, %s77
      %s81 = sphi 0, %s80
      %s97 = sphi 0, %s81
      %s103 = sphi 0, %s105
      %s106 = sphi 0, %s103
      %s107 = sphi 0, %s106
      %s123 = sphi 0, %s107
      %s127 = sphi 0, %s127
      %s129 = sphi 0, %s127
      %s130 = sphi 0, %s129
      %s144 = sphi 0, %s130
      %s148 = sphi 0, %s148
      %s150 = sphi 0, %s148
      %s151 = sphi 0, %s150
      %s165 = sphi 0, %s151
      %s171 = sphi 0, %s173
      %s174 = sphi 0, %s171
      %s175 = sphi 0, %s174
      %s191 = sphi 0, %s175
    $region4: #{tpu_custom_call.1} parent=1 // loop_header_branch
      %18 = sbr.rel (%p16) target = $region8
    $region5: #{tpu_custom_call.1} parent=1 // loop_body
      %s20 = ssub.s32 %s15, 1
      %s21 = ssub.s32 %s15, 2
      %s22 = sadd.s32 %s15, 1
      %s23 = ssub.s32 %s15, %s22
      %p24 = scmp.eq.s32.totalorder %s23, 0
      %s26 = sadd.s32 %s25, 1
      %s27 = scalar_select %p24, %s25, %s26
      %p30 = pneg %p24
      %p31 = scmp.eq.s32.totalorder %s15, 1
      %p32 = por %p30, %p31
      %p33 = scmp.ne.s32.totalorder %s25, %s28
      %p34 = scmp.eq.s32.totalorder %s15, 0
      %p35 = por %p33, %p34
      %p36 = scmp.ne.s32.totalorder %s25, %s28
      %p37 = scmp.eq.s32.totalorder %s20, 1
      %p38 = por %p36, %p37
      %p39 = scmp.ne.s32.totalorder %s28, %s29
      %p40 = scmp.eq.s32.totalorder %s20, 0
      %p41 = por %p39, %p40
      %p42 = scmp.ne.s32.totalorder %s28, %s29
      %p43 = scmp.eq.s32.totalorder %s21, 1
      %p44 = por %p42, %p43
      %p46 = scmp.ne.s32.totalorder %s29, %s45
      %p47 = scmp.eq.s32.totalorder %s21, 0
      %p48 = por %p46, %p47
      %s49 = ssub.s32 %s15, %s22
      %p50 = scmp.eq.s32.totalorder %s49, 0
      %s52 = sadd.s32 %s51, 1
      %s53 = scalar_select %p50, %s51, %s52
      %p56 = pneg %p50
      %p57 = scmp.eq.s32.totalorder %s15, 1
      %p58 = por %p56, %p57
      %p59 = scmp.ne.s32.totalorder %s51, %s54
      %p60 = scmp.eq.s32.totalorder %s15, 0
      %p61 = por %p59, %p60
      %p62 = scmp.ne.s32.totalorder %s51, %s54
      %p63 = scmp.eq.s32.totalorder %s20, 1
      %p64 = por %p62, %p63
      %p65 = scmp.ne.s32.totalorder %s54, %s55
      %p66 = scmp.eq.s32.totalorder %s20, 0
      %p67 = por %p65, %p66
      %p68 = scmp.ne.s32.totalorder %s54, %s55
      %p69 = scmp.eq.s32.totalorder %s21, 1
      %p70 = por %p68, %p69
      %p72 = scmp.ne.s32.totalorder %s55, %s71
      %p73 = scmp.eq.s32.totalorder %s21, 0
      %p74 = por %p72, %p73
      %s75 = ssub.s32 %s15, %s22
      %p76 = scmp.eq.s32.totalorder %s75, 0
      %s78 = sadd.s32 %s77, 1
      %s79 = scalar_select %p76, %s77, %s78
      %p82 = pneg %p76
      %p83 = scmp.eq.s32.totalorder %s15, 1
      %p84 = por %p82, %p83
      %p85 = scmp.ne.s32.totalorder %s77, %s80
      %p86 = scmp.eq.s32.totalorder %s15, 0
      %p87 = por %p85, %p86
      %p88 = scmp.ne.s32.totalorder %s77, %s80
      %p89 = scmp.eq.s32.totalorder %s20, 1
      %p90 = por %p88, %p89
      %p91 = scmp.ne.s32.totalorder %s80, %s81
      %p92 = scmp.eq.s32.totalorder %s20, 0
      %p93 = por %p91, %p92
      %p94 = scmp.ne.s32.totalorder %s80, %s81
      %p95 = scmp.eq.s32.totalorder %s21, 1
      %p96 = por %p94, %p95
      %p98 = scmp.ne.s32.totalorder %s81, %s97
      %p99 = scmp.eq.s32.totalorder %s21, 0
      %p100 = por %p98, %p99
      %s101 = ssub.s32 %s15, %s22
      %p102 = scmp.eq.s32.totalorder %s101, 0
      %s104 = sadd.s32 %s103, 1
      %s105 = scalar_select %p102, %s103, %s104
      %p108 = pneg %p102
      %p109 = scmp.eq.s32.totalorder %s15, 1
      %p110 = por %p108, %p109
      %p111 = scmp.ne.s32.totalorder %s103, %s106
      %p112 = scmp.eq.s32.totalorder %s15, 0
      %p113 = por %p111, %p112
      %p114 = scmp.ne.s32.totalorder %s103, %s106
      %p115 = scmp.eq.s32.totalorder %s20, 1
      %p116 = por %p114, %p115
      %p117 = scmp.ne.s32.totalorder %s106, %s107
      %p118 = scmp.eq.s32.totalorder %s20, 0
      %p119 = por %p117, %p118
      %p120 = scmp.ne.s32.totalorder %s106, %s107
      %p121 = scmp.eq.s32.totalorder %s21, 1
      %p122 = por %p120, %p121
      %p124 = scmp.ne.s32.totalorder %s107, %s123
      %p125 = scmp.eq.s32.totalorder %s21, 0
      %p126 = por %p124, %p125
      %s128 = sadd.s32 %s127, 1
      %p131 = scmp.eq.s32.totalorder %s15, 1
      %p132 = scmp.ne.s32.totalorder %s127, %s129
      %p133 = scmp.eq.s32.totalorder %s15, 0
      %p134 = por %p132, %p133
      %p135 = scmp.ne.s32.totalorder %s127, %s129
      %p136 = scmp.eq.s32.totalorder %s20, 1
      %p137 = por %p135, %p136
      %p138 = scmp.ne.s32.totalorder %s129, %s130
      %p139 = scmp.eq.s32.totalorder %s20, 0
      %p140 = por %p138, %p139
      %p141 = scmp.ne.s32.totalorder %s129, %s130
      %p142 = scmp.eq.s32.totalorder %s21, 1
      %p143 = por %p141, %p142
      %p145 = scmp.ne.s32.totalorder %s130, %s144
      %p146 = scmp.eq.s32.totalorder %s21, 0
      %p147 = por %p145, %p146
      %s149 = sadd.s32 %s148, 1
      %p152 = scmp.eq.s32.totalorder %s15, 1
      %p153 = scmp.ne.s32.totalorder %s148, %s150
      %p154 = scmp.eq.s32.totalorder %s15, 0
      %p155 = por %p153, %p154
      %p156 = scmp.ne.s32.totalorder %s148, %s150
      %p157 = scmp.eq.s32.totalorder %s20, 1
      %p158 = por %p156, %p157
      %p159 = scmp.ne.s32.totalorder %s150, %s151
      %p160 = scmp.eq.s32.totalorder %s20, 0
      %p161 = por %p159, %p160
      %p162 = scmp.ne.s32.totalorder %s150, %s151
      %p163 = scmp.eq.s32.totalorder %s21, 1
      %p164 = por %p162, %p163
      %p166 = scmp.ne.s32.totalorder %s151, %s165
      %p167 = scmp.eq.s32.totalorder %s21, 0
      %p168 = por %p166, %p167
      %s169 = ssub.s32 %s15, %s22
      %p170 = scmp.eq.s32.totalorder %s169, 0
      %s172 = sadd.s32 %s171, 1
      %s173 = scalar_select %p170, %s171, %s172
      %p176 = pneg %p170
      %p177 = scmp.eq.s32.totalorder %s15, 1
      %p178 = por %p176, %p177
      %p179 = scmp.ne.s32.totalorder %s171, %s174
      %p180 = scmp.eq.s32.totalorder %s15, 0
      %p181 = por %p179, %p180
      %p182 = scmp.ne.s32.totalorder %s171, %s174
      %p183 = scmp.eq.s32.totalorder %s20, 1
      %p184 = por %p182, %p183
      %p185 = scmp.ne.s32.totalorder %s174, %s175
      %p186 = scmp.eq.s32.totalorder %s20, 0
      %p187 = por %p185, %p186
      %p188 = scmp.ne.s32.totalorder %s174, %s175
      %p189 = scmp.eq.s32.totalorder %s21, 1
      %p190 = por %p188, %p189
      %p192 = scmp.ne.s32.totalorder %s175, %s191
      %p193 = scmp.eq.s32.totalorder %s21, 0
      %p194 = por %p192, %p193
      %p195 = scmp.le.s32.totalorder 1, %s15
      %p196 = scmp.lt.s32.totalorder %s15, 3
      %p197 = pnand %p195, %p196
      %p198 = pneg %p197
      // Predicated region
      $region9: #{tpu_custom_call.1} parent=5 // pred_check
        _
      $region10: #{tpu_custom_call.1} parent=5 // pred_check_branch
        %200 = sbr.rel (%p197) target = $region12
      $region11: #{tpu_custom_call.1} parent=5 // pred_region
        %s201 = ssub.s32 %s15, 1
        // Predicated region
        $region13: #{tpu_custom_call.1} parent=11 // pred_check
          %p202 = pneg %p140
        $region14: #{tpu_custom_call.1} parent=11 // pred_check_branch
          %204 = sbr.rel (%p202) target = $region16
        $region15: #{tpu_custom_call.1} parent=11 // pred_region
          _
        $region16: #{tpu_custom_call.1} parent=11 // pred_fallthru
          _
        // Predicated region
        $region17: #{tpu_custom_call.1} parent=11 // pred_check
          %p205 = pneg %p161
        $region18: #{tpu_custom_call.1} parent=11 // pred_check_branch
          %207 = sbr.rel (%p205) target = $region20
        $region19: #{tpu_custom_call.1} parent=11 // pred_region
          _
        $region20: #{tpu_custom_call.1} parent=11 // pred_fallthru
          _
      $region12: #{tpu_custom_call.1} parent=5 // pred_fallthru
        _
      %p208 = scmp.lt.s32.totalorder %s15, 2
      // Predicated region
      $region21: #{tpu_custom_call.1} parent=5 // pred_check
        %p209 = pneg %p208
      $region22: #{tpu_custom_call.1} parent=5 // pred_check_branch
        %211 = sbr.rel (%p209) target = $region24
      $region23: #{tpu_custom_call.1} parent=5 // pred_region
        // Predicated region
        $region25: #{tpu_custom_call.1} parent=23 // pred_check
          %p212 = pneg %p35
        $region26: #{tpu_custom_call.1} parent=23 // pred_check_branch
          %214 = sbr.rel (%p212) target = $region28
        $region27: #{tpu_custom_call.1} parent=23 // pred_region
          %p215 = scmp.lt.s32.totalorder %s15, 1
          %s216 = scalar_select %p215, %s15, 1
          %s217 = smul.addr %s216, 18
          %s218 = smul.addr %s217, 4
          %s219 = scalar_lea.vmem %s0, %s218
        $region28: #{tpu_custom_call.1} parent=23 // pred_fallthru
          _
        // Predicated region
        $region29: #{tpu_custom_call.1} parent=23 // pred_check
          %p220 = pneg %p61
        $region30: #{tpu_custom_call.1} parent=23 // pred_check_branch
          %222 = sbr.rel (%p220) target = $region32
        $region31: #{tpu_custom_call.1} parent=23 // pred_region
          %p223 = scmp.lt.s32.totalorder %s15, 1
          %s224 = scalar_select %p223, %s15, 1
          %s225 = smul.addr %s224, 18
          %s226 = smul.addr %s225, 4
          %s227 = scalar_lea.vmem %s1, %s226
        $region32: #{tpu_custom_call.1} parent=23 // pred_fallthru
          _
        // Predicated region
        $region33: #{tpu_custom_call.1} parent=23 // pred_check
          %p228 = pneg %p87
        $region34: #{tpu_custom_call.1} parent=23 // pred_check_branch
          %230 = sbr.rel (%p228) target = $region36
        $region35: #{tpu_custom_call.1} parent=23 // pred_region
          %p231 = scmp.lt.s32.totalorder %s15, 1
          %s232 = scalar_select %p231, %s15, 1
          %s233 = smul.addr %s232, 18
          %s234 = smul.addr %s233, 4
          %s235 = scalar_lea.vmem %s2, %s234
        $region36: #{tpu_custom_call.1} parent=23 // pred_fallthru
          _
        // Predicated region
        $region37: #{tpu_custom_call.1} parent=23 // pred_check
          %p236 = pneg %p113
        $region38: #{tpu_custom_call.1} parent=23 // pred_check_branch
          %238 = sbr.rel (%p236) target = $region40
        $region39: #{tpu_custom_call.1} parent=23 // pred_region
          %p239 = scmp.lt.s32.totalorder %s15, 1
          %s240 = scalar_select %p239, %s15, 1
          %s241 = smul.addr %s240, 18
          %s242 = smul.addr %s241, 4
          %s243 = scalar_lea.vmem %s3, %s242
        $region40: #{tpu_custom_call.1} parent=23 // pred_fallthru
          _
      $region24: #{tpu_custom_call.1} parent=5 // pred_fallthru
        _
      %p244 = scmp.le.s32.totalorder 1, %s15
      %p245 = scmp.lt.s32.totalorder %s15, 3
      %p246 = pnand %p244, %p245
      %p247 = pneg %p246
      // Predicated region
      $region41: #{tpu_custom_call.1} parent=5 // pred_check
        _
      $region42: #{tpu_custom_call.1} parent=5 // pred_check_branch
        %249 = sbr.rel (%p246) target = $region44
      $region43: #{tpu_custom_call.1} parent=5 // pred_region
        %s250 = ssub.s32 %s15, 1
        %p251 = scmp.lt.s32.totalorder %s20, 1
        %s252 = scalar_select %p251, %s20, 1
        %s253 = smul.addr %s252, 18
        %s254 = smul.addr %s253, 4
        %s255 = scalar_lea.vmem %s0, %s254
        %p256 = pneg %p41
        %p257 = pneg %p38
        %p258 = scmp.lt.s32.totalorder %s20, 1
        %s259 = scalar_select %p258, %s20, 1
        %s260 = smul.addr %s259, 18
        %s261 = smul.addr %s260, 4
        %s262 = scalar_lea.vmem %s1, %s261
        %p263 = pneg %p67
        %p264 = pneg %p64
        %p265 = scmp.lt.s32.totalorder %s20, 1
        %s266 = scalar_select %p265, %s20, 1
        %s267 = smul.addr %s266, 18
        %s268 = smul.addr %s267, 4
        %s269 = scalar_lea.vmem %s2, %s268
        %p270 = pneg %p93
        %p271 = pneg %p90
        %p272 = scmp.lt.s32.totalorder %s20, 1
        %s273 = scalar_select %p272, %s20, 1
        %s274 = smul.addr %s273, 18
        %s275 = smul.addr %s274, 4
        %s276 = scalar_lea.vmem %s3, %s275
        %p277 = pneg %p119
        %p278 = pneg %p116
        %p279 = pneg %p140
        %p280 = pneg %p137
        %p281 = pneg %p161
        %p282 = pneg %p158
        %p283 = pneg %p187
        %p284 = pneg %p184
        %s285 = sand.u32 %s174, 1
        %s286 = scalar_lea.sflag [#allocation3], %s285
        %s287 = sand.u32 %s174, 1
        %s288 = smul.addr %s287, 32
        %s289 = scalar_lea.vmem [#allocation2], %s288
        %p290 = scmp.lt.s32.totalorder %s20, 1
        %s291 = scalar_select %p290, %s20, 1
        %s292 = smul.addr %s291, 18
        %s293 = smul.addr %s292, 4
        %s294 = scalar_lea.vmem %s0, %s293
        %p295 = scmp.lt.s32.totalorder %s20, 1
        %s296 = scalar_select %p295, %s20, 1
        %s297 = smul.addr %s296, 18
        %s298 = smul.addr %s297, 4
        %s299 = scalar_lea.vmem %s1, %s298
        %p300 = scmp.lt.s32.totalorder %s20, 1
        %s301 = scalar_select %p300, %s20, 1
        %s302 = smul.addr %s301, 18
        %s303 = smul.addr %s302, 4
        %s304 = scalar_lea.vmem %s2, %s303
        %p305 = scmp.lt.s32.totalorder %s20, 1
        %s306 = scalar_select %p305, %s20, 1
        %s307 = smul.addr %s306, 18
        %s308 = smul.addr %s307, 4
        %s309 = scalar_lea.vmem %s3, %s308
        %v311 = vld [vmem:[%s4] sm:$0x3]
        %v312 = vld [vmem:[%s4 + $0x2] sm:$0x3]
        %v313 = vld [vmem:[%s4 + $0x4] sm:$0x3]
        %v314 = vld [vmem:[%s4 + $0x6] sm:$0x3]
        %v315 = vld [vmem:[%s4 + $0x8] sm:$0x3]
        %v316 = vld [vmem:[%s4 + $0xa] sm:$0x3]
        %v317 = vld [vmem:[%s4 + $0xc] sm:$0x3]
        %v318 = vld [vmem:[%s4 + $0xe] sm:$0x3]
        %v319 = vld [vmem:[%s4 + $0x10] sm:$0x3]
        %v320 = vld [vmem:[%s294] sm:$0xf]
        %v321 = vld [vmem:[%s294 + $0x8] sm:$0xf]
        %v322 = vld [vmem:[%s294 + $0x10] sm:$0xf]
        %v323 = vld [vmem:[%s294 + $0x18] sm:$0xf]
        %v324 = vld [vmem:[%s294 + $0x20] sm:$0xf]
        %v325 = vld [vmem:[%s294 + $0x28] sm:$0xf]
        %v326 = vld [vmem:[%s294 + $0x30] sm:$0xf]
        %v327 = vld [vmem:[%s294 + $0x38] sm:$0xf]
        %v328 = vld [vmem:[%s299] sm:$0xf]
        %v329 = vld [vmem:[%s299 + $0x8] sm:$0xf]
        %v330 = vld [vmem:[%s299 + $0x10] sm:$0xf]
        %v331 = vld [vmem:[%s299 + $0x18] sm:$0xf]
        %v332 = vld [vmem:[%s299 + $0x20] sm:$0xf]
        %v333 = vld [vmem:[%s299 + $0x28] sm:$0xf]
        %v334 = vld [vmem:[%s299 + $0x30] sm:$0xf]
        %v335 = vld [vmem:[%s299 + $0x38] sm:$0xf]
        %vm336 = vcmask 31744
        %v338 = vsel %vm336, %v328, 0
        %vm340 = vcmask 1041408
        %v342 = vsel %vm340, %v312, 0
        %344 = vmatprep.subr.bf16.mxu0 0
        %345 = vmatpush1.bf16.msra.mxu0 %v342
        %346 = vmatprep.subr.bf16.mxu0 0
        %347 = vmatpush1.bf16.msra.mxu0 0
        %348 = vmatprep.subr.bf16.mxu0 0
        %349 = vmatpush1.bf16.msra.mxu0 0
        %350 = vmatprep.subr.bf16.mxu0 0
        %351 = vmatpush1.bf16.msra.mxu0 0
        %352 = vmatprep.subr.bf16.mxu0 0
        %353 = vmatpush1.bf16.msra.mxu0 0
        %354 = vmatprep.subr.bf16.mxu0 0
        %355 = vmatpush1.bf16.msra.mxu0 0
        %356 = vmatprep.subr.bf16.mxu0 0
        %357 = vmatpush1.bf16.msra.mxu0 0
        %358 = vmatprep.subr.bf16.mxu0 0
        %359 = vmatpush1.bf16.msra.mxu0 0
        %360 = vmatprep.subr.bf16.mxu0 0
        %361 = vmatpush1.bf16.msra.mxu0 0
        %362 = vmatprep.subr.bf16.mxu0 0
        %363 = vmatpush1.bf16.msra.mxu0 0
        %364 = vmatprep.subr.bf16.mxu0 0
        %365 = vmatpush1.bf16.msra.mxu0 0
        %366 = vmatprep.subr.bf16.mxu0 0
        %367 = vmatpush1.bf16.msra.mxu0 0
        %368 = vmatprep.subr.bf16.mxu0 0
        %369 = vmatpush1.bf16.msra.mxu0 0
        %370 = vmatprep.subr.bf16.mxu0 0
        %371 = vmatpush1.bf16.msra.mxu0 0
        %372 = vmatprep.subr.bf16.mxu0 0
        %373 = vmatpush1.bf16.msra.mxu0 0
        %374 = vmatprep.subr.bf16.mxu0 0
        %375 = vmatpush1.bf16.msra.mxu0 0
        %376 = vmatprep.mubr.bf16.mxu0 0
        %377 = vmatmul.mubr.bf16.gmra.mrb[0].mxu0 %v338
        %v378 = vpop.f32.mrb[0].mxu0
        %v379 = vadd.f32 0.0, %v378
        %v380 = vpop.f32.mrb[0].mxu0
        %v381 = vpop.f32.mrb[0].mxu0
        %v382 = vpop.f32.mrb[0].mxu0
        %383 = vdwg.mxu0
        %v385 = vsel %vm336, %v329, 0
        %387 = vmatprep.subr.bf16.mxu0 0
        %388 = vmatpush1.bf16.msra.mxu0 %v342
        %389 = vmatprep.subr.bf16.mxu0 0
        %390 = vmatpush1.bf16.msra.mxu0 0
        %391 = vmatprep.subr.bf16.mxu0 0
        %392 = vmatpush1.bf16.msra.mxu0 0
        %393 = vmatprep.subr.bf16.mxu0 0
        %394 = vmatpush1.bf16.msra.mxu0 0
        %395 = vmatprep.subr.bf16.mxu0 0
        %396 = vmatpush1.bf16.msra.mxu0 0
        %397 = vmatprep.subr.bf16.mxu0 0
        %398 = vmatpush1.bf16.msra.mxu0 0
        %399 = vmatprep.subr.bf16.mxu0 0
        %400 = vmatpush1.bf16.msra.mxu0 0
        %401 = vmatprep.subr.bf16.mxu0 0
        %402 = vmatpush1.bf16.msra.mxu0 0
        %403 = vmatprep.subr.bf16.mxu0 0
        %404 = vmatpush1.bf16.msra.mxu0 0
        %405 = vmatprep.subr.bf16.mxu0 0
        %406 = vmatpush1.bf16.msra.mxu0 0
        %407 = vmatprep.subr.bf16.mxu0 0
        %408 = vmatpush1.bf16.msra.mxu0 0
        %409 = vmatprep.subr.bf16.mxu0 0
        %410 = vmatpush1.bf16.msra.mxu0 0
        %411 = vmatprep.subr.bf16.mxu0 0
        %412 = vmatpush1.bf16.msra.mxu0 0
        %413 = vmatprep.subr.bf16.mxu0 0
        %414 = vmatpush1.bf16.msra.mxu0 0
        %415 = vmatprep.subr.bf16.mxu0 0
        %416 = vmatpush1.bf16.msra.mxu0 0
        %417 = vmatprep.subr.bf16.mxu0 0
        %418 = vmatpush1.bf16.msra.mxu0 0
        %419 = vmatprep.mubr.bf16.mxu0 0
        %420 = vmatmul.mubr.bf16.gmra.mrb[0].mxu0 %v385
        %v421 = vpop.f32.mrb[0].mxu0
        %v422 = vadd.f32 0.0, %v421
        %v423 = vpop.f32.mrb[0].mxu0
        %v424 = vpop.f32.mrb[0].mxu0
        %v425 = vpop.f32.mrb[0].mxu0
        %426 = vdwg.mxu0
        %v428 = vsel %vm336, %v330, 0
        %430 = vmatprep.subr.bf16.mxu0 0
        %431 = vmatpush1.bf16.msra.mxu0 %v342
        %432 = vmatprep.subr.bf16.mxu0 0
        %433 = vmatpush1.bf16.msra.mxu0 0
        %434 = vmatprep.subr.bf16.mxu0 0
        %435 = vmatpush1.bf16.msra.mxu0 0
        %436 = vmatprep.subr.bf16.mxu0 0
        %437 = vmatpush1.bf16.msra.mxu0 0
        %438 = vmatprep.subr.bf16.mxu0 0
        %439 = vmatpush1.bf16.msra.mxu0 0
        %440 = vmatprep.subr.bf16.mxu0 0
        %441 = vmatpush1.bf16.msra.mxu0 0
        %442 = vmatprep.subr.bf16.mxu0 0
        %443 = vmatpush1.bf16.msra.mxu0 0
        %444 = vmatprep.subr.bf16.mxu0 0
        %445 = vmatpush1.bf16.msra.mxu0 0
        %446 = vmatprep.subr.bf16.mxu0 0
        %447 = vmatpush1.bf16.msra.mxu0 0
        %448 = vmatprep.subr.bf16.mxu0 0
        %449 = vmatpush1.bf16.msra.mxu0 0
        %450 = vmatprep.subr.bf16.mxu0 0
        %451 = vmatpush1.bf16.msra.mxu0 0
        %452 = vmatprep.subr.bf16.mxu0 0
        %453 = vmatpush1.bf16.msra.mxu0 0
        %454 = vmatprep.subr.bf16.mxu0 0
        %455 = vmatpush1.bf16.msra.mxu0 0
        %456 = vmatprep.subr.bf16.mxu0 0
        %457 = vmatpush1.bf16.msra.mxu0 0
        %458 = vmatprep.subr.bf16.mxu0 0
        %459 = vmatpush1.bf16.msra.mxu0 0
        %460 = vmatprep.subr.bf16.mxu0 0
        %461 = vmatpush1.bf16.msra.mxu0 0
        %462 = vmatprep.mubr.bf16.mxu0 0
        %463 = vmatmul.mubr.bf16.gmra.mrb[0].mxu0 %v428
        %v464 = vpop.f32.mrb[0].mxu0
        %v465 = vadd.f32 0.0, %v464
        %v466 = vpop.f32.mrb[0].mxu0
        %v467 = vpop.f32.mrb[0].mxu0
        %v468 = vpop.f32.mrb[0].mxu0
        %469 = vdwg.mxu0
        %v471 = vsel %vm336, %v331, 0
        %473 = vmatprep.subr.bf16.mxu0 0
        %474 = vmatpush1.bf16.msra.mxu0 %v342
        %475 = vmatprep.subr.bf16.mxu0 0
        %476 = vmatpush1.bf16.msra.mxu0 0
        %477 = vmatprep.subr.bf16.mxu0 0
        %478 = vmatpush1.bf16.msra.mxu0 0
        %479 = vmatprep.subr.bf16.mxu0 0
        %480 = vmatpush1.bf16.msra.mxu0 0
        %481 = vmatprep.subr.bf16.mxu0 0
        %482 = vmatpush1.bf16.msra.mxu0 0
        %483 = vmatprep.subr.bf16.mxu0 0
        %484 = vmatpush1.bf16.msra.mxu0 0
        %485 = vmatprep.subr.bf16.mxu0 0
        %486 = vmatpush1.bf16.msra.mxu0 0
        %487 = vmatprep.subr.bf16.mxu0 0
        %488 = vmatpush1.bf16.msra.mxu0 0
        %489 = vmatprep.subr.bf16.mxu0 0
        %490 = vmatpush1.bf16.msra.mxu0 0
        %491 = vmatprep.subr.bf16.mxu0 0
        %492 = vmatpush1.bf16.msra.mxu0 0
        %493 = vmatprep.subr.bf16.mxu0 0
        %494 = vmatpush1.bf16.msra.mxu0 0
        %495 = vmatprep.subr.bf16.mxu0 0
        %496 = vmatpush1.bf16.msra.mxu0 0
        %497 = vmatprep.subr.bf16.mxu0 0
        %498 = vmatpush1.bf16.msra.mxu0 0
        %499 = vmatprep.subr.bf16.mxu0 0
        %500 = vmatpush1.bf16.msra.mxu0 0
        %501 = vmatprep.subr.bf16.mxu0 0
        %502 = vmatpush1.bf16.msra.mxu0 0
        %503 = vmatprep.subr.bf16.mxu0 0
        %504 = vmatpush1.bf16.msra.mxu0 0
        %505 = vmatprep.mubr.bf16.mxu0 0
        %506 = vmatmul.mubr.bf16.gmra.mrb[0].mxu0 %v471
        %v507 = vpop.f32.mrb[0].mxu0
        %v508 = vadd.f32 0.0, %v507
        %v509 = vpop.f32.mrb[0].mxu0
        %v510 = vpop.f32.mrb[0].mxu0
        %v511 = vpop.f32.mrb[0].mxu0
        %512 = vdwg.mxu0
        %v514 = vsel %vm336, %v332, 0
        %516 = vmatprep.subr.bf16.mxu0 0
        %517 = vmatpush1.bf16.msra.mxu0 %v342
        %518 = vmatprep.subr.bf16.mxu0 0
        %519 = vmatpush1.bf16.msra.mxu0 0
        %520 = vmatprep.subr.bf16.mxu0 0
        %521 = vmatpush1.bf16.msra.mxu0 0
        %522 = vmatprep.subr.bf16.mxu0 0
        %523 = vmatpush1.bf16.msra.mxu0 0
        %524 = vmatprep.subr.bf16.mxu0 0
        %525 = vmatpush1.bf16.msra.mxu0 0
        %526 = vmatprep.subr.bf16.mxu0 0
        %527 = vmatpush1.bf16.msra.mxu0 0
        %528 = vmatprep.subr.bf16.mxu0 0
        %529 = vmatpush1.bf16.msra.mxu0 0
        %530 = vmatprep.subr.bf16.mxu0 0
        %531 = vmatpush1.bf16.msra.mxu0 0
        %532 = vmatprep.subr.bf16.mxu0 0
        %533 = vmatpush1.bf16.msra.mxu0 0
        %534 = vmatprep.subr.bf16.mxu0 0
        %535 = vmatpush1.bf16.msra.mxu0 0
        %536 = vmatprep.subr.bf16.mxu0 0
        %537 = vmatpush1.bf16.msra.mxu0 0
        %538 = vmatprep.subr.bf16.mxu0 0
        %539 = vmatpush1.bf16.msra.mxu0 0
        %540 = vmatprep.subr.bf16.mxu0 0
        %541 = vmatpush1.bf16.msra.mxu0 0
        %542 = vmatprep.subr.bf16.mxu0 0
        %543 = vmatpush1.bf16.msra.mxu0 0
        %544 = vmatprep.subr.bf16.mxu0 0
        %545 = vmatpush1.bf16.msra.mxu0 0
        %546 = vmatprep.subr.bf16.mxu0 0
        %547 = vmatpush1.bf16.msra.mxu0 0
        %548 = vmatprep.mubr.bf16.mxu0 0
        %549 = vmatmul.mubr.bf16.gmra.mrb[0].mxu0 %v514
        %v550 = vpop.f32.mrb[0].mxu0
        %v551 = vadd.f32 0.0, %v550
        %v552 = vpop.f32.mrb[0].mxu0
        %v553 = vpop.f32.mrb[0].mxu0
        %v554 = vpop.f32.mrb[0].mxu0
        %555 = vdwg.mxu0
        %v557 = vsel %vm336, %v333, 0
        %559 = vmatprep.subr.bf16.mxu0 0
        %560 = vmatpush1.bf16.msra.mxu0 %v342
        %561 = vmatprep.subr.bf16.mxu0 0
        %562 = vmatpush1.bf16.msra.mxu0 0
        %563 = vmatprep.subr.bf16.mxu0 0
        %564 = vmatpush1.bf16.msra.mxu0 0
        %565 = vmatprep.subr.bf16.mxu0 0
        %566 = vmatpush1.bf16.msra.mxu0 0
        %567 = vmatprep.subr.bf16.mxu0 0
        %568 = vmatpush1.bf16.msra.mxu0 0
        %569 = vmatprep.subr.bf16.mxu0 0
        %570 = vmatpush1.bf16.msra.mxu0 0
        %571 = vmatprep.subr.bf16.mxu0 0
        %572 = vmatpush1.bf16.msra.mxu0 0
        %573 = vmatprep.subr.bf16.mxu0 0
        %574 = vmatpush1.bf16.msra.mxu0 0
        %575 = vmatprep.subr.bf16.mxu0 0
        %576 = vmatpush1.bf16.msra.mxu0 0
        %577 = vmatprep.subr.bf16.mxu0 0
        %578 = vmatpush1.bf16.msra.mxu0 0
        %579 = vmatprep.subr.bf16.mxu0 0
        %580 = vmatpush1.bf16.msra.mxu0 0
        %581 = vmatprep.subr.bf16.mxu0 0
        %582 = vmatpush1.bf16.msra.mxu0 0
        %583 = vmatprep.subr.bf16.mxu0 0
        %584 = vmatpush1.bf16.msra.mxu0 0
        %585 = vmatprep.subr.bf16.mxu0 0
        %586 = vmatpush1.bf16.msra.mxu0 0
        %587 = vmatprep.subr.bf16.mxu0 0
        %588 = vmatpush1.bf16.msra.mxu0 0
        %589 = vmatprep.subr.bf16.mxu0 0
        %590 = vmatpush1.bf16.msra.mxu0 0
        %591 = vmatprep.mubr.bf16.mxu0 0
        %592 = vmatmul.mubr.bf16.gmra.mrb[0].mxu0 %v557
        %v593 = vpop.f32.mrb[0].mxu0
        %v594 = vadd.f32 0.0, %v593
        %v595 = vpop.f32.mrb[0].mxu0
        %v596 = vpop.f32.mrb[0].mxu0
        %v597 = vpop.f32.mrb[0].mxu0
        %598 = vdwg.mxu0
        %v600 = vsel %vm336, %v334, 0
        %602 = vmatprep.subr.bf16.mxu0 0
        %603 = vmatpush1.bf16.msra.mxu0 %v342
        %604 = vmatprep.subr.bf16.mxu0 0
        %605 = vmatpush1.bf16.msra.mxu0 0
        %606 = vmatprep.subr.bf16.mxu0 0
        %607 = vmatpush1.bf16.msra.mxu0 0
        %608 = vmatprep.subr.bf16.mxu0 0
        %609 = vmatpush1.bf16.msra.mxu0 0
        %610 = vmatprep.subr.bf16.mxu0 0
        %611 = vmatpush1.bf16.msra.mxu0 0
        %612 = vmatprep.subr.bf16.mxu0 0
        %613 = vmatpush1.bf16.msra.mxu0 0
        %614 = vmatprep.subr.bf16.mxu0 0
        %615 = vmatpush1.bf16.msra.mxu0 0
        %616 = vmatprep.subr.bf16.mxu0 0
        %617 = vmatpush1.bf16.msra.mxu0 0
        %618 = vmatprep.subr.bf16.mxu0 0
        %619 = vmatpush1.bf16.msra.mxu0 0
        %620 = vmatprep.subr.bf16.mxu0 0
        %621 = vmatpush1.bf16.msra.mxu0 0
        %622 = vmatprep.subr.bf16.mxu0 0
        %623 = vmatpush1.bf16.msra.mxu0 0
        %624 = vmatprep.subr.bf16.mxu0 0
        %625 = vmatpush1.bf16.msra.mxu0 0
        %626 = vmatprep.subr.bf16.mxu0 0
        %627 = vmatpush1.bf16.msra.mxu0 0
        %628 = vmatprep.subr.bf16.mxu0 0
        %629 = vmatpush1.bf16.msra.mxu0 0
        %630 = vmatprep.subr.bf16.mxu0 0
        %631 = vmatpush1.bf16.msra.mxu0 0
        %632 = vmatprep.subr.bf16.mxu0 0
        %633 = vmatpush1.bf16.msra.mxu0 0
        %634 = vmatprep.mubr.bf16.mxu0 0
        %635 = vmatmul.mubr.bf16.gmra.mrb[0].mxu0 %v600
        %v636 = vpop.f32.mrb[0].mxu0
        %v637 = vadd.f32 0.0, %v636
        %v638 = vpop.f32.mrb[0].mxu0
        %v639 = vpop.f32.mrb[0].mxu0
        %v640 = vpop.f32.mrb[0].mxu0
        %641 = vdwg.mxu0
        %v643 = vsel %vm336, %v335, 0
        %645 = vmatprep.subr.bf16.mxu0 0
        %646 = vmatpush1.bf16.msra.mxu0 %v342
        %647 = vmatprep.subr.bf16.mxu0 0
        %648 = vmatpush1.bf16.msra.mxu0 0
        %649 = vmatprep.subr.bf16.mxu0 0
        %650 = vmatpush1.bf16.msra.mxu0 0
        %651 = vmatprep.subr.bf16.mxu0 0
        %652 = vmatpush1.bf16.msra.mxu0 0
        %653 = vmatprep.subr.bf16.mxu0 0
        %654 = vmatpush1.bf16.msra.mxu0 0
        %655 = vmatprep.subr.bf16.mxu0 0
        %656 = vmatpush1.bf16.msra.mxu0 0
        %657 = vmatprep.subr.bf16.mxu0 0
        %658 = vmatpush1.bf16.msra.mxu0 0
        %659 = vmatprep.subr.bf16.mxu0 0
        %660 = vmatpush1.bf16.msra.mxu0 0
        %661 = vmatprep.subr.bf16.mxu0 0
        %662 = vmatpush1.bf16.msra.mxu0 0
        %663 = vmatprep.subr.bf16.mxu0 0
        %664 = vmatpush1.bf16.msra.mxu0 0
        %665 = vmatprep.subr.bf16.mxu0 0
        %666 = vmatpush1.bf16.msra.mxu0 0
        %667 = vmatprep.subr.bf16.mxu0 0
        %668 = vmatpush1.bf16.msra.mxu0 0
        %669 = vmatprep.subr.bf16.mxu0 0
        %670 = vmatpush1.bf16.msra.mxu0 0
        %671 = vmatprep.subr.bf16.mxu0 0
        %672 = vmatpush1.bf16.msra.mxu0 0
        %673 = vmatprep.subr.bf16.mxu0 0
        %674 = vmatpush1.bf16.msra.mxu0 0
        %675 = vmatprep.subr.bf16.mxu0 0
        %676 = vmatpush1.bf16.msra.mxu0 0
        %677 = vmatprep.mubr.bf16.mxu0 0
        %678 = vmatmul.mubr.bf16.gmra.mrb[0].mxu0 %v643
        %v679 = vpop.f32.mrb[0].mxu0
        %v680 = vadd.f32 0.0, %v679
        %v681 = vpop.f32.mrb[0].mxu0
        %v682 = vpop.f32.mrb[0].mxu0
        %v683 = vpop.f32.mrb[0].mxu0
        %684 = vdwg.mxu0
        %v686 = vsel %vm336, %v320, 0
        %v689 = vsel %vm340, %v311, 0
        %691 = vmatprep.subr.bf16.mxu0 0
        %692 = vmatpush1.bf16.msra.mxu0 %v689
        %693 = vmatprep.subr.bf16.mxu0 0
        %694 = vmatpush1.bf16.msra.mxu0 0
        %695 = vmatprep.subr.bf16.mxu0 0
        %696 = vmatpush1.bf16.msra.mxu0 0
        %697 = vmatprep.subr.bf16.mxu0 0
        %698 = vmatpush1.bf16.msra.mxu0 0
        %699 = vmatprep.subr.bf16.mxu0 0
        %700 = vmatpush1.bf16.msra.mxu0 0
        %701 = vmatprep.subr.bf16.mxu0 0
        %702 = vmatpush1.bf16.msra.mxu0 0
        %703 = vmatprep.subr.bf16.mxu0 0
        %704 = vmatpush1.bf16.msra.mxu0 0
        %705 = vmatprep.subr.bf16.mxu0 0
        %706 = vmatpush1.bf16.msra.mxu0 0
        %707 = vmatprep.subr.bf16.mxu0 0
        %708 = vmatpush1.bf16.msra.mxu0 0
        %709 = vmatprep.subr.bf16.mxu0 0
        %710 = vmatpush1.bf16.msra.mxu0 0
        %711 = vmatprep.subr.bf16.mxu0 0
        %712 = vmatpush1.bf16.msra.mxu0 0
        %713 = vmatprep.subr.bf16.mxu0 0
        %714 = vmatpush1.bf16.msra.mxu0 0
        %715 = vmatprep.subr.bf16.mxu0 0
        %716 = vmatpush1.bf16.msra.mxu0 0
        %717 = vmatprep.subr.bf16.mxu0 0
        %718 = vmatpush1.bf16.msra.mxu0 0
        %719 = vmatprep.subr.bf16.mxu0 0
        %720 = vmatpush1.bf16.msra.mxu0 0
        %721 = vmatprep.subr.bf16.mxu0 0
        %722 = vmatpush1.bf16.msra.mxu0 0
        %723 = vmatprep.mubr.bf16.mxu0 0
        %724 = vmatmul.mubr.bf16.gmra.mrb[0].mxu0 %v686
        %v725 = vpop.f32.mrb[0].mxu0
        %v726 = vadd.f32 %v379, %v725
        %v727 = vpop.f32.mrb[0].mxu0
        %v728 = vpop.f32.mrb[0].mxu0
        %v729 = vpop.f32.mrb[0].mxu0
        %730 = vdwg.mxu0
        %v732 = vsel %vm336, %v321, 0
        %734 = vmatprep.subr.bf16.mxu0 0
        %735 = vmatpush1.bf16.msra.mxu0 %v689
        %736 = vmatprep.subr.bf16.mxu0 0
        %737 = vmatpush1.bf16.msra.mxu0 0
        %738 = vmatprep.subr.bf16.mxu0 0
        %739 = vmatpush1.bf16.msra.mxu0 0
        %740 = vmatprep.subr.bf16.mxu0 0
        %741 = vmatpush1.bf16.msra.mxu0 0
        %742 = vmatprep.subr.bf16.mxu0 0
        %743 = vmatpush1.bf16.msra.mxu0 0
        %744 = vmatprep.subr.bf16.mxu0 0
        %745 = vmatpush1.bf16.msra.mxu0 0
        %746 = vmatprep.subr.bf16.mxu0 0
        %747 = vmatpush1.bf16.msra.mxu0 0
        %748 = vmatprep.subr.bf16.mxu0 0
        %749 = vmatpush1.bf16.msra.mxu0 0
        %750 = vmatprep.subr.bf16.mxu0 0
        %751 = vmatpush1.bf16.msra.mxu0 0
        %752 = vmatprep.subr.bf16.mxu0 0
        %753 = vmatpush1.bf16.msra.mxu0 0
        %754 = vmatprep.subr.bf16.mxu0 0
        %755 = vmatpush1.bf16.msra.mxu0 0
        %756 = vmatprep.subr.bf16.mxu0 0
        %757 = vmatpush1.bf16.msra.mxu0 0
        %758 = vmatprep.subr.bf16.mxu0 0
        %759 = vmatpush1.bf16.msra.mxu0 0
        %760 = vmatprep.subr.bf16.mxu0 0
        %761 = vmatpush1.bf16.msra.mxu0 0
        %762 = vmatprep.subr.bf16.mxu0 0
        %763 = vmatpush1.bf16.msra.mxu0 0
        %764 = vmatprep.subr.bf16.mxu0 0
        %765 = vmatpush1.bf16.msra.mxu0 0
        %766 = vmatprep.mubr.bf16.mxu0 0
        %767 = vmatmul.mubr.bf16.gmra.mrb[0].mxu0 %v732
        %v768 = vpop.f32.mrb[0].mxu0
        %v769 = vadd.f32 %v422, %v768
        %v770 = vpop.f32.mrb[0].mxu0
        %v771 = vpop.f32.mrb[0].mxu0
        %v772 = vpop.f32.mrb[0].mxu0
        %773 = vdwg.mxu0
        %v775 = vsel %vm336, %v322, 0
        %777 = vmatprep.subr.bf16.mxu0 0
        %778 = vmatpush1.bf16.msra.mxu0 %v689
        %779 = vmatprep.subr.bf16.mxu0 0
        %780 = vmatpush1.bf16.msra.mxu0 0
        %781 = vmatprep.subr.bf16.mxu0 0
        %782 = vmatpush1.bf16.msra.mxu0 0
        %783 = vmatprep.subr.bf16.mxu0 0
        %784 = vmatpush1.bf16.msra.mxu0 0
        %785 = vmatprep.subr.bf16.mxu0 0
        %786 = vmatpush1.bf16.msra.mxu0 0
        %787 = vmatprep.subr.bf16.mxu0 0
        %788 = vmatpush1.bf16.msra.mxu0 0
        %789 = vmatprep.subr.bf16.mxu0 0
        %790 = vmatpush1.bf16.msra.mxu0 0
        %791 = vmatprep.subr.bf16.mxu0 0
        %792 = vmatpush1.bf16.msra.mxu0 0
        %793 = vmatprep.subr.bf16.mxu0 0
        %794 = vmatpush1.bf16.msra.mxu0 0
        %795 = vmatprep.subr.bf16.mxu0 0
        %796 = vmatpush1.bf16.msra.mxu0 0
        %797 = vmatprep.subr.bf16.mxu0 0
        %798 = vmatpush1.bf16.msra.mxu0 0
        %799 = vmatprep.subr.bf16.mxu0 0
        %800 = vmatpush1.bf16.msra.mxu0 0
        %801 = vmatprep.subr.bf16.mxu0 0
        %802 = vmatpush1.bf16.msra.mxu0 0
        %803 = vmatprep.subr.bf16.mxu0 0
        %804 = vmatpush1.bf16.msra.mxu0 0
        %805 = vmatprep.subr.bf16.mxu0 0
        %806 = vmatpush1.bf16.msra.mxu0 0
        %807 = vmatprep.subr.bf16.mxu0 0
        %808 = vmatpush1.bf16.msra.mxu0 0
        %809 = vmatprep.mubr.bf16.mxu0 0
        %810 = vmatmul.mubr.bf16.gmra.mrb[0].mxu0 %v775
        %v811 = vpop.f32.mrb[0].mxu0
        %v812 = vadd.f32 %v465, %v811
        %v813 = vpop.f32.mrb[0].mxu0
        %v814 = vpop.f32.mrb[0].mxu0
        %v815 = vpop.f32.mrb[0].mxu0
        %816 = vdwg.mxu0
        %v818 = vsel %vm336, %v323, 0
        %820 = vmatprep.subr.bf16.mxu0 0
        %821 = vmatpush1.bf16.msra.mxu0 %v689
        %822 = vmatprep.subr.bf16.mxu0 0
        %823 = vmatpush1.bf16.msra.mxu0 0
        %824 = vmatprep.subr.bf16.mxu0 0
        %825 = vmatpush1.bf16.msra.mxu0 0
        %826 = vmatprep.subr.bf16.mxu0 0
        %827 = vmatpush1.bf16.msra.mxu0 0
        %828 = vmatprep.subr.bf16.mxu0 0
        %829 = vmatpush1.bf16.msra.mxu0 0
        %830 = vmatprep.subr.bf16.mxu0 0
        %831 = vmatpush1.bf16.msra.mxu0 0
        %832 = vmatprep.subr.bf16.mxu0 0
        %833 = vmatpush1.bf16.msra.mxu0 0
        %834 = vmatprep.subr.bf16.mxu0 0
        %835 = vmatpush1.bf16.msra.mxu0 0
        %836 = vmatprep.subr.bf16.mxu0 0
        %837 = vmatpush1.bf16.msra.mxu0 0
        %838 = vmatprep.subr.bf16.mxu0 0
        %839 = vmatpush1.bf16.msra.mxu0 0
        %840 = vmatprep.subr.bf16.mxu0 0
        %841 = vmatpush1.bf16.msra.mxu0 0
        %842 = vmatprep.subr.bf16.mxu0 0
        %843 = vmatpush1.bf16.msra.mxu0 0
        %844 = vmatprep.subr.bf16.mxu0 0
        %845 = vmatpush1.bf16.msra.mxu0 0
        %846 = vmatprep.subr.bf16.mxu0 0
        %847 = vmatpush1.bf16.msra.mxu0 0
        %848 = vmatprep.subr.bf16.mxu0 0
        %849 = vmatpush1.bf16.msra.mxu0 0
        %850 = vmatprep.subr.bf16.mxu0 0
        %851 = vmatpush1.bf16.msra.mxu0 0
        %852 = vmatprep.mubr.bf16.mxu0 0
        %853 = vmatmul.mubr.bf16.gmra.mrb[0].mxu0 %v818
        %v854 = vpop.f32.mrb[0].mxu0
        %v855 = vadd.f32 %v508, %v854
        %v856 = vpop.f32.mrb[0].mxu0
        %v857 = vpop.f32.mrb[0].mxu0
        %v858 = vpop.f32.mrb[0].mxu0
        %859 = vdwg.mxu0
        %v861 = vsel %vm336, %v324, 0
        %863 = vmatprep.subr.bf16.mxu0 0
        %864 = vmatpush1.bf16.msra.mxu0 %v689
        %865 = vmatprep.subr.bf16.mxu0 0
        %866 = vmatpush1.bf16.msra.mxu0 0
        %867 = vmatprep.subr.bf16.mxu0 0
        %868 = vmatpush1.bf16.msra.mxu0 0
        %869 = vmatprep.subr.bf16.mxu0 0
        %870 = vmatpush1.bf16.msra.mxu0 0
        %871 = vmatprep.subr.bf16.mxu0 0
        %872 = vmatpush1.bf16.msra.mxu0 0
        %873 = vmatprep.subr.bf16.mxu0 0
        %874 = vmatpush1.bf16.msra.mxu0 0
        %875 = vmatprep.subr.bf16.mxu0 0
        %876 = vmatpush1.bf16.msra.mxu0 0
        %877 = vmatprep.subr.bf16.mxu0 0
        %878 = vmatpush1.bf16.msra.mxu0 0
        %879 = vmatprep.subr.bf16.mxu0 0
        %880 = vmatpush1.bf16.msra.mxu0 0
        %881 = vmatprep.subr.bf16.mxu0 0
        %882 = vmatpush1.bf16.msra.mxu0 0
        %883 = vmatprep.subr.bf16.mxu0 0
        %884 = vmatpush1.bf16.msra.mxu0 0
        %885 = vmatprep.subr.bf16.mxu0 0
        %886 = vmatpush1.bf16.msra.mxu0 0
        %887 = vmatprep.subr.bf16.mxu0 0
        %888 = vmatpush1.bf16.msra.mxu0 0
        %889 = vmatprep.subr.bf16.mxu0 0
        %890 = vmatpush1.bf16.msra.mxu0 0
        %891 = vmatprep.subr.bf16.mxu0 0
        %892 = vmatpush1.bf16.msra.mxu0 0
        %893 = vmatprep.subr.bf16.mxu0 0
        %894 = vmatpush1.bf16.msra.mxu0 0
        %895 = vmatprep.mubr.bf16.mxu0 0
        %896 = vmatmul.mubr.bf16.gmra.mrb[0].mxu0 %v861
        %v897 = vpop.f32.mrb[0].mxu0
        %v898 = vadd.f32 %v551, %v897
        %v899 = vpop.f32.mrb[0].mxu0
        %v900 = vpop.f32.mrb[0].mxu0
        %v901 = vpop.f32.mrb[0].mxu0
        %902 = vdwg.mxu0
        %v904 = vsel %vm336, %v325, 0
        %906 = vmatprep.subr.bf16.mxu0 0
        %907 = vmatpush1.bf16.msra.mxu0 %v689
        %908 = vmatprep.subr.bf16.mxu0 0
        %909 = vmatpush1.bf16.msra.mxu0 0
        %910 = vmatprep.subr.bf16.mxu0 0
        %911 = vmatpush1.bf16.msra.mxu0 0
        %912 = vmatprep.subr.bf16.mxu0 0
        %913 = vmatpush1.bf16.msra.mxu0 0
        %914 = vmatprep.subr.bf16.mxu0 0
        %915 = vmatpush1.bf16.msra.mxu0 0
        %916 = vmatprep.subr.bf16.mxu0 0
        %917 = vmatpush1.bf16.msra.mxu0 0
        %918 = vmatprep.subr.bf16.mxu0 0
        %919 = vmatpush1.bf16.msra.mxu0 0
        %920 = vmatprep.subr.bf16.mxu0 0
        %921 = vmatpush1.bf16.msra.mxu0 0
        %922 = vmatprep.subr.bf16.mxu0 0
        %923 = vmatpush1.bf16.msra.mxu0 0
        %924 = vmatprep.subr.bf16.mxu0 0
        %925 = vmatpush1.bf16.msra.mxu0 0
        %926 = vmatprep.subr.bf16.mxu0 0
        %927 = vmatpush1.bf16.msra.mxu0 0
        %928 = vmatprep.subr.bf16.mxu0 0
        %929 = vmatpush1.bf16.msra.mxu0 0
        %930 = vmatprep.subr.bf16.mxu0 0
        %931 = vmatpush1.bf16.msra.mxu0 0
        %932 = vmatprep.subr.bf16.mxu0 0
        %933 = vmatpush1.bf16.msra.mxu0 0
        %934 = vmatprep.subr.bf16.mxu0 0
        %935 = vmatpush1.bf16.msra.mxu0 0
        %936 = vmatprep.subr.bf16.mxu0 0
        %937 = vmatpush1.bf16.msra.mxu0 0
        %938 = vmatprep.mubr.bf16.mxu0 0
        %939 = vmatmul.mubr.bf16.gmra.mrb[0].mxu0 %v904
        %v940 = vpop.f32.mrb[0].mxu0
        %v941 = vadd.f32 %v594, %v940
        %v942 = vpop.f32.mrb[0].mxu0
        %v943 = vpop.f32.mrb[0].mxu0
        %v944 = vpop.f32.mrb[0].mxu0
        %945 = vdwg.mxu0
        %v947 = vsel %vm336, %v326, 0
        %949 = vmatprep.subr.bf16.mxu0 0
        %950 = vmatpush1.bf16.msra.mxu0 %v689
        %951 = vmatprep.subr.bf16.mxu0 0
        %952 = vmatpush1.bf16.msra.mxu0 0
        %953 = vmatprep.subr.bf16.mxu0 0
        %954 = vmatpush1.bf16.msra.mxu0 0
        %955 = vmatprep.subr.bf16.mxu0 0
        %956 = vmatpush1.bf16.msra.mxu0 0
        %957 = vmatprep.subr.bf16.mxu0 0
        %958 = vmatpush1.bf16.msra.mxu0 0
        %959 = vmatprep.subr.bf16.mxu0 0
        %960 = vmatpush1.bf16.msra.mxu0 0
        %961 = vmatprep.subr.bf16.mxu0 0
        %962 = vmatpush1.bf16.msra.mxu0 0
        %963 = vmatprep.subr.bf16.mxu0 0
        %964 = vmatpush1.bf16.msra.mxu0 0
        %965 = vmatprep.subr.bf16.mxu0 0
        %966 = vmatpush1.bf16.msra.mxu0 0
        %967 = vmatprep.subr.bf16.mxu0 0
        %968 = vmatpush1.bf16.msra.mxu0 0
        %969 = vmatprep.subr.bf16.mxu0 0
        %970 = vmatpush1.bf16.msra.mxu0 0
        %971 = vmatprep.subr.bf16.mxu0 0
        %972 = vmatpush1.bf16.msra.mxu0 0
        %973 = vmatprep.subr.bf16.mxu0 0
        %974 = vmatpush1.bf16.msra.mxu0 0
        %975 = vmatprep.subr.bf16.mxu0 0
        %976 = vmatpush1.bf16.msra.mxu0 0
        %977 = vmatprep.subr.bf16.mxu0 0
        %978 = vmatpush1.bf16.msra.mxu0 0
        %979 = vmatprep.subr.bf16.mxu0 0
        %980 = vmatpush1.bf16.msra.mxu0 0
        %981 = vmatprep.mubr.bf16.mxu0 0
        %982 = vmatmul.mubr.bf16.gmra.mrb[0].mxu0 %v947
        %v983 = vpop.f32.mrb[0].mxu0
        %v984 = vadd.f32 %v637, %v983
        %v985 = vpop.f32.mrb[0].mxu0
        %v986 = vpop.f32.mrb[0].mxu0
        %v987 = vpop.f32.mrb[0].mxu0
        %988 = vdwg.mxu0
        %v990 = vsel %vm336, %v327, 0
        %992 = vmatprep.subr.bf16.mxu0 0
        %993 = vmatpush1.bf16.msra.mxu0 %v689
        %994 = vmatprep.subr.bf16.mxu0 0
        %995 = vmatpush1.bf16.msra.mxu0 0
        %996 = vmatprep.subr.bf16.mxu0 0
        %997 = vmatpush1.bf16.msra.mxu0 0
        %998 = vmatprep.subr.bf16.mxu0 0
        %999 = vmatpush1.bf16.msra.mxu0 0
        %1000 = vmatprep.subr.bf16.mxu0 0
        %1001 = vmatpush1.bf16.msra.mxu0 0
        %1002 = vmatprep.subr.bf16.mxu0 0
        %1003 = vmatpush1.bf16.msra.mxu0 0
        %1004 = vmatprep.subr.bf16.mxu0 0
        %1005 = vmatpush1.bf16.msra.mxu0 0
        %1006 = vmatprep.subr.bf16.mxu0 0
        %1007 = vmatpush1.bf16.msra.mxu0 0
        %1008 = vmatprep.subr.bf16.mxu0 0
        %1009 = vmatpush1.bf16.msra.mxu0 0
        %1010 = vmatprep.subr.bf16.mxu0 0
        %1011 = vmatpush1.bf16.msra.mxu0 0
        %1012 = vmatprep.subr.bf16.mxu0 0
        %1013 = vmatpush1.bf16.msra.mxu0 0
        %1014 = vmatprep.subr.bf16.mxu0 0
        %1015 = vmatpush1.bf16.msra.mxu0 0
        %1016 = vmatprep.subr.bf16.mxu0 0
        %1017 = vmatpush1.bf16.msra.mxu0 0
        %1018 = vmatprep.subr.bf16.mxu0 0
        %1019 = vmatpush1.bf16.msra.mxu0 0
        %1020 = vmatprep.subr.bf16.mxu0 0
        %1021 = vmatpush1.bf16.msra.mxu0 0
        %1022 = vmatprep.subr.bf16.mxu0 0
        %1023 = vmatpush1.bf16.msra.mxu0 0
        %1024 = vmatprep.mubr.bf16.mxu0 0
        %1025 = vmatmul.mubr.bf16.gmra.mrb[0].mxu0 %v990
        %v1026 = vpop.f32.mrb[0].mxu0
        %v1027 = vadd.f32 %v680, %v1026
        %v1028 = vpop.f32.mrb[0].mxu0
        %v1029 = vpop.f32.mrb[0].mxu0
        %v1030 = vpop.f32.mrb[0].mxu0
        %1031 = vdwg.mxu0
        %v1032 = vld [vmem:[%s294] sm:$0xf]
        %v1033 = vld [vmem:[%s294 + $0x4] sm:$0x1]
        %v1034 = vld [vmem:[%s294 + $0x8] sm:$0xf]
        %v1035 = vld [vmem:[%s294 + $0xc] sm:$0x1]
        %v1036 = vld [vmem:[%s294 + $0x10] sm:$0xf]
        %v1037 = vld [vmem:[%s294 + $0x14] sm:$0x1]
        %v1038 = vld [vmem:[%s294 + $0x18] sm:$0xf]
        %v1039 = vld [vmem:[%s294 + $0x1c] sm:$0x1]
        %v1040 = vld [vmem:[%s294 + $0x20] sm:$0xf]
        %v1041 = vld [vmem:[%s294 + $0x24] sm:$0x1]
        %v1042 = vld [vmem:[%s294 + $0x28] sm:$0xf]
        %v1043 = vld [vmem:[%s294 + $0x2c] sm:$0x1]
        %v1044 = vld [vmem:[%s294 + $0x30] sm:$0xf]
        %v1045 = vld [vmem:[%s294 + $0x34] sm:$0x1]
        %v1046 = vld [vmem:[%s294 + $0x38] sm:$0xf]
        %v1047 = vld [vmem:[%s294 + $0x3c] sm:$0x1]
        %v1050 = vunpack.c.l.b16 %v1032
        %v1051 = vunpack.c.l.b16 %v1033
        %v1052 = vpack.c.b16 %v1051, %v1050
        %v1054 = vshrl.u32 %v1052, 16
        %v1056 = vshll.u32 %v1052, 16
        %v1058 = vrot.slane %v1056, 1
        %v1059 = vor.u32 %v1054, %v1058
        %v1061 = vsel %vm336, %v1059, 0
        %v1064 = vsel %vm340, %v313, 0
        %1066 = vmatprep.subr.bf16.mxu0 0
        %1067 = vmatpush1.bf16.msra.mxu0 %v1064
        %1068 = vmatprep.subr.bf16.mxu0 0
        %1069 = vmatpush1.bf16.msra.mxu0 0
        %1070 = vmatprep.subr.bf16.mxu0 0
        %1071 = vmatpush1.bf16.msra.mxu0 0
        %1072 = vmatprep.subr.bf16.mxu0 0
        %1073 = vmatpush1.bf16.msra.mxu0 0
        %1074 = vmatprep.subr.bf16.mxu0 0
        %1075 = vmatpush1.bf16.msra.mxu0 0
        %1076 = vmatprep.subr.bf16.mxu0 0
        %1077 = vmatpush1.bf16.msra.mxu0 0
        %1078 = vmatprep.subr.bf16.mxu0 0
        %1079 = vmatpush1.bf16.msra.mxu0 0
        %1080 = vmatprep.subr.bf16.mxu0 0
        %1081 = vmatpush1.bf16.msra.mxu0 0
        %1082 = vmatprep.subr.bf16.mxu0 0
        %1083 = vmatpush1.bf16.msra.mxu0 0
        %1084 = vmatprep.subr.bf16.mxu0 0
        %1085 = vmatpush1.bf16.msra.mxu0 0
        %1086 = vmatprep.subr.bf16.mxu0 0
        %1087 = vmatpush1.bf16.msra.mxu0 0
        %1088 = vmatprep.subr.bf16.mxu0 0
        %1089 = vmatpush1.bf16.msra.mxu0 0
        %1090 = vmatprep.subr.bf16.mxu0 0
        %1091 = vmatpush1.bf16.msra.mxu0 0
        %1092 = vmatprep.subr.bf16.mxu0 0
        %1093 = vmatpush1.bf16.msra.mxu0 0
        %1094 = vmatprep.subr.bf16.mxu0 0
        %1095 = vmatpush1.bf16.msra.mxu0 0
        %1096 = vmatprep.subr.bf16.mxu0 0
        %1097 = vmatpush1.bf16.msra.mxu0 0
        %1098 = vmatprep.mubr.bf16.mxu0 0
        %1099 = vmatmul.mubr.bf16.gmra.mrb[0].mxu0 %v1061
        %v1100 = vpop.f32.mrb[0].mxu0
        %v1101 = vadd.f32 0.0, %v1100
        %v1102 = vpop.f32.mrb[0].mxu0
        %v1103 = vpop.f32.mrb[0].mxu0
        %v1104 = vpop.f32.mrb[0].mxu0
        %1105 = vdwg.mxu0
        %v1108 = vunpack.c.l.b16 %v1034
        %v1109 = vunpack.c.l.b16 %v1035
        %v1110 = vpack.c.b16 %v1109, %v1108
        %v1112 = vshrl.u32 %v1110, 16
        %v1114 = vshll.u32 %v1110, 16
        %v1116 = vrot.slane %v1114, 1
        %v1117 = vor.u32 %v1112, %v1116
        %v1119 = vsel %vm336, %v1117, 0
        %1121 = vmatprep.subr.bf16.mxu0 0
        %1122 = vmatpush1.bf16.msra.mxu0 %v1064
        %1123 = vmatprep.subr.bf16.mxu0 0
        %1124 = vmatpush1.bf16.msra.mxu0 0
        %1125 = vmatprep.subr.bf16.mxu0 0
        %1126 = vmatpush1.bf16.msra.mxu0 0
        %1127 = vmatprep.subr.bf16.mxu0 0
        %1128 = vmatpush1.bf16.msra.mxu0 0
        %1129 = vmatprep.subr.bf16.mxu0 0
        %1130 = vmatpush1.bf16.msra.mxu0 0
        %1131 = vmatprep.subr.bf16.mxu0 0
        %1132 = vmatpush1.bf16.msra.mxu0 0
        %1133 = vmatprep.subr.bf16.mxu0 0
        %1134 = vmatpush1.bf16.msra.mxu0 0
        %1135 = vmatprep.subr.bf16.mxu0 0
        %1136 = vmatpush1.bf16.msra.mxu0 0
        %1137 = vmatprep.subr.bf16.mxu0 0
        %1138 = vmatpush1.bf16.msra.mxu0 0
        %1139 = vmatprep.subr.bf16.mxu0 0
        %1140 = vmatpush1.bf16.msra.mxu0 0
        %1141 = vmatprep.subr.bf16.mxu0 0
        %1142 = vmatpush1.bf16.msra.mxu0 0
        %1143 = vmatprep.subr.bf16.mxu0 0
        %1144 = vmatpush1.bf16.msra.mxu0 0
        %1145 = vmatprep.subr.bf16.mxu0 0
        %1146 = vmatpush1.bf16.msra.mxu0 0
        %1147 = vmatprep.subr.bf16.mxu0 0
        %1148 = vmatpush1.bf16.msra.mxu0 0
        %1149 = vmatprep.subr.bf16.mxu0 0
        %1150 = vmatpush1.bf16.msra.mxu0 0
        %1151 = vmatprep.subr.bf16.mxu0 0
        %1152 = vmatpush1.bf16.msra.mxu0 0
        %1153 = vmatprep.mubr.bf16.mxu0 0
        %1154 = vmatmul.mubr.bf16.gmra.mrb[0].mxu0 %v1119
        %v1155 = vpop.f32.mrb[0].mxu0
        %v1156 = vadd.f32 0.0, %v1155
        %v1157 = vpop.f32.mrb[0].mxu0
        %v1158 = vpop.f32.mrb[0].mxu0
        %v1159 = vpop.f32.mrb[0].mxu0
        %1160 = vdwg.mxu0
        %v1163 = vunpack.c.l.b16 %v1036
        %v1164 = vunpack.c.l.b16 %v1037
        %v1165 = vpack.c.b16 %v1164, %v1163
        %v1167 = vshrl.u32 %v1165, 16
        %v1169 = vshll.u32 %v1165, 16
        %v1171 = vrot.slane %v1169, 1
        %v1172 = vor.u32 %v1167, %v1171
        %v1174 = vsel %vm336, %v1172, 0
        %1176 = vmatprep.subr.bf16.mxu0 0
        %1177 = vmatpush1.bf16.msra.mxu0 %v1064
        %1178 = vmatprep.subr.bf16.mxu0 0
        %1179 = vmatpush1.bf16.msra.mxu0 0
        %1180 = vmatprep.subr.bf16.mxu0 0
        %1181 = vmatpush1.bf16.msra.mxu0 0
        %1182 = vmatprep.subr.bf16.mxu0 0
        %1183 = vmatpush1.bf16.msra.mxu0 0
        %1184 = vmatprep.subr.bf16.mxu0 0
        %1185 = vmatpush1.bf16.msra.mxu0 0
        %1186 = vmatprep.subr.bf16.mxu0 0
        %1187 = vmatpush1.bf16.msra.mxu0 0
        %1188 = vmatprep.subr.bf16.mxu0 0
        %1189 = vmatpush1.bf16.msra.mxu0 0
        %1190 = vmatprep.subr.bf16.mxu0 0
        %1191 = vmatpush1.bf16.msra.mxu0 0
        %1192 = vmatprep.subr.bf16.mxu0 0
        %1193 = vmatpush1.bf16.msra.mxu0 0
        %1194 = vmatprep.subr.bf16.mxu0 0
        %1195 = vmatpush1.bf16.msra.mxu0 0
        %1196 = vmatprep.subr.bf16.mxu0 0
        %1197 = vmatpush1.bf16.msra.mxu0 0
        %1198 = vmatprep.subr.bf16.mxu0 0
        %1199 = vmatpush1.bf16.msra.mxu0 0
        %1200 = vmatprep.subr.bf16.mxu0 0
        %1201 = vmatpush1.bf16.msra.mxu0 0
        %1202 = vmatprep.subr.bf16.mxu0 0
        %1203 = vmatpush1.bf16.msra.mxu0 0
        %1204 = vmatprep.subr.bf16.mxu0 0
        %1205 = vmatpush1.bf16.msra.mxu0 0
        %1206 = vmatprep.subr.bf16.mxu0 0
        %1207 = vmatpush1.bf16.msra.mxu0 0
        %1208 = vmatprep.mubr.bf16.mxu0 0
        %1209 = vmatmul.mubr.bf16.gmra.mrb[0].mxu0 %v1174
        %v1210 = vpop.f32.mrb[0].mxu0
        %v1211 = vadd.f32 0.0, %v1210
        %v1212 = vpop.f32.mrb[0].mxu0
        %v1213 = vpop.f32.mrb[0].mxu0
        %v1214 = vpop.f32.mrb[0].mxu0
        %1215 = vdwg.mxu0
        %v1218 = vunpack.c.l.b16 %v1038
        %v1219 = vunpack.c.l.b16 %v1039
        %v1220 = vpack.c.b16 %v1219, %v1218
        %v1222 = vshrl.u32 %v1220, 16
        %v1224 = vshll.u32 %v1220, 16
        %v1226 = vrot.slane %v1224, 1
        %v1227 = vor.u32 %v1222, %v1226
        %v1229 = vsel %vm336, %v1227, 0
        %1231 = vmatprep.subr.bf16.mxu0 0
        %1232 = vmatpush1.bf16.msra.mxu0 %v1064
        %1233 = vmatprep.subr.bf16.mxu0 0
        %1234 = vmatpush1.bf16.msra.mxu0 0
        %1235 = vmatprep.subr.bf16.mxu0 0
        %1236 = vmatpush1.bf16.msra.mxu0 0
        %1237 = vmatprep.subr.bf16.mxu0 0
        %1238 = vmatpush1.bf16.msra.mxu0 0
        %1239 = vmatprep.subr.bf16.mxu0 0
        %1240 = vmatpush1.bf16.msra.mxu0 0
        %1241 = vmatprep.subr.bf16.mxu0 0
        %1242 = vmatpush1.bf16.msra.mxu0 0
        %1243 = vmatprep.subr.bf16.mxu0 0
        %1244 = vmatpush1.bf16.msra.mxu0 0
        %1245 = vmatprep.subr.bf16.mxu0 0
        %1246 = vmatpush1.bf16.msra.mxu0 0
        %1247 = vmatprep.subr.bf16.mxu0 0
        %1248 = vmatpush1.bf16.msra.mxu0 0
        %1249 = vmatprep.subr.bf16.mxu0 0
        %1250 = vmatpush1.bf16.msra.mxu0 0
        %1251 = vmatprep.subr.bf16.mxu0 0
        %1252 = vmatpush1.bf16.msra.mxu0 0
        %1253 = vmatprep.subr.bf16.mxu0 0
        %1254 = vmatpush1.bf16.msra.mxu0 0
        %1255 = vmatprep.subr.bf16.mxu0 0
        %1256 = vmatpush1.bf16.msra.mxu0 0
        %1257 = vmatprep.subr.bf16.mxu0 0
        %1258 = vmatpush1.bf16.msra.mxu0 0
        %1259 = vmatprep.subr.bf16.mxu0 0
        %1260 = vmatpush1.bf16.msra.mxu0 0
        %1261 = vmatprep.subr.bf16.mxu0 0
        %1262 = vmatpush1.bf16.msra.mxu0 0
        %1263 = vmatprep.mubr.bf16.mxu0 0
        %1264 = vmatmul.mubr.bf16.gmra.mrb[0].mxu0 %v1229
        %v1265 = vpop.f32.mrb[0].mxu0
        %v1266 = vadd.f32 0.0, %v1265
        %v1267 = vpop.f32.mrb[0].mxu0
        %v1268 = vpop.f32.mrb[0].mxu0
        %v1269 = vpop.f32.mrb[0].mxu0
        %1270 = vdwg.mxu0
        %v1273 = vunpack.c.l.b16 %v1040
        %v1274 = vunpack.c.l.b16 %v1041
        %v1275 = vpack.c.b16 %v1274, %v1273
        %v1277 = vshrl.u32 %v1275, 16
        %v1279 = vshll.u32 %v1275, 16
        %v1281 = vrot.slane %v1279, 1
        %v1282 = vor.u32 %v1277, %v1281
        %v1284 = vsel %vm336, %v1282, 0
        %1286 = vmatprep.subr.bf16.mxu0 0
        %1287 = vmatpush1.bf16.msra.mxu0 %v1064
        %1288 = vmatprep.subr.bf16.mxu0 0
        %1289 = vmatpush1.bf16.msra.mxu0 0
        %1290 = vmatprep.subr.bf16.mxu0 0
        %1291 = vmatpush1.bf16.msra.mxu0 0
        %1292 = vmatprep.subr.bf16.mxu0 0
        %1293 = vmatpush1.bf16.msra.mxu0 0
        %1294 = vmatprep.subr.bf16.mxu0 0
        %1295 = vmatpush1.bf16.msra.mxu0 0
        %1296 = vmatprep.subr.bf16.mxu0 0
        %1297 = vmatpush1.bf16.msra.mxu0 0
        %1298 = vmatprep.subr.bf16.mxu0 0
        %1299 = vmatpush1.bf16.msra.mxu0 0
        %1300 = vmatprep.subr.bf16.mxu0 0
        %1301 = vmatpush1.bf16.msra.mxu0 0
        %1302 = vmatprep.subr.bf16.mxu0 0
        %1303 = vmatpush1.bf16.msra.mxu0 0
        %1304 = vmatprep.subr.bf16.mxu0 0
        %1305 = vmatpush1.bf16.msra.mxu0 0
        %1306 = vmatprep.subr.bf16.mxu0 0
        %1307 = vmatpush1.bf16.msra.mxu0 0
        %1308 = vmatprep.subr.bf16.mxu0 0
        %1309 = vmatpush1.bf16.msra.mxu0 0
        %1310 = vmatprep.subr.bf16.mxu0 0
        %1311 = vmatpush1.bf16.msra.mxu0 0
        %1312 = vmatprep.subr.bf16.mxu0 0
        %1313 = vmatpush1.bf16.msra.mxu0 0
        %1314 = vmatprep.subr.bf16.mxu0 0
        %1315 = vmatpush1.bf16.msra.mxu0 0
        %1316 = vmatprep.subr.bf16.mxu0 0
        %1317 = vmatpush1.bf16.msra.mxu0 0
        %1318 = vmatprep.mubr.bf16.mxu0 0
        %1319 = vmatmul.mubr.bf16.gmra.mrb[0].mxu0 %v1284
        %v1320 = vpop.f32.mrb[0].mxu0
        %v1321 = vadd.f32 0.0, %v1320
        %v1322 = vpop.f32.mrb[0].mxu0
        %v1323 = vpop.f32.mrb[0].mxu0
        %v1324 = vpop.f32.mrb[0].mxu0
        %1325 = vdwg.mxu0
        %v1328 = vunpack.c.l.b16 %v1042
        %v1329 = vunpack.c.l.b16 %v1043
        %v1330 = vpack.c.b16 %v1329, %v1328
        %v1332 = vshrl.u32 %v1330, 16
        %v1334 = vshll.u32 %v1330, 16
        %v1336 = vrot.slane %v1334, 1
        %v1337 = vor.u32 %v1332, %v1336
        %v1339 = vsel %vm336, %v1337, 0
        %1341 = vmatprep.subr.bf16.mxu0 0
        %1342 = vmatpush1.bf16.msra.mxu0 %v1064
        %1343 = vmatprep.subr.bf16.mxu0 0
        %1344 = vmatpush1.bf16.msra.mxu0 0
        %1345 = vmatprep.subr.bf16.mxu0 0
        %1346 = vmatpush1.bf16.msra.mxu0 0
        %1347 = vmatprep.subr.bf16.mxu0 0
        %1348 = vmatpush1.bf16.msra.mxu0 0
        %1349 = vmatprep.subr.bf16.mxu0 0
        %1350 = vmatpush1.bf16.msra.mxu0 0
        %1351 = vmatprep.subr.bf16.mxu0 0
        %1352 = vmatpush1.bf16.msra.mxu0 0
        %1353 = vmatprep.subr.bf16.mxu0 0
        %1354 = vmatpush1.bf16.msra.mxu0 0
        %1355 = vmatprep.subr.bf16.mxu0 0
        %1356 = vmatpush1.bf16.msra.mxu0 0
        %1357 = vmatprep.subr.bf16.mxu0 0
        %1358 = vmatpush1.bf16.msra.mxu0 0
        %1359 = vmatprep.subr.bf16.mxu0 0
        %1360 = vmatpush1.bf16.msra.mxu0 0
        %1361 = vmatprep.subr.bf16.mxu0 0
        %1362 = vmatpush1.bf16.msra.mxu0 0
        %1363 = vmatprep.subr.bf16.mxu0 0
        %1364 = vmatpush1.bf16.msra.mxu0 0
        %1365 = vmatprep.subr.bf16.mxu0 0
        %1366 = vmatpush1.bf16.msra.mxu0 0
        %1367 = vmatprep.subr.bf16.mxu0 0
        %1368 = vmatpush1.bf16.msra.mxu0 0
        %1369 = vmatprep.subr.bf16.mxu0 0
        %1370 = vmatpush1.bf16.msra.mxu0 0
        %1371 = vmatprep.subr.bf16.mxu0 0
        %1372 = vmatpush1.bf16.msra.mxu0 0
        %1373 = vmatprep.mubr.bf16.mxu0 0
        %1374 = vmatmul.mubr.bf16.gmra.mrb[0].mxu0 %v1339
        %v1375 = vpop.f32.mrb[0].mxu0
        %v1376 = vadd.f32 0.0, %v1375
        %v1377 = vpop.f32.mrb[0].mxu0
        %v1378 = vpop.f32.mrb[0].mxu0
        %v1379 = vpop.f32.mrb[0].mxu0
        %1380 = vdwg.mxu0
        %v1383 = vunpack.c.l.b16 %v1044
        %v1384 = vunpack.c.l.b16 %v1045
        %v1385 = vpack.c.b16 %v1384, %v1383
        %v1387 = vshrl.u32 %v1385, 16
        %v1389 = vshll.u32 %v1385, 16
        %v1391 = vrot.slane %v1389, 1
        %v1392 = vor.u32 %v1387, %v1391
        %v1394 = vsel %vm336, %v1392, 0
        %1396 = vmatprep.subr.bf16.mxu0 0
        %1397 = vmatpush1.bf16.msra.mxu0 %v1064
        %1398 = vmatprep.subr.bf16.mxu0 0
        %1399 = vmatpush1.bf16.msra.mxu0 0
        %1400 = vmatprep.subr.bf16.mxu0 0
        %1401 = vmatpush1.bf16.msra.mxu0 0
        %1402 = vmatprep.subr.bf16.mxu0 0
        %1403 = vmatpush1.bf16.msra.mxu0 0
        %1404 = vmatprep.subr.bf16.mxu0 0
        %1405 = vmatpush1.bf16.msra.mxu0 0
        %1406 = vmatprep.subr.bf16.mxu0 0
        %1407 = vmatpush1.bf16.msra.mxu0 0
        %1408 = vmatprep.subr.bf16.mxu0 0
        %1409 = vmatpush1.bf16.msra.mxu0 0
        %1410 = vmatprep.subr.bf16.mxu0 0
        %1411 = vmatpush1.bf16.msra.mxu0 0
        %1412 = vmatprep.subr.bf16.mxu0 0
        %1413 = vmatpush1.bf16.msra.mxu0 0
        %1414 = vmatprep.subr.bf16.mxu0 0
        %1415 = vmatpush1.bf16.msra.mxu0 0
        %1416 = vmatprep.subr.bf16.mxu0 0
        %1417 = vmatpush1.bf16.msra.mxu0 0
        %1418 = vmatprep.subr.bf16.mxu0 0
        %1419 = vmatpush1.bf16.msra.mxu0 0
        %1420 = vmatprep.subr.bf16.mxu0 0
        %1421 = vmatpush1.bf16.msra.mxu0 0
        %1422 = vmatprep.subr.bf16.mxu0 0
        %1423 = vmatpush1.bf16.msra.mxu0 0
        %1424 = vmatprep.subr.bf16.mxu0 0
        %1425 = vmatpush1.bf16.msra.mxu0 0
        %1426 = vmatprep.subr.bf16.mxu0 0
        %1427 = vmatpush1.bf16.msra.mxu0 0
        %1428 = vmatprep.mubr.bf16.mxu0 0
        %1429 = vmatmul.mubr.bf16.gmra.mrb[0].mxu0 %v1394
        %v1430 = vpop.f32.mrb[0].mxu0
        %v1431 = vadd.f32 0.0, %v1430
        %v1432 = vpop.f32.mrb[0].mxu0
        %v1433 = vpop.f32.mrb[0].mxu0
        %v1434 = vpop.f32.mrb[0].mxu0
        %1435 = vdwg.mxu0
        %v1438 = vunpack.c.l.b16 %v1046
        %v1439 = vunpack.c.l.b16 %v1047
        %v1440 = vpack.c.b16 %v1439, %v1438
        %v1442 = vshrl.u32 %v1440, 16
        %v1444 = vshll.u32 %v1440, 16
        %v1446 = vrot.slane %v1444, 1
        %v1447 = vor.u32 %v1442, %v1446
        %v1449 = vsel %vm336, %v1447, 0
        %1451 = vmatprep.subr.bf16.mxu0 0
        %1452 = vmatpush1.bf16.msra.mxu0 %v1064
        %1453 = vmatprep.subr.bf16.mxu0 0
        %1454 = vmatpush1.bf16.msra.mxu0 0
        %1455 = vmatprep.subr.bf16.mxu0 0
        %1456 = vmatpush1.bf16.msra.mxu0 0
        %1457 = vmatprep.subr.bf16.mxu0 0
        %1458 = vmatpush1.bf16.msra.mxu0 0
        %1459 = vmatprep.subr.bf16.mxu0 0
        %1460 = vmatpush1.bf16.msra.mxu0 0
        %1461 = vmatprep.subr.bf16.mxu0 0
        %1462 = vmatpush1.bf16.msra.mxu0 0
        %1463 = vmatprep.subr.bf16.mxu0 0
        %1464 = vmatpush1.bf16.msra.mxu0 0
        %1465 = vmatprep.subr.bf16.mxu0 0
        %1466 = vmatpush1.bf16.msra.mxu0 0
        %1467 = vmatprep.subr.bf16.mxu0 0
        %1468 = vmatpush1.bf16.msra.mxu0 0
        %1469 = vmatprep.subr.bf16.mxu0 0
        %1470 = vmatpush1.bf16.msra.mxu0 0
        %1471 = vmatprep.subr.bf16.mxu0 0
        %1472 = vmatpush1.bf16.msra.mxu0 0
        %1473 = vmatprep.subr.bf16.mxu0 0
        %1474 = vmatpush1.bf16.msra.mxu0 0
        %1475 = vmatprep.subr.bf16.mxu0 0
        %1476 = vmatpush1.bf16.msra.mxu0 0
        %1477 = vmatprep.subr.bf16.mxu0 0
        %1478 = vmatpush1.bf16.msra.mxu0 0
        %1479 = vmatprep.subr.bf16.mxu0 0
        %1480 = vmatpush1.bf16.msra.mxu0 0
        %1481 = vmatprep.subr.bf16.mxu0 0
        %1482 = vmatpush1.bf16.msra.mxu0 0
        %1483 = vmatprep.mubr.bf16.mxu0 0
        %1484 = vmatmul.mubr.bf16.gmra.mrb[0].mxu0 %v1449
        %v1485 = vpop.f32.mrb[0].mxu0
        %v1486 = vadd.f32 0.0, %v1485
        %v1487 = vpop.f32.mrb[0].mxu0
        %v1488 = vpop.f32.mrb[0].mxu0
        %v1489 = vpop.f32.mrb[0].mxu0
        %1490 = vdwg.mxu0
        %v1491 = vadd.f32 %v726, %v1101
        %v1492 = vadd.f32 %v769, %v1156
        %v1493 = vadd.f32 %v812, %v1211
        %v1494 = vadd.f32 %v855, %v1266
        %v1495 = vadd.f32 %v898, %v1321
        %v1496 = vadd.f32 %v941, %v1376
        %v1497 = vadd.f32 %v984, %v1431
        %v1498 = vadd.f32 %v1027, %v1486
        %v1499 = vld [vmem:[%s304] sm:$0xf]
        %v1500 = vld [vmem:[%s304 + $0x8] sm:$0xf]
        %v1501 = vld [vmem:[%s304 + $0x10] sm:$0xf]
        %v1502 = vld [vmem:[%s304 + $0x18] sm:$0xf]
        %v1503 = vld [vmem:[%s304 + $0x20] sm:$0xf]
        %v1504 = vld [vmem:[%s304 + $0x28] sm:$0xf]
        %v1505 = vld [vmem:[%s304 + $0x30] sm:$0xf]
        %v1506 = vld [vmem:[%s304 + $0x38] sm:$0xf]
        %v1508 = vsel %vm336, %v1499, 0
        %v1511 = vsel %vm340, %v314, 0
        %1513 = vmatprep.subr.bf16.mxu0 0
        %1514 = vmatpush1.bf16.msra.mxu0 %v1511
        %1515 = vmatprep.subr.bf16.mxu0 0
        %1516 = vmatpush1.bf16.msra.mxu0 0
        %1517 = vmatprep.subr.bf16.mxu0 0
        %1518 = vmatpush1.bf16.msra.mxu0 0
        %1519 = vmatprep.subr.bf16.mxu0 0
        %1520 = vmatpush1.bf16.msra.mxu0 0
        %1521 = vmatprep.subr.bf16.mxu0 0
        %1522 = vmatpush1.bf16.msra.mxu0 0
        %1523 = vmatprep.subr.bf16.mxu0 0
        %1524 = vmatpush1.bf16.msra.mxu0 0
        %1525 = vmatprep.subr.bf16.mxu0 0
        %1526 = vmatpush1.bf16.msra.mxu0 0
        %1527 = vmatprep.subr.bf16.mxu0 0
        %1528 = vmatpush1.bf16.msra.mxu0 0
        %1529 = vmatprep.subr.bf16.mxu0 0
        %1530 = vmatpush1.bf16.msra.mxu0 0
        %1531 = vmatprep.subr.bf16.mxu0 0
        %1532 = vmatpush1.bf16.msra.mxu0 0
        %1533 = vmatprep.subr.bf16.mxu0 0
        %1534 = vmatpush1.bf16.msra.mxu0 0
        %1535 = vmatprep.subr.bf16.mxu0 0
        %1536 = vmatpush1.bf16.msra.mxu0 0
        %1537 = vmatprep.subr.bf16.mxu0 0
        %1538 = vmatpush1.bf16.msra.mxu0 0
        %1539 = vmatprep.subr.bf16.mxu0 0
        %1540 = vmatpush1.bf16.msra.mxu0 0
        %1541 = vmatprep.subr.bf16.mxu0 0
        %1542 = vmatpush1.bf16.msra.mxu0 0
        %1543 = vmatprep.subr.bf16.mxu0 0
        %1544 = vmatpush1.bf16.msra.mxu0 0
        %1545 = vmatprep.mubr.bf16.mxu0 0
        %1546 = vmatmul.mubr.bf16.gmra.mrb[0].mxu0 %v1508
        %v1547 = vpop.f32.mrb[0].mxu0
        %v1548 = vadd.f32 0.0, %v1547
        %v1549 = vpop.f32.mrb[0].mxu0
        %v1550 = vpop.f32.mrb[0].mxu0
        %v1551 = vpop.f32.mrb[0].mxu0
        %1552 = vdwg.mxu0
        %v1554 = vsel %vm336, %v1500, 0
        %1556 = vmatprep.subr.bf16.mxu0 0
        %1557 = vmatpush1.bf16.msra.mxu0 %v1511
        %1558 = vmatprep.subr.bf16.mxu0 0
        %1559 = vmatpush1.bf16.msra.mxu0 0
        %1560 = vmatprep.subr.bf16.mxu0 0
        %1561 = vmatpush1.bf16.msra.mxu0 0
        %1562 = vmatprep.subr.bf16.mxu0 0
        %1563 = vmatpush1.bf16.msra.mxu0 0
        %1564 = vmatprep.subr.bf16.mxu0 0
        %1565 = vmatpush1.bf16.msra.mxu0 0
        %1566 = vmatprep.subr.bf16.mxu0 0
        %1567 = vmatpush1.bf16.msra.mxu0 0
        %1568 = vmatprep.subr.bf16.mxu0 0
        %1569 = vmatpush1.bf16.msra.mxu0 0
        %1570 = vmatprep.subr.bf16.mxu0 0
        %1571 = vmatpush1.bf16.msra.mxu0 0
        %1572 = vmatprep.subr.bf16.mxu0 0
        %1573 = vmatpush1.bf16.msra.mxu0 0
        %1574 = vmatprep.subr.bf16.mxu0 0
        %1575 = vmatpush1.bf16.msra.mxu0 0
        %1576 = vmatprep.subr.bf16.mxu0 0
        %1577 = vmatpush1.bf16.msra.mxu0 0
        %1578 = vmatprep.subr.bf16.mxu0 0
        %1579 = vmatpush1.bf16.msra.mxu0 0
        %1580 = vmatprep.subr.bf16.mxu0 0
        %1581 = vmatpush1.bf16.msra.mxu0 0
        %1582 = vmatprep.subr.bf16.mxu0 0
        %1583 = vmatpush1.bf16.msra.mxu0 0
        %1584 = vmatprep.subr.bf16.mxu0 0
        %1585 = vmatpush1.bf16.msra.mxu0 0
        %1586 = vmatprep.subr.bf16.mxu0 0
        %1587 = vmatpush1.bf16.msra.mxu0 0
        %1588 = vmatprep.mubr.bf16.mxu0 0
        %1589 = vmatmul.mubr.bf16.gmra.mrb[0].mxu0 %v1554
        %v1590 = vpop.f32.mrb[0].mxu0
        %v1591 = vadd.f32 0.0, %v1590
        %v1592 = vpop.f32.mrb[0].mxu0
        %v1593 = vpop.f32.mrb[0].mxu0
        %v1594 = vpop.f32.mrb[0].mxu0
        %1595 = vdwg.mxu0
        %v1597 = vsel %vm336, %v1501, 0
        %1599 = vmatprep.subr.bf16.mxu0 0
        %1600 = vmatpush1.bf16.msra.mxu0 %v1511
        %1601 = vmatprep.subr.bf16.mxu0 0
        %1602 = vmatpush1.bf16.msra.mxu0 0
        %1603 = vmatprep.subr.bf16.mxu0 0
        %1604 = vmatpush1.bf16.msra.mxu0 0
        %1605 = vmatprep.subr.bf16.mxu0 0
        %1606 = vmatpush1.bf16.msra.mxu0 0
        %1607 = vmatprep.subr.bf16.mxu0 0
        %1608 = vmatpush1.bf16.msra.mxu0 0
        %1609 = vmatprep.subr.bf16.mxu0 0
        %1610 = vmatpush1.bf16.msra.mxu0 0
        %1611 = vmatprep.subr.bf16.mxu0 0
        %1612 = vmatpush1.bf16.msra.mxu0 0
        %1613 = vmatprep.subr.bf16.mxu0 0
        %1614 = vmatpush1.bf16.msra.mxu0 0
        %1615 = vmatprep.subr.bf16.mxu0 0
        %1616 = vmatpush1.bf16.msra.mxu0 0
        %1617 = vmatprep.subr.bf16.mxu0 0
        %1618 = vmatpush1.bf16.msra.mxu0 0
        %1619 = vmatprep.subr.bf16.mxu0 0
        %1620 = vmatpush1.bf16.msra.mxu0 0
        %1621 = vmatprep.subr.bf16.mxu0 0
        %1622 = vmatpush1.bf16.msra.mxu0 0
        %1623 = vmatprep.subr.bf16.mxu0 0
        %1624 = vmatpush1.bf16.msra.mxu0 0
        %1625 = vmatprep.subr.bf16.mxu0 0
        %1626 = vmatpush1.bf16.msra.mxu0 0
        %1627 = vmatprep.subr.bf16.mxu0 0
        %1628 = vmatpush1.bf16.msra.mxu0 0
        %1629 = vmatprep.subr.bf16.mxu0 0
        %1630 = vmatpush1.bf16.msra.mxu0 0
        %1631 = vmatprep.mubr.bf16.mxu0 0
        %1632 = vmatmul.mubr.bf16.gmra.mrb[0].mxu0 %v1597
        %v1633 = vpop.f32.mrb[0].mxu0
        %v1634 = vadd.f32 0.0, %v1633
        %v1635 = vpop.f32.mrb[0].mxu0
        %v1636 = vpop.f32.mrb[0].mxu0
        %v1637 = vpop.f32.mrb[0].mxu0
        %1638 = vdwg.mxu0
        %v1640 = vsel %vm336, %v1502, 0
        %1642 = vmatprep.subr.bf16.mxu0 0
        %1643 = vmatpush1.bf16.msra.mxu0 %v1511
        %1644 = vmatprep.subr.bf16.mxu0 0
        %1645 = vmatpush1.bf16.msra.mxu0 0
        %1646 = vmatprep.subr.bf16.mxu0 0
        %1647 = vmatpush1.bf16.msra.mxu0 0
        %1648 = vmatprep.subr.bf16.mxu0 0
        %1649 = vmatpush1.bf16.msra.mxu0 0
        %1650 = vmatprep.subr.bf16.mxu0 0
        %1651 = vmatpush1.bf16.msra.mxu0 0
        %1652 = vmatprep.subr.bf16.mxu0 0
        %1653 = vmatpush1.bf16.msra.mxu0 0
        %1654 = vmatprep.subr.bf16.mxu0 0
        %1655 = vmatpush1.bf16.msra.mxu0 0
        %1656 = vmatprep.subr.bf16.mxu0 0
        %1657 = vmatpush1.bf16.msra.mxu0 0
        %1658 = vmatprep.subr.bf16.mxu0 0
        %1659 = vmatpush1.bf16.msra.mxu0 0
        %1660 = vmatprep.subr.bf16.mxu0 0
        %1661 = vmatpush1.bf16.msra.mxu0 0
        %1662 = vmatprep.subr.bf16.mxu0 0
        %1663 = vmatpush1.bf16.msra.mxu0 0
        %1664 = vmatprep.subr.bf16.mxu0 0
        %1665 = vmatpush1.bf16.msra.mxu0 0
        %1666 = vmatprep.subr.bf16.mxu0 0
        %1667 = vmatpush1.bf16.msra.mxu0 0
        %1668 = vmatprep.subr.bf16.mxu0 0
        %1669 = vmatpush1.bf16.msra.mxu0 0
        %1670 = vmatprep.subr.bf16.mxu0 0
        %1671 = vmatpush1.bf16.msra.mxu0 0
        %1672 = vmatprep.subr.bf16.mxu0 0
        %1673 = vmatpush1.bf16.msra.mxu0 0
        %1674 = vmatprep.mubr.bf16.mxu0 0
        %1675 = vmatmul.mubr.bf16.gmra.mrb[0].mxu0 %v1640
        %v1676 = vpop.f32.mrb[0].mxu0
        %v1677 = vadd.f32 0.0, %v1676
        %v1678 = vpop.f32.mrb[0].mxu0
        %v1679 = vpop.f32.mrb[0].mxu0
        %v1680 = vpop.f32.mrb[0].mxu0
        %1681 = vdwg.mxu0
        %v1683 = vsel %vm336, %v1503, 0
        %1685 = vmatprep.subr.bf16.mxu0 0
        %1686 = vmatpush1.bf16.msra.mxu0 %v1511
        %1687 = vmatprep.subr.bf16.mxu0 0
        %1688 = vmatpush1.bf16.msra.mxu0 0
        %1689 = vmatprep.subr.bf16.mxu0 0
        %1690 = vmatpush1.bf16.msra.mxu0 0
        %1691 = vmatprep.subr.bf16.mxu0 0
        %1692 = vmatpush1.bf16.msra.mxu0 0
        %1693 = vmatprep.subr.bf16.mxu0 0
        %1694 = vmatpush1.bf16.msra.mxu0 0
        %1695 = vmatprep.subr.bf16.mxu0 0
        %1696 = vmatpush1.bf16.msra.mxu0 0
        %1697 = vmatprep.subr.bf16.mxu0 0
        %1698 = vmatpush1.bf16.msra.mxu0 0
        %1699 = vmatprep.subr.bf16.mxu0 0
        %1700 = vmatpush1.bf16.msra.mxu0 0
        %1701 = vmatprep.subr.bf16.mxu0 0
        %1702 = vmatpush1.bf16.msra.mxu0 0
        %1703 = vmatprep.subr.bf16.mxu0 0
        %1704 = vmatpush1.bf16.msra.mxu0 0
        %1705 = vmatprep.subr.bf16.mxu0 0
        %1706 = vmatpush1.bf16.msra.mxu0 0
        %1707 = vmatprep.subr.bf16.mxu0 0
        %1708 = vmatpush1.bf16.msra.mxu0 0
        %1709 = vmatprep.subr.bf16.mxu0 0
        %1710 = vmatpush1.bf16.msra.mxu0 0
        %1711 = vmatprep.subr.bf16.mxu0 0
        %1712 = vmatpush1.bf16.msra.mxu0 0
        %1713 = vmatprep.subr.bf16.mxu0 0
        %1714 = vmatpush1.bf16.msra.mxu0 0
        %1715 = vmatprep.subr.bf16.mxu0 0
        %1716 = vmatpush1.bf16.msra.mxu0 0
        %1717 = vmatprep.mubr.bf16.mxu0 0
        %1718 = vmatmul.mubr.bf16.gmra.mrb[0].mxu0 %v1683
        %v1719 = vpop.f32.mrb[0].mxu0
        %v1720 = vadd.f32 0.0, %v1719
        %v1721 = vpop.f32.mrb[0].mxu0
        %v1722 = vpop.f32.mrb[0].mxu0
        %v1723 = vpop.f32.mrb[0].mxu0
        %1724 = vdwg.mxu0
        %v1726 = vsel %vm336, %v1504, 0
        %1728 = vmatprep.subr.bf16.mxu0 0
        %1729 = vmatpush1.bf16.msra.mxu0 %v1511
        %1730 = vmatprep.subr.bf16.mxu0 0
        %1731 = vmatpush1.bf16.msra.mxu0 0
        %1732 = vmatprep.subr.bf16.mxu0 0
        %1733 = vmatpush1.bf16.msra.mxu0 0
        %1734 = vmatprep.subr.bf16.mxu0 0
        %1735 = vmatpush1.bf16.msra.mxu0 0
        %1736 = vmatprep.subr.bf16.mxu0 0
        %1737 = vmatpush1.bf16.msra.mxu0 0
        %1738 = vmatprep.subr.bf16.mxu0 0
        %1739 = vmatpush1.bf16.msra.mxu0 0
        %1740 = vmatprep.subr.bf16.mxu0 0
        %1741 = vmatpush1.bf16.msra.mxu0 0
        %1742 = vmatprep.subr.bf16.mxu0 0
        %1743 = vmatpush1.bf16.msra.mxu0 0
        %1744 = vmatprep.subr.bf16.mxu0 0
        %1745 = vmatpush1.bf16.msra.mxu0 0
        %1746 = vmatprep.subr.bf16.mxu0 0
        %1747 = vmatpush1.bf16.msra.mxu0 0
        %1748 = vmatprep.subr.bf16.mxu0 0
        %1749 = vmatpush1.bf16.msra.mxu0 0
        %1750 = vmatprep.subr.bf16.mxu0 0
        %1751 = vmatpush1.bf16.msra.mxu0 0
        %1752 = vmatprep.subr.bf16.mxu0 0
        %1753 = vmatpush1.bf16.msra.mxu0 0
        %1754 = vmatprep.subr.bf16.mxu0 0
        %1755 = vmatpush1.bf16.msra.mxu0 0
        %1756 = vmatprep.subr.bf16.mxu0 0
        %1757 = vmatpush1.bf16.msra.mxu0 0
        %1758 = vmatprep.subr.bf16.mxu0 0
        %1759 = vmatpush1.bf16.msra.mxu0 0
        %1760 = vmatprep.mubr.bf16.mxu0 0
        %1761 = vmatmul.mubr.bf16.gmra.mrb[0].mxu0 %v1726
        %v1762 = vpop.f32.mrb[0].mxu0
        %v1763 = vadd.f32 0.0, %v1762
        %v1764 = vpop.f32.mrb[0].mxu0
        %v1765 = vpop.f32.mrb[0].mxu0
        %v1766 = vpop.f32.mrb[0].mxu0
        %1767 = vdwg.mxu0
        %v1769 = vsel %vm336, %v1505, 0
        %1771 = vmatprep.subr.bf16.mxu0 0
        %1772 = vmatpush1.bf16.msra.mxu0 %v1511
        %1773 = vmatprep.subr.bf16.mxu0 0
        %1774 = vmatpush1.bf16.msra.mxu0 0
        %1775 = vmatprep.subr.bf16.mxu0 0
        %1776 = vmatpush1.bf16.msra.mxu0 0
        %1777 = vmatprep.subr.bf16.mxu0 0
        %1778 = vmatpush1.bf16.msra.mxu0 0
        %1779 = vmatprep.subr.bf16.mxu0 0
        %1780 = vmatpush1.bf16.msra.mxu0 0
        %1781 = vmatprep.subr.bf16.mxu0 0
        %1782 = vmatpush1.bf16.msra.mxu0 0
        %1783 = vmatprep.subr.bf16.mxu0 0
        %1784 = vmatpush1.bf16.msra.mxu0 0
        %1785 = vmatprep.subr.bf16.mxu0 0
        %1786 = vmatpush1.bf16.msra.mxu0 0
        %1787 = vmatprep.subr.bf16.mxu0 0
        %1788 = vmatpush1.bf16.msra.mxu0 0
        %1789 = vmatprep.subr.bf16.mxu0 0
        %1790 = vmatpush1.bf16.msra.mxu0 0
        %1791 = vmatprep.subr.bf16.mxu0 0
        %1792 = vmatpush1.bf16.msra.mxu0 0
        %1793 = vmatprep.subr.bf16.mxu0 0
        %1794 = vmatpush1.bf16.msra.mxu0 0
        %1795 = vmatprep.subr.bf16.mxu0 0
        %1796 = vmatpush1.bf16.msra.mxu0 0
        %1797 = vmatprep.subr.bf16.mxu0 0
        %1798 = vmatpush1.bf16.msra.mxu0 0
        %1799 = vmatprep.subr.bf16.mxu0 0
        %1800 = vmatpush1.bf16.msra.mxu0 0
        %1801 = vmatprep.subr.bf16.mxu0 0
        %1802 = vmatpush1.bf16.msra.mxu0 0
        %1803 = vmatprep.mubr.bf16.mxu0 0
        %1804 = vmatmul.mubr.bf16.gmra.mrb[0].mxu0 %v1769
        %v1805 = vpop.f32.mrb[0].mxu0
        %v1806 = vadd.f32 0.0, %v1805
        %v1807 = vpop.f32.mrb[0].mxu0
        %v1808 = vpop.f32.mrb[0].mxu0
        %v1809 = vpop.f32.mrb[0].mxu0
        %1810 = vdwg.mxu0
        %v1812 = vsel %vm336, %v1506, 0
        %1814 = vmatprep.subr.bf16.mxu0 0
        %1815 = vmatpush1.bf16.msra.mxu0 %v1511
        %1816 = vmatprep.subr.bf16.mxu0 0
        %1817 = vmatpush1.bf16.msra.mxu0 0
        %1818 = vmatprep.subr.bf16.mxu0 0
        %1819 = vmatpush1.bf16.msra.mxu0 0
        %1820 = vmatprep.subr.bf16.mxu0 0
        %1821 = vmatpush1.bf16.msra.mxu0 0
        %1822 = vmatprep.subr.bf16.mxu0 0
        %1823 = vmatpush1.bf16.msra.mxu0 0
        %1824 = vmatprep.subr.bf16.mxu0 0
        %1825 = vmatpush1.bf16.msra.mxu0 0
        %1826 = vmatprep.subr.bf16.mxu0 0
        %1827 = vmatpush1.bf16.msra.mxu0 0
        %1828 = vmatprep.subr.bf16.mxu0 0
        %1829 = vmatpush1.bf16.msra.mxu0 0
        %1830 = vmatprep.subr.bf16.mxu0 0
        %1831 = vmatpush1.bf16.msra.mxu0 0
        %1832 = vmatprep.subr.bf16.mxu0 0
        %1833 = vmatpush1.bf16.msra.mxu0 0
        %1834 = vmatprep.subr.bf16.mxu0 0
        %1835 = vmatpush1.bf16.msra.mxu0 0
        %1836 = vmatprep.subr.bf16.mxu0 0
        %1837 = vmatpush1.bf16.msra.mxu0 0
        %1838 = vmatprep.subr.bf16.mxu0 0
        %1839 = vmatpush1.bf16.msra.mxu0 0
        %1840 = vmatprep.subr.bf16.mxu0 0
        %1841 = vmatpush1.bf16.msra.mxu0 0
        %1842 = vmatprep.subr.bf16.mxu0 0
        %1843 = vmatpush1.bf16.msra.mxu0 0
        %1844 = vmatprep.subr.bf16.mxu0 0
        %1845 = vmatpush1.bf16.msra.mxu0 0
        %1846 = vmatprep.mubr.bf16.mxu0 0
        %1847 = vmatmul.mubr.bf16.gmra.mrb[0].mxu0 %v1812
        %v1848 = vpop.f32.mrb[0].mxu0
        %v1849 = vadd.f32 0.0, %v1848
        %v1850 = vpop.f32.mrb[0].mxu0
        %v1851 = vpop.f32.mrb[0].mxu0
        %v1852 = vpop.f32.mrb[0].mxu0
        %1853 = vdwg.mxu0
        %v1854 = vadd.f32 %v1491, %v1548
        %v1855 = vadd.f32 %v1492, %v1591
        %v1856 = vadd.f32 %v1493, %v1634
        %v1857 = vadd.f32 %v1494, %v1677
        %v1858 = vadd.f32 %v1495, %v1720
        %v1859 = vadd.f32 %v1496, %v1763
        %v1860 = vadd.f32 %v1497, %v1806
        %v1861 = vadd.f32 %v1498, %v1849
        %v1862 = vld [vmem:[%s309] sm:$0xf]
        %v1863 = vld [vmem:[%s309 + $0x8] sm:$0xf]
        %v1864 = vld [vmem:[%s309 + $0x10] sm:$0xf]
        %v1865 = vld [vmem:[%s309 + $0x18] sm:$0xf]
        %v1866 = vld [vmem:[%s309 + $0x20] sm:$0xf]
        %v1867 = vld [vmem:[%s309 + $0x28] sm:$0xf]
        %v1868 = vld [vmem:[%s309 + $0x30] sm:$0xf]
        %v1869 = vld [vmem:[%s309 + $0x38] sm:$0xf]
        %v1871 = vsel %vm336, %v1862, 0
        %v1874 = vsel %vm340, %v315, 0
        %1876 = vmatprep.subr.bf16.mxu0 0
        %1877 = vmatpush1.bf16.msra.mxu0 %v1874
        %1878 = vmatprep.subr.bf16.mxu0 0
        %1879 = vmatpush1.bf16.msra.mxu0 0
        %1880 = vmatprep.subr.bf16.mxu0 0
        %1881 = vmatpush1.bf16.msra.mxu0 0
        %1882 = vmatprep.subr.bf16.mxu0 0
        %1883 = vmatpush1.bf16.msra.mxu0 0
        %1884 = vmatprep.subr.bf16.mxu0 0
        %1885 = vmatpush1.bf16.msra.mxu0 0
        %1886 = vmatprep.subr.bf16.mxu0 0
        %1887 = vmatpush1.bf16.msra.mxu0 0
        %1888 = vmatprep.subr.bf16.mxu0 0
        %1889 = vmatpush1.bf16.msra.mxu0 0
        %1890 = vmatprep.subr.bf16.mxu0 0
        %1891 = vmatpush1.bf16.msra.mxu0 0
        %1892 = vmatprep.subr.bf16.mxu0 0
        %1893 = vmatpush1.bf16.msra.mxu0 0
        %1894 = vmatprep.subr.bf16.mxu0 0
        %1895 = vmatpush1.bf16.msra.mxu0 0
        %1896 = vmatprep.subr.bf16.mxu0 0
        %1897 = vmatpush1.bf16.msra.mxu0 0
        %1898 = vmatprep.subr.bf16.mxu0 0
        %1899 = vmatpush1.bf16.msra.mxu0 0
        %1900 = vmatprep.subr.bf16.mxu0 0
        %1901 = vmatpush1.bf16.msra.mxu0 0
        %1902 = vmatprep.subr.bf16.mxu0 0
        %1903 = vmatpush1.bf16.msra.mxu0 0
        %1904 = vmatprep.subr.bf16.mxu0 0
        %1905 = vmatpush1.bf16.msra.mxu0 0
        %1906 = vmatprep.subr.bf16.mxu0 0
        %1907 = vmatpush1.bf16.msra.mxu0 0
        %1908 = vmatprep.mubr.bf16.mxu0 0
        %1909 = vmatmul.mubr.bf16.gmra.mrb[0].mxu0 %v1871
        %v1910 = vpop.f32.mrb[0].mxu0
        %v1911 = vadd.f32 0.0, %v1910
        %v1912 = vpop.f32.mrb[0].mxu0
        %v1913 = vpop.f32.mrb[0].mxu0
        %v1914 = vpop.f32.mrb[0].mxu0
        %1915 = vdwg.mxu0
        %v1917 = vsel %vm336, %v1863, 0
        %1919 = vmatprep.subr.bf16.mxu0 0
        %1920 = vmatpush1.bf16.msra.mxu0 %v1874
        %1921 = vmatprep.subr.bf16.mxu0 0
        %1922 = vmatpush1.bf16.msra.mxu0 0
        %1923 = vmatprep.subr.bf16.mxu0 0
        %1924 = vmatpush1.bf16.msra.mxu0 0
        %1925 = vmatprep.subr.bf16.mxu0 0
        %1926 = vmatpush1.bf16.msra.mxu0 0
        %1927 = vmatprep.subr.bf16.mxu0 0
        %1928 = vmatpush1.bf16.msra.mxu0 0
        %1929 = vmatprep.subr.bf16.mxu0 0
        %1930 = vmatpush1.bf16.msra.mxu0 0
        %1931 = vmatprep.subr.bf16.mxu0 0
        %1932 = vmatpush1.bf16.msra.mxu0 0
        %1933 = vmatprep.subr.bf16.mxu0 0
        %1934 = vmatpush1.bf16.msra.mxu0 0
        %1935 = vmatprep.subr.bf16.mxu0 0
        %1936 = vmatpush1.bf16.msra.mxu0 0
        %1937 = vmatprep.subr.bf16.mxu0 0
        %1938 = vmatpush1.bf16.msra.mxu0 0
        %1939 = vmatprep.subr.bf16.mxu0 0
        %1940 = vmatpush1.bf16.msra.mxu0 0
        %1941 = vmatprep.subr.bf16.mxu0 0
        %1942 = vmatpush1.bf16.msra.mxu0 0
        %1943 = vmatprep.subr.bf16.mxu0 0
        %1944 = vmatpush1.bf16.msra.mxu0 0
        %1945 = vmatprep.subr.bf16.mxu0 0
        %1946 = vmatpush1.bf16.msra.mxu0 0
        %1947 = vmatprep.subr.bf16.mxu0 0
        %1948 = vmatpush1.bf16.msra.mxu0 0
        %1949 = vmatprep.subr.bf16.mxu0 0
        %1950 = vmatpush1.bf16.msra.mxu0 0
        %1951 = vmatprep.mubr.bf16.mxu0 0
        %1952 = vmatmul.mubr.bf16.gmra.mrb[0].mxu0 %v1917
        %v1953 = vpop.f32.mrb[0].mxu0
        %v1954 = vadd.f32 0.0, %v1953
        %v1955 = vpop.f32.mrb[0].mxu0
        %v1956 = vpop.f32.mrb[0].mxu0
        %v1957 = vpop.f32.mrb[0].mxu0
        %1958 = vdwg.mxu0
        %v1960 = vsel %vm336, %v1864, 0
        %1962 = vmatprep.subr.bf16.mxu0 0
        %1963 = vmatpush1.bf16.msra.mxu0 %v1874
        %1964 = vmatprep.subr.bf16.mxu0 0
        %1965 = vmatpush1.bf16.msra.mxu0 0
        %1966 = vmatprep.subr.bf16.mxu0 0
        %1967 = vmatpush1.bf16.msra.mxu0 0
        %1968 = vmatprep.subr.bf16.mxu0 0
        %1969 = vmatpush1.bf16.msra.mxu0 0
        %1970 = vmatprep.subr.bf16.mxu0 0
        %1971 = vmatpush1.bf16.msra.mxu0 0
        %1972 = vmatprep.subr.bf16.mxu0 0
        %1973 = vmatpush1.bf16.msra.mxu0 0
        %1974 = vmatprep.subr.bf16.mxu0 0
        %1975 = vmatpush1.bf16.msra.mxu0 0
        %1976 = vmatprep.subr.bf16.mxu0 0
        %1977 = vmatpush1.bf16.msra.mxu0 0
        %1978 = vmatprep.subr.bf16.mxu0 0
        %1979 = vmatpush1.bf16.msra.mxu0 0
        %1980 = vmatprep.subr.bf16.mxu0 0
        %1981 = vmatpush1.bf16.msra.mxu0 0
        %1982 = vmatprep.subr.bf16.mxu0 0
        %1983 = vmatpush1.bf16.msra.mxu0 0
        %1984 = vmatprep.subr.bf16.mxu0 0
        %1985 = vmatpush1.bf16.msra.mxu0 0
        %1986 = vmatprep.subr.bf16.mxu0 0
        %1987 = vmatpush1.bf16.msra.mxu0 0
        %1988 = vmatprep.subr.bf16.mxu0 0
        %1989 = vmatpush1.bf16.msra.mxu0 0
        %1990 = vmatprep.subr.bf16.mxu0 0
        %1991 = vmatpush1.bf16.msra.mxu0 0
        %1992 = vmatprep.subr.bf16.mxu0 0
        %1993 = vmatpush1.bf16.msra.mxu0 0
        %1994 = vmatprep.mubr.bf16.mxu0 0
        %1995 = vmatmul.mubr.bf16.gmra.mrb[0].mxu0 %v1960
        %v1996 = vpop.f32.mrb[0].mxu0
        %v1997 = vadd.f32 0.0, %v1996
        %v1998 = vpop.f32.mrb[0].mxu0
        %v1999 = vpop.f32.mrb[0].mxu0
        %v2000 = vpop.f32.mrb[0].mxu0
        %2001 = vdwg.mxu0
        %v2003 = vsel %vm336, %v1865, 0
        %2005 = vmatprep.subr.bf16.mxu0 0
        %2006 = vmatpush1.bf16.msra.mxu0 %v1874
        %2007 = vmatprep.subr.bf16.mxu0 0
        %2008 = vmatpush1.bf16.msra.mxu0 0
        %2009 = vmatprep.subr.bf16.mxu0 0
        %2010 = vmatpush1.bf16.msra.mxu0 0
        %2011 = vmatprep.subr.bf16.mxu0 0
        %2012 = vmatpush1.bf16.msra.mxu0 0
        %2013 = vmatprep.subr.bf16.mxu0 0
        %2014 = vmatpush1.bf16.msra.mxu0 0
        %2015 = vmatprep.subr.bf16.mxu0 0
        %2016 = vmatpush1.bf16.msra.mxu0 0
        %2017 = vmatprep.subr.bf16.mxu0 0
        %2018 = vmatpush1.bf16.msra.mxu0 0
        %2019 = vmatprep.subr.bf16.mxu0 0
        %2020 = vmatpush1.bf16.msra.mxu0 0
        %2021 = vmatprep.subr.bf16.mxu0 0
        %2022 = vmatpush1.bf16.msra.mxu0 0
        %2023 = vmatprep.subr.bf16.mxu0 0
        %2024 = vmatpush1.bf16.msra.mxu0 0
        %2025 = vmatprep.subr.bf16.mxu0 0
        %2026 = vmatpush1.bf16.msra.mxu0 0
        %2027 = vmatprep.subr.bf16.mxu0 0
        %2028 = vmatpush1.bf16.msra.mxu0 0
        %2029 = vmatprep.subr.bf16.mxu0 0
        %2030 = vmatpush1.bf16.msra.mxu0 0
        %2031 = vmatprep.subr.bf16.mxu0 0
        %2032 = vmatpush1.bf16.msra.mxu0 0
        %2033 = vmatprep.subr.bf16.mxu0 0
        %2034 = vmatpush1.bf16.msra.mxu0 0
        %2035 = vmatprep.subr.bf16.mxu0 0
        %2036 = vmatpush1.bf16.msra.mxu0 0
        %2037 = vmatprep.mubr.bf16.mxu0 0
        %2038 = vmatmul.mubr.bf16.gmra.mrb[0].mxu0 %v2003
        %v2039 = vpop.f32.mrb[0].mxu0
        %v2040 = vadd.f32 0.0, %v2039
        %v2041 = vpop.f32.mrb[0].mxu0
        %v2042 = vpop.f32.mrb[0].mxu0
        %v2043 = vpop.f32.mrb[0].mxu0
        %2044 = vdwg.mxu0
        %v2046 = vsel %vm336, %v1866, 0
        %2048 = vmatprep.subr.bf16.mxu0 0
        %2049 = vmatpush1.bf16.msra.mxu0 %v1874
        %2050 = vmatprep.subr.bf16.mxu0 0
        %2051 = vmatpush1.bf16.msra.mxu0 0
        %2052 = vmatprep.subr.bf16.mxu0 0
        %2053 = vmatpush1.bf16.msra.mxu0 0
        %2054 = vmatprep.subr.bf16.mxu0 0
        %2055 = vmatpush1.bf16.msra.mxu0 0
        %2056 = vmatprep.subr.bf16.mxu0 0
        %2057 = vmatpush1.bf16.msra.mxu0 0
        %2058 = vmatprep.subr.bf16.mxu0 0
        %2059 = vmatpush1.bf16.msra.mxu0 0
        %2060 = vmatprep.subr.bf16.mxu0 0
        %2061 = vmatpush1.bf16.msra.mxu0 0
        %2062 = vmatprep.subr.bf16.mxu0 0
        %2063 = vmatpush1.bf16.msra.mxu0 0
        %2064 = vmatprep.subr.bf16.mxu0 0
        %2065 = vmatpush1.bf16.msra.mxu0 0
        %2066 = vmatprep.subr.bf16.mxu0 0
        %2067 = vmatpush1.bf16.msra.mxu0 0
        %2068 = vmatprep.subr.bf16.mxu0 0
        %2069 = vmatpush1.bf16.msra.mxu0 0
        %2070 = vmatprep.subr.bf16.mxu0 0
        %2071 = vmatpush1.bf16.msra.mxu0 0
        %2072 = vmatprep.subr.bf16.mxu0 0
        %2073 = vmatpush1.bf16.msra.mxu0 0
        %2074 = vmatprep.subr.bf16.mxu0 0
        %2075 = vmatpush1.bf16.msra.mxu0 0
        %2076 = vmatprep.subr.bf16.mxu0 0
        %2077 = vmatpush1.bf16.msra.mxu0 0
        %2078 = vmatprep.subr.bf16.mxu0 0
        %2079 = vmatpush1.bf16.msra.mxu0 0
        %2080 = vmatprep.mubr.bf16.mxu0 0
        %2081 = vmatmul.mubr.bf16.gmra.mrb[0].mxu0 %v2046
        %v2082 = vpop.f32.mrb[0].mxu0
        %v2083 = vadd.f32 0.0, %v2082
        %v2084 = vpop.f32.mrb[0].mxu0
        %v2085 = vpop.f32.mrb[0].mxu0
        %v2086 = vpop.f32.mrb[0].mxu0
        %2087 = vdwg.mxu0
        %v2089 = vsel %vm336, %v1867, 0
        %2091 = vmatprep.subr.bf16.mxu0 0
        %2092 = vmatpush1.bf16.msra.mxu0 %v1874
        %2093 = vmatprep.subr.bf16.mxu0 0
        %2094 = vmatpush1.bf16.msra.mxu0 0
        %2095 = vmatprep.subr.bf16.mxu0 0
        %2096 = vmatpush1.bf16.msra.mxu0 0
        %2097 = vmatprep.subr.bf16.mxu0 0
        %2098 = vmatpush1.bf16.msra.mxu0 0
        %2099 = vmatprep.subr.bf16.mxu0 0
        %2100 = vmatpush1.bf16.msra.mxu0 0
        %2101 = vmatprep.subr.bf16.mxu0 0
        %2102 = vmatpush1.bf16.msra.mxu0 0
        %2103 = vmatprep.subr.bf16.mxu0 0
        %2104 = vmatpush1.bf16.msra.mxu0 0
        %2105 = vmatprep.subr.bf16.mxu0 0
        %2106 = vmatpush1.bf16.msra.mxu0 0
        %2107 = vmatprep.subr.bf16.mxu0 0
        %2108 = vmatpush1.bf16.msra.mxu0 0
        %2109 = vmatprep.subr.bf16.mxu0 0
        %2110 = vmatpush1.bf16.msra.mxu0 0
        %2111 = vmatprep.subr.bf16.mxu0 0
        %2112 = vmatpush1.bf16.msra.mxu0 0
        %2113 = vmatprep.subr.bf16.mxu0 0
        %2114 = vmatpush1.bf16.msra.mxu0 0
        %2115 = vmatprep.subr.bf16.mxu0 0
        %2116 = vmatpush1.bf16.msra.mxu0 0
        %2117 = vmatprep.subr.bf16.mxu0 0
        %2118 = vmatpush1.bf16.msra.mxu0 0
        %2119 = vmatprep.subr.bf16.mxu0 0
        %2120 = vmatpush1.bf16.msra.mxu0 0
        %2121 = vmatprep.subr.bf16.mxu0 0
        %2122 = vmatpush1.bf16.msra.mxu0 0
        %2123 = vmatprep.mubr.bf16.mxu0 0
        %2124 = vmatmul.mubr.bf16.gmra.mrb[0].mxu0 %v2089
        %v2125 = vpop.f32.mrb[0].mxu0
        %v2126 = vadd.f32 0.0, %v2125
        %v2127 = vpop.f32.mrb[0].mxu0
        %v2128 = vpop.f32.mrb[0].mxu0
        %v2129 = vpop.f32.mrb[0].mxu0
        %2130 = vdwg.mxu0
        %v2132 = vsel %vm336, %v1868, 0
        %2134 = vmatprep.subr.bf16.mxu0 0
        %2135 = vmatpush1.bf16.msra.mxu0 %v1874
        %2136 = vmatprep.subr.bf16.mxu0 0
        %2137 = vmatpush1.bf16.msra.mxu0 0
        %2138 = vmatprep.subr.bf16.mxu0 0
        %2139 = vmatpush1.bf16.msra.mxu0 0
        %2140 = vmatprep.subr.bf16.mxu0 0
        %2141 = vmatpush1.bf16.msra.mxu0 0
        %2142 = vmatprep.subr.bf16.mxu0 0
        %2143 = vmatpush1.bf16.msra.mxu0 0
        %2144 = vmatprep.subr.bf16.mxu0 0
        %2145 = vmatpush1.bf16.msra.mxu0 0
        %2146 = vmatprep.subr.bf16.mxu0 0
        %2147 = vmatpush1.bf16.msra.mxu0 0
        %2148 = vmatprep.subr.bf16.mxu0 0
        %2149 = vmatpush1.bf16.msra.mxu0 0
        %2150 = vmatprep.subr.bf16.mxu0 0
        %2151 = vmatpush1.bf16.msra.mxu0 0
        %2152 = vmatprep.subr.bf16.mxu0 0
        %2153 = vmatpush1.bf16.msra.mxu0 0
        %2154 = vmatprep.subr.bf16.mxu0 0
        %2155 = vmatpush1.bf16.msra.mxu0 0
        %2156 = vmatprep.subr.bf16.mxu0 0
        %2157 = vmatpush1.bf16.msra.mxu0 0
        %2158 = vmatprep.subr.bf16.mxu0 0
        %2159 = vmatpush1.bf16.msra.mxu0 0
        %2160 = vmatprep.subr.bf16.mxu0 0
        %2161 = vmatpush1.bf16.msra.mxu0 0
        %2162 = vmatprep.subr.bf16.mxu0 0
        %2163 = vmatpush1.bf16.msra.mxu0 0
        %2164 = vmatprep.subr.bf16.mxu0 0
        %2165 = vmatpush1.bf16.msra.mxu0 0
        %2166 = vmatprep.mubr.bf16.mxu0 0
        %2167 = vmatmul.mubr.bf16.gmra.mrb[0].mxu0 %v2132
        %v2168 = vpop.f32.mrb[0].mxu0
        %v2169 = vadd.f32 0.0, %v2168
        %v2170 = vpop.f32.mrb[0].mxu0
        %v2171 = vpop.f32.mrb[0].mxu0
        %v2172 = vpop.f32.mrb[0].mxu0
        %2173 = vdwg.mxu0
        %v2175 = vsel %vm336, %v1869, 0
        %2177 = vmatprep.subr.bf16.mxu0 0
        %2178 = vmatpush1.bf16.msra.mxu0 %v1874
        %2179 = vmatprep.subr.bf16.mxu0 0
        %2180 = vmatpush1.bf16.msra.mxu0 0
        %2181 = vmatprep.subr.bf16.mxu0 0
        %2182 = vmatpush1.bf16.msra.mxu0 0
        %2183 = vmatprep.subr.bf16.mxu0 0
        %2184 = vmatpush1.bf16.msra.mxu0 0
        %2185 = vmatprep.subr.bf16.mxu0 0
        %2186 = vmatpush1.bf16.msra.mxu0 0
        %2187 = vmatprep.subr.bf16.mxu0 0
        %2188 = vmatpush1.bf16.msra.mxu0 0
        %2189 = vmatprep.subr.bf16.mxu0 0
        %2190 = vmatpush1.bf16.msra.mxu0 0
        %2191 = vmatprep.subr.bf16.mxu0 0
        %2192 = vmatpush1.bf16.msra.mxu0 0
        %2193 = vmatprep.subr.bf16.mxu0 0
        %2194 = vmatpush1.bf16.msra.mxu0 0
        %2195 = vmatprep.subr.bf16.mxu0 0
        %2196 = vmatpush1.bf16.msra.mxu0 0
        %2197 = vmatprep.subr.bf16.mxu0 0
        %2198 = vmatpush1.bf16.msra.mxu0 0
        %2199 = vmatprep.subr.bf16.mxu0 0
        %2200 = vmatpush1.bf16.msra.mxu0 0
        %2201 = vmatprep.subr.bf16.mxu0 0
        %2202 = vmatpush1.bf16.msra.mxu0 0
        %2203 = vmatprep.subr.bf16.mxu0 0
        %2204 = vmatpush1.bf16.msra.mxu0 0
        %2205 = vmatprep.subr.bf16.mxu0 0
        %2206 = vmatpush1.bf16.msra.mxu0 0
        %2207 = vmatprep.subr.bf16.mxu0 0
        %2208 = vmatpush1.bf16.msra.mxu0 0
        %2209 = vmatprep.mubr.bf16.mxu0 0
        %2210 = vmatmul.mubr.bf16.gmra.mrb[0].mxu0 %v2175
        %v2211 = vpop.f32.mrb[0].mxu0
        %v2212 = vadd.f32 0.0, %v2211
        %v2213 = vpop.f32.mrb[0].mxu0
        %v2214 = vpop.f32.mrb[0].mxu0
        %v2215 = vpop.f32.mrb[0].mxu0
        %2216 = vdwg.mxu0
        %v2217 = vadd.f32 %v1854, %v1911
        %v2218 = vadd.f32 %v1855, %v1954
        %v2219 = vadd.f32 %v1856, %v1997
        %v2220 = vadd.f32 %v1857, %v2040
        %v2221 = vadd.f32 %v1858, %v2083
        %v2222 = vadd.f32 %v1859, %v2126
        %v2223 = vadd.f32 %v1860, %v2169
        %v2224 = vadd.f32 %v1861, %v2212
        %v2225 = vld [vmem:[%s304] sm:$0xf]
        %v2226 = vld [vmem:[%s304 + $0x4] sm:$0x1]
        %v2227 = vld [vmem:[%s304 + $0x8] sm:$0xf]
        %v2228 = vld [vmem:[%s304 + $0xc] sm:$0x1]
        %v2229 = vld [vmem:[%s304 + $0x10] sm:$0xf]
        %v2230 = vld [vmem:[%s304 + $0x14] sm:$0x1]
        %v2231 = vld [vmem:[%s304 + $0x18] sm:$0xf]
        %v2232 = vld [vmem:[%s304 + $0x1c] sm:$0x1]
        %v2233 = vld [vmem:[%s304 + $0x20] sm:$0xf]
        %v2234 = vld [vmem:[%s304 + $0x24] sm:$0x1]
        %v2235 = vld [vmem:[%s304 + $0x28] sm:$0xf]
        %v2236 = vld [vmem:[%s304 + $0x2c] sm:$0x1]
        %v2237 = vld [vmem:[%s304 + $0x30] sm:$0xf]
        %v2238 = vld [vmem:[%s304 + $0x34] sm:$0x1]
        %v2239 = vld [vmem:[%s304 + $0x38] sm:$0xf]
        %v2240 = vld [vmem:[%s304 + $0x3c] sm:$0x1]
        %v2243 = vunpack.c.l.b16 %v2225
        %v2244 = vunpack.c.l.b16 %v2226
        %v2245 = vpack.c.b16 %v2244, %v2243
        %v2247 = vshrl.u32 %v2245, 16
        %v2249 = vshll.u32 %v2245, 16
        %v2251 = vrot.slane %v2249, 1
        %v2252 = vor.u32 %v2247, %v2251
        %v2254 = vsel %vm336, %v2252, 0
        %v2257 = vsel %vm340, %v316, 0
        %2259 = vmatprep.subr.bf16.mxu0 0
        %2260 = vmatpush1.bf16.msra.mxu0 %v2257
        %2261 = vmatprep.subr.bf16.mxu0 0
        %2262 = vmatpush1.bf16.msra.mxu0 0
        %2263 = vmatprep.subr.bf16.mxu0 0
        %2264 = vmatpush1.bf16.msra.mxu0 0
        %2265 = vmatprep.subr.bf16.mxu0 0
        %2266 = vmatpush1.bf16.msra.mxu0 0
        %2267 = vmatprep.subr.bf16.mxu0 0
        %2268 = vmatpush1.bf16.msra.mxu0 0
        %2269 = vmatprep.subr.bf16.mxu0 0
        %2270 = vmatpush1.bf16.msra.mxu0 0
        %2271 = vmatprep.subr.bf16.mxu0 0
        %2272 = vmatpush1.bf16.msra.mxu0 0
        %2273 = vmatprep.subr.bf16.mxu0 0
        %2274 = vmatpush1.bf16.msra.mxu0 0
        %2275 = vmatprep.subr.bf16.mxu0 0
        %2276 = vmatpush1.bf16.msra.mxu0 0
        %2277 = vmatprep.subr.bf16.mxu0 0
        %2278 = vmatpush1.bf16.msra.mxu0 0
        %2279 = vmatprep.subr.bf16.mxu0 0
        %2280 = vmatpush1.bf16.msra.mxu0 0
        %2281 = vmatprep.subr.bf16.mxu0 0
        %2282 = vmatpush1.bf16.msra.mxu0 0
        %2283 = vmatprep.subr.bf16.mxu0 0
        %2284 = vmatpush1.bf16.msra.mxu0 0
        %2285 = vmatprep.subr.bf16.mxu0 0
        %2286 = vmatpush1.bf16.msra.mxu0 0
        %2287 = vmatprep.subr.bf16.mxu0 0
        %2288 = vmatpush1.bf16.msra.mxu0 0
        %2289 = vmatprep.subr.bf16.mxu0 0
        %2290 = vmatpush1.bf16.msra.mxu0 0
        %2291 = vmatprep.mubr.bf16.mxu0 0
        %2292 = vmatmul.mubr.bf16.gmra.mrb[0].mxu0 %v2254
        %v2293 = vpop.f32.mrb[0].mxu0
        %v2294 = vadd.f32 0.0, %v2293
        %v2295 = vpop.f32.mrb[0].mxu0
        %v2296 = vpop.f32.mrb[0].mxu0
        %v2297 = vpop.f32.mrb[0].mxu0
        %2298 = vdwg.mxu0
        %v2301 = vunpack.c.l.b16 %v2227
        %v2302 = vunpack.c.l.b16 %v2228
        %v2303 = vpack.c.b16 %v2302, %v2301
        %v2305 = vshrl.u32 %v2303, 16
        %v2307 = vshll.u32 %v2303, 16
        %v2309 = vrot.slane %v2307, 1
        %v2310 = vor.u32 %v2305, %v2309
        %v2312 = vsel %vm336, %v2310, 0
        %2314 = vmatprep.subr.bf16.mxu0 0
        %2315 = vmatpush1.bf16.msra.mxu0 %v2257
        %2316 = vmatprep.subr.bf16.mxu0 0
        %2317 = vmatpush1.bf16.msra.mxu0 0
        %2318 = vmatprep.subr.bf16.mxu0 0
        %2319 = vmatpush1.bf16.msra.mxu0 0
        %2320 = vmatprep.subr.bf16.mxu0 0
        %2321 = vmatpush1.bf16.msra.mxu0 0
        %2322 = vmatprep.subr.bf16.mxu0 0
        %2323 = vmatpush1.bf16.msra.mxu0 0
        %2324 = vmatprep.subr.bf16.mxu0 0
        %2325 = vmatpush1.bf16.msra.mxu0 0
        %2326 = vmatprep.subr.bf16.mxu0 0
        %2327 = vmatpush1.bf16.msra.mxu0 0
        %2328 = vmatprep.subr.bf16.mxu0 0
        %2329 = vmatpush1.bf16.msra.mxu0 0
        %2330 = vmatprep.subr.bf16.mxu0 0
        %2331 = vmatpush1.bf16.msra.mxu0 0
        %2332 = vmatprep.subr.bf16.mxu0 0
        %2333 = vmatpush1.bf16.msra.mxu0 0
        %2334 = vmatprep.subr.bf16.mxu0 0
        %2335 = vmatpush1.bf16.msra.mxu0 0
        %2336 = vmatprep.subr.bf16.mxu0 0
        %2337 = vmatpush1.bf16.msra.mxu0 0
        %2338 = vmatprep.subr.bf16.mxu0 0
        %2339 = vmatpush1.bf16.msra.mxu0 0
        %2340 = vmatprep.subr.bf16.mxu0 0
        %2341 = vmatpush1.bf16.msra.mxu0 0
        %2342 = vmatprep.subr.bf16.mxu0 0
        %2343 = vmatpush1.bf16.msra.mxu0 0
        %2344 = vmatprep.subr.bf16.mxu0 0
        %2345 = vmatpush1.bf16.msra.mxu0 0
        %2346 = vmatprep.mubr.bf16.mxu0 0
        %2347 = vmatmul.mubr.bf16.gmra.mrb[0].mxu0 %v2312
        %v2348 = vpop.f32.mrb[0].mxu0
        %v2349 = vadd.f32 0.0, %v2348
        %v2350 = vpop.f32.mrb[0].mxu0
        %v2351 = vpop.f32.mrb[0].mxu0
        %v2352 = vpop.f32.mrb[0].mxu0
        %2353 = vdwg.mxu0
        %v2356 = vunpack.c.l.b16 %v2229
        %v2357 = vunpack.c.l.b16 %v2230
        %v2358 = vpack.c.b16 %v2357, %v2356
        %v2360 = vshrl.u32 %v2358, 16
        %v2362 = vshll.u32 %v2358, 16
        %v2364 = vrot.slane %v2362, 1
        %v2365 = vor.u32 %v2360, %v2364
        %v2367 = vsel %vm336, %v2365, 0
        %2369 = vmatprep.subr.bf16.mxu0 0
        %2370 = vmatpush1.bf16.msra.mxu0 %v2257
        %2371 = vmatprep.subr.bf16.mxu0 0
        %2372 = vmatpush1.bf16.msra.mxu0 0
        %2373 = vmatprep.subr.bf16.mxu0 0
        %2374 = vmatpush1.bf16.msra.mxu0 0
        %2375 = vmatprep.subr.bf16.mxu0 0
        %2376 = vmatpush1.bf16.msra.mxu0 0
        %2377 = vmatprep.subr.bf16.mxu0 0
        %2378 = vmatpush1.bf16.msra.mxu0 0
        %2379 = vmatprep.subr.bf16.mxu0 0
        %2380 = vmatpush1.bf16.msra.mxu0 0
        %2381 = vmatprep.subr.bf16.mxu0 0
        %2382 = vmatpush1.bf16.msra.mxu0 0
        %2383 = vmatprep.subr.bf16.mxu0 0
        %2384 = vmatpush1.bf16.msra.mxu0 0
        %2385 = vmatprep.subr.bf16.mxu0 0
        %2386 = vmatpush1.bf16.msra.mxu0 0
        %2387 = vmatprep.subr.bf16.mxu0 0
        %2388 = vmatpush1.bf16.msra.mxu0 0
        %2389 = vmatprep.subr.bf16.mxu0 0
        %2390 = vmatpush1.bf16.msra.mxu0 0
        %2391 = vmatprep.subr.bf16.mxu0 0
        %2392 = vmatpush1.bf16.msra.mxu0 0
        %2393 = vmatprep.subr.bf16.mxu0 0
        %2394 = vmatpush1.bf16.msra.mxu0 0
        %2395 = vmatprep.subr.bf16.mxu0 0
        %2396 = vmatpush1.bf16.msra.mxu0 0
        %2397 = vmatprep.subr.bf16.mxu0 0
        %2398 = vmatpush1.bf16.msra.mxu0 0
        %2399 = vmatprep.subr.bf16.mxu0 0
        %2400 = vmatpush1.bf16.msra.mxu0 0
        %2401 = vmatprep.mubr.bf16.mxu0 0
        %2402 = vmatmul.mubr.bf16.gmra.mrb[0].mxu0 %v2367
        %v2403 = vpop.f32.mrb[0].mxu0
        %v2404 = vadd.f32 0.0, %v2403
        %v2405 = vpop.f32.mrb[0].mxu0
        %v2406 = vpop.f32.mrb[0].mxu0
        %v2407 = vpop.f32.mrb[0].mxu0
        %2408 = vdwg.mxu0
        %v2411 = vunpack.c.l.b16 %v2231
        %v2412 = vunpack.c.l.b16 %v2232
        %v2413 = vpack.c.b16 %v2412, %v2411
        %v2415 = vshrl.u32 %v2413, 16
        %v2417 = vshll.u32 %v2413, 16
        %v2419 = vrot.slane %v2417, 1
        %v2420 = vor.u32 %v2415, %v2419
        %v2422 = vsel %vm336, %v2420, 0
        %2424 = vmatprep.subr.bf16.mxu0 0
        %2425 = vmatpush1.bf16.msra.mxu0 %v2257
        %2426 = vmatprep.subr.bf16.mxu0 0
        %2427 = vmatpush1.bf16.msra.mxu0 0
        %2428 = vmatprep.subr.bf16.mxu0 0
        %2429 = vmatpush1.bf16.msra.mxu0 0
        %2430 = vmatprep.subr.bf16.mxu0 0
        %2431 = vmatpush1.bf16.msra.mxu0 0
        %2432 = vmatprep.subr.bf16.mxu0 0
        %2433 = vmatpush1.bf16.msra.mxu0 0
        %2434 = vmatprep.subr.bf16.mxu0 0
        %2435 = vmatpush1.bf16.msra.mxu0 0
        %2436 = vmatprep.subr.bf16.mxu0 0
        %2437 = vmatpush1.bf16.msra.mxu0 0
        %2438 = vmatprep.subr.bf16.mxu0 0
        %2439 = vmatpush1.bf16.msra.mxu0 0
        %2440 = vmatprep.subr.bf16.mxu0 0
        %2441 = vmatpush1.bf16.msra.mxu0 0
        %2442 = vmatprep.subr.bf16.mxu0 0
        %2443 = vmatpush1.bf16.msra.mxu0 0
        %2444 = vmatprep.subr.bf16.mxu0 0
        %2445 = vmatpush1.bf16.msra.mxu0 0
        %2446 = vmatprep.subr.bf16.mxu0 0
        %2447 = vmatpush1.bf16.msra.mxu0 0
        %2448 = vmatprep.subr.bf16.mxu0 0
        %2449 = vmatpush1.bf16.msra.mxu0 0
        %2450 = vmatprep.subr.bf16.mxu0 0
        %2451 = vmatpush1.bf16.msra.mxu0 0
        %2452 = vmatprep.subr.bf16.mxu0 0
        %2453 = vmatpush1.bf16.msra.mxu0 0
        %2454 = vmatprep.subr.bf16.mxu0 0
        %2455 = vmatpush1.bf16.msra.mxu0 0
        %2456 = vmatprep.mubr.bf16.mxu0 0
        %2457 = vmatmul.mubr.bf16.gmra.mrb[0].mxu0 %v2422
        %v2458 = vpop.f32.mrb[0].mxu0
        %v2459 = vadd.f32 0.0, %v2458
        %v2460 = vpop.f32.mrb[0].mxu0
        %v2461 = vpop.f32.mrb[0].mxu0
        %v2462 = vpop.f32.mrb[0].mxu0
        %2463 = vdwg.mxu0
        %v2466 = vunpack.c.l.b16 %v2233
        %v2467 = vunpack.c.l.b16 %v2234
        %v2468 = vpack.c.b16 %v2467, %v2466
        %v2470 = vshrl.u32 %v2468, 16
        %v2472 = vshll.u32 %v2468, 16
        %v2474 = vrot.slane %v2472, 1
        %v2475 = vor.u32 %v2470, %v2474
        %v2477 = vsel %vm336, %v2475, 0
        %2479 = vmatprep.subr.bf16.mxu0 0
        %2480 = vmatpush1.bf16.msra.mxu0 %v2257
        %2481 = vmatprep.subr.bf16.mxu0 0
        %2482 = vmatpush1.bf16.msra.mxu0 0
        %2483 = vmatprep.subr.bf16.mxu0 0
        %2484 = vmatpush1.bf16.msra.mxu0 0
        %2485 = vmatprep.subr.bf16.mxu0 0
        %2486 = vmatpush1.bf16.msra.mxu0 0
        %2487 = vmatprep.subr.bf16.mxu0 0
        %2488 = vmatpush1.bf16.msra.mxu0 0
        %2489 = vmatprep.subr.bf16.mxu0 0
        %2490 = vmatpush1.bf16.msra.mxu0 0
        %2491 = vmatprep.subr.bf16.mxu0 0
        %2492 = vmatpush1.bf16.msra.mxu0 0
        %2493 = vmatprep.subr.bf16.mxu0 0
        %2494 = vmatpush1.bf16.msra.mxu0 0
        %2495 = vmatprep.subr.bf16.mxu0 0
        %2496 = vmatpush1.bf16.msra.mxu0 0
        %2497 = vmatprep.subr.bf16.mxu0 0
        %2498 = vmatpush1.bf16.msra.mxu0 0
        %2499 = vmatprep.subr.bf16.mxu0 0
        %2500 = vmatpush1.bf16.msra.mxu0 0
        %2501 = vmatprep.subr.bf16.mxu0 0
        %2502 = vmatpush1.bf16.msra.mxu0 0
        %2503 = vmatprep.subr.bf16.mxu0 0
        %2504 = vmatpush1.bf16.msra.mxu0 0
        %2505 = vmatprep.subr.bf16.mxu0 0
        %2506 = vmatpush1.bf16.msra.mxu0 0
        %2507 = vmatprep.subr.bf16.mxu0 0
        %2508 = vmatpush1.bf16.msra.mxu0 0
        %2509 = vmatprep.subr.bf16.mxu0 0
        %2510 = vmatpush1.bf16.msra.mxu0 0
        %2511 = vmatprep.mubr.bf16.mxu0 0
        %2512 = vmatmul.mubr.bf16.gmra.mrb[0].mxu0 %v2477
        %v2513 = vpop.f32.mrb[0].mxu0
        %v2514 = vadd.f32 0.0, %v2513
        %v2515 = vpop.f32.mrb[0].mxu0
        %v2516 = vpop.f32.mrb[0].mxu0
        %v2517 = vpop.f32.mrb[0].mxu0
        %2518 = vdwg.mxu0
        %v2521 = vunpack.c.l.b16 %v2235
        %v2522 = vunpack.c.l.b16 %v2236
        %v2523 = vpack.c.b16 %v2522, %v2521
        %v2525 = vshrl.u32 %v2523, 16
        %v2527 = vshll.u32 %v2523, 16
        %v2529 = vrot.slane %v2527, 1
        %v2530 = vor.u32 %v2525, %v2529
        %v2532 = vsel %vm336, %v2530, 0
        %2534 = vmatprep.subr.bf16.mxu0 0
        %2535 = vmatpush1.bf16.msra.mxu0 %v2257
        %2536 = vmatprep.subr.bf16.mxu0 0
        %2537 = vmatpush1.bf16.msra.mxu0 0
        %2538 = vmatprep.subr.bf16.mxu0 0
        %2539 = vmatpush1.bf16.msra.mxu0 0
        %2540 = vmatprep.subr.bf16.mxu0 0
        %2541 = vmatpush1.bf16.msra.mxu0 0
        %2542 = vmatprep.subr.bf16.mxu0 0
        %2543 = vmatpush1.bf16.msra.mxu0 0
        %2544 = vmatprep.subr.bf16.mxu0 0
        %2545 = vmatpush1.bf16.msra.mxu0 0
        %2546 = vmatprep.subr.bf16.mxu0 0
        %2547 = vmatpush1.bf16.msra.mxu0 0
        %2548 = vmatprep.subr.bf16.mxu0 0
        %2549 = vmatpush1.bf16.msra.mxu0 0
        %2550 = vmatprep.subr.bf16.mxu0 0
        %2551 = vmatpush1.bf16.msra.mxu0 0
        %2552 = vmatprep.subr.bf16.mxu0 0
        %2553 = vmatpush1.bf16.msra.mxu0 0
        %2554 = vmatprep.subr.bf16.mxu0 0
        %2555 = vmatpush1.bf16.msra.mxu0 0
        %2556 = vmatprep.subr.bf16.mxu0 0
        %2557 = vmatpush1.bf16.msra.mxu0 0
        %2558 = vmatprep.subr.bf16.mxu0 0
        %2559 = vmatpush1.bf16.msra.mxu0 0
        %2560 = vmatprep.subr.bf16.mxu0 0
        %2561 = vmatpush1.bf16.msra.mxu0 0
        %2562 = vmatprep.subr.bf16.mxu0 0
        %2563 = vmatpush1.bf16.msra.mxu0 0
        %2564 = vmatprep.subr.bf16.mxu0 0
        %2565 = vmatpush1.bf16.msra.mxu0 0
        %2566 = vmatprep.mubr.bf16.mxu0 0
        %2567 = vmatmul.mubr.bf16.gmra.mrb[0].mxu0 %v2532
        %v2568 = vpop.f32.mrb[0].mxu0
        %v2569 = vadd.f32 0.0, %v2568
        %v2570 = vpop.f32.mrb[0].mxu0
        %v2571 = vpop.f32.mrb[0].mxu0
        %v2572 = vpop.f32.mrb[0].mxu0
        %2573 = vdwg.mxu0
        %v2576 = vunpack.c.l.b16 %v2237
        %v2577 = vunpack.c.l.b16 %v2238
        %v2578 = vpack.c.b16 %v2577, %v2576
        %v2580 = vshrl.u32 %v2578, 16
        %v2582 = vshll.u32 %v2578, 16
        %v2584 = vrot.slane %v2582, 1
        %v2585 = vor.u32 %v2580, %v2584
        %v2587 = vsel %vm336, %v2585, 0
        %2589 = vmatprep.subr.bf16.mxu0 0
        %2590 = vmatpush1.bf16.msra.mxu0 %v2257
        %2591 = vmatprep.subr.bf16.mxu0 0
        %2592 = vmatpush1.bf16.msra.mxu0 0
        %2593 = vmatprep.subr.bf16.mxu0 0
        %2594 = vmatpush1.bf16.msra.mxu0 0
        %2595 = vmatprep.subr.bf16.mxu0 0
        %2596 = vmatpush1.bf16.msra.mxu0 0
        %2597 = vmatprep.subr.bf16.mxu0 0
        %2598 = vmatpush1.bf16.msra.mxu0 0
        %2599 = vmatprep.subr.bf16.mxu0 0
        %2600 = vmatpush1.bf16.msra.mxu0 0
        %2601 = vmatprep.subr.bf16.mxu0 0
        %2602 = vmatpush1.bf16.msra.mxu0 0
        %2603 = vmatprep.subr.bf16.mxu0 0
        %2604 = vmatpush1.bf16.msra.mxu0 0
        %2605 = vmatprep.subr.bf16.mxu0 0
        %2606 = vmatpush1.bf16.msra.mxu0 0
        %2607 = vmatprep.subr.bf16.mxu0 0
        %2608 = vmatpush1.bf16.msra.mxu0 0
        %2609 = vmatprep.subr.bf16.mxu0 0
        %2610 = vmatpush1.bf16.msra.mxu0 0
        %2611 = vmatprep.subr.bf16.mxu0 0
        %2612 = vmatpush1.bf16.msra.mxu0 0
        %2613 = vmatprep.subr.bf16.mxu0 0
        %2614 = vmatpush1.bf16.msra.mxu0 0
        %2615 = vmatprep.subr.bf16.mxu0 0
        %2616 = vmatpush1.bf16.msra.mxu0 0
        %2617 = vmatprep.subr.bf16.mxu0 0
        %2618 = vmatpush1.bf16.msra.mxu0 0
        %2619 = vmatprep.subr.bf16.mxu0 0
        %2620 = vmatpush1.bf16.msra.mxu0 0
        %2621 = vmatprep.mubr.bf16.mxu0 0
        %2622 = vmatmul.mubr.bf16.gmra.mrb[0].mxu0 %v2587
        %v2623 = vpop.f32.mrb[0].mxu0
        %v2624 = vadd.f32 0.0, %v2623
        %v2625 = vpop.f32.mrb[0].mxu0
        %v2626 = vpop.f32.mrb[0].mxu0
        %v2627 = vpop.f32.mrb[0].mxu0
        %2628 = vdwg.mxu0
        %v2631 = vunpack.c.l.b16 %v2239
        %v2632 = vunpack.c.l.b16 %v2240
        %v2633 = vpack.c.b16 %v2632, %v2631
        %v2635 = vshrl.u32 %v2633, 16
        %v2637 = vshll.u32 %v2633, 16
        %v2639 = vrot.slane %v2637, 1
        %v2640 = vor.u32 %v2635, %v2639
        %v2642 = vsel %vm336, %v2640, 0
        %2644 = vmatprep.subr.bf16.mxu0 0
        %2645 = vmatpush1.bf16.msra.mxu0 %v2257
        %2646 = vmatprep.subr.bf16.mxu0 0
        %2647 = vmatpush1.bf16.msra.mxu0 0
        %2648 = vmatprep.subr.bf16.mxu0 0
        %2649 = vmatpush1.bf16.msra.mxu0 0
        %2650 = vmatprep.subr.bf16.mxu0 0
        %2651 = vmatpush1.bf16.msra.mxu0 0
        %2652 = vmatprep.subr.bf16.mxu0 0
        %2653 = vmatpush1.bf16.msra.mxu0 0
        %2654 = vmatprep.subr.bf16.mxu0 0
        %2655 = vmatpush1.bf16.msra.mxu0 0
        %2656 = vmatprep.subr.bf16.mxu0 0
        %2657 = vmatpush1.bf16.msra.mxu0 0
        %2658 = vmatprep.subr.bf16.mxu0 0
        %2659 = vmatpush1.bf16.msra.mxu0 0
        %2660 = vmatprep.subr.bf16.mxu0 0
        %2661 = vmatpush1.bf16.msra.mxu0 0
        %2662 = vmatprep.subr.bf16.mxu0 0
        %2663 = vmatpush1.bf16.msra.mxu0 0
        %2664 = vmatprep.subr.bf16.mxu0 0
        %2665 = vmatpush1.bf16.msra.mxu0 0
        %2666 = vmatprep.subr.bf16.mxu0 0
        %2667 = vmatpush1.bf16.msra.mxu0 0
        %2668 = vmatprep.subr.bf16.mxu0 0
        %2669 = vmatpush1.bf16.msra.mxu0 0
        %2670 = vmatprep.subr.bf16.mxu0 0
        %2671 = vmatpush1.bf16.msra.mxu0 0
        %2672 = vmatprep.subr.bf16.mxu0 0
        %2673 = vmatpush1.bf16.msra.mxu0 0
        %2674 = vmatprep.subr.bf16.mxu0 0
        %2675 = vmatpush1.bf16.msra.mxu0 0
        %2676 = vmatprep.mubr.bf16.mxu0 0
        %2677 = vmatmul.mubr.bf16.gmra.mrb[0].mxu0 %v2642
        %v2678 = vpop.f32.mrb[0].mxu0
        %v2679 = vadd.f32 0.0, %v2678
        %v2680 = vpop.f32.mrb[0].mxu0
        %v2681 = vpop.f32.mrb[0].mxu0
        %v2682 = vpop.f32.mrb[0].mxu0
        %2683 = vdwg.mxu0
        %v2684 = vadd.f32 %v2217, %v2294
        %v2685 = vadd.f32 %v2218, %v2349
        %v2686 = vadd.f32 %v2219, %v2404
        %v2687 = vadd.f32 %v2220, %v2459
        %v2688 = vadd.f32 %v2221, %v2514
        %v2689 = vadd.f32 %v2222, %v2569
        %v2690 = vadd.f32 %v2223, %v2624
        %v2691 = vadd.f32 %v2224, %v2679
        %s2692 = scalar_lea.vmem %s294, 8
        %v2693 = vld [vmem:[%s2692] sm:$0xf]
        %v2694 = vld [vmem:[%s2692 + $0x8] sm:$0xf]
        %v2695 = vld [vmem:[%s2692 + $0x10] sm:$0xf]
        %v2696 = vld [vmem:[%s2692 + $0x18] sm:$0xf]
        %v2697 = vld [vmem:[%s2692 + $0x20] sm:$0xf]
        %v2698 = vld [vmem:[%s2692 + $0x28] sm:$0xf]
        %v2699 = vld [vmem:[%s2692 + $0x30] sm:$0xf]
        %v2700 = vld [vmem:[%s2692 + $0x38] sm:$0xf]
        %v2702 = vsel %vm336, %v2693, 0
        %v2705 = vsel %vm340, %v317, 0
        %2707 = vmatprep.subr.bf16.mxu0 0
        %2708 = vmatpush1.bf16.msra.mxu0 %v2705
        %2709 = vmatprep.subr.bf16.mxu0 0
        %2710 = vmatpush1.bf16.msra.mxu0 0
        %2711 = vmatprep.subr.bf16.mxu0 0
        %2712 = vmatpush1.bf16.msra.mxu0 0
        %2713 = vmatprep.subr.bf16.mxu0 0
        %2714 = vmatpush1.bf16.msra.mxu0 0
        %2715 = vmatprep.subr.bf16.mxu0 0
        %2716 = vmatpush1.bf16.msra.mxu0 0
        %2717 = vmatprep.subr.bf16.mxu0 0
        %2718 = vmatpush1.bf16.msra.mxu0 0
        %2719 = vmatprep.subr.bf16.mxu0 0
        %2720 = vmatpush1.bf16.msra.mxu0 0
        %2721 = vmatprep.subr.bf16.mxu0 0
        %2722 = vmatpush1.bf16.msra.mxu0 0
        %2723 = vmatprep.subr.bf16.mxu0 0
        %2724 = vmatpush1.bf16.msra.mxu0 0
        %2725 = vmatprep.subr.bf16.mxu0 0
        %2726 = vmatpush1.bf16.msra.mxu0 0
        %2727 = vmatprep.subr.bf16.mxu0 0
        %2728 = vmatpush1.bf16.msra.mxu0 0
        %2729 = vmatprep.subr.bf16.mxu0 0
        %2730 = vmatpush1.bf16.msra.mxu0 0
        %2731 = vmatprep.subr.bf16.mxu0 0
        %2732 = vmatpush1.bf16.msra.mxu0 0
        %2733 = vmatprep.subr.bf16.mxu0 0
        %2734 = vmatpush1.bf16.msra.mxu0 0
        %2735 = vmatprep.subr.bf16.mxu0 0
        %2736 = vmatpush1.bf16.msra.mxu0 0
        %2737 = vmatprep.subr.bf16.mxu0 0
        %2738 = vmatpush1.bf16.msra.mxu0 0
        %2739 = vmatprep.mubr.bf16.mxu0 0
        %2740 = vmatmul.mubr.bf16.gmra.mrb[0].mxu0 %v2702
        %v2741 = vpop.f32.mrb[0].mxu0
        %v2742 = vadd.f32 0.0, %v2741
        %v2743 = vpop.f32.mrb[0].mxu0
        %v2744 = vpop.f32.mrb[0].mxu0
        %v2745 = vpop.f32.mrb[0].mxu0
        %2746 = vdwg.mxu0
        %v2748 = vsel %vm336, %v2694, 0
        %2750 = vmatprep.subr.bf16.mxu0 0
        %2751 = vmatpush1.bf16.msra.mxu0 %v2705
        %2752 = vmatprep.subr.bf16.mxu0 0
        %2753 = vmatpush1.bf16.msra.mxu0 0
        %2754 = vmatprep.subr.bf16.mxu0 0
        %2755 = vmatpush1.bf16.msra.mxu0 0
        %2756 = vmatprep.subr.bf16.mxu0 0
        %2757 = vmatpush1.bf16.msra.mxu0 0
        %2758 = vmatprep.subr.bf16.mxu0 0
        %2759 = vmatpush1.bf16.msra.mxu0 0
        %2760 = vmatprep.subr.bf16.mxu0 0
        %2761 = vmatpush1.bf16.msra.mxu0 0
        %2762 = vmatprep.subr.bf16.mxu0 0
        %2763 = vmatpush1.bf16.msra.mxu0 0
        %2764 = vmatprep.subr.bf16.mxu0 0
        %2765 = vmatpush1.bf16.msra.mxu0 0
        %2766 = vmatprep.subr.bf16.mxu0 0
        %2767 = vmatpush1.bf16.msra.mxu0 0
        %2768 = vmatprep.subr.bf16.mxu0 0
        %2769 = vmatpush1.bf16.msra.mxu0 0
        %2770 = vmatprep.subr.bf16.mxu0 0
        %2771 = vmatpush1.bf16.msra.mxu0 0
        %2772 = vmatprep.subr.bf16.mxu0 0
        %2773 = vmatpush1.bf16.msra.mxu0 0
        %2774 = vmatprep.subr.bf16.mxu0 0
        %2775 = vmatpush1.bf16.msra.mxu0 0
        %2776 = vmatprep.subr.bf16.mxu0 0
        %2777 = vmatpush1.bf16.msra.mxu0 0
        %2778 = vmatprep.subr.bf16.mxu0 0
        %2779 = vmatpush1.bf16.msra.mxu0 0
        %2780 = vmatprep.subr.bf16.mxu0 0
        %2781 = vmatpush1.bf16.msra.mxu0 0
        %2782 = vmatprep.mubr.bf16.mxu0 0
        %2783 = vmatmul.mubr.bf16.gmra.mrb[0].mxu0 %v2748
        %v2784 = vpop.f32.mrb[0].mxu0
        %v2785 = vadd.f32 0.0, %v2784
        %v2786 = vpop.f32.mrb[0].mxu0
        %v2787 = vpop.f32.mrb[0].mxu0
        %v2788 = vpop.f32.mrb[0].mxu0
        %2789 = vdwg.mxu0
        %v2791 = vsel %vm336, %v2695, 0
        %2793 = vmatprep.subr.bf16.mxu0 0
        %2794 = vmatpush1.bf16.msra.mxu0 %v2705
        %2795 = vmatprep.subr.bf16.mxu0 0
        %2796 = vmatpush1.bf16.msra.mxu0 0
        %2797 = vmatprep.subr.bf16.mxu0 0
        %2798 = vmatpush1.bf16.msra.mxu0 0
        %2799 = vmatprep.subr.bf16.mxu0 0
        %2800 = vmatpush1.bf16.msra.mxu0 0
        %2801 = vmatprep.subr.bf16.mxu0 0
        %2802 = vmatpush1.bf16.msra.mxu0 0
        %2803 = vmatprep.subr.bf16.mxu0 0
        %2804 = vmatpush1.bf16.msra.mxu0 0
        %2805 = vmatprep.subr.bf16.mxu0 0
        %2806 = vmatpush1.bf16.msra.mxu0 0
        %2807 = vmatprep.subr.bf16.mxu0 0
        %2808 = vmatpush1.bf16.msra.mxu0 0
        %2809 = vmatprep.subr.bf16.mxu0 0
        %2810 = vmatpush1.bf16.msra.mxu0 0
        %2811 = vmatprep.subr.bf16.mxu0 0
        %2812 = vmatpush1.bf16.msra.mxu0 0
        %2813 = vmatprep.subr.bf16.mxu0 0
        %2814 = vmatpush1.bf16.msra.mxu0 0
        %2815 = vmatprep.subr.bf16.mxu0 0
        %2816 = vmatpush1.bf16.msra.mxu0 0
        %2817 = vmatprep.subr.bf16.mxu0 0
        %2818 = vmatpush1.bf16.msra.mxu0 0
        %2819 = vmatprep.subr.bf16.mxu0 0
        %2820 = vmatpush1.bf16.msra.mxu0 0
        %2821 = vmatprep.subr.bf16.mxu0 0
        %2822 = vmatpush1.bf16.msra.mxu0 0
        %2823 = vmatprep.subr.bf16.mxu0 0
        %2824 = vmatpush1.bf16.msra.mxu0 0
        %2825 = vmatprep.mubr.bf16.mxu0 0
        %2826 = vmatmul.mubr.bf16.gmra.mrb[0].mxu0 %v2791
        %v2827 = vpop.f32.mrb[0].mxu0
        %v2828 = vadd.f32 0.0, %v2827
        %v2829 = vpop.f32.mrb[0].mxu0
        %v2830 = vpop.f32.mrb[0].mxu0
        %v2831 = vpop.f32.mrb[0].mxu0
        %2832 = vdwg.mxu0
        %v2834 = vsel %vm336, %v2696, 0
        %2836 = vmatprep.subr.bf16.mxu0 0
        %2837 = vmatpush1.bf16.msra.mxu0 %v2705
        %2838 = vmatprep.subr.bf16.mxu0 0
        %2839 = vmatpush1.bf16.msra.mxu0 0
        %2840 = vmatprep.subr.bf16.mxu0 0
        %2841 = vmatpush1.bf16.msra.mxu0 0
        %2842 = vmatprep.subr.bf16.mxu0 0
        %2843 = vmatpush1.bf16.msra.mxu0 0
        %2844 = vmatprep.subr.bf16.mxu0 0
        %2845 = vmatpush1.bf16.msra.mxu0 0
        %2846 = vmatprep.subr.bf16.mxu0 0
        %2847 = vmatpush1.bf16.msra.mxu0 0
        %2848 = vmatprep.subr.bf16.mxu0 0
        %2849 = vmatpush1.bf16.msra.mxu0 0
        %2850 = vmatprep.subr.bf16.mxu0 0
        %2851 = vmatpush1.bf16.msra.mxu0 0
        %2852 = vmatprep.subr.bf16.mxu0 0
        %2853 = vmatpush1.bf16.msra.mxu0 0
        %2854 = vmatprep.subr.bf16.mxu0 0
        %2855 = vmatpush1.bf16.msra.mxu0 0
        %2856 = vmatprep.subr.bf16.mxu0 0
        %2857 = vmatpush1.bf16.msra.mxu0 0
        %2858 = vmatprep.subr.bf16.mxu0 0
        %2859 = vmatpush1.bf16.msra.mxu0 0
        %2860 = vmatprep.subr.bf16.mxu0 0
        %2861 = vmatpush1.bf16.msra.mxu0 0
        %2862 = vmatprep.subr.bf16.mxu0 0
        %2863 = vmatpush1.bf16.msra.mxu0 0
        %2864 = vmatprep.subr.bf16.mxu0 0
        %2865 = vmatpush1.bf16.msra.mxu0 0
        %2866 = vmatprep.subr.bf16.mxu0 0
        %2867 = vmatpush1.bf16.msra.mxu0 0
        %2868 = vmatprep.mubr.bf16.mxu0 0
        %2869 = vmatmul.mubr.bf16.gmra.mrb[0].mxu0 %v2834
        %v2870 = vpop.f32.mrb[0].mxu0
        %v2871 = vadd.f32 0.0, %v2870
        %v2872 = vpop.f32.mrb[0].mxu0
        %v2873 = vpop.f32.mrb[0].mxu0
        %v2874 = vpop.f32.mrb[0].mxu0
        %2875 = vdwg.mxu0
        %v2877 = vsel %vm336, %v2697, 0
        %2879 = vmatprep.subr.bf16.mxu0 0
        %2880 = vmatpush1.bf16.msra.mxu0 %v2705
        %2881 = vmatprep.subr.bf16.mxu0 0
        %2882 = vmatpush1.bf16.msra.mxu0 0
        %2883 = vmatprep.subr.bf16.mxu0 0
        %2884 = vmatpush1.bf16.msra.mxu0 0
        %2885 = vmatprep.subr.bf16.mxu0 0
        %2886 = vmatpush1.bf16.msra.mxu0 0
        %2887 = vmatprep.subr.bf16.mxu0 0
        %2888 = vmatpush1.bf16.msra.mxu0 0
        %2889 = vmatprep.subr.bf16.mxu0 0
        %2890 = vmatpush1.bf16.msra.mxu0 0
        %2891 = vmatprep.subr.bf16.mxu0 0
        %2892 = vmatpush1.bf16.msra.mxu0 0
        %2893 = vmatprep.subr.bf16.mxu0 0
        %2894 = vmatpush1.bf16.msra.mxu0 0
        %2895 = vmatprep.subr.bf16.mxu0 0
        %2896 = vmatpush1.bf16.msra.mxu0 0
        %2897 = vmatprep.subr.bf16.mxu0 0
        %2898 = vmatpush1.bf16.msra.mxu0 0
        %2899 = vmatprep.subr.bf16.mxu0 0
        %2900 = vmatpush1.bf16.msra.mxu0 0
        %2901 = vmatprep.subr.bf16.mxu0 0
        %2902 = vmatpush1.bf16.msra.mxu0 0
        %2903 = vmatprep.subr.bf16.mxu0 0
        %2904 = vmatpush1.bf16.msra.mxu0 0
        %2905 = vmatprep.subr.bf16.mxu0 0
        %2906 = vmatpush1.bf16.msra.mxu0 0
        %2907 = vmatprep.subr.bf16.mxu0 0
        %2908 = vmatpush1.bf16.msra.mxu0 0
        %2909 = vmatprep.subr.bf16.mxu0 0
        %2910 = vmatpush1.bf16.msra.mxu0 0
        %2911 = vmatprep.mubr.bf16.mxu0 0
        %2912 = vmatmul.mubr.bf16.gmra.mrb[0].mxu0 %v2877
        %v2913 = vpop.f32.mrb[0].mxu0
        %v2914 = vadd.f32 0.0, %v2913
        %v2915 = vpop.f32.mrb[0].mxu0
        %v2916 = vpop.f32.mrb[0].mxu0
        %v2917 = vpop.f32.mrb[0].mxu0
        %2918 = vdwg.mxu0
        %v2920 = vsel %vm336, %v2698, 0
        %2922 = vmatprep.subr.bf16.mxu0 0
        %2923 = vmatpush1.bf16.msra.mxu0 %v2705
        %2924 = vmatprep.subr.bf16.mxu0 0
        %2925 = vmatpush1.bf16.msra.mxu0 0
        %2926 = vmatprep.subr.bf16.mxu0 0
        %2927 = vmatpush1.bf16.msra.mxu0 0
        %2928 = vmatprep.subr.bf16.mxu0 0
        %2929 = vmatpush1.bf16.msra.mxu0 0
        %2930 = vmatprep.subr.bf16.mxu0 0
        %2931 = vmatpush1.bf16.msra.mxu0 0
        %2932 = vmatprep.subr.bf16.mxu0 0
        %2933 = vmatpush1.bf16.msra.mxu0 0
        %2934 = vmatprep.subr.bf16.mxu0 0
        %2935 = vmatpush1.bf16.msra.mxu0 0
        %2936 = vmatprep.subr.bf16.mxu0 0
        %2937 = vmatpush1.bf16.msra.mxu0 0
        %2938 = vmatprep.subr.bf16.mxu0 0
        %2939 = vmatpush1.bf16.msra.mxu0 0
        %2940 = vmatprep.subr.bf16.mxu0 0
        %2941 = vmatpush1.bf16.msra.mxu0 0
        %2942 = vmatprep.subr.bf16.mxu0 0
        %2943 = vmatpush1.bf16.msra.mxu0 0
        %2944 = vmatprep.subr.bf16.mxu0 0
        %2945 = vmatpush1.bf16.msra.mxu0 0
        %2946 = vmatprep.subr.bf16.mxu0 0
        %2947 = vmatpush1.bf16.msra.mxu0 0
        %2948 = vmatprep.subr.bf16.mxu0 0
        %2949 = vmatpush1.bf16.msra.mxu0 0
        %2950 = vmatprep.subr.bf16.mxu0 0
        %2951 = vmatpush1.bf16.msra.mxu0 0
        %2952 = vmatprep.subr.bf16.mxu0 0
        %2953 = vmatpush1.bf16.msra.mxu0 0
        %2954 = vmatprep.mubr.bf16.mxu0 0
        %2955 = vmatmul.mubr.bf16.gmra.mrb[0].mxu0 %v2920
        %v2956 = vpop.f32.mrb[0].mxu0
        %v2957 = vadd.f32 0.0, %v2956
        %v2958 = vpop.f32.mrb[0].mxu0
        %v2959 = vpop.f32.mrb[0].mxu0
        %v2960 = vpop.f32.mrb[0].mxu0
        %2961 = vdwg.mxu0
        %v2963 = vsel %vm336, %v2699, 0
        %2965 = vmatprep.subr.bf16.mxu0 0
        %2966 = vmatpush1.bf16.msra.mxu0 %v2705
        %2967 = vmatprep.subr.bf16.mxu0 0
        %2968 = vmatpush1.bf16.msra.mxu0 0
        %2969 = vmatprep.subr.bf16.mxu0 0
        %2970 = vmatpush1.bf16.msra.mxu0 0
        %2971 = vmatprep.subr.bf16.mxu0 0
        %2972 = vmatpush1.bf16.msra.mxu0 0
        %2973 = vmatprep.subr.bf16.mxu0 0
        %2974 = vmatpush1.bf16.msra.mxu0 0
        %2975 = vmatprep.subr.bf16.mxu0 0
        %2976 = vmatpush1.bf16.msra.mxu0 0
        %2977 = vmatprep.subr.bf16.mxu0 0
        %2978 = vmatpush1.bf16.msra.mxu0 0
        %2979 = vmatprep.subr.bf16.mxu0 0
        %2980 = vmatpush1.bf16.msra.mxu0 0
        %2981 = vmatprep.subr.bf16.mxu0 0
        %2982 = vmatpush1.bf16.msra.mxu0 0
        %2983 = vmatprep.subr.bf16.mxu0 0
        %2984 = vmatpush1.bf16.msra.mxu0 0
        %2985 = vmatprep.subr.bf16.mxu0 0
        %2986 = vmatpush1.bf16.msra.mxu0 0
        %2987 = vmatprep.subr.bf16.mxu0 0
        %2988 = vmatpush1.bf16.msra.mxu0 0
        %2989 = vmatprep.subr.bf16.mxu0 0
        %2990 = vmatpush1.bf16.msra.mxu0 0
        %2991 = vmatprep.subr.bf16.mxu0 0
        %2992 = vmatpush1.bf16.msra.mxu0 0
        %2993 = vmatprep.subr.bf16.mxu0 0
        %2994 = vmatpush1.bf16.msra.mxu0 0
        %2995 = vmatprep.subr.bf16.mxu0 0
        %2996 = vmatpush1.bf16.msra.mxu0 0
        %2997 = vmatprep.mubr.bf16.mxu0 0
        %2998 = vmatmul.mubr.bf16.gmra.mrb[0].mxu0 %v2963
        %v2999 = vpop.f32.mrb[0].mxu0
        %v3000 = vadd.f32 0.0, %v2999
        %v3001 = vpop.f32.mrb[0].mxu0
        %v3002 = vpop.f32.mrb[0].mxu0
        %v3003 = vpop.f32.mrb[0].mxu0
        %3004 = vdwg.mxu0
        %v3006 = vsel %vm336, %v2700, 0
        %3008 = vmatprep.subr.bf16.mxu0 0
        %3009 = vmatpush1.bf16.msra.mxu0 %v2705
        %3010 = vmatprep.subr.bf16.mxu0 0
        %3011 = vmatpush1.bf16.msra.mxu0 0
        %3012 = vmatprep.subr.bf16.mxu0 0
        %3013 = vmatpush1.bf16.msra.mxu0 0
        %3014 = vmatprep.subr.bf16.mxu0 0
        %3015 = vmatpush1.bf16.msra.mxu0 0
        %3016 = vmatprep.subr.bf16.mxu0 0
        %3017 = vmatpush1.bf16.msra.mxu0 0
        %3018 = vmatprep.subr.bf16.mxu0 0
        %3019 = vmatpush1.bf16.msra.mxu0 0
        %3020 = vmatprep.subr.bf16.mxu0 0
        %3021 = vmatpush1.bf16.msra.mxu0 0
        %3022 = vmatprep.subr.bf16.mxu0 0
        %3023 = vmatpush1.bf16.msra.mxu0 0
        %3024 = vmatprep.subr.bf16.mxu0 0
        %3025 = vmatpush1.bf16.msra.mxu0 0
        %3026 = vmatprep.subr.bf16.mxu0 0
        %3027 = vmatpush1.bf16.msra.mxu0 0
        %3028 = vmatprep.subr.bf16.mxu0 0
        %3029 = vmatpush1.bf16.msra.mxu0 0
        %3030 = vmatprep.subr.bf16.mxu0 0
        %3031 = vmatpush1.bf16.msra.mxu0 0
        %3032 = vmatprep.subr.bf16.mxu0 0
        %3033 = vmatpush1.bf16.msra.mxu0 0
        %3034 = vmatprep.subr.bf16.mxu0 0
        %3035 = vmatpush1.bf16.msra.mxu0 0
        %3036 = vmatprep.subr.bf16.mxu0 0
        %3037 = vmatpush1.bf16.msra.mxu0 0
        %3038 = vmatprep.subr.bf16.mxu0 0
        %3039 = vmatpush1.bf16.msra.mxu0 0
        %3040 = vmatprep.mubr.bf16.mxu0 0
        %3041 = vmatmul.mubr.bf16.gmra.mrb[0].mxu0 %v3006
        %v3042 = vpop.f32.mrb[0].mxu0
        %v3043 = vadd.f32 0.0, %v3042
        %v3044 = vpop.f32.mrb[0].mxu0
        %v3045 = vpop.f32.mrb[0].mxu0
        %v3046 = vpop.f32.mrb[0].mxu0
        %3047 = vdwg.mxu0
        %v3048 = vadd.f32 %v2684, %v2742
        %v3049 = vadd.f32 %v2685, %v2785
        %v3050 = vadd.f32 %v2686, %v2828
        %v3051 = vadd.f32 %v2687, %v2871
        %v3052 = vadd.f32 %v2688, %v2914
        %v3053 = vadd.f32 %v2689, %v2957
        %v3054 = vadd.f32 %v2690, %v3000
        %v3055 = vadd.f32 %v2691, %v3043
        %s3056 = scalar_lea.vmem %s299, 8
        %v3057 = vld [vmem:[%s3056] sm:$0xf]
        %v3058 = vld [vmem:[%s3056 + $0x8] sm:$0xf]
        %v3059 = vld [vmem:[%s3056 + $0x10] sm:$0xf]
        %v3060 = vld [vmem:[%s3056 + $0x18] sm:$0xf]
        %v3061 = vld [vmem:[%s3056 + $0x20] sm:$0xf]
        %v3062 = vld [vmem:[%s3056 + $0x28] sm:$0xf]
        %v3063 = vld [vmem:[%s3056 + $0x30] sm:$0xf]
        %v3064 = vld [vmem:[%s3056 + $0x38] sm:$0xf]
        %v3066 = vsel %vm336, %v3057, 0
        %v3069 = vsel %vm340, %v318, 0
        %3071 = vmatprep.subr.bf16.mxu0 0
        %3072 = vmatpush1.bf16.msra.mxu0 %v3069
        %3073 = vmatprep.subr.bf16.mxu0 0
        %3074 = vmatpush1.bf16.msra.mxu0 0
        %3075 = vmatprep.subr.bf16.mxu0 0
        %3076 = vmatpush1.bf16.msra.mxu0 0
        %3077 = vmatprep.subr.bf16.mxu0 0
        %3078 = vmatpush1.bf16.msra.mxu0 0
        %3079 = vmatprep.subr.bf16.mxu0 0
        %3080 = vmatpush1.bf16.msra.mxu0 0
        %3081 = vmatprep.subr.bf16.mxu0 0
        %3082 = vmatpush1.bf16.msra.mxu0 0
        %3083 = vmatprep.subr.bf16.mxu0 0
        %3084 = vmatpush1.bf16.msra.mxu0 0
        %3085 = vmatprep.subr.bf16.mxu0 0
        %3086 = vmatpush1.bf16.msra.mxu0 0
        %3087 = vmatprep.subr.bf16.mxu0 0
        %3088 = vmatpush1.bf16.msra.mxu0 0
        %3089 = vmatprep.subr.bf16.mxu0 0
        %3090 = vmatpush1.bf16.msra.mxu0 0
        %3091 = vmatprep.subr.bf16.mxu0 0
        %3092 = vmatpush1.bf16.msra.mxu0 0
        %3093 = vmatprep.subr.bf16.mxu0 0
        %3094 = vmatpush1.bf16.msra.mxu0 0
        %3095 = vmatprep.subr.bf16.mxu0 0
        %3096 = vmatpush1.bf16.msra.mxu0 0
        %3097 = vmatprep.subr.bf16.mxu0 0
        %3098 = vmatpush1.bf16.msra.mxu0 0
        %3099 = vmatprep.subr.bf16.mxu0 0
        %3100 = vmatpush1.bf16.msra.mxu0 0
        %3101 = vmatprep.subr.bf16.mxu0 0
        %3102 = vmatpush1.bf16.msra.mxu0 0
        %3103 = vmatprep.mubr.bf16.mxu0 0
        %3104 = vmatmul.mubr.bf16.gmra.mrb[0].mxu0 %v3066
        %v3105 = vpop.f32.mrb[0].mxu0
        %v3106 = vadd.f32 0.0, %v3105
        %v3107 = vpop.f32.mrb[0].mxu0
        %v3108 = vpop.f32.mrb[0].mxu0
        %v3109 = vpop.f32.mrb[0].mxu0
        %3110 = vdwg.mxu0
        %v3112 = vsel %vm336, %v3058, 0
        %3114 = vmatprep.subr.bf16.mxu0 0
        %3115 = vmatpush1.bf16.msra.mxu0 %v3069
        %3116 = vmatprep.subr.bf16.mxu0 0
        %3117 = vmatpush1.bf16.msra.mxu0 0
        %3118 = vmatprep.subr.bf16.mxu0 0
        %3119 = vmatpush1.bf16.msra.mxu0 0
        %3120 = vmatprep.subr.bf16.mxu0 0
        %3121 = vmatpush1.bf16.msra.mxu0 0
        %3122 = vmatprep.subr.bf16.mxu0 0
        %3123 = vmatpush1.bf16.msra.mxu0 0
        %3124 = vmatprep.subr.bf16.mxu0 0
        %3125 = vmatpush1.bf16.msra.mxu0 0
        %3126 = vmatprep.subr.bf16.mxu0 0
        %3127 = vmatpush1.bf16.msra.mxu0 0
        %3128 = vmatprep.subr.bf16.mxu0 0
        %3129 = vmatpush1.bf16.msra.mxu0 0
        %3130 = vmatprep.subr.bf16.mxu0 0
        %3131 = vmatpush1.bf16.msra.mxu0 0
        %3132 = vmatprep.subr.bf16.mxu0 0
        %3133 = vmatpush1.bf16.msra.mxu0 0
        %3134 = vmatprep.subr.bf16.mxu0 0
        %3135 = vmatpush1.bf16.msra.mxu0 0
        %3136 = vmatprep.subr.bf16.mxu0 0
        %3137 = vmatpush1.bf16.msra.mxu0 0
        %3138 = vmatprep.subr.bf16.mxu0 0
        %3139 = vmatpush1.bf16.msra.mxu0 0
        %3140 = vmatprep.subr.bf16.mxu0 0
        %3141 = vmatpush1.bf16.msra.mxu0 0
        %3142 = vmatprep.subr.bf16.mxu0 0
        %3143 = vmatpush1.bf16.msra.mxu0 0
        %3144 = vmatprep.subr.bf16.mxu0 0
        %3145 = vmatpush1.bf16.msra.mxu0 0
        %3146 = vmatprep.mubr.bf16.mxu0 0
        %3147 = vmatmul.mubr.bf16.gmra.mrb[0].mxu0 %v3112
        %v3148 = vpop.f32.mrb[0].mxu0
        %v3149 = vadd.f32 0.0, %v3148
        %v3150 = vpop.f32.mrb[0].mxu0
        %v3151 = vpop.f32.mrb[0].mxu0
        %v3152 = vpop.f32.mrb[0].mxu0
        %3153 = vdwg.mxu0
        %v3155 = vsel %vm336, %v3059, 0
        %3157 = vmatprep.subr.bf16.mxu0 0
        %3158 = vmatpush1.bf16.msra.mxu0 %v3069
        %3159 = vmatprep.subr.bf16.mxu0 0
        %3160 = vmatpush1.bf16.msra.mxu0 0
        %3161 = vmatprep.subr.bf16.mxu0 0
        %3162 = vmatpush1.bf16.msra.mxu0 0
        %3163 = vmatprep.subr.bf16.mxu0 0
        %3164 = vmatpush1.bf16.msra.mxu0 0
        %3165 = vmatprep.subr.bf16.mxu0 0
        %3166 = vmatpush1.bf16.msra.mxu0 0
        %3167 = vmatprep.subr.bf16.mxu0 0
        %3168 = vmatpush1.bf16.msra.mxu0 0
        %3169 = vmatprep.subr.bf16.mxu0 0
        %3170 = vmatpush1.bf16.msra.mxu0 0
        %3171 = vmatprep.subr.bf16.mxu0 0
        %3172 = vmatpush1.bf16.msra.mxu0 0
        %3173 = vmatprep.subr.bf16.mxu0 0
        %3174 = vmatpush1.bf16.msra.mxu0 0
        %3175 = vmatprep.subr.bf16.mxu0 0
        %3176 = vmatpush1.bf16.msra.mxu0 0
        %3177 = vmatprep.subr.bf16.mxu0 0
        %3178 = vmatpush1.bf16.msra.mxu0 0
        %3179 = vmatprep.subr.bf16.mxu0 0
        %3180 = vmatpush1.bf16.msra.mxu0 0
        %3181 = vmatprep.subr.bf16.mxu0 0
        %3182 = vmatpush1.bf16.msra.mxu0 0
        %3183 = vmatprep.subr.bf16.mxu0 0
        %3184 = vmatpush1.bf16.msra.mxu0 0
        %3185 = vmatprep.subr.bf16.mxu0 0
        %3186 = vmatpush1.bf16.msra.mxu0 0
        %3187 = vmatprep.subr.bf16.mxu0 0
        %3188 = vmatpush1.bf16.msra.mxu0 0
        %3189 = vmatprep.mubr.bf16.mxu0 0
        %3190 = vmatmul.mubr.bf16.gmra.mrb[0].mxu0 %v3155
        %v3191 = vpop.f32.mrb[0].mxu0
        %v3192 = vadd.f32 0.0, %v3191
        %v3193 = vpop.f32.mrb[0].mxu0
        %v3194 = vpop.f32.mrb[0].mxu0
        %v3195 = vpop.f32.mrb[0].mxu0
        %3196 = vdwg.mxu0
        %v3198 = vsel %vm336, %v3060, 0
        %3200 = vmatprep.subr.bf16.mxu0 0
        %3201 = vmatpush1.bf16.msra.mxu0 %v3069
        %3202 = vmatprep.subr.bf16.mxu0 0
        %3203 = vmatpush1.bf16.msra.mxu0 0
        %3204 = vmatprep.subr.bf16.mxu0 0
        %3205 = vmatpush1.bf16.msra.mxu0 0
        %3206 = vmatprep.subr.bf16.mxu0 0
        %3207 = vmatpush1.bf16.msra.mxu0 0
        %3208 = vmatprep.subr.bf16.mxu0 0
        %3209 = vmatpush1.bf16.msra.mxu0 0
        %3210 = vmatprep.subr.bf16.mxu0 0
        %3211 = vmatpush1.bf16.msra.mxu0 0
        %3212 = vmatprep.subr.bf16.mxu0 0
        %3213 = vmatpush1.bf16.msra.mxu0 0
        %3214 = vmatprep.subr.bf16.mxu0 0
        %3215 = vmatpush1.bf16.msra.mxu0 0
        %3216 = vmatprep.subr.bf16.mxu0 0
        %3217 = vmatpush1.bf16.msra.mxu0 0
        %3218 = vmatprep.subr.bf16.mxu0 0
        %3219 = vmatpush1.bf16.msra.mxu0 0
        %3220 = vmatprep.subr.bf16.mxu0 0
        %3221 = vmatpush1.bf16.msra.mxu0 0
        %3222 = vmatprep.subr.bf16.mxu0 0
        %3223 = vmatpush1.bf16.msra.mxu0 0
        %3224 = vmatprep.subr.bf16.mxu0 0
        %3225 = vmatpush1.bf16.msra.mxu0 0
        %3226 = vmatprep.subr.bf16.mxu0 0
        %3227 = vmatpush1.bf16.msra.mxu0 0
        %3228 = vmatprep.subr.bf16.mxu0 0
        %3229 = vmatpush1.bf16.msra.mxu0 0
        %3230 = vmatprep.subr.bf16.mxu0 0
        %3231 = vmatpush1.bf16.msra.mxu0 0
        %3232 = vmatprep.mubr.bf16.mxu0 0
        %3233 = vmatmul.mubr.bf16.gmra.mrb[0].mxu0 %v3198
        %v3234 = vpop.f32.mrb[0].mxu0
        %v3235 = vadd.f32 0.0, %v3234
        %v3236 = vpop.f32.mrb[0].mxu0
        %v3237 = vpop.f32.mrb[0].mxu0
        %v3238 = vpop.f32.mrb[0].mxu0
        %3239 = vdwg.mxu0
        %v3241 = vsel %vm336, %v3061, 0
        %3243 = vmatprep.subr.bf16.mxu0 0
        %3244 = vmatpush1.bf16.msra.mxu0 %v3069
        %3245 = vmatprep.subr.bf16.mxu0 0
        %3246 = vmatpush1.bf16.msra.mxu0 0
        %3247 = vmatprep.subr.bf16.mxu0 0
        %3248 = vmatpush1.bf16.msra.mxu0 0
        %3249 = vmatprep.subr.bf16.mxu0 0
        %3250 = vmatpush1.bf16.msra.mxu0 0
        %3251 = vmatprep.subr.bf16.mxu0 0
        %3252 = vmatpush1.bf16.msra.mxu0 0
        %3253 = vmatprep.subr.bf16.mxu0 0
        %3254 = vmatpush1.bf16.msra.mxu0 0
        %3255 = vmatprep.subr.bf16.mxu0 0
        %3256 = vmatpush1.bf16.msra.mxu0 0
        %3257 = vmatprep.subr.bf16.mxu0 0
        %3258 = vmatpush1.bf16.msra.mxu0 0
        %3259 = vmatprep.subr.bf16.mxu0 0
        %3260 = vmatpush1.bf16.msra.mxu0 0
        %3261 = vmatprep.subr.bf16.mxu0 0
        %3262 = vmatpush1.bf16.msra.mxu0 0
        %3263 = vmatprep.subr.bf16.mxu0 0
        %3264 = vmatpush1.bf16.msra.mxu0 0
        %3265 = vmatprep.subr.bf16.mxu0 0
        %3266 = vmatpush1.bf16.msra.mxu0 0
        %3267 = vmatprep.subr.bf16.mxu0 0
        %3268 = vmatpush1.bf16.msra.mxu0 0
        %3269 = vmatprep.subr.bf16.mxu0 0
        %3270 = vmatpush1.bf16.msra.mxu0 0
        %3271 = vmatprep.subr.bf16.mxu0 0
        %3272 = vmatpush1.bf16.msra.mxu0 0
        %3273 = vmatprep.subr.bf16.mxu0 0
        %3274 = vmatpush1.bf16.msra.mxu0 0
        %3275 = vmatprep.mubr.bf16.mxu0 0
        %3276 = vmatmul.mubr.bf16.gmra.mrb[0].mxu0 %v3241
        %v3277 = vpop.f32.mrb[0].mxu0
        %v3278 = vadd.f32 0.0, %v3277
        %v3279 = vpop.f32.mrb[0].mxu0
        %v3280 = vpop.f32.mrb[0].mxu0
        %v3281 = vpop.f32.mrb[0].mxu0
        %3282 = vdwg.mxu0
        %v3284 = vsel %vm336, %v3062, 0
        %3286 = vmatprep.subr.bf16.mxu0 0
        %3287 = vmatpush1.bf16.msra.mxu0 %v3069
        %3288 = vmatprep.subr.bf16.mxu0 0
        %3289 = vmatpush1.bf16.msra.mxu0 0
        %3290 = vmatprep.subr.bf16.mxu0 0
        %3291 = vmatpush1.bf16.msra.mxu0 0
        %3292 = vmatprep.subr.bf16.mxu0 0
        %3293 = vmatpush1.bf16.msra.mxu0 0
        %3294 = vmatprep.subr.bf16.mxu0 0
        %3295 = vmatpush1.bf16.msra.mxu0 0
        %3296 = vmatprep.subr.bf16.mxu0 0
        %3297 = vmatpush1.bf16.msra.mxu0 0
        %3298 = vmatprep.subr.bf16.mxu0 0
        %3299 = vmatpush1.bf16.msra.mxu0 0
        %3300 = vmatprep.subr.bf16.mxu0 0
        %3301 = vmatpush1.bf16.msra.mxu0 0
        %3302 = vmatprep.subr.bf16.mxu0 0
        %3303 = vmatpush1.bf16.msra.mxu0 0
        %3304 = vmatprep.subr.bf16.mxu0 0
        %3305 = vmatpush1.bf16.msra.mxu0 0
        %3306 = vmatprep.subr.bf16.mxu0 0
        %3307 = vmatpush1.bf16.msra.mxu0 0
        %3308 = vmatprep.subr.bf16.mxu0 0
        %3309 = vmatpush1.bf16.msra.mxu0 0
        %3310 = vmatprep.subr.bf16.mxu0 0
        %3311 = vmatpush1.bf16.msra.mxu0 0
        %3312 = vmatprep.subr.bf16.mxu0 0
        %3313 = vmatpush1.bf16.msra.mxu0 0
        %3314 = vmatprep.subr.bf16.mxu0 0
        %3315 = vmatpush1.bf16.msra.mxu0 0
        %3316 = vmatprep.subr.bf16.mxu0 0
        %3317 = vmatpush1.bf16.msra.mxu0 0
        %3318 = vmatprep.mubr.bf16.mxu0 0
        %3319 = vmatmul.mubr.bf16.gmra.mrb[0].mxu0 %v3284
        %v3320 = vpop.f32.mrb[0].mxu0
        %v3321 = vadd.f32 0.0, %v3320
        %v3322 = vpop.f32.mrb[0].mxu0
        %v3323 = vpop.f32.mrb[0].mxu0
        %v3324 = vpop.f32.mrb[0].mxu0
        %3325 = vdwg.mxu0
        %v3327 = vsel %vm336, %v3063, 0
        %3329 = vmatprep.subr.bf16.mxu0 0
        %3330 = vmatpush1.bf16.msra.mxu0 %v3069
        %3331 = vmatprep.subr.bf16.mxu0 0
        %3332 = vmatpush1.bf16.msra.mxu0 0
        %3333 = vmatprep.subr.bf16.mxu0 0
        %3334 = vmatpush1.bf16.msra.mxu0 0
        %3335 = vmatprep.subr.bf16.mxu0 0
        %3336 = vmatpush1.bf16.msra.mxu0 0
        %3337 = vmatprep.subr.bf16.mxu0 0
        %3338 = vmatpush1.bf16.msra.mxu0 0
        %3339 = vmatprep.subr.bf16.mxu0 0
        %3340 = vmatpush1.bf16.msra.mxu0 0
        %3341 = vmatprep.subr.bf16.mxu0 0
        %3342 = vmatpush1.bf16.msra.mxu0 0
        %3343 = vmatprep.subr.bf16.mxu0 0
        %3344 = vmatpush1.bf16.msra.mxu0 0
        %3345 = vmatprep.subr.bf16.mxu0 0
        %3346 = vmatpush1.bf16.msra.mxu0 0
        %3347 = vmatprep.subr.bf16.mxu0 0
        %3348 = vmatpush1.bf16.msra.mxu0 0
        %3349 = vmatprep.subr.bf16.mxu0 0
        %3350 = vmatpush1.bf16.msra.mxu0 0
        %3351 = vmatprep.subr.bf16.mxu0 0
        %3352 = vmatpush1.bf16.msra.mxu0 0
        %3353 = vmatprep.subr.bf16.mxu0 0
        %3354 = vmatpush1.bf16.msra.mxu0 0
        %3355 = vmatprep.subr.bf16.mxu0 0
        %3356 = vmatpush1.bf16.msra.mxu0 0
        %3357 = vmatprep.subr.bf16.mxu0 0
        %3358 = vmatpush1.bf16.msra.mxu0 0
        %3359 = vmatprep.subr.bf16.mxu0 0
        %3360 = vmatpush1.bf16.msra.mxu0 0
        %3361 = vmatprep.mubr.bf16.mxu0 0
        %3362 = vmatmul.mubr.bf16.gmra.mrb[0].mxu0 %v3327
        %v3363 = vpop.f32.mrb[0].mxu0
        %v3364 = vadd.f32 0.0, %v3363
        %v3365 = vpop.f32.mrb[0].mxu0
        %v3366 = vpop.f32.mrb[0].mxu0
        %v3367 = vpop.f32.mrb[0].mxu0
        %3368 = vdwg.mxu0
        %v3370 = vsel %vm336, %v3064, 0
        %3372 = vmatprep.subr.bf16.mxu0 0
        %3373 = vmatpush1.bf16.msra.mxu0 %v3069
        %3374 = vmatprep.subr.bf16.mxu0 0
        %3375 = vmatpush1.bf16.msra.mxu0 0
        %3376 = vmatprep.subr.bf16.mxu0 0
        %3377 = vmatpush1.bf16.msra.mxu0 0
        %3378 = vmatprep.subr.bf16.mxu0 0
        %3379 = vmatpush1.bf16.msra.mxu0 0
        %3380 = vmatprep.subr.bf16.mxu0 0
        %3381 = vmatpush1.bf16.msra.mxu0 0
        %3382 = vmatprep.subr.bf16.mxu0 0
        %3383 = vmatpush1.bf16.msra.mxu0 0
        %3384 = vmatprep.subr.bf16.mxu0 0
        %3385 = vmatpush1.bf16.msra.mxu0 0
        %3386 = vmatprep.subr.bf16.mxu0 0
        %3387 = vmatpush1.bf16.msra.mxu0 0
        %3388 = vmatprep.subr.bf16.mxu0 0
        %3389 = vmatpush1.bf16.msra.mxu0 0
        %3390 = vmatprep.subr.bf16.mxu0 0
        %3391 = vmatpush1.bf16.msra.mxu0 0
        %3392 = vmatprep.subr.bf16.mxu0 0
        %3393 = vmatpush1.bf16.msra.mxu0 0
        %3394 = vmatprep.subr.bf16.mxu0 0
        %3395 = vmatpush1.bf16.msra.mxu0 0
        %3396 = vmatprep.subr.bf16.mxu0 0
        %3397 = vmatpush1.bf16.msra.mxu0 0
        %3398 = vmatprep.subr.bf16.mxu0 0
        %3399 = vmatpush1.bf16.msra.mxu0 0
        %3400 = vmatprep.subr.bf16.mxu0 0
        %3401 = vmatpush1.bf16.msra.mxu0 0
        %3402 = vmatprep.subr.bf16.mxu0 0
        %3403 = vmatpush1.bf16.msra.mxu0 0
        %3404 = vmatprep.mubr.bf16.mxu0 0
        %3405 = vmatmul.mubr.bf16.gmra.mrb[0].mxu0 %v3370
        %v3406 = vpop.f32.mrb[0].mxu0
        %v3407 = vadd.f32 0.0, %v3406
        %v3408 = vpop.f32.mrb[0].mxu0
        %v3409 = vpop.f32.mrb[0].mxu0
        %v3410 = vpop.f32.mrb[0].mxu0
        %3411 = vdwg.mxu0
        %v3412 = vadd.f32 %v3048, %v3106
        %v3413 = vadd.f32 %v3049, %v3149
        %v3414 = vadd.f32 %v3050, %v3192
        %v3415 = vadd.f32 %v3051, %v3235
        %v3416 = vadd.f32 %v3052, %v3278
        %v3417 = vadd.f32 %v3053, %v3321
        %v3418 = vadd.f32 %v3054, %v3364
        %v3419 = vadd.f32 %v3055, %v3407
        %v3420 = vld [vmem:[%s2692] sm:$0xf]
        %v3421 = vld [vmem:[%s2692 + $0x4] sm:$0x1]
        %v3422 = vld [vmem:[%s2692 + $0x8] sm:$0xf]
        %v3423 = vld [vmem:[%s2692 + $0xc] sm:$0x1]
        %v3424 = vld [vmem:[%s2692 + $0x10] sm:$0xf]
        %v3425 = vld [vmem:[%s2692 + $0x14] sm:$0x1]
        %v3426 = vld [vmem:[%s2692 + $0x18] sm:$0xf]
        %v3427 = vld [vmem:[%s2692 + $0x1c] sm:$0x1]
        %v3428 = vld [vmem:[%s2692 + $0x20] sm:$0xf]
        %v3429 = vld [vmem:[%s2692 + $0x24] sm:$0x1]
        %v3430 = vld [vmem:[%s2692 + $0x28] sm:$0xf]
        %v3431 = vld [vmem:[%s2692 + $0x2c] sm:$0x1]
        %v3432 = vld [vmem:[%s2692 + $0x30] sm:$0xf]
        %v3433 = vld [vmem:[%s2692 + $0x34] sm:$0x1]
        %v3434 = vld [vmem:[%s2692 + $0x38] sm:$0xf]
        %v3435 = vld [vmem:[%s2692 + $0x3c] sm:$0x1]
        %v3438 = vunpack.c.l.b16 %v3420
        %v3439 = vunpack.c.l.b16 %v3421
        %v3440 = vpack.c.b16 %v3439, %v3438
        %v3442 = vshrl.u32 %v3440, 16
        %v3444 = vshll.u32 %v3440, 16
        %v3446 = vrot.slane %v3444, 1
        %v3447 = vor.u32 %v3442, %v3446
        %v3449 = vsel %vm336, %v3447, 0
        %v3452 = vsel %vm340, %v319, 0
        %3454 = vmatprep.subr.bf16.mxu0 0
        %3455 = vmatpush1.bf16.msra.mxu0 %v3452
        %3456 = vmatprep.subr.bf16.mxu0 0
        %3457 = vmatpush1.bf16.msra.mxu0 0
        %3458 = vmatprep.subr.bf16.mxu0 0
        %3459 = vmatpush1.bf16.msra.mxu0 0
        %3460 = vmatprep.subr.bf16.mxu0 0
        %3461 = vmatpush1.bf16.msra.mxu0 0
        %3462 = vmatprep.subr.bf16.mxu0 0
        %3463 = vmatpush1.bf16.msra.mxu0 0
        %3464 = vmatprep.subr.bf16.mxu0 0
        %3465 = vmatpush1.bf16.msra.mxu0 0
        %3466 = vmatprep.subr.bf16.mxu0 0
        %3467 = vmatpush1.bf16.msra.mxu0 0
        %3468 = vmatprep.subr.bf16.mxu0 0
        %3469 = vmatpush1.bf16.msra.mxu0 0
        %3470 = vmatprep.subr.bf16.mxu0 0
        %3471 = vmatpush1.bf16.msra.mxu0 0
        %3472 = vmatprep.subr.bf16.mxu0 0
        %3473 = vmatpush1.bf16.msra.mxu0 0
        %3474 = vmatprep.subr.bf16.mxu0 0
        %3475 = vmatpush1.bf16.msra.mxu0 0
        %3476 = vmatprep.subr.bf16.mxu0 0
        %3477 = vmatpush1.bf16.msra.mxu0 0
        %3478 = vmatprep.subr.bf16.mxu0 0
        %3479 = vmatpush1.bf16.msra.mxu0 0
        %3480 = vmatprep.subr.bf16.mxu0 0
        %3481 = vmatpush1.bf16.msra.mxu0 0
        %3482 = vmatprep.subr.bf16.mxu0 0
        %3483 = vmatpush1.bf16.msra.mxu0 0
        %3484 = vmatprep.subr.bf16.mxu0 0
        %3485 = vmatpush1.bf16.msra.mxu0 0
        %3486 = vmatprep.mubr.bf16.mxu0 0
        %3487 = vmatmul.mubr.bf16.gmra.mrb[0].mxu0 %v3449
        %v3488 = vpop.f32.mrb[0].mxu0
        %v3489 = vadd.f32 0.0, %v3488
        %v3490 = vpop.f32.mrb[0].mxu0
        %v3491 = vpop.f32.mrb[0].mxu0
        %v3492 = vpop.f32.mrb[0].mxu0
        %3493 = vdwg.mxu0
        %v3496 = vunpack.c.l.b16 %v3422
        %v3497 = vunpack.c.l.b16 %v3423
        %v3498 = vpack.c.b16 %v3497, %v3496
        %v3500 = vshrl.u32 %v3498, 16
        %v3502 = vshll.u32 %v3498, 16
        %v3504 = vrot.slane %v3502, 1
        %v3505 = vor.u32 %v3500, %v3504
        %v3507 = vsel %vm336, %v3505, 0
        %3509 = vmatprep.subr.bf16.mxu0 0
        %3510 = vmatpush1.bf16.msra.mxu0 %v3452
        %3511 = vmatprep.subr.bf16.mxu0 0
        %3512 = vmatpush1.bf16.msra.mxu0 0
        %3513 = vmatprep.subr.bf16.mxu0 0
        %3514 = vmatpush1.bf16.msra.mxu0 0
        %3515 = vmatprep.subr.bf16.mxu0 0
        %3516 = vmatpush1.bf16.msra.mxu0 0
        %3517 = vmatprep.subr.bf16.mxu0 0
        %3518 = vmatpush1.bf16.msra.mxu0 0
        %3519 = vmatprep.subr.bf16.mxu0 0
        %3520 = vmatpush1.bf16.msra.mxu0 0
        %3521 = vmatprep.subr.bf16.mxu0 0
        %3522 = vmatpush1.bf16.msra.mxu0 0
        %3523 = vmatprep.subr.bf16.mxu0 0
        %3524 = vmatpush1.bf16.msra.mxu0 0
        %3525 = vmatprep.subr.bf16.mxu0 0
        %3526 = vmatpush1.bf16.msra.mxu0 0
        %3527 = vmatprep.subr.bf16.mxu0 0
        %3528 = vmatpush1.bf16.msra.mxu0 0
        %3529 = vmatprep.subr.bf16.mxu0 0
        %3530 = vmatpush1.bf16.msra.mxu0 0
        %3531 = vmatprep.subr.bf16.mxu0 0
        %3532 = vmatpush1.bf16.msra.mxu0 0
        %3533 = vmatprep.subr.bf16.mxu0 0
        %3534 = vmatpush1.bf16.msra.mxu0 0
        %3535 = vmatprep.subr.bf16.mxu0 0
        %3536 = vmatpush1.bf16.msra.mxu0 0
        %3537 = vmatprep.subr.bf16.mxu0 0
        %3538 = vmatpush1.bf16.msra.mxu0 0
        %3539 = vmatprep.subr.bf16.mxu0 0
        %3540 = vmatpush1.bf16.msra.mxu0 0
        %3541 = vmatprep.mubr.bf16.mxu0 0
        %3542 = vmatmul.mubr.bf16.gmra.mrb[0].mxu0 %v3507
        %v3543 = vpop.f32.mrb[0].mxu0
        %v3544 = vadd.f32 0.0, %v3543
        %v3545 = vpop.f32.mrb[0].mxu0
        %v3546 = vpop.f32.mrb[0].mxu0
        %v3547 = vpop.f32.mrb[0].mxu0
        %3548 = vdwg.mxu0
        %v3551 = vunpack.c.l.b16 %v3424
        %v3552 = vunpack.c.l.b16 %v3425
        %v3553 = vpack.c.b16 %v3552, %v3551
        %v3555 = vshrl.u32 %v3553, 16
        %v3557 = vshll.u32 %v3553, 16
        %v3559 = vrot.slane %v3557, 1
        %v3560 = vor.u32 %v3555, %v3559
        %v3562 = vsel %vm336, %v3560, 0
        %3564 = vmatprep.subr.bf16.mxu0 0
        %3565 = vmatpush1.bf16.msra.mxu0 %v3452
        %3566 = vmatprep.subr.bf16.mxu0 0
        %3567 = vmatpush1.bf16.msra.mxu0 0
        %3568 = vmatprep.subr.bf16.mxu0 0
        %3569 = vmatpush1.bf16.msra.mxu0 0
        %3570 = vmatprep.subr.bf16.mxu0 0
        %3571 = vmatpush1.bf16.msra.mxu0 0
        %3572 = vmatprep.subr.bf16.mxu0 0
        %3573 = vmatpush1.bf16.msra.mxu0 0
        %3574 = vmatprep.subr.bf16.mxu0 0
        %3575 = vmatpush1.bf16.msra.mxu0 0
        %3576 = vmatprep.subr.bf16.mxu0 0
        %3577 = vmatpush1.bf16.msra.mxu0 0
        %3578 = vmatprep.subr.bf16.mxu0 0
        %3579 = vmatpush1.bf16.msra.mxu0 0
        %3580 = vmatprep.subr.bf16.mxu0 0
        %3581 = vmatpush1.bf16.msra.mxu0 0
        %3582 = vmatprep.subr.bf16.mxu0 0
        %3583 = vmatpush1.bf16.msra.mxu0 0
        %3584 = vmatprep.subr.bf16.mxu0 0
        %3585 = vmatpush1.bf16.msra.mxu0 0
        %3586 = vmatprep.subr.bf16.mxu0 0
        %3587 = vmatpush1.bf16.msra.mxu0 0
        %3588 = vmatprep.subr.bf16.mxu0 0
        %3589 = vmatpush1.bf16.msra.mxu0 0
        %3590 = vmatprep.subr.bf16.mxu0 0
        %3591 = vmatpush1.bf16.msra.mxu0 0
        %3592 = vmatprep.subr.bf16.mxu0 0
        %3593 = vmatpush1.bf16.msra.mxu0 0
        %3594 = vmatprep.subr.bf16.mxu0 0
        %3595 = vmatpush1.bf16.msra.mxu0 0
        %3596 = vmatprep.mubr.bf16.mxu0 0
        %3597 = vmatmul.mubr.bf16.gmra.mrb[0].mxu0 %v3562
        %v3598 = vpop.f32.mrb[0].mxu0
        %v3599 = vadd.f32 0.0, %v3598
        %v3600 = vpop.f32.mrb[0].mxu0
        %v3601 = vpop.f32.mrb[0].mxu0
        %v3602 = vpop.f32.mrb[0].mxu0
        %3603 = vdwg.mxu0
        %v3606 = vunpack.c.l.b16 %v3426
        %v3607 = vunpack.c.l.b16 %v3427
        %v3608 = vpack.c.b16 %v3607, %v3606
        %v3610 = vshrl.u32 %v3608, 16
        %v3612 = vshll.u32 %v3608, 16
        %v3614 = vrot.slane %v3612, 1
        %v3615 = vor.u32 %v3610, %v3614
        %v3617 = vsel %vm336, %v3615, 0
        %3619 = vmatprep.subr.bf16.mxu0 0
        %3620 = vmatpush1.bf16.msra.mxu0 %v3452
        %3621 = vmatprep.subr.bf16.mxu0 0
        %3622 = vmatpush1.bf16.msra.mxu0 0
        %3623 = vmatprep.subr.bf16.mxu0 0
        %3624 = vmatpush1.bf16.msra.mxu0 0
        %3625 = vmatprep.subr.bf16.mxu0 0
        %3626 = vmatpush1.bf16.msra.mxu0 0
        %3627 = vmatprep.subr.bf16.mxu0 0
        %3628 = vmatpush1.bf16.msra.mxu0 0
        %3629 = vmatprep.subr.bf16.mxu0 0
        %3630 = vmatpush1.bf16.msra.mxu0 0
        %3631 = vmatprep.subr.bf16.mxu0 0
        %3632 = vmatpush1.bf16.msra.mxu0 0
        %3633 = vmatprep.subr.bf16.mxu0 0
        %3634 = vmatpush1.bf16.msra.mxu0 0
        %3635 = vmatprep.subr.bf16.mxu0 0
        %3636 = vmatpush1.bf16.msra.mxu0 0
        %3637 = vmatprep.subr.bf16.mxu0 0
        %3638 = vmatpush1.bf16.msra.mxu0 0
        %3639 = vmatprep.subr.bf16.mxu0 0
        %3640 = vmatpush1.bf16.msra.mxu0 0
        %3641 = vmatprep.subr.bf16.mxu0 0
        %3642 = vmatpush1.bf16.msra.mxu0 0
        %3643 = vmatprep.subr.bf16.mxu0 0
        %3644 = vmatpush1.bf16.msra.mxu0 0
        %3645 = vmatprep.subr.bf16.mxu0 0
        %3646 = vmatpush1.bf16.msra.mxu0 0
        %3647 = vmatprep.subr.bf16.mxu0 0
        %3648 = vmatpush1.bf16.msra.mxu0 0
        %3649 = vmatprep.subr.bf16.mxu0 0
        %3650 = vmatpush1.bf16.msra.mxu0 0
        %3651 = vmatprep.mubr.bf16.mxu0 0
        %3652 = vmatmul.mubr.bf16.gmra.mrb[0].mxu0 %v3617
        %v3653 = vpop.f32.mrb[0].mxu0
        %v3654 = vadd.f32 0.0, %v3653
        %v3655 = vpop.f32.mrb[0].mxu0
        %v3656 = vpop.f32.mrb[0].mxu0
        %v3657 = vpop.f32.mrb[0].mxu0
        %3658 = vdwg.mxu0
        %v3661 = vunpack.c.l.b16 %v3428
        %v3662 = vunpack.c.l.b16 %v3429
        %v3663 = vpack.c.b16 %v3662, %v3661
        %v3665 = vshrl.u32 %v3663, 16
        %v3667 = vshll.u32 %v3663, 16
        %v3669 = vrot.slane %v3667, 1
        %v3670 = vor.u32 %v3665, %v3669
        %v3672 = vsel %vm336, %v3670, 0
        %3674 = vmatprep.subr.bf16.mxu0 0
        %3675 = vmatpush1.bf16.msra.mxu0 %v3452
        %3676 = vmatprep.subr.bf16.mxu0 0
        %3677 = vmatpush1.bf16.msra.mxu0 0
        %3678 = vmatprep.subr.bf16.mxu0 0
        %3679 = vmatpush1.bf16.msra.mxu0 0
        %3680 = vmatprep.subr.bf16.mxu0 0
        %3681 = vmatpush1.bf16.msra.mxu0 0
        %3682 = vmatprep.subr.bf16.mxu0 0
        %3683 = vmatpush1.bf16.msra.mxu0 0
        %3684 = vmatprep.subr.bf16.mxu0 0
        %3685 = vmatpush1.bf16.msra.mxu0 0
        %3686 = vmatprep.subr.bf16.mxu0 0
        %3687 = vmatpush1.bf16.msra.mxu0 0
        %3688 = vmatprep.subr.bf16.mxu0 0
        %3689 = vmatpush1.bf16.msra.mxu0 0
        %3690 = vmatprep.subr.bf16.mxu0 0
        %3691 = vmatpush1.bf16.msra.mxu0 0
        %3692 = vmatprep.subr.bf16.mxu0 0
        %3693 = vmatpush1.bf16.msra.mxu0 0
        %3694 = vmatprep.subr.bf16.mxu0 0
        %3695 = vmatpush1.bf16.msra.mxu0 0
        %3696 = vmatprep.subr.bf16.mxu0 0
        %3697 = vmatpush1.bf16.msra.mxu0 0
        %3698 = vmatprep.subr.bf16.mxu0 0
        %3699 = vmatpush1.bf16.msra.mxu0 0
        %3700 = vmatprep.subr.bf16.mxu0 0
        %3701 = vmatpush1.bf16.msra.mxu0 0
        %3702 = vmatprep.subr.bf16.mxu0 0
        %3703 = vmatpush1.bf16.msra.mxu0 0
        %3704 = vmatprep.subr.bf16.mxu0 0
        %3705 = vmatpush1.bf16.msra.mxu0 0
        %3706 = vmatprep.mubr.bf16.mxu0 0
        %3707 = vmatmul.mubr.bf16.gmra.mrb[0].mxu0 %v3672
        %v3708 = vpop.f32.mrb[0].mxu0
        %v3709 = vadd.f32 0.0, %v3708
        %v3710 = vpop.f32.mrb[0].mxu0
        %v3711 = vpop.f32.mrb[0].mxu0
        %v3712 = vpop.f32.mrb[0].mxu0
        %3713 = vdwg.mxu0
        %v3716 = vunpack.c.l.b16 %v3430
        %v3717 = vunpack.c.l.b16 %v3431
        %v3718 = vpack.c.b16 %v3717, %v3716
        %v3720 = vshrl.u32 %v3718, 16
        %v3722 = vshll.u32 %v3718, 16
        %v3724 = vrot.slane %v3722, 1
        %v3725 = vor.u32 %v3720, %v3724
        %v3727 = vsel %vm336, %v3725, 0
        %3729 = vmatprep.subr.bf16.mxu0 0
        %3730 = vmatpush1.bf16.msra.mxu0 %v3452
        %3731 = vmatprep.subr.bf16.mxu0 0
        %3732 = vmatpush1.bf16.msra.mxu0 0
        %3733 = vmatprep.subr.bf16.mxu0 0
        %3734 = vmatpush1.bf16.msra.mxu0 0
        %3735 = vmatprep.subr.bf16.mxu0 0
        %3736 = vmatpush1.bf16.msra.mxu0 0
        %3737 = vmatprep.subr.bf16.mxu0 0
        %3738 = vmatpush1.bf16.msra.mxu0 0
        %3739 = vmatprep.subr.bf16.mxu0 0
        %3740 = vmatpush1.bf16.msra.mxu0 0
        %3741 = vmatprep.subr.bf16.mxu0 0
        %3742 = vmatpush1.bf16.msra.mxu0 0
        %3743 = vmatprep.subr.bf16.mxu0 0
        %3744 = vmatpush1.bf16.msra.mxu0 0
        %3745 = vmatprep.subr.bf16.mxu0 0
        %3746 = vmatpush1.bf16.msra.mxu0 0
        %3747 = vmatprep.subr.bf16.mxu0 0
        %3748 = vmatpush1.bf16.msra.mxu0 0
        %3749 = vmatprep.subr.bf16.mxu0 0
        %3750 = vmatpush1.bf16.msra.mxu0 0
        %3751 = vmatprep.subr.bf16.mxu0 0
        %3752 = vmatpush1.bf16.msra.mxu0 0
        %3753 = vmatprep.subr.bf16.mxu0 0
        %3754 = vmatpush1.bf16.msra.mxu0 0
        %3755 = vmatprep.subr.bf16.mxu0 0
        %3756 = vmatpush1.bf16.msra.mxu0 0
        %3757 = vmatprep.subr.bf16.mxu0 0
        %3758 = vmatpush1.bf16.msra.mxu0 0
        %3759 = vmatprep.subr.bf16.mxu0 0
        %3760 = vmatpush1.bf16.msra.mxu0 0
        %3761 = vmatprep.mubr.bf16.mxu0 0
        %3762 = vmatmul.mubr.bf16.gmra.mrb[0].mxu0 %v3727
        %v3763 = vpop.f32.mrb[0].mxu0
        %v3764 = vadd.f32 0.0, %v3763
        %v3765 = vpop.f32.mrb[0].mxu0
        %v3766 = vpop.f32.mrb[0].mxu0
        %v3767 = vpop.f32.mrb[0].mxu0
        %3768 = vdwg.mxu0
        %v3771 = vunpack.c.l.b16 %v3432
        %v3772 = vunpack.c.l.b16 %v3433
        %v3773 = vpack.c.b16 %v3772, %v3771
        %v3775 = vshrl.u32 %v3773, 16
        %v3777 = vshll.u32 %v3773, 16
        %v3779 = vrot.slane %v3777, 1
        %v3780 = vor.u32 %v3775, %v3779
        %v3782 = vsel %vm336, %v3780, 0
        %3784 = vmatprep.subr.bf16.mxu0 0
        %3785 = vmatpush1.bf16.msra.mxu0 %v3452
        %3786 = vmatprep.subr.bf16.mxu0 0
        %3787 = vmatpush1.bf16.msra.mxu0 0
        %3788 = vmatprep.subr.bf16.mxu0 0
        %3789 = vmatpush1.bf16.msra.mxu0 0
        %3790 = vmatprep.subr.bf16.mxu0 0
        %3791 = vmatpush1.bf16.msra.mxu0 0
        %3792 = vmatprep.subr.bf16.mxu0 0
        %3793 = vmatpush1.bf16.msra.mxu0 0
        %3794 = vmatprep.subr.bf16.mxu0 0
        %3795 = vmatpush1.bf16.msra.mxu0 0
        %3796 = vmatprep.subr.bf16.mxu0 0
        %3797 = vmatpush1.bf16.msra.mxu0 0
        %3798 = vmatprep.subr.bf16.mxu0 0
        %3799 = vmatpush1.bf16.msra.mxu0 0
        %3800 = vmatprep.subr.bf16.mxu0 0
        %3801 = vmatpush1.bf16.msra.mxu0 0
        %3802 = vmatprep.subr.bf16.mxu0 0
        %3803 = vmatpush1.bf16.msra.mxu0 0
        %3804 = vmatprep.subr.bf16.mxu0 0
        %3805 = vmatpush1.bf16.msra.mxu0 0
        %3806 = vmatprep.subr.bf16.mxu0 0
        %3807 = vmatpush1.bf16.msra.mxu0 0
        %3808 = vmatprep.subr.bf16.mxu0 0
        %3809 = vmatpush1.bf16.msra.mxu0 0
        %3810 = vmatprep.subr.bf16.mxu0 0
        %3811 = vmatpush1.bf16.msra.mxu0 0
        %3812 = vmatprep.subr.bf16.mxu0 0
        %3813 = vmatpush1.bf16.msra.mxu0 0
        %3814 = vmatprep.subr.bf16.mxu0 0
        %3815 = vmatpush1.bf16.msra.mxu0 0
        %3816 = vmatprep.mubr.bf16.mxu0 0
        %3817 = vmatmul.mubr.bf16.gmra.mrb[0].mxu0 %v3782
        %v3818 = vpop.f32.mrb[0].mxu0
        %v3819 = vadd.f32 0.0, %v3818
        %v3820 = vpop.f32.mrb[0].mxu0
        %v3821 = vpop.f32.mrb[0].mxu0
        %v3822 = vpop.f32.mrb[0].mxu0
        %3823 = vdwg.mxu0
        %v3826 = vunpack.c.l.b16 %v3434
        %v3827 = vunpack.c.l.b16 %v3435
        %v3828 = vpack.c.b16 %v3827, %v3826
        %v3830 = vshrl.u32 %v3828, 16
        %v3832 = vshll.u32 %v3828, 16
        %v3834 = vrot.slane %v3832, 1
        %v3835 = vor.u32 %v3830, %v3834
        %v3837 = vsel %vm336, %v3835, 0
        %3839 = vmatprep.subr.bf16.mxu0 0
        %3840 = vmatpush1.bf16.msra.mxu0 %v3452
        %3841 = vmatprep.subr.bf16.mxu0 0
        %3842 = vmatpush1.bf16.msra.mxu0 0
        %3843 = vmatprep.subr.bf16.mxu0 0
        %3844 = vmatpush1.bf16.msra.mxu0 0
        %3845 = vmatprep.subr.bf16.mxu0 0
        %3846 = vmatpush1.bf16.msra.mxu0 0
        %3847 = vmatprep.subr.bf16.mxu0 0
        %3848 = vmatpush1.bf16.msra.mxu0 0
        %3849 = vmatprep.subr.bf16.mxu0 0
        %3850 = vmatpush1.bf16.msra.mxu0 0
        %3851 = vmatprep.subr.bf16.mxu0 0
        %3852 = vmatpush1.bf16.msra.mxu0 0
        %3853 = vmatprep.subr.bf16.mxu0 0
        %3854 = vmatpush1.bf16.msra.mxu0 0
        %3855 = vmatprep.subr.bf16.mxu0 0
        %3856 = vmatpush1.bf16.msra.mxu0 0
        %3857 = vmatprep.subr.bf16.mxu0 0
        %3858 = vmatpush1.bf16.msra.mxu0 0
        %3859 = vmatprep.subr.bf16.mxu0 0
        %3860 = vmatpush1.bf16.msra.mxu0 0
        %3861 = vmatprep.subr.bf16.mxu0 0
        %3862 = vmatpush1.bf16.msra.mxu0 0
        %3863 = vmatprep.subr.bf16.mxu0 0
        %3864 = vmatpush1.bf16.msra.mxu0 0
        %3865 = vmatprep.subr.bf16.mxu0 0
        %3866 = vmatpush1.bf16.msra.mxu0 0
        %3867 = vmatprep.subr.bf16.mxu0 0
        %3868 = vmatpush1.bf16.msra.mxu0 0
        %3869 = vmatprep.subr.bf16.mxu0 0
        %3870 = vmatpush1.bf16.msra.mxu0 0
        %3871 = vmatprep.mubr.bf16.mxu0 0
        %3872 = vmatmul.mubr.bf16.gmra.mrb[0].mxu0 %v3837
        %v3873 = vpop.f32.mrb[0].mxu0
        %v3874 = vadd.f32 0.0, %v3873
        %v3875 = vpop.f32.mrb[0].mxu0
        %v3876 = vpop.f32.mrb[0].mxu0
        %v3877 = vpop.f32.mrb[0].mxu0
        %3878 = vdwg.mxu0
        %v3879 = vadd.f32 %v3412, %v3489
        %v3880 = vadd.f32 %v3413, %v3544
        %v3881 = vadd.f32 %v3414, %v3599
        %v3882 = vadd.f32 %v3415, %v3654
        %v3883 = vadd.f32 %v3416, %v3709
        %v3884 = vadd.f32 %v3417, %v3764
        %v3885 = vadd.f32 %v3418, %v3819
        %v3886 = vadd.f32 %v3419, %v3874
        %v3887 = vld [vmem:[%s5] sm:$0x1]
        %v3888 = vld [vmem:[%s5 + $0x1] sm:$0x1]
        %v3889 = vlaneseq
        %v3890 = vshrl.u32 %v3889, 7
        %v3891 = vsub.s32 0, %v3890
        %v3892 = vrot.slane %v3887, %v3891
        %v3893 = vmul.f32 %v3879, %v3892
        %v3894 = vmul.f32 %v3880, %v3892
        %v3895 = vmul.f32 %v3881, %v3892
        %v3896 = vmul.f32 %v3882, %v3892
        %v3897 = vmul.f32 %v3883, %v3892
        %v3898 = vmul.f32 %v3884, %v3892
        %v3899 = vmul.f32 %v3885, %v3892
        %v3900 = vmul.f32 %v3886, %v3892
        %v3901 = vlaneseq
        %v3902 = vshrl.u32 %v3901, 7
        %v3903 = vsub.s32 0, %v3902
        %v3904 = vrot.slane %v3888, %v3903
        %v3905 = vadd.f32 %v3893, %v3904
        %v3906 = vadd.f32 %v3894, %v3904
        %v3907 = vadd.f32 %v3895, %v3904
        %v3908 = vadd.f32 %v3896, %v3904
        %v3909 = vadd.f32 %v3897, %v3904
        %v3910 = vadd.f32 %v3898, %v3904
        %v3911 = vadd.f32 %v3899, %v3904
        %v3912 = vadd.f32 %v3900, %v3904
        %v3913 = vmax.f32 %v3905, 0.0
        %v3914 = vmax.f32 %v3906, 0.0
        %v3915 = vmax.f32 %v3907, 0.0
        %v3916 = vmax.f32 %v3908, 0.0
        %v3917 = vmax.f32 %v3909, 0.0
        %v3918 = vmax.f32 %v3910, 0.0
        %v3919 = vmax.f32 %v3911, 0.0
        %v3920 = vmax.f32 %v3912, 0.0
        %v3921 = vpack.c.bf16 %v3913, %v3913
        %v3922 = vpack.c.bf16 %v3914, %v3914
        %v3923 = vpack.c.bf16 %v3915, %v3915
        %v3924 = vpack.c.bf16 %v3916, %v3916
        %v3925 = vpack.c.bf16 %v3917, %v3917
        %v3926 = vpack.c.bf16 %v3918, %v3918
        %v3927 = vpack.c.bf16 %v3919, %v3919
        %v3928 = vpack.c.bf16 %v3920, %v3920
        %3929 = vst [vmem:[%s289] sm:$0xf] %v3921
        %3930 = vst [vmem:[%s289 + $0x4] sm:$0xf] %v3922
        %3931 = vst [vmem:[%s289 + $0x8] sm:$0xf] %v3923
        %3932 = vst [vmem:[%s289 + $0xc] sm:$0xf] %v3924
        %3933 = vst [vmem:[%s289 + $0x10] sm:$0xf] %v3925
        %3934 = vst [vmem:[%s289 + $0x14] sm:$0xf] %v3926
        %3935 = vst [vmem:[%s289 + $0x18] sm:$0xf] %v3927
        %3936 = vst [vmem:[%s289 + $0x1c] sm:$0xf] %v3928
        %s3937 = sand.u32 %s174, 1
        %s3938 = scalar_lea.sflag [#allocation3], %s3937
        %s3939 = sand.u32 %s174, 1
        %s3940 = smul.addr %s3939, 32
        %s3941 = scalar_lea.vmem [#allocation2], %s3940
        // Predicated region
        $region45: #{tpu_custom_call.1} parent=43 // pred_check
          %p3942 = pneg %p184
        $region46: #{tpu_custom_call.1} parent=43 // pred_check_branch
          %3944 = sbr.rel (%p3942) target = $region48
        $region47: #{tpu_custom_call.1} parent=43 // pred_region
          %s3946 = ssub.s32 512, 512
          %3947 = vsyncadd %s3938, %s3946
          %s3948 = smul.addr %s20, 8
          %s3949 = smul.addr %s3948, 64
          %s3950 = scalar_lea.hbm %s6, %s3949
          %s3951 = sshll.u32 %s3941, 4
          %s3952 = int_to_ptr.vmem [resolvable:$true] %s3951
          %3957 = dma.vmem_to_hbm [thread:$0]  %s3952, 512, %s3950, %s3938, 64, 64, 4
        $region48: #{tpu_custom_call.1} parent=43 // pred_fallthru
          _
      $region44: #{tpu_custom_call.1} parent=5 // pred_fallthru
        _
      %p3958 = scmp.le.s32.totalorder 2, %s15
      // Predicated region
      $region49: #{tpu_custom_call.1} parent=5 // pred_check
        %p3959 = pneg %p3958
      $region50: #{tpu_custom_call.1} parent=5 // pred_check_branch
        %3961 = sbr.rel (%p3959) target = $region52
      $region51: #{tpu_custom_call.1} parent=5 // pred_region
        %s3962 = ssub.s32 %s15, 2
        // Predicated region
        $region53: #{tpu_custom_call.1} parent=51 // pred_check
          %p3963 = pneg %p190
        $region54: #{tpu_custom_call.1} parent=51 // pred_check_branch
          %3965 = sbr.rel (%p3963) target = $region56
        $region55: #{tpu_custom_call.1} parent=51 // pred_region
          %s3966 = sand.u32 %s175, 1
          %s3967 = scalar_lea.sflag [#allocation3], %s3966
          %s3968 = sand.u32 %s175, 1
          %s3969 = smul.addr %s3968, 32
          %s3970 = scalar_lea.vmem [#allocation2], %s3969
          %3971 = dma.done %s3967, 512
        $region56: #{tpu_custom_call.1} parent=51 // pred_fallthru
          _
      $region52: #{tpu_custom_call.1} parent=5 // pred_fallthru
        _
    $region6: #{tpu_custom_call.1} parent=1 // loop_footer
      %s19 = sadd.s32 1, %s15
    $region7: #{tpu_custom_call.1} parent=1 // loop_footer_branch
      %14 = sbr.rel target = $region3
    $region8: #{tpu_custom_call.1} parent=1 // loop_exit
      _
    %3972 = vsyncpa [#allocation3], 1
    %s3973 = scalar_lea.sflag [#allocation3], 1
    %3974 = vsyncpa %s3973, 1

// kernel: tpu_custom_call.1
$region0: #{tpu_custom_call.1}
  #allocation0 [shape = 'u32[]', space=smem, size = 0x4, offset = 0x4, fixed_abs, tag = 'smem constant byte address 0x4 - core index']
  #allocation1 [shape = 'u32[144,128]{1,0:T(1,128)}', space=vmem, size = 0x12000, scoped, tag = 'internal scratch']
  %s0 = inlined_call_operand.vmem [shape: bf16[2,9,9,4], index: 0, kind: input, shape index: {}]
  %s1 = inlined_call_operand.vmem [shape: bf16[2,9,9,4], index: 1, kind: input, shape index: {}]
  %s2 = inlined_call_operand.vmem [shape: bf16[2,9,9,4], index: 2, kind: input, shape index: {}]
  %s3 = inlined_call_operand.vmem [shape: bf16[2,9,9,4], index: 3, kind: input, shape index: {}]
  %s4 = inlined_call_operand.vmem [shape: bf16[9,4,128], index: 4, kind: input, shape index: {}]
  %s5 = inlined_call_operand.vmem [shape: f32[2,128], index: 5, kind: input, shape index: {}]
  %s6 = inlined_call_operand.hbm [shape: bf16[2,8,8,128], index: 6, kind: output, shape index: {}]
  %s7 = sld [smem:[#allocation0]]
  $region57: #{tpu_custom_call.1} parent=0
    _
  %s9 = ssub.s32 1, %s7
  %s10 = scalar_select 0, %s9, %s7
  $region1: #{tpu_custom_call.1} parent=0
    #allocation2 [shape = 'u8[32768]{0}', space=vmem, size = 0x8000, scoped, tag = 'output window, operand 0']
    #allocation3 [shape = 's32[2]{0}', space=sflag, size = 0x8, scoped, tag = 'scoped memory for tpu_custom_call.1']
    %11 = vsyncpa [#allocation3], 0
    %s12 = scalar_lea.sflag [#allocation3], 1
    %13 = vsyncpa %s12, 0
    loop: start=0, step=1, limit=4
    $region2: #{tpu_custom_call.1} parent=1 // loop_pre_header
      _
    $region3: #{tpu_custom_call.1} parent=1 // loop_header
      %s15 = sphi 0, %s19
      %p16 = scmp.ge.s32.totalorder %s15, 4
      %s25 = sphi 0, %s27
      %s28 = sphi 0, %s25
      %s29 = sphi 0, %s28
      %s45 = sphi 0, %s29
      %s51 = sphi 0, %s53
      %s54 = sphi 0, %s51
      %s55 = sphi 0, %s54
      %s71 = sphi 0, %s55
      %s77 = sphi 0, %s79
      %s80 = sphi 0, %s77
      %s81 = sphi 0, %s80
      %s97 = sphi 0, %s81
      %s103 = sphi 0, %s105
      %s106 = sphi 0, %s103
      %s107 = sphi 0, %s106
      %s123 = sphi 0, %s107
      %s127 = sphi 0, %s127
      %s129 = sphi 0, %s127
      %s130 = sphi 0, %s129
      %s144 = sphi 0, %s130
      %s148 = sphi 0, %s148
      %s150 = sphi 0, %s148
      %s151 = sphi 0, %s150
      %s165 = sphi 0, %s151
      %s171 = sphi 0, %s173
      %s174 = sphi 0, %s171
      %s175 = sphi 0, %s174
      %s191 = sphi 0, %s175
    $region4: #{tpu_custom_call.1} parent=1 // loop_header_branch
      %18 = sbr.rel (%p16) target = $region8
    $region5: #{tpu_custom_call.1} parent=1 // loop_body
      %s20 = ssub.s32 %s15, 1
      %s21 = ssub.s32 %s15, 2
      %s22 = sadd.s32 %s15, 1
      %s23 = ssub.s32 %s15, %s22
      %p24 = scmp.eq.s32.totalorder %s23, 0
      %s26 = sadd.s32 %s25, 1
      %s27 = scalar_select %p24, %s25, %s26
      %p30 = pneg %p24
      %p31 = scmp.eq.s32.totalorder %s15, 1
      %p32 = por %p30, %p31
      %p33 = scmp.ne.s32.totalorder %s25, %s28
      %p34 = scmp.eq.s32.totalorder %s15, 0
      %p35 = por %p33, %p34
      %p36 = scmp.ne.s32.totalorder %s25, %s28
      %p37 = scmp.eq.s32.totalorder %s20, 1
      %p38 = por %p36, %p37
      %p39 = scmp.ne.s32.totalorder %s28, %s29
      %p40 = scmp.eq.s32.totalorder %s20, 0
      %p41 = por %p39, %p40
      %p42 = scmp.ne.s32.totalorder %s28, %s29
      %p43 = scmp.eq.s32.totalorder %s21, 1
      %p44 = por %p42, %p43
      %p46 = scmp.ne.s32.totalorder %s29, %s45
      %p47 = scmp.eq.s32.totalorder %s21, 0
      %p48 = por %p46, %p47
      %s49 = ssub.s32 %s15, %s22
      %p50 = scmp.eq.s32.totalorder %s49, 0
      %s52 = sadd.s32 %s51, 1
      %s53 = scalar_select %p50, %s51, %s52
      %p56 = pneg %p50
      %p57 = scmp.eq.s32.totalorder %s15, 1
      %p58 = por %p56, %p57
      %p59 = scmp.ne.s32.totalorder %s51, %s54
      %p60 = scmp.eq.s32.totalorder %s15, 0
      %p61 = por %p59, %p60
      %p62 = scmp.ne.s32.totalorder %s51, %s54
      %p63 = scmp.eq.s32.totalorder %s20, 1
      %p64 = por %p62, %p63
      %p65 = scmp.ne.s32.totalorder %s54, %s55
      %p66 = scmp.eq.s32.totalorder %s20, 0
      %p67 = por %p65, %p66
      %p68 = scmp.ne.s32.totalorder %s54, %s55
      %p69 = scmp.eq.s32.totalorder %s21, 1
      %p70 = por %p68, %p69
      %p72 = scmp.ne.s32.totalorder %s55, %s71
      %p73 = scmp.eq.s32.totalorder %s21, 0
      %p74 = por %p72, %p73
      %s75 = ssub.s32 %s15, %s22
      %p76 = scmp.eq.s32.totalorder %s75, 0
      %s78 = sadd.s32 %s77, 1
      %s79 = scalar_select %p76, %s77, %s78
      %p82 = pneg %p76
      %p83 = scmp.eq.s32.totalorder %s15, 1
      %p84 = por %p82, %p83
      %p85 = scmp.ne.s32.totalorder %s77, %s80
      %p86 = scmp.eq.s32.totalorder %s15, 0
      %p87 = por %p85, %p86
      %p88 = scmp.ne.s32.totalorder %s77, %s80
      %p89 = scmp.eq.s32.totalorder %s20, 1
      %p90 = por %p88, %p89
      %p91 = scmp.ne.s32.totalorder %s80, %s81
      %p92 = scmp.eq.s32.totalorder %s20, 0
      %p93 = por %p91, %p92
      %p94 = scmp.ne.s32.totalorder %s80, %s81
      %p95 = scmp.eq.s32.totalorder %s21, 1
      %p96 = por %p94, %p95
      %p98 = scmp.ne.s32.totalorder %s81, %s97
      %p99 = scmp.eq.s32.totalorder %s21, 0
      %p100 = por %p98, %p99
      %s101 = ssub.s32 %s15, %s22
      %p102 = scmp.eq.s32.totalorder %s101, 0
      %s104 = sadd.s32 %s103, 1
      %s105 = scalar_select %p102, %s103, %s104
      %p108 = pneg %p102
      %p109 = scmp.eq.s32.totalorder %s15, 1
      %p110 = por %p108, %p109
      %p111 = scmp.ne.s32.totalorder %s103, %s106
      %p112 = scmp.eq.s32.totalorder %s15, 0
      %p113 = por %p111, %p112
      %p114 = scmp.ne.s32.totalorder %s103, %s106
      %p115 = scmp.eq.s32.totalorder %s20, 1
      %p116 = por %p114, %p115
      %p117 = scmp.ne.s32.totalorder %s106, %s107
      %p118 = scmp.eq.s32.totalorder %s20, 0
      %p119 = por %p117, %p118
      %p120 = scmp.ne.s32.totalorder %s106, %s107
      %p121 = scmp.eq.s32.totalorder %s21, 1
      %p122 = por %p120, %p121
      %p124 = scmp.ne.s32.totalorder %s107, %s123
      %p125 = scmp.eq.s32.totalorder %s21, 0
      %p126 = por %p124, %p125
      %s128 = sadd.s32 %s127, 1
      %p131 = scmp.eq.s32.totalorder %s15, 1
      %p132 = scmp.ne.s32.totalorder %s127, %s129
      %p133 = scmp.eq.s32.totalorder %s15, 0
      %p134 = por %p132, %p133
      %p135 = scmp.ne.s32.totalorder %s127, %s129
      %p136 = scmp.eq.s32.totalorder %s20, 1
      %p137 = por %p135, %p136
      %p138 = scmp.ne.s32.totalorder %s129, %s130
      %p139 = scmp.eq.s32.totalorder %s20, 0
      %p140 = por %p138, %p139
      %p141 = scmp.ne.s32.totalorder %s129, %s130
      %p142 = scmp.eq.s32.totalorder %s21, 1
      %p143 = por %p141, %p142
      %p145 = scmp.ne.s32.totalorder %s130, %s144
      %p146 = scmp.eq.s32.totalorder %s21, 0
      %p147 = por %p145, %p146
      %s149 = sadd.s32 %s148, 1
      %p152 = scmp.eq.s32.totalorder %s15, 1
      %p153 = scmp.ne.s32.totalorder %s148, %s150
      %p154 = scmp.eq.s32.totalorder %s15, 0
      %p155 = por %p153, %p154
      %p156 = scmp.ne.s32.totalorder %s148, %s150
      %p157 = scmp.eq.s32.totalorder %s20, 1
      %p158 = por %p156, %p157
      %p159 = scmp.ne.s32.totalorder %s150, %s151
      %p160 = scmp.eq.s32.totalorder %s20, 0
      %p161 = por %p159, %p160
      %p162 = scmp.ne.s32.totalorder %s150, %s151
      %p163 = scmp.eq.s32.totalorder %s21, 1
      %p164 = por %p162, %p163
      %p166 = scmp.ne.s32.totalorder %s151, %s165
      %p167 = scmp.eq.s32.totalorder %s21, 0
      %p168 = por %p166, %p167
      %s169 = ssub.s32 %s15, %s22
      %p170 = scmp.eq.s32.totalorder %s169, 0
      %s172 = sadd.s32 %s171, 1
      %s173 = scalar_select %p170, %s171, %s172
      %p176 = pneg %p170
      %p177 = scmp.eq.s32.totalorder %s15, 1
      %p178 = por %p176, %p177
      %p179 = scmp.ne.s32.totalorder %s171, %s174
      %p180 = scmp.eq.s32.totalorder %s15, 0
      %p181 = por %p179, %p180
      %p182 = scmp.ne.s32.totalorder %s171, %s174
      %p183 = scmp.eq.s32.totalorder %s20, 1
      %p184 = por %p182, %p183
      %p185 = scmp.ne.s32.totalorder %s174, %s175
      %p186 = scmp.eq.s32.totalorder %s20, 0
      %p187 = por %p185, %p186
      %p188 = scmp.ne.s32.totalorder %s174, %s175
      %p189 = scmp.eq.s32.totalorder %s21, 1
      %p190 = por %p188, %p189
      %p192 = scmp.ne.s32.totalorder %s175, %s191
      %p193 = scmp.eq.s32.totalorder %s21, 0
      %p194 = por %p192, %p193
      %p195 = scmp.le.s32.totalorder 1, %s15
      %p196 = scmp.lt.s32.totalorder %s15, 3
      %p197 = pnand %p195, %p196
      %p198 = pneg %p197
      // Predicated region
      $region9: #{tpu_custom_call.1} parent=5 // pred_check
        _
      $region10: #{tpu_custom_call.1} parent=5 // pred_check_branch
        %200 = sbr.rel (%p197) target = $region12
      $region11: #{tpu_custom_call.1} parent=5 // pred_region
        %s201 = ssub.s32 %s15, 1
        // Predicated region
        $region13: #{tpu_custom_call.1} parent=11 // pred_check
          %p202 = pneg %p140
        $region14: #{tpu_custom_call.1} parent=11 // pred_check_branch
          %204 = sbr.rel (%p202) target = $region16
        $region15: #{tpu_custom_call.1} parent=11 // pred_region
          _
        $region16: #{tpu_custom_call.1} parent=11 // pred_fallthru
          _
        // Predicated region
        $region17: #{tpu_custom_call.1} parent=11 // pred_check
          %p205 = pneg %p161
        $region18: #{tpu_custom_call.1} parent=11 // pred_check_branch
          %207 = sbr.rel (%p205) target = $region20
        $region19: #{tpu_custom_call.1} parent=11 // pred_region
          _
        $region20: #{tpu_custom_call.1} parent=11 // pred_fallthru
          _
      $region12: #{tpu_custom_call.1} parent=5 // pred_fallthru
        _
      %p208 = scmp.lt.s32.totalorder %s15, 2
      // Predicated region
      $region21: #{tpu_custom_call.1} parent=5 // pred_check
        %p209 = pneg %p208
      $region22: #{tpu_custom_call.1} parent=5 // pred_check_branch
        %211 = sbr.rel (%p209) target = $region24
      $region23: #{tpu_custom_call.1} parent=5 // pred_region
        // Predicated region
        $region25: #{tpu_custom_call.1} parent=23 // pred_check
          %p212 = pneg %p35
        $region26: #{tpu_custom_call.1} parent=23 // pred_check_branch
          %214 = sbr.rel (%p212) target = $region28
        $region27: #{tpu_custom_call.1} parent=23 // pred_region
          %p215 = scmp.lt.s32.totalorder %s15, 1
          %s216 = scalar_select %p215, %s15, 1
          %s217 = smul.addr %s216, 18
          %s218 = smul.addr %s217, 4
          %s219 = scalar_lea.vmem %s0, %s218
        $region28: #{tpu_custom_call.1} parent=23 // pred_fallthru
          _
        // Predicated region
        $region29: #{tpu_custom_call.1} parent=23 // pred_check
          %p220 = pneg %p61
        $region30: #{tpu_custom_call.1} parent=23 // pred_check_branch
          %222 = sbr.rel (%p220) target = $region32
        $region31: #{tpu_custom_call.1} parent=23 // pred_region
          %p223 = scmp.lt.s32.totalorder %s15, 1
          %s224 = scalar_select %p223, %s15, 1
          %s225 = smul.addr %s224, 18
          %s226 = smul.addr %s225, 4
          %s227 = scalar_lea.vmem %s1, %s226
        $region32: #{tpu_custom_call.1} parent=23 // pred_fallthru
          _
        // Predicated region
        $region33: #{tpu_custom_call.1} parent=23 // pred_check
          %p228 = pneg %p87
        $region34: #{tpu_custom_call.1} parent=23 // pred_check_branch
          %230 = sbr.rel (%p228) target = $region36
        $region35: #{tpu_custom_call.1} parent=23 // pred_region
          %p231 = scmp.lt.s32.totalorder %s15, 1
          %s232 = scalar_select %p231, %s15, 1
          %s233 = smul.addr %s232, 18
          %s234 = smul.addr %s233, 4
          %s235 = scalar_lea.vmem %s2, %s234
        $region36: #{tpu_custom_call.1} parent=23 // pred_fallthru
          _
        // Predicated region
        $region37: #{tpu_custom_call.1} parent=23 // pred_check
          %p236 = pneg %p113
        $region38: #{tpu_custom_call.1} parent=23 // pred_check_branch
          %238 = sbr.rel (%p236) target = $region40
        $region39: #{tpu_custom_call.1} parent=23 // pred_region
          %p239 = scmp.lt.s32.totalorder %s15, 1
          %s240 = scalar_select %p239, %s15, 1
          %s241 = smul.addr %s240, 18
          %s242 = smul.addr %s241, 4
          %s243 = scalar_lea.vmem %s3, %s242
        $region40: #{tpu_custom_call.1} parent=23 // pred_fallthru
          _
      $region24: #{tpu_custom_call.1} parent=5 // pred_fallthru
        _
      %p244 = scmp.le.s32.totalorder 1, %s15
      %p245 = scmp.lt.s32.totalorder %s15, 3
      %p246 = pnand %p244, %p245
      %p247 = pneg %p246
      // Predicated region
      $region41: #{tpu_custom_call.1} parent=5 // pred_check
        _
      $region42: #{tpu_custom_call.1} parent=5 // pred_check_branch
        %249 = sbr.rel (%p246) target = $region44
      $region43: #{tpu_custom_call.1} parent=5 // pred_region
        %s250 = ssub.s32 %s15, 1
        %p251 = scmp.lt.s32.totalorder %s20, 1
        %s252 = scalar_select %p251, %s20, 1
        %s253 = smul.addr %s252, 18
        %s254 = smul.addr %s253, 4
        %s255 = scalar_lea.vmem %s0, %s254
        %p256 = pneg %p41
        %p257 = pneg %p38
        %p258 = scmp.lt.s32.totalorder %s20, 1
        %s259 = scalar_select %p258, %s20, 1
        %s260 = smul.addr %s259, 18
        %s261 = smul.addr %s260, 4
        %s262 = scalar_lea.vmem %s1, %s261
        %p263 = pneg %p67
        %p264 = pneg %p64
        %p265 = scmp.lt.s32.totalorder %s20, 1
        %s266 = scalar_select %p265, %s20, 1
        %s267 = smul.addr %s266, 18
        %s268 = smul.addr %s267, 4
        %s269 = scalar_lea.vmem %s2, %s268
        %p270 = pneg %p93
        %p271 = pneg %p90
        %p272 = scmp.lt.s32.totalorder %s20, 1
        %s273 = scalar_select %p272, %s20, 1
        %s274 = smul.addr %s273, 18
        %s275 = smul.addr %s274, 4
        %s276 = scalar_lea.vmem %s3, %s275
        %p277 = pneg %p119
        %p278 = pneg %p116
        %p279 = pneg %p140
        %p280 = pneg %p137
        %p281 = pneg %p161
        %p282 = pneg %p158
        %p283 = pneg %p187
        %p284 = pneg %p184
        %s285 = sand.u32 %s174, 1
        %s286 = scalar_lea.sflag [#allocation3], %s285
        %s287 = sand.u32 %s174, 1
        %s288 = smul.addr %s287, 32
        %s289 = scalar_lea.vmem [#allocation2], %s288
        %p290 = scmp.lt.s32.totalorder %s20, 1
        %s291 = scalar_select %p290, %s20, 1
        %s292 = smul.addr %s291, 18
        %s293 = smul.addr %s292, 4
        %s294 = scalar_lea.vmem %s0, %s293
        %p295 = scmp.lt.s32.totalorder %s20, 1
        %s296 = scalar_select %p295, %s20, 1
        %s297 = smul.addr %s296, 18
        %s298 = smul.addr %s297, 4
        %s299 = scalar_lea.vmem %s1, %s298
        %p300 = scmp.lt.s32.totalorder %s20, 1
        %s301 = scalar_select %p300, %s20, 1
        %s302 = smul.addr %s301, 18
        %s303 = smul.addr %s302, 4
        %s304 = scalar_lea.vmem %s2, %s303
        %p305 = scmp.lt.s32.totalorder %s20, 1
        %s306 = scalar_select %p305, %s20, 1
        %s307 = smul.addr %s306, 18
        %s308 = smul.addr %s307, 4
        %s309 = scalar_lea.vmem %s3, %s308
        %v311 = vld [vmem:[%s4] sm:$0x3]
        %v312 = vld [vmem:[%s4 + $0x2] sm:$0x3]
        %v313 = vld [vmem:[%s4 + $0x4] sm:$0x3]
        %v314 = vld [vmem:[%s4 + $0x6] sm:$0x3]
        %v315 = vld [vmem:[%s4 + $0x8] sm:$0x3]
        %v316 = vld [vmem:[%s4 + $0xa] sm:$0x3]
        %v317 = vld [vmem:[%s4 + $0xc] sm:$0x3]
        %v318 = vld [vmem:[%s4 + $0xe] sm:$0x3]
        %v319 = vld [vmem:[%s4 + $0x10] sm:$0x3]
        %v320 = vld [vmem:[%s294] sm:$0xf]
        %v321 = vld [vmem:[%s294 + $0x8] sm:$0xf]
        %v322 = vld [vmem:[%s294 + $0x10] sm:$0xf]
        %v323 = vld [vmem:[%s294 + $0x18] sm:$0xf]
        %v324 = vld [vmem:[%s294 + $0x20] sm:$0xf]
        %v325 = vld [vmem:[%s294 + $0x28] sm:$0xf]
        %v326 = vld [vmem:[%s294 + $0x30] sm:$0xf]
        %v327 = vld [vmem:[%s294 + $0x38] sm:$0xf]
        %v328 = vld [vmem:[%s299] sm:$0xf]
        %v329 = vld [vmem:[%s299 + $0x8] sm:$0xf]
        %v330 = vld [vmem:[%s299 + $0x10] sm:$0xf]
        %v331 = vld [vmem:[%s299 + $0x18] sm:$0xf]
        %v332 = vld [vmem:[%s299 + $0x20] sm:$0xf]
        %v333 = vld [vmem:[%s299 + $0x28] sm:$0xf]
        %v334 = vld [vmem:[%s299 + $0x30] sm:$0xf]
        %v335 = vld [vmem:[%s299 + $0x38] sm:$0xf]
        %vm336 = vcmask 31744
        %v338 = vsel %vm336, %v328, 0
        %vm340 = vcmask 1041408
        %v342 = vsel %vm340, %v312, 0
        %344 = vmatprep.subr.bf16.mxu0 0
        %345 = vmatpush1.bf16.msra.mxu0 %v342
        %346 = vmatprep.subr.bf16.mxu0 0
        %347 = vmatpush1.bf16.msra.mxu0 0
        %348 = vmatprep.subr.bf16.mxu0 0
        %349 = vmatpush1.bf16.msra.mxu0 0
        %350 = vmatprep.subr.bf16.mxu0 0
        %351 = vmatpush1.bf16.msra.mxu0 0
        %352 = vmatprep.subr.bf16.mxu0 0
        %353 = vmatpush1.bf16.msra.mxu0 0
        %354 = vmatprep.subr.bf16.mxu0 0
        %355 = vmatpush1.bf16.msra.mxu0 0
        %356 = vmatprep.subr.bf16.mxu0 0
        %357 = vmatpush1.bf16.msra.mxu0 0
        %358 = vmatprep.subr.bf16.mxu0 0
        %359 = vmatpush1.bf16.msra.mxu0 0
        %360 = vmatprep.subr.bf16.mxu0 0
        %361 = vmatpush1.bf16.msra.mxu0 0
        %362 = vmatprep.subr.bf16.mxu0 0
        %363 = vmatpush1.bf16.msra.mxu0 0
        %364 = vmatprep.subr.bf16.mxu0 0
        %365 = vmatpush1.bf16.msra.mxu0 0
        %366 = vmatprep.subr.bf16.mxu0 0
        %367 = vmatpush1.bf16.msra.mxu0 0
        %368 = vmatprep.subr.bf16.mxu0 0
        %369 = vmatpush1.bf16.msra.mxu0 0
        %370 = vmatprep.subr.bf16.mxu0 0
        %371 = vmatpush1.bf16.msra.mxu0 0
        %372 = vmatprep.subr.bf16.mxu0 0
        %373 = vmatpush1.bf16.msra.mxu0 0
        %374 = vmatprep.subr.bf16.mxu0 0
        %375 = vmatpush1.bf16.msra.mxu0 0
        %376 = vmatprep.mubr.bf16.mxu0 0
        %377 = vmatmul.mubr.bf16.gmra.mrb[0].mxu0 %v338
        %v378 = vpop.f32.mrb[0].mxu0
        %v379 = vadd.f32 0.0, %v378
        %v380 = vpop.f32.mrb[0].mxu0
        %v381 = vpop.f32.mrb[0].mxu0
        %v382 = vpop.f32.mrb[0].mxu0
        %383 = vdwg.mxu0
        %v385 = vsel %vm336, %v329, 0
        %387 = vmatprep.subr.bf16.mxu0 0
        %388 = vmatpush1.bf16.msra.mxu0 %v342
        %389 = vmatprep.subr.bf16.mxu0 0
        %390 = vmatpush1.bf16.msra.mxu0 0
        %391 = vmatprep.subr.bf16.mxu0 0
        %392 = vmatpush1.bf16.msra.mxu0 0
        %393 = vmatprep.subr.bf16.mxu0 0
        %394 = vmatpush1.bf16.msra.mxu0 0
        %395 = vmatprep.subr.bf16.mxu0 0
        %396 = vmatpush1.bf16.msra.mxu0 0
        %397 = vmatprep.subr.bf16.mxu0 0
        %398 = vmatpush1.bf16.msra.mxu0 0
        %399 = vmatprep.subr.bf16.mxu0 0
        %400 = vmatpush1.bf16.msra.mxu0 0
        %401 = vmatprep.subr.bf16.mxu0 0
        %402 = vmatpush1.bf16.msra.mxu0 0
        %403 = vmatprep.subr.bf16.mxu0 0
        %404 = vmatpush1.bf16.msra.mxu0 0
        %405 = vmatprep.subr.bf16.mxu0 0
        %406 = vmatpush1.bf16.msra.mxu0 0
        %407 = vmatprep.subr.bf16.mxu0 0
        %408 = vmatpush1.bf16.msra.mxu0 0
        %409 = vmatprep.subr.bf16.mxu0 0
        %410 = vmatpush1.bf16.msra.mxu0 0
        %411 = vmatprep.subr.bf16.mxu0 0
        %412 = vmatpush1.bf16.msra.mxu0 0
        %413 = vmatprep.subr.bf16.mxu0 0
        %414 = vmatpush1.bf16.msra.mxu0 0
        %415 = vmatprep.subr.bf16.mxu0 0
        %416 = vmatpush1.bf16.msra.mxu0 0
        %417 = vmatprep.subr.bf16.mxu0 0
        %418 = vmatpush1.bf16.msra.mxu0 0
        %419 = vmatprep.mubr.bf16.mxu0 0
        %420 = vmatmul.mubr.bf16.gmra.mrb[0].mxu0 %v385
        %v421 = vpop.f32.mrb[0].mxu0
        %v422 = vadd.f32 0.0, %v421
        %v423 = vpop.f32.mrb[0].mxu0
        %v424 = vpop.f32.mrb[0].mxu0
        %v425 = vpop.f32.mrb[0].mxu0
        %426 = vdwg.mxu0
        %v428 = vsel %vm336, %v330, 0
        %430 = vmatprep.subr.bf16.mxu0 0
        %431 = vmatpush1.bf16.msra.mxu0 %v342
        %432 = vmatprep.subr.bf16.mxu0 0
        %433 = vmatpush1.bf16.msra.mxu0 0
        %434 = vmatprep.subr.bf16.mxu0 0
        %435 = vmatpush1.bf16.msra.mxu0 0
        %436 = vmatprep.subr.bf16.mxu0 0
        %437 = vmatpush1.bf16.msra.mxu0 0
        %438 = vmatprep.subr.bf16.mxu0 0
        %439 = vmatpush1.bf16.msra.mxu0 0
        %440 = vmatprep.subr.bf16.mxu0 0
        %441 = vmatpush1.bf16.msra.mxu0 0
        %442 = vmatprep.subr.bf16.mxu0 0
        %443 = vmatpush1.bf16.msra.mxu0 0
        %444 = vmatprep.subr.bf16.mxu0 0
        %445 = vmatpush1.bf16.msra.mxu0 0
        %446 = vmatprep.subr.bf16.mxu0 0
        %447 = vmatpush1.bf16.msra.mxu0 0
        %448 = vmatprep.subr.bf16.mxu0 0
        %449 = vmatpush1.bf16.msra.mxu0 0
        %450 = vmatprep.subr.bf16.mxu0 0
        %451 = vmatpush1.bf16.msra.mxu0 0
        %452 = vmatprep.subr.bf16.mxu0 0
        %453 = vmatpush1.bf16.msra.mxu0 0
        %454 = vmatprep.subr.bf16.mxu0 0
        %455 = vmatpush1.bf16.msra.mxu0 0
        %456 = vmatprep.subr.bf16.mxu0 0
        %457 = vmatpush1.bf16.msra.mxu0 0
        %458 = vmatprep.subr.bf16.mxu0 0
        %459 = vmatpush1.bf16.msra.mxu0 0
        %460 = vmatprep.subr.bf16.mxu0 0
        %461 = vmatpush1.bf16.msra.mxu0 0
        %462 = vmatprep.mubr.bf16.mxu0 0
        %463 = vmatmul.mubr.bf16.gmra.mrb[0].mxu0 %v428
        %v464 = vpop.f32.mrb[0].mxu0
        %v465 = vadd.f32 0.0, %v464
        %v466 = vpop.f32.mrb[0].mxu0
        %v467 = vpop.f32.mrb[0].mxu0
        %v468 = vpop.f32.mrb[0].mxu0
        %469 = vdwg.mxu0
        %v471 = vsel %vm336, %v331, 0
        %473 = vmatprep.subr.bf16.mxu0 0
        %474 = vmatpush1.bf16.msra.mxu0 %v342
        %475 = vmatprep.subr.bf16.mxu0 0
        %476 = vmatpush1.bf16.msra.mxu0 0
        %477 = vmatprep.subr.bf16.mxu0 0
        %478 = vmatpush1.bf16.msra.mxu0 0
        %479 = vmatprep.subr.bf16.mxu0 0
        %480 = vmatpush1.bf16.msra.mxu0 0
        %481 = vmatprep.subr.bf16.mxu0 0
        %482 = vmatpush1.bf16.msra.mxu0 0
        %483 = vmatprep.subr.bf16.mxu0 0
        %484 = vmatpush1.bf16.msra.mxu0 0
        %485 = vmatprep.subr.bf16.mxu0 0
        %486 = vmatpush1.bf16.msra.mxu0 0
        %487 = vmatprep.subr.bf16.mxu0 0
        %488 = vmatpush1.bf16.msra.mxu0 0
        %489 = vmatprep.subr.bf16.mxu0 0
        %490 = vmatpush1.bf16.msra.mxu0 0
        %491 = vmatprep.subr.bf16.mxu0 0
        %492 = vmatpush1.bf16.msra.mxu0 0
        %493 = vmatprep.subr.bf16.mxu0 0
        %494 = vmatpush1.bf16.msra.mxu0 0
        %495 = vmatprep.subr.bf16.mxu0 0
        %496 = vmatpush1.bf16.msra.mxu0 0
        %497 = vmatprep.subr.bf16.mxu0 0
        %498 = vmatpush1.bf16.msra.mxu0 0
        %499 = vmatprep.subr.bf16.mxu0 0
        %500 = vmatpush1.bf16.msra.mxu0 0
        %501 = vmatprep.subr.bf16.mxu0 0
        %502 = vmatpush1.bf16.msra.mxu0 0
        %503 = vmatprep.subr.bf16.mxu0 0
        %504 = vmatpush1.bf16.msra.mxu0 0
        %505 = vmatprep.mubr.bf16.mxu0 0
        %506 = vmatmul.mubr.bf16.gmra.mrb[0].mxu0 %v471
        %v507 = vpop.f32.mrb[0].mxu0
        %v508 = vadd.f32 0.0, %v507
        %v509 = vpop.f32.mrb[0].mxu0
        %v510 = vpop.f32.mrb[0].mxu0
        %v511 = vpop.f32.mrb[0].mxu0
        %512 = vdwg.mxu0
        %v514 = vsel %vm336, %v332, 0
        %516 = vmatprep.subr.bf16.mxu0 0
        %517 = vmatpush1.bf16.msra.mxu0 %v342
        %518 = vmatprep.subr.bf16.mxu0 0
        %519 = vmatpush1.bf16.msra.mxu0 0
        %520 = vmatprep.subr.bf16.mxu0 0
        %521 = vmatpush1.bf16.msra.mxu0 0
        %522 = vmatprep.subr.bf16.mxu0 0
        %523 = vmatpush1.bf16.msra.mxu0 0
        %524 = vmatprep.subr.bf16.mxu0 0
        %525 = vmatpush1.bf16.msra.mxu0 0
        %526 = vmatprep.subr.bf16.mxu0 0
        %527 = vmatpush1.bf16.msra.mxu0 0
        %528 = vmatprep.subr.bf16.mxu0 0
        %529 = vmatpush1.bf16.msra.mxu0 0
        %530 = vmatprep.subr.bf16.mxu0 0
        %531 = vmatpush1.bf16.msra.mxu0 0
        %532 = vmatprep.subr.bf16.mxu0 0
        %533 = vmatpush1.bf16.msra.mxu0 0
        %534 = vmatprep.subr.bf16.mxu0 0
        %535 = vmatpush1.bf16.msra.mxu0 0
        %536 = vmatprep.subr.bf16.mxu0 0
        %537 = vmatpush1.bf16.msra.mxu0 0
        %538 = vmatprep.subr.bf16.mxu0 0
        %539 = vmatpush1.bf16.msra.mxu0 0
        %540 = vmatprep.subr.bf16.mxu0 0
        %541 = vmatpush1.bf16.msra.mxu0 0
        %542 = vmatprep.subr.bf16.mxu0 0
        %543 = vmatpush1.bf16.msra.mxu0 0
        %544 = vmatprep.subr.bf16.mxu0 0
        %545 = vmatpush1.bf16.msra.mxu0 0
        %546 = vmatprep.subr.bf16.mxu0 0
        %547 = vmatpush1.bf16.msra.mxu0 0
        %548 = vmatprep.mubr.bf16.mxu0 0
        %549 = vmatmul.mubr.bf16.gmra.mrb[0].mxu0 %v514
        %v550 = vpop.f32.mrb[0].mxu0
        %v551 = vadd.f32 0.0, %v550
        %v552 = vpop.f32.mrb[0].mxu0
        %v553 = vpop.f32.mrb[0].mxu0
        %v554 = vpop.f32.mrb[0].mxu0
        %555 = vdwg.mxu0
        %v557 = vsel %vm336, %v333, 0
        %559 = vmatprep.subr.bf16.mxu0 0
        %560 = vmatpush1.bf16.msra.mxu0 %v342
        %561 = vmatprep.subr.bf16.mxu0 0
        %562 = vmatpush1.bf16.msra.mxu0 0
        %563 = vmatprep.subr.bf16.mxu0 0
        %564 = vmatpush1.bf16.msra.mxu0 0
        %565 = vmatprep.subr.bf16.mxu0 0
        %566 = vmatpush1.bf16.msra.mxu0 0
        %567 = vmatprep.subr.bf16.mxu0 0
        %568 = vmatpush1.bf16.msra.mxu0 0
        %569 = vmatprep.subr.bf16.mxu0 0
        %570 = vmatpush1.bf16.msra.mxu0 0
        %571 = vmatprep.subr.bf16.mxu0 0
        %572 = vmatpush1.bf16.msra.mxu0 0
        %573 = vmatprep.subr.bf16.mxu0 0
        %574 = vmatpush1.bf16.msra.mxu0 0
        %575 = vmatprep.subr.bf16.mxu0 0
        %576 = vmatpush1.bf16.msra.mxu0 0
        %577 = vmatprep.subr.bf16.mxu0 0
        %578 = vmatpush1.bf16.msra.mxu0 0
        %579 = vmatprep.subr.bf16.mxu0 0
        %580 = vmatpush1.bf16.msra.mxu0 0
        %581 = vmatprep.subr.bf16.mxu0 0
        %582 = vmatpush1.bf16.msra.mxu0 0
        %583 = vmatprep.subr.bf16.mxu0 0
        %584 = vmatpush1.bf16.msra.mxu0 0
        %585 = vmatprep.subr.bf16.mxu0 0
        %586 = vmatpush1.bf16.msra.mxu0 0
        %587 = vmatprep.subr.bf16.mxu0 0
        %588 = vmatpush1.bf16.msra.mxu0 0
        %589 = vmatprep.subr.bf16.mxu0 0
        %590 = vmatpush1.bf16.msra.mxu0 0
        %591 = vmatprep.mubr.bf16.mxu0 0
        %592 = vmatmul.mubr.bf16.gmra.mrb[0].mxu0 %v557
        %v593 = vpop.f32.mrb[0].mxu0
        %v594 = vadd.f32 0.0, %v593
        %v595 = vpop.f32.mrb[0].mxu0
        %v596 = vpop.f32.mrb[0].mxu0
        %v597 = vpop.f32.mrb[0].mxu0
        %598 = vdwg.mxu0
        %v600 = vsel %vm336, %v334, 0
        %602 = vmatprep.subr.bf16.mxu0 0
        %603 = vmatpush1.bf16.msra.mxu0 %v342
        %604 = vmatprep.subr.bf16.mxu0 0
        %605 = vmatpush1.bf16.msra.mxu0 0
        %606 = vmatprep.subr.bf16.mxu0 0
        %607 = vmatpush1.bf16.msra.mxu0 0
        %608 = vmatprep.subr.bf16.mxu0 0
        %609 = vmatpush1.bf16.msra.mxu0 0
        %610 = vmatprep.subr.bf16.mxu0 0
        %611 = vmatpush1.bf16.msra.mxu0 0
        %612 = vmatprep.subr.bf16.mxu0 0
        %613 = vmatpush1.bf16.msra.mxu0 0
        %614 = vmatprep.subr.bf16.mxu0 0
        %615 = vmatpush1.bf16.msra.mxu0 0
        %616 = vmatprep.subr.bf16.mxu0 0
        %617 = vmatpush1.bf16.msra.mxu0 0
        %618 = vmatprep.subr.bf16.mxu0 0
        %619 = vmatpush1.bf16.msra.mxu0 0
        %620 = vmatprep.subr.bf16.mxu0 0
        %621 = vmatpush1.bf16.msra.mxu0 0
        %622 = vmatprep.subr.bf16.mxu0 0
        %623 = vmatpush1.bf16.msra.mxu0 0
        %624 = vmatprep.subr.bf16.mxu0 0
        %625 = vmatpush1.bf16.msra.mxu0 0
        %626 = vmatprep.subr.bf16.mxu0 0
        %627 = vmatpush1.bf16.msra.mxu0 0
        %628 = vmatprep.subr.bf16.mxu0 0
        %629 = vmatpush1.bf16.msra.mxu0 0
        %630 = vmatprep.subr.bf16.mxu0 0
        %631 = vmatpush1.bf16.msra.mxu0 0
        %632 = vmatprep.subr.bf16.mxu0 0
        %633 = vmatpush1.bf16.msra.mxu0 0
        %634 = vmatprep.mubr.bf16.mxu0 0
        %635 = vmatmul.mubr.bf16.gmra.mrb[0].mxu0 %v600
        %v636 = vpop.f32.mrb[0].mxu0
        %v637 = vadd.f32 0.0, %v636
        %v638 = vpop.f32.mrb[0].mxu0
        %v639 = vpop.f32.mrb[0].mxu0
        %v640 = vpop.f32.mrb[0].mxu0
        %641 = vdwg.mxu0
        %v643 = vsel %vm336, %v335, 0
        %645 = vmatprep.subr.bf16.mxu0 0
        %646 = vmatpush1.bf16.msra.mxu0 %v342
        %647 = vmatprep.subr.bf16.mxu0 0
        %648 = vmatpush1.bf16.msra.mxu0 0
        %649 = vmatprep.subr.bf16.mxu0 0
        %650 = vmatpush1.bf16.msra.mxu0 0
        %651 = vmatprep.subr.bf16.mxu0 0
        %652 = vmatpush1.bf16.msra.mxu0 0
        %653 = vmatprep.subr.bf16.mxu0 0
        %654 = vmatpush1.bf16.msra.mxu0 0
        %655 = vmatprep.subr.bf16.mxu0 0
        %656 = vmatpush1.bf16.msra.mxu0 0
        %657 = vmatprep.subr.bf16.mxu0 0
        %658 = vmatpush1.bf16.msra.mxu0 0
        %659 = vmatprep.subr.bf16.mxu0 0
        %660 = vmatpush1.bf16.msra.mxu0 0
        %661 = vmatprep.subr.bf16.mxu0 0
        %662 = vmatpush1.bf16.msra.mxu0 0
        %663 = vmatprep.subr.bf16.mxu0 0
        %664 = vmatpush1.bf16.msra.mxu0 0
        %665 = vmatprep.subr.bf16.mxu0 0
        %666 = vmatpush1.bf16.msra.mxu0 0
        %667 = vmatprep.subr.bf16.mxu0 0
        %668 = vmatpush1.bf16.msra.mxu0 0
        %669 = vmatprep.subr.bf16.mxu0 0
        %670 = vmatpush1.bf16.msra.mxu0 0
        %671 = vmatprep.subr.bf16.mxu0 0
        %672 = vmatpush1.bf16.msra.mxu0 0
        %673 = vmatprep.subr.bf16.mxu0 0
        %674 = vmatpush1.bf16.msra.mxu0 0
        %675 = vmatprep.subr.bf16.mxu0 0
        %676 = vmatpush1.bf16.msra.mxu0 0
        %677 = vmatprep.mubr.bf16.mxu0 0
        %678 = vmatmul.mubr.bf16.gmra.mrb[0].mxu0 %v643
        %v679 = vpop.f32.mrb[0].mxu0
        %v680 = vadd.f32 0.0, %v679
        %v681 = vpop.f32.mrb[0].mxu0
        %v682 = vpop.f32.mrb[0].mxu0
        %v683 = vpop.f32.mrb[0].mxu0
        %684 = vdwg.mxu0
        %v686 = vsel %vm336, %v320, 0
        %v689 = vsel %vm340, %v311, 0
        %691 = vmatprep.subr.bf16.mxu0 0
        %692 = vmatpush1.bf16.msra.mxu0 %v689
        %693 = vmatprep.subr.bf16.mxu0 0
        %694 = vmatpush1.bf16.msra.mxu0 0
        %695 = vmatprep.subr.bf16.mxu0 0
        %696 = vmatpush1.bf16.msra.mxu0 0
        %697 = vmatprep.subr.bf16.mxu0 0
        %698 = vmatpush1.bf16.msra.mxu0 0
        %699 = vmatprep.subr.bf16.mxu0 0
        %700 = vmatpush1.bf16.msra.mxu0 0
        %701 = vmatprep.subr.bf16.mxu0 0
        %702 = vmatpush1.bf16.msra.mxu0 0
        %703 = vmatprep.subr.bf16.mxu0 0
        %704 = vmatpush1.bf16.msra.mxu0 0
        %705 = vmatprep.subr.bf16.mxu0 0
        %706 = vmatpush1.bf16.msra.mxu0 0
        %707 = vmatprep.subr.bf16.mxu0 0
        %708 = vmatpush1.bf16.msra.mxu0 0
        %709 = vmatprep.subr.bf16.mxu0 0
        %710 = vmatpush1.bf16.msra.mxu0 0
        %711 = vmatprep.subr.bf16.mxu0 0
        %712 = vmatpush1.bf16.msra.mxu0 0
        %713 = vmatprep.subr.bf16.mxu0 0
        %714 = vmatpush1.bf16.msra.mxu0 0
        %715 = vmatprep.subr.bf16.mxu0 0
        %716 = vmatpush1.bf16.msra.mxu0 0
        %717 = vmatprep.subr.bf16.mxu0 0
        %718 = vmatpush1.bf16.msra.mxu0 0
        %719 = vmatprep.subr.bf16.mxu0 0
        %720 = vmatpush1.bf16.msra.mxu0 0
        %721 = vmatprep.subr.bf16.mxu0 0
        %722 = vmatpush1.bf16.msra.mxu0 0
        %723 = vmatprep.mubr.bf16.mxu0 0
        %724 = vmatmul.mubr.bf16.gmra.mrb[0].mxu0 %v686
        %v725 = vpop.f32.mrb[0].mxu0
        %v726 = vadd.f32 %v379, %v725
        %v727 = vpop.f32.mrb[0].mxu0
        %v728 = vpop.f32.mrb[0].mxu0
        %v729 = vpop.f32.mrb[0].mxu0
        %730 = vdwg.mxu0
        %v732 = vsel %vm336, %v321, 0
        %734 = vmatprep.subr.bf16.mxu0 0
        %735 = vmatpush1.bf16.msra.mxu0 %v689
        %736 = vmatprep.subr.bf16.mxu0 0
        %737 = vmatpush1.bf16.msra.mxu0 0
        %738 = vmatprep.subr.bf16.mxu0 0
        %739 = vmatpush1.bf16.msra.mxu0 0
        %740 = vmatprep.subr.bf16.mxu0 0
        %741 = vmatpush1.bf16.msra.mxu0 0
        %742 = vmatprep.subr.bf16.mxu0 0
        %743 = vmatpush1.bf16.msra.mxu0 0
        %744 = vmatprep.subr.bf16.mxu0 0
        %745 = vmatpush1.bf16.msra.mxu0 0
        %746 = vmatprep.subr.bf16.mxu0 0
        %747 = vmatpush1.bf16.msra.mxu0 0
        %748 = vmatprep.subr.bf16.mxu0 0
        %749 = vmatpush1.bf16.msra.mxu0 0
        %750 = vmatprep.subr.bf16.mxu0 0
        %751 = vmatpush1.bf16.msra.mxu0 0
        %752 = vmatprep.subr.bf16.mxu0 0
        %753 = vmatpush1.bf16.msra.mxu0 0
        %754 = vmatprep.subr.bf16.mxu0 0
        %755 = vmatpush1.bf16.msra.mxu0 0
        %756 = vmatprep.subr.bf16.mxu0 0
        %757 = vmatpush1.bf16.msra.mxu0 0
        %758 = vmatprep.subr.bf16.mxu0 0
        %759 = vmatpush1.bf16.msra.mxu0 0
        %760 = vmatprep.subr.bf16.mxu0 0
        %761 = vmatpush1.bf16.msra.mxu0 0
        %762 = vmatprep.subr.bf16.mxu0 0
        %763 = vmatpush1.bf16.msra.mxu0 0
        %764 = vmatprep.subr.bf16.mxu0 0
        %765 = vmatpush1.bf16.msra.mxu0 0
        %766 = vmatprep.mubr.bf16.mxu0 0
        %767 = vmatmul.mubr.bf16.gmra.mrb[0].mxu0 %v732
        %v768 = vpop.f32.mrb[0].mxu0
        %v769 = vadd.f32 %v422, %v768
        %v770 = vpop.f32.mrb[0].mxu0
        %v771 = vpop.f32.mrb[0].mxu0
        %v772 = vpop.f32.mrb[0].mxu0
        %773 = vdwg.mxu0
        %v775 = vsel %vm336, %v322, 0
        %777 = vmatprep.subr.bf16.mxu0 0
        %778 = vmatpush1.bf16.msra.mxu0 %v689
        %779 = vmatprep.subr.bf16.mxu0 0
        %780 = vmatpush1.bf16.msra.mxu0 0
        %781 = vmatprep.subr.bf16.mxu0 0
        %782 = vmatpush1.bf16.msra.mxu0 0
        %783 = vmatprep.subr.bf16.mxu0 0
        %784 = vmatpush1.bf16.msra.mxu0 0
        %785 = vmatprep.subr.bf16.mxu0 0
        %786 = vmatpush1.bf16.msra.mxu0 0
        %787 = vmatprep.subr.bf16.mxu0 0
        %788 = vmatpush1.bf16.msra.mxu0 0
        %789 = vmatprep.subr.bf16.mxu0 0
        %790 = vmatpush1.bf16.msra.mxu0 0
        %791 = vmatprep.subr.bf16.mxu0 0
        %792 = vmatpush1.bf16.msra.mxu0 0
        %793 = vmatprep.subr.bf16.mxu0 0
        %794 = vmatpush1.bf16.msra.mxu0 0
        %795 = vmatprep.subr.bf16.mxu0 0
        %796 = vmatpush1.bf16.msra.mxu0 0
        %797 = vmatprep.subr.bf16.mxu0 0
        %798 = vmatpush1.bf16.msra.mxu0 0
        %799 = vmatprep.subr.bf16.mxu0 0
        %800 = vmatpush1.bf16.msra.mxu0 0
        %801 = vmatprep.subr.bf16.mxu0 0
        %802 = vmatpush1.bf16.msra.mxu0 0
        %803 = vmatprep.subr.bf16.mxu0 0
        %804 = vmatpush1.bf16.msra.mxu0 0
        %805 = vmatprep.subr.bf16.mxu0 0
        %806 = vmatpush1.bf16.msra.mxu0 0
        %807 = vmatprep.subr.bf16.mxu0 0
        %808 = vmatpush1.bf16.msra.mxu0 0
        %809 = vmatprep.mubr.bf16.mxu0 0
        %810 = vmatmul.mubr.bf16.gmra.mrb[0].mxu0 %v775
        %v811 = vpop.f32.mrb[0].mxu0
        %v812 = vadd.f32 %v465, %v811
        %v813 = vpop.f32.mrb[0].mxu0
        %v814 = vpop.f32.mrb[0].mxu0
        %v815 = vpop.f32.mrb[0].mxu0
        %816 = vdwg.mxu0
        %v818 = vsel %vm336, %v323, 0
        %820 = vmatprep.subr.bf16.mxu0 0
        %821 = vmatpush1.bf16.msra.mxu0 %v689
        %822 = vmatprep.subr.bf16.mxu0 0
        %823 = vmatpush1.bf16.msra.mxu0 0
        %824 = vmatprep.subr.bf16.mxu0 0
        %825 = vmatpush1.bf16.msra.mxu0 0
        %826 = vmatprep.subr.bf16.mxu0 0
        %827 = vmatpush1.bf16.msra.mxu0 0
        %828 = vmatprep.subr.bf16.mxu0 0
        %829 = vmatpush1.bf16.msra.mxu0 0
        %830 = vmatprep.subr.bf16.mxu0 0
        %831 = vmatpush1.bf16.msra.mxu0 0
        %832 = vmatprep.subr.bf16.mxu0 0
        %833 = vmatpush1.bf16.msra.mxu0 0
        %834 = vmatprep.subr.bf16.mxu0 0
        %835 = vmatpush1.bf16.msra.mxu0 0
        %836 = vmatprep.subr.bf16.mxu0 0
        %837 = vmatpush1.bf16.msra.mxu0 0
        %838 = vmatprep.subr.bf16.mxu0 0
        %839 = vmatpush1.bf16.msra.mxu0 0
        %840 = vmatprep.subr.bf16.mxu0 0
        %841 = vmatpush1.bf16.msra.mxu0 0
        %842 = vmatprep.subr.bf16.mxu0 0
        %843 = vmatpush1.bf16.msra.mxu0 0
        %844 = vmatprep.subr.bf16.mxu0 0
        %845 = vmatpush1.bf16.msra.mxu0 0
        %846 = vmatprep.subr.bf16.mxu0 0
        %847 = vmatpush1.bf16.msra.mxu0 0
        %848 = vmatprep.subr.bf16.mxu0 0
        %849 = vmatpush1.bf16.msra.mxu0 0
        %850 = vmatprep.subr.bf16.mxu0 0
        %851 = vmatpush1.bf16.msra.mxu0 0
        %852 = vmatprep.mubr.bf16.mxu0 0
        %853 = vmatmul.mubr.bf16.gmra.mrb[0].mxu0 %v818
        %v854 = vpop.f32.mrb[0].mxu0
        %v855 = vadd.f32 %v508, %v854
        %v856 = vpop.f32.mrb[0].mxu0
        %v857 = vpop.f32.mrb[0].mxu0
        %v858 = vpop.f32.mrb[0].mxu0
        %859 = vdwg.mxu0
        %v861 = vsel %vm336, %v324, 0
        %863 = vmatprep.subr.bf16.mxu0 0
        %864 = vmatpush1.bf16.msra.mxu0 %v689
        %865 = vmatprep.subr.bf16.mxu0 0
        %866 = vmatpush1.bf16.msra.mxu0 0
        %867 = vmatprep.subr.bf16.mxu0 0
        %868 = vmatpush1.bf16.msra.mxu0 0
        %869 = vmatprep.subr.bf16.mxu0 0
        %870 = vmatpush1.bf16.msra.mxu0 0
        %871 = vmatprep.subr.bf16.mxu0 0
        %872 = vmatpush1.bf16.msra.mxu0 0
        %873 = vmatprep.subr.bf16.mxu0 0
        %874 = vmatpush1.bf16.msra.mxu0 0
        %875 = vmatprep.subr.bf16.mxu0 0
        %876 = vmatpush1.bf16.msra.mxu0 0
        %877 = vmatprep.subr.bf16.mxu0 0
        %878 = vmatpush1.bf16.msra.mxu0 0
        %879 = vmatprep.subr.bf16.mxu0 0
        %880 = vmatpush1.bf16.msra.mxu0 0
        %881 = vmatprep.subr.bf16.mxu0 0
        %882 = vmatpush1.bf16.msra.mxu0 0
        %883 = vmatprep.subr.bf16.mxu0 0
        %884 = vmatpush1.bf16.msra.mxu0 0
        %885 = vmatprep.subr.bf16.mxu0 0
        %886 = vmatpush1.bf16.msra.mxu0 0
        %887 = vmatprep.subr.bf16.mxu0 0
        %888 = vmatpush1.bf16.msra.mxu0 0
        %889 = vmatprep.subr.bf16.mxu0 0
        %890 = vmatpush1.bf16.msra.mxu0 0
        %891 = vmatprep.subr.bf16.mxu0 0
        %892 = vmatpush1.bf16.msra.mxu0 0
        %893 = vmatprep.subr.bf16.mxu0 0
        %894 = vmatpush1.bf16.msra.mxu0 0
        %895 = vmatprep.mubr.bf16.mxu0 0
        %896 = vmatmul.mubr.bf16.gmra.mrb[0].mxu0 %v861
        %v897 = vpop.f32.mrb[0].mxu0
        %v898 = vadd.f32 %v551, %v897
        %v899 = vpop.f32.mrb[0].mxu0
        %v900 = vpop.f32.mrb[0].mxu0
        %v901 = vpop.f32.mrb[0].mxu0
        %902 = vdwg.mxu0
        %v904 = vsel %vm336, %v325, 0
        %906 = vmatprep.subr.bf16.mxu0 0
        %907 = vmatpush1.bf16.msra.mxu0 %v689
        %908 = vmatprep.subr.bf16.mxu0 0
        %909 = vmatpush1.bf16.msra.mxu0 0
        %910 = vmatprep.subr.bf16.mxu0 0
        %911 = vmatpush1.bf16.msra.mxu0 0
        %912 = vmatprep.subr.bf16.mxu0 0
        %913 = vmatpush1.bf16.msra.mxu0 0
        %914 = vmatprep.subr.bf16.mxu0 0
        %915 = vmatpush1.bf16.msra.mxu0 0
        %916 = vmatprep.subr.bf16.mxu0 0
        %917 = vmatpush1.bf16.msra.mxu0 0
        %918 = vmatprep.subr.bf16.mxu0 0
        %919 = vmatpush1.bf16.msra.mxu0 0
        %920 = vmatprep.subr.bf16.mxu0 0
        %921 = vmatpush1.bf16.msra.mxu0 0
        %922 = vmatprep.subr.bf16.mxu0 0
        %923 = vmatpush1.bf16.msra.mxu0 0
        %924 = vmatprep.subr.bf16.mxu0 0
        %925 = vmatpush1.bf16.msra.mxu0 0
        %926 = vmatprep.subr.bf16.mxu0 0
        %927 = vmatpush1.bf16.msra.mxu0 0
        %928 = vmatprep.subr.bf16.mxu0 0
        %929 = vmatpush1.bf16.msra.mxu0 0
        %930 = vmatprep.subr.bf16.mxu0 0
        %931 = vmatpush1.bf16.msra.mxu0 0
        %932 = vmatprep.subr.bf16.mxu0 0
        %933 = vmatpush1.bf16.msra.mxu0 0
        %934 = vmatprep.subr.bf16.mxu0 0
        %935 = vmatpush1.bf16.msra.mxu0 0
        %936 = vmatprep.subr.bf16.mxu0 0
        %937 = vmatpush1.bf16.msra.mxu0 0
        %938 = vmatprep.mubr.bf16.mxu0 0
        %939 = vmatmul.mubr.bf16.gmra.mrb[0].mxu0 %v904
        %v940 = vpop.f32.mrb[0].mxu0
        %v941 = vadd.f32 %v594, %v940
        %v942 = vpop.f32.mrb[0].mxu0
        %v943 = vpop.f32.mrb[0].mxu0
        %v944 = vpop.f32.mrb[0].mxu0
        %945 = vdwg.mxu0
        %v947 = vsel %vm336, %v326, 0
        %949 = vmatprep.subr.bf16.mxu0 0
        %950 = vmatpush1.bf16.msra.mxu0 %v689
        %951 = vmatprep.subr.bf16.mxu0 0
        %952 = vmatpush1.bf16.msra.mxu0 0
        %953 = vmatprep.subr.bf16.mxu0 0
        %954 = vmatpush1.bf16.msra.mxu0 0
        %955 = vmatprep.subr.bf16.mxu0 0
        %956 = vmatpush1.bf16.msra.mxu0 0
        %957 = vmatprep.subr.bf16.mxu0 0
        %958 = vmatpush1.bf16.msra.mxu0 0
        %959 = vmatprep.subr.bf16.mxu0 0
        %960 = vmatpush1.bf16.msra.mxu0 0
        %961 = vmatprep.subr.bf16.mxu0 0
        %962 = vmatpush1.bf16.msra.mxu0 0
        %963 = vmatprep.subr.bf16.mxu0 0
        %964 = vmatpush1.bf16.msra.mxu0 0
        %965 = vmatprep.subr.bf16.mxu0 0
        %966 = vmatpush1.bf16.msra.mxu0 0
        %967 = vmatprep.subr.bf16.mxu0 0
        %968 = vmatpush1.bf16.msra.mxu0 0
        %969 = vmatprep.subr.bf16.mxu0 0
        %970 = vmatpush1.bf16.msra.mxu0 0
        %971 = vmatprep.subr.bf16.mxu0 0
        %972 = vmatpush1.bf16.msra.mxu0 0
        %973 = vmatprep.subr.bf16.mxu0 0
        %974 = vmatpush1.bf16.msra.mxu0 0
        %975 = vmatprep.subr.bf16.mxu0 0
        %976 = vmatpush1.bf16.msra.mxu0 0
        %977 = vmatprep.subr.bf16.mxu0 0
        %978 = vmatpush1.bf16.msra.mxu0 0
        %979 = vmatprep.subr.bf16.mxu0 0
        %980 = vmatpush1.bf16.msra.mxu0 0
        %981 = vmatprep.mubr.bf16.mxu0 0
        %982 = vmatmul.mubr.bf16.gmra.mrb[0].mxu0 %v947
        %v983 = vpop.f32.mrb[0].mxu0
        %v984 = vadd.f32 %v637, %v983
        %v985 = vpop.f32.mrb[0].mxu0
        %v986 = vpop.f32.mrb[0].mxu0
        %v987 = vpop.f32.mrb[0].mxu0
        %988 = vdwg.mxu0
        %v990 = vsel %vm336, %v327, 0
        %992 = vmatprep.subr.bf16.mxu0 0
        %993 = vmatpush1.bf16.msra.mxu0 %v689
        %994 = vmatprep.subr.bf16.mxu0 0
        %995 = vmatpush1.bf16.msra.mxu0 0
        %996 = vmatprep.subr.bf16.mxu0 0
        %997 = vmatpush1.bf16.msra.mxu0 0
        %998 = vmatprep.subr.bf16.mxu0 0
        %999 = vmatpush1.bf16.msra.mxu0 0
        %1000 = vmatprep.subr.bf16.mxu0 0
        %1001 = vmatpush1.bf16.msra.mxu0 0
        %1002 = vmatprep.subr.bf16.mxu0 0
        %1003 = vmatpush1.bf16.msra.mxu0 0
        %1004 = vmatprep.subr.bf16.mxu0 0
        %1005 = vmatpush1.bf16.msra.mxu0 0
        %1006 = vmatprep.subr.bf16.mxu0 0
        %1007 = vmatpush1.bf16.msra.mxu0 0
        %1008 = vmatprep.subr.bf16.mxu0 0
        %1009 = vmatpush1.bf16.msra.mxu0 0
        %1010 = vmatprep.subr.bf16.mxu0 0
        %1011 = vmatpush1.bf16.msra.mxu0 0
        %1012 = vmatprep.subr.bf16.mxu0 0
        %1013 = vmatpush1.bf16.msra.mxu0 0
        %1014 = vmatprep.subr.bf16.mxu0 0
        %1015 = vmatpush1.bf16.msra.mxu0 0
        %1016 = vmatprep.subr.bf16.mxu0 0
        %1017 = vmatpush1.bf16.msra.mxu0 0
        %1018 = vmatprep.subr.bf16.mxu0 0
        %1019 = vmatpush1.bf16.msra.mxu0 0
        %1020 = vmatprep.subr.bf16.mxu0 0
        %1021 = vmatpush1.bf16.msra.mxu0 0
        %1022 = vmatprep.subr.bf16.mxu0 0
        %1023 = vmatpush1.bf16.msra.mxu0 0
        %1024 = vmatprep.mubr.bf16.mxu0 0
        %1025 = vmatmul.mubr.bf16.gmra.mrb[0].mxu0 %v990
        %v1026 = vpop.f32.mrb[0].mxu0
        %v1027 = vadd.f32 %v680, %v1026
        %v1028 = vpop.f32.mrb[0].mxu0
        %v1029 = vpop.f32.mrb[0].mxu0
        %v1030 = vpop.f32.mrb[0].mxu0
        %1031 = vdwg.mxu0
        %v1032 = vld [vmem:[%s294] sm:$0xf]
        %v1033 = vld [vmem:[%s294 + $0x4] sm:$0x1]
        %v1034 = vld [vmem:[%s294 + $0x8] sm:$0xf]
        %v1035 = vld [vmem:[%s294 + $0xc] sm:$0x1]
        %v1036 = vld [vmem:[%s294 + $0x10] sm:$0xf]
        %v1037 = vld [vmem:[%s294 + $0x14] sm:$0x1]
        %v1038 = vld [vmem:[%s294 + $0x18] sm:$0xf]
        %v1039 = vld [vmem:[%s294 + $0x1c] sm:$0x1]
        %v1040 = vld [vmem:[%s294 + $0x20] sm:$0xf]
        %v1041 = vld [vmem:[%s294 + $0x24] sm:$0x1]
        %v1042 = vld [vmem:[%s294 + $0x28] sm:$0xf]
        %v1043 = vld [vmem:[%s294 + $0x2c] sm:$0x1]
        %v1044 = vld [vmem:[%s294 + $0x30] sm:$0xf]
        %v1045 = vld [vmem:[%s294 + $0x34] sm:$0x1]
        %v1046 = vld [vmem:[%s294 + $0x38] sm:$0xf]
        %v1047 = vld [vmem:[%s294 + $0x3c] sm:$0x1]
        %v1050 = vunpack.c.l.b16 %v1032
        %v1051 = vunpack.c.l.b16 %v1033
        %v1052 = vpack.c.b16 %v1051, %v1050
        %v1054 = vshrl.u32 %v1052, 16
        %v1056 = vshll.u32 %v1052, 16
        %v1058 = vrot.slane %v1056, 1
        %v1059 = vor.u32 %v1054, %v1058
        %v1061 = vsel %vm336, %v1059, 0
        %v1064 = vsel %vm340, %v313, 0
        %1066 = vmatprep.subr.bf16.mxu0 0
        %1067 = vmatpush1.bf16.msra.mxu0 %v1064
        %1068 = vmatprep.subr.bf16.mxu0 0
        %1069 = vmatpush1.bf16.msra.mxu0 0
        %1070 = vmatprep.subr.bf16.mxu0 0
        %1071 = vmatpush1.bf16.msra.mxu0 0
        %1072 = vmatprep.subr.bf16.mxu0 0
        %1073 = vmatpush1.bf16.msra.mxu0 0
        %1074 = vmatprep.subr.bf16.mxu0 0
        %1075 = vmatpush1.bf16.msra.mxu0 0
        %1076 = vmatprep.subr.bf16.mxu0 0
        %1077 = vmatpush1.bf16.msra.mxu0 0
        %1078 = vmatprep.subr.bf16.mxu0 0
        %1079 = vmatpush1.bf16.msra.mxu0 0
        %1080 = vmatprep.subr.bf16.mxu0 0
        %1081 = vmatpush1.bf16.msra.mxu0 0
        %1082 = vmatprep.subr.bf16.mxu0 0
        %1083 = vmatpush1.bf16.msra.mxu0 0
        %1084 = vmatprep.subr.bf16.mxu0 0
        %1085 = vmatpush1.bf16.msra.mxu0 0
        %1086 = vmatprep.subr.bf16.mxu0 0
        %1087 = vmatpush1.bf16.msra.mxu0 0
        %1088 = vmatprep.subr.bf16.mxu0 0
        %1089 = vmatpush1.bf16.msra.mxu0 0
        %1090 = vmatprep.subr.bf16.mxu0 0
        %1091 = vmatpush1.bf16.msra.mxu0 0
        %1092 = vmatprep.subr.bf16.mxu0 0
        %1093 = vmatpush1.bf16.msra.mxu0 0
        %1094 = vmatprep.subr.bf16.mxu0 0
        %1095 = vmatpush1.bf16.msra.mxu0 0
        %1096 = vmatprep.subr.bf16.mxu0 0
        %1097 = vmatpush1.bf16.msra.mxu0 0
        %1098 = vmatprep.mubr.bf16.mxu0 0
        %1099 = vmatmul.mubr.bf16.gmra.mrb[0].mxu0 %v1061
        %v1100 = vpop.f32.mrb[0].mxu0
        %v1101 = vadd.f32 0.0, %v1100
        %v1102 = vpop.f32.mrb[0].mxu0
        %v1103 = vpop.f32.mrb[0].mxu0
        %v1104 = vpop.f32.mrb[0].mxu0
        %1105 = vdwg.mxu0
        %v1108 = vunpack.c.l.b16 %v1034
        %v1109 = vunpack.c.l.b16 %v1035
        %v1110 = vpack.c.b16 %v1109, %v1108
        %v1112 = vshrl.u32 %v1110, 16
        %v1114 = vshll.u32 %v1110, 16
        %v1116 = vrot.slane %v1114, 1
        %v1117 = vor.u32 %v1112, %v1116
        %v1119 = vsel %vm336, %v1117, 0
        %1121 = vmatprep.subr.bf16.mxu0 0
        %1122 = vmatpush1.bf16.msra.mxu0 %v1064
        %1123 = vmatprep.subr.bf16.mxu0 0
        %1124 = vmatpush1.bf16.msra.mxu0 0
        %1125 = vmatprep.subr.bf16.mxu0 0
        %1126 = vmatpush1.bf16.msra.mxu0 0
        %1127 = vmatprep.subr.bf16.mxu0 0
        %1128 = vmatpush1.bf16.msra.mxu0 0
        %1129 = vmatprep.subr.bf16.mxu0 0
        %1130 = vmatpush1.bf16.msra.mxu0 0
        %1131 = vmatprep.subr.bf16.mxu0 0
        %1132 = vmatpush1.bf16.msra.mxu0 0
        %1133 = vmatprep.subr.bf16.mxu0 0
        %1134 = vmatpush1.bf16.msra.mxu0 0
        %1135 = vmatprep.subr.bf16.mxu0 0
        %1136 = vmatpush1.bf16.msra.mxu0 0
        %1137 = vmatprep.subr.bf16.mxu0 0
        %1138 = vmatpush1.bf16.msra.mxu0 0
        %1139 = vmatprep.subr.bf16.mxu0 0
        %1140 = vmatpush1.bf16.msra.mxu0 0
        %1141 = vmatprep.subr.bf16.mxu0 0
        %1142 = vmatpush1.bf16.msra.mxu0 0
        %1143 = vmatprep.subr.bf16.mxu0 0
        %1144 = vmatpush1.bf16.msra.mxu0 0
        %1145 = vmatprep.subr.bf16.mxu0 0
        %1146 = vmatpush1.bf16.msra.mxu0 0
        %1147 = vmatprep.subr.bf16.mxu0 0
        %1148 = vmatpush1.bf16.msra.mxu0 0
        %1149 = vmatprep.subr.bf16.mxu0 0
        %1150 = vmatpush1.bf16.msra.mxu0 0
        %1151 = vmatprep.subr.bf16.mxu0 0
        %1152 = vmatpush1.bf16.msra.mxu0 0
        %1153 = vmatprep.mubr.bf16.mxu0 0
        %1154 = vmatmul.mubr.bf16.gmra.mrb[0].mxu0 %v1119
        %v1155 = vpop.f32.mrb[0].mxu0
        %v1156 = vadd.f32 0.0, %v1155
        %v1157 = vpop.f32.mrb[0].mxu0
        %v1158 = vpop.f32.mrb[0].mxu0
        %v1159 = vpop.f32.mrb[0].mxu0
        %1160 = vdwg.mxu0
        %v1163 = vunpack.c.l.b16 %v1036
        %v1164 = vunpack.c.l.b16 %v1037
        %v1165 = vpack.c.b16 %v1164, %v1163
        %v1167 = vshrl.u32 %v1165, 16
        %v1169 = vshll.u32 %v1165, 16
        %v1171 = vrot.slane %v1169, 1
        %v1172 = vor.u32 %v1167, %v1171
        %v1174 = vsel %vm336, %v1172, 0
        %1176 = vmatprep.subr.bf16.mxu0 0
        %1177 = vmatpush1.bf16.msra.mxu0 %v1064
        %1178 = vmatprep.subr.bf16.mxu0 0
        %1179 = vmatpush1.bf16.msra.mxu0 0
        %1180 = vmatprep.subr.bf16.mxu0 0
        %1181 = vmatpush1.bf16.msra.mxu0 0
        %1182 = vmatprep.subr.bf16.mxu0 0
        %1183 = vmatpush1.bf16.msra.mxu0 0
        %1184 = vmatprep.subr.bf16.mxu0 0
        %1185 = vmatpush1.bf16.msra.mxu0 0
        %1186 = vmatprep.subr.bf16.mxu0 0
        %1187 = vmatpush1.bf16.msra.mxu0 0
        %1188 = vmatprep.subr.bf16.mxu0 0
        %1189 = vmatpush1.bf16.msra.mxu0 0
        %1190 = vmatprep.subr.bf16.mxu0 0
        %1191 = vmatpush1.bf16.msra.mxu0 0
        %1192 = vmatprep.subr.bf16.mxu0 0
        %1193 = vmatpush1.bf16.msra.mxu0 0
        %1194 = vmatprep.subr.bf16.mxu0 0
        %1195 = vmatpush1.bf16.msra.mxu0 0
        %1196 = vmatprep.subr.bf16.mxu0 0
        %1197 = vmatpush1.bf16.msra.mxu0 0
        %1198 = vmatprep.subr.bf16.mxu0 0
        %1199 = vmatpush1.bf16.msra.mxu0 0
        %1200 = vmatprep.subr.bf16.mxu0 0
        %1201 = vmatpush1.bf16.msra.mxu0 0
        %1202 = vmatprep.subr.bf16.mxu0 0
        %1203 = vmatpush1.bf16.msra.mxu0 0
        %1204 = vmatprep.subr.bf16.mxu0 0
        %1205 = vmatpush1.bf16.msra.mxu0 0
        %1206 = vmatprep.subr.bf16.mxu0 0
        %1207 = vmatpush1.bf16.msra.mxu0 0
        %1208 = vmatprep.mubr.bf16.mxu0 0
        %1209 = vmatmul.mubr.bf16.gmra.mrb[0].mxu0 %v1174
        %v1210 = vpop.f32.mrb[0].mxu0
        %v1211 = vadd.f32 0.0, %v1210
        %v1212 = vpop.f32.mrb[0].mxu0
        %v1213 = vpop.f32.mrb[0].mxu0
        %v1214 = vpop.f32.mrb[0].mxu0
        %1215 = vdwg.mxu0
        %v1218 = vunpack.c.l.b16 %v1038
        %v1219 = vunpack.c.l.b16 %v1039
        %v1220 = vpack.c.b16 %v1219, %v1218
        %v1222 = vshrl.u32 %v1220, 16
        %v1224 = vshll.u32 %v1220, 16
        %v1226 = vrot.slane %v1224, 1
        %v1227 = vor.u32 %v1222, %v1226
        %v1229 = vsel %vm336, %v1227, 0
        %1231 = vmatprep.subr.bf16.mxu0 0
        %1232 = vmatpush1.bf16.msra.mxu0 %v1064
        %1233 = vmatprep.subr.bf16.mxu0 0
        %1234 = vmatpush1.bf16.msra.mxu0 0
        %1235 = vmatprep.subr.bf16.mxu0 0
        %1236 = vmatpush1.bf16.msra.mxu0 0
        %1237 = vmatprep.subr.bf16.mxu0 0
        %1238 = vmatpush1.bf16.msra.mxu0 0
        %1239 = vmatprep.subr.bf16.mxu0 0
        %1240 = vmatpush1.bf16.msra.mxu0 0
        %1241 = vmatprep.subr.bf16.mxu0 0
        %1242 = vmatpush1.bf16.msra.mxu0 0
        %1243 = vmatprep.subr.bf16.mxu0 0
        %1244 = vmatpush1.bf16.msra.mxu0 0
        %1245 = vmatprep.subr.bf16.mxu0 0
        %1246 = vmatpush1.bf16.msra.mxu0 0
        %1247 = vmatprep.subr.bf16.mxu0 0
        %1248 = vmatpush1.bf16.msra.mxu0 0
        %1249 = vmatprep.subr.bf16.mxu0 0
        %1250 = vmatpush1.bf16.msra.mxu0 0
        %1251 = vmatprep.subr.bf16.mxu0 0
        %1252 = vmatpush1.bf16.msra.mxu0 0
        %1253 = vmatprep.subr.bf16.mxu0 0
        %1254 = vmatpush1.bf16.msra.mxu0 0
        %1255 = vmatprep.subr.bf16.mxu0 0
        %1256 = vmatpush1.bf16.msra.mxu0 0
        %1257 = vmatprep.subr.bf16.mxu0 0
        %1258 = vmatpush1.bf16.msra.mxu0 0
        %1259 = vmatprep.subr.bf16.mxu0 0
        %1260 = vmatpush1.bf16.msra.mxu0 0
        %1261 = vmatprep.subr.bf16.mxu0 0
        %1262 = vmatpush1.bf16.msra.mxu0 0
        %1263 = vmatprep.mubr.bf16.mxu0 0
        %1264 = vmatmul.mubr.bf16.gmra.mrb[0].mxu0 %v1229
        %v1265 = vpop.f32.mrb[0].mxu0
        %v1266 = vadd.f32 0.0, %v1265
        %v1267 = vpop.f32.mrb[0].mxu0
        %v1268 = vpop.f32.mrb[0].mxu0
        %v1269 = vpop.f32.mrb[0].mxu0
        %1270 = vdwg.mxu0
        %v1273 = vunpack.c.l.b16 %v1040
        %v1274 = vunpack.c.l.b16 %v1041
        %v1275 = vpack.c.b16 %v1274, %v1273
        %v1277 = vshrl.u32 %v1275, 16
        %v1279 = vshll.u32 %v1275, 16
        %v1281 = vrot.slane %v1279, 1
        %v1282 = vor.u32 %v1277, %v1281
        %v1284 = vsel %vm336, %v1282, 0
        %1286 = vmatprep.subr.bf16.mxu0 0
        %1287 = vmatpush1.bf16.msra.mxu0 %v1064
        %1288 = vmatprep.subr.bf16.mxu0 0
        %1289 = vmatpush1.bf16.msra.mxu0 0
        %1290 = vmatprep.subr.bf16.mxu0 0
        %1291 = vmatpush1.bf16.msra.mxu0 0
        %1292 = vmatprep.subr.bf16.mxu0 0
        %1293 = vmatpush1.bf16.msra.mxu0 0
        %1294 = vmatprep.subr.bf16.mxu0 0
        %1295 = vmatpush1.bf16.msra.mxu0 0
        %1296 = vmatprep.subr.bf16.mxu0 0
        %1297 = vmatpush1.bf16.msra.mxu0 0
        %1298 = vmatprep.subr.bf16.mxu0 0
        %1299 = vmatpush1.bf16.msra.mxu0 0
        %1300 = vmatprep.subr.bf16.mxu0 0
        %1301 = vmatpush1.bf16.msra.mxu0 0
        %1302 = vmatprep.subr.bf16.mxu0 0
        %1303 = vmatpush1.bf16.msra.mxu0 0
        %1304 = vmatprep.subr.bf16.mxu0 0
        %1305 = vmatpush1.bf16.msra.mxu0 0
        %1306 = vmatprep.subr.bf16.mxu0 0
        %1307 = vmatpush1.bf16.msra.mxu0 0
        %1308 = vmatprep.subr.bf16.mxu0 0
        %1309 = vmatpush1.bf16.msra.mxu0 0
        %1310 = vmatprep.subr.bf16.mxu0 0
        %1311 = vmatpush1.bf16.msra.mxu0 0
        %1312 = vmatprep.subr.bf16.mxu0 0
        %1313 = vmatpush1.bf16.msra.mxu0 0
        %1314 = vmatprep.subr.bf16.mxu0 0
        %1315 = vmatpush1.bf16.msra.mxu0 0
        %1316 = vmatprep.subr.bf16.mxu0 0
        %1317 = vmatpush1.bf16.msra.mxu0 0
        %1318 = vmatprep.mubr.bf16.mxu0 0
        %1319 = vmatmul.mubr.bf16.gmra.mrb[0].mxu0 %v1284
        %v1320 = vpop.f32.mrb[0].mxu0
        %v1321 = vadd.f32 0.0, %v1320
        %v1322 = vpop.f32.mrb[0].mxu0
        %v1323 = vpop.f32.mrb[0].mxu0
        %v1324 = vpop.f32.mrb[0].mxu0
        %1325 = vdwg.mxu0
        %v1328 = vunpack.c.l.b16 %v1042
        %v1329 = vunpack.c.l.b16 %v1043
        %v1330 = vpack.c.b16 %v1329, %v1328
        %v1332 = vshrl.u32 %v1330, 16
        %v1334 = vshll.u32 %v1330, 16
        %v1336 = vrot.slane %v1334, 1
        %v1337 = vor.u32 %v1332, %v1336
        %v1339 = vsel %vm336, %v1337, 0
        %1341 = vmatprep.subr.bf16.mxu0 0
        %1342 = vmatpush1.bf16.msra.mxu0 %v1064
        %1343 = vmatprep.subr.bf16.mxu0 0
        %1344 = vmatpush1.bf16.msra.mxu0 0
        %1345 = vmatprep.subr.bf16.mxu0 0
        %1346 = vmatpush1.bf16.msra.mxu0 0
        %1347 = vmatprep.subr.bf16.mxu0 0
        %1348 = vmatpush1.bf16.msra.mxu0 0
        %1349 = vmatprep.subr.bf16.mxu0 0
        %1350 = vmatpush1.bf16.msra.mxu0 0
        %1351 = vmatprep.subr.bf16.mxu0 0
        %1352 = vmatpush1.bf16.msra.mxu0 0
        %1353 = vmatprep.subr.bf16.mxu0 0
        %1354 = vmatpush1.bf16.msra.mxu0 0
        %1355 = vmatprep.subr.bf16.mxu0 0
        %1356 = vmatpush1.bf16.msra.mxu0 0
        %1357 = vmatprep.subr.bf16.mxu0 0
        %1358 = vmatpush1.bf16.msra.mxu0 0
        %1359 = vmatprep.subr.bf16.mxu0 0
        %1360 = vmatpush1.bf16.msra.mxu0 0
        %1361 = vmatprep.subr.bf16.mxu0 0
        %1362 = vmatpush1.bf16.msra.mxu0 0
        %1363 = vmatprep.subr.bf16.mxu0 0
        %1364 = vmatpush1.bf16.msra.mxu0 0
        %1365 = vmatprep.subr.bf16.mxu0 0
        %1366 = vmatpush1.bf16.msra.mxu0 0
        %1367 = vmatprep.subr.bf16.mxu0 0
        %1368 = vmatpush1.bf16.msra.mxu0 0
        %1369 = vmatprep.subr.bf16.mxu0 0
        %1370 = vmatpush1.bf16.msra.mxu0 0
        %1371 = vmatprep.subr.bf16.mxu0 0
        %1372 = vmatpush1.bf16.msra.mxu0 0
        %1373 = vmatprep.mubr.bf16.mxu0 0
        %1374 = vmatmul.mubr.bf16.gmra.mrb[0].mxu0 %v1339
        %v1375 = vpop.f32.mrb[0].mxu0
        %v1376 = vadd.f32 0.0, %v1375
        %v1377 = vpop.f32.mrb[0].mxu0
        %v1378 = vpop.f32.mrb[0].mxu0
        %v1379 = vpop.f32.mrb[0].mxu0
        %1380 = vdwg.mxu0
        %v1383 = vunpack.c.l.b16 %v1044
        %v1384 = vunpack.c.l.b16 %v1045
        %v1385 = vpack.c.b16 %v1384, %v1383
        %v1387 = vshrl.u32 %v1385, 16
        %v1389 = vshll.u32 %v1385, 16
        %v1391 = vrot.slane %v1389, 1
        %v1392 = vor.u32 %v1387, %v1391
        %v1394 = vsel %vm336, %v1392, 0
        %1396 = vmatprep.subr.bf16.mxu0 0
        %1397 = vmatpush1.bf16.msra.mxu0 %v1064
        %1398 = vmatprep.subr.bf16.mxu0 0
        %1399 = vmatpush1.bf16.msra.mxu0 0
        %1400 = vmatprep.subr.bf16.mxu0 0
        %1401 = vmatpush1.bf16.msra.mxu0 0
        %1402 = vmatprep.subr.bf16.mxu0 0
        %1403 = vmatpush1.bf16.msra.mxu0 0
        %1404 = vmatprep.subr.bf16.mxu0 0
        %1405 = vmatpush1.bf16.msra.mxu0 0
        %1406 = vmatprep.subr.bf16.mxu0 0
        %1407 = vmatpush1.bf16.msra.mxu0 0
        %1408 = vmatprep.subr.bf16.mxu0 0
        %1409 = vmatpush1.bf16.msra.mxu0 0
        %1410 = vmatprep.subr.bf16.mxu0 0
        %1411 = vmatpush1.bf16.msra.mxu0 0
        %1412 = vmatprep.subr.bf16.mxu0 0
        %1413 = vmatpush1.bf16.msra.mxu0 0
        %1414 = vmatprep.subr.bf16.mxu0 0
        %1415 = vmatpush1.bf16.msra.mxu0 0
        %1416 = vmatprep.subr.bf16.mxu0 0
        %1417 = vmatpush1.bf16.msra.mxu0 0
        %1418 = vmatprep.subr.bf16.mxu0 0
        %1419 = vmatpush1.bf16.msra.mxu0 0
        %1420 = vmatprep.subr.bf16.mxu0 0
        %1421 = vmatpush1.bf16.msra.mxu0 0
        %1422 = vmatprep.subr.bf16.mxu0 0
        %1423 = vmatpush1.bf16.msra.mxu0 0
        %1424 = vmatprep.subr.bf16.mxu0 0
        %1425 = vmatpush1.bf16.msra.mxu0 0
        %1426 = vmatprep.subr.bf16.mxu0 0
        %1427 = vmatpush1.bf16.msra.mxu0 0
        %1428 = vmatprep.mubr.bf16.mxu0 0
        %1429 = vmatmul.mubr.bf16.gmra.mrb[0].mxu0 %v1394
        %v1430 = vpop.f32.mrb[0].mxu0
        %v1431 = vadd.f32 0.0, %v1430
        %v1432 = vpop.f32.mrb[0].mxu0
        %v1433 = vpop.f32.mrb[0].mxu0
        %v1434 = vpop.f32.mrb[0].mxu0
        %1435 = vdwg.mxu0
        %v1438 = vunpack.c.l.b16 %v1046
        %v1439 = vunpack.c.l.b16 %v1047
        %v1440 = vpack.c.b16 %v1439, %v1438
        %v1442 = vshrl.u32 %v1440, 16
        %v1444 = vshll.u32 %v1440, 16
        %v1446 = vrot.slane %v1444, 1
        %v1447 = vor.u32 %v1442, %v1446
        %v1449 = vsel %vm336, %v1447, 0
        %1451 = vmatprep.subr.bf16.mxu0 0
        %1452 = vmatpush1.bf16.msra.mxu0 %v1064
        %1453 = vmatprep.subr.bf16.mxu0 0
        %1454 = vmatpush1.bf16.msra.mxu0 0
        %1455 = vmatprep.subr.bf16.mxu0 0
        %1456 = vmatpush1.bf16.msra.mxu0 0
        %1457 = vmatprep.subr.bf16.mxu0 0
        %1458 = vmatpush1.bf16.msra.mxu0 0
        %1459 = vmatprep.subr.bf16.mxu0 0
        %1460 = vmatpush1.bf16.msra.mxu0 0
        %1461 = vmatprep.subr.bf16.mxu0 0
        %1462 = vmatpush1.bf16.msra.mxu0 0
        %1463 = vmatprep.subr.bf16.mxu0 0
        %1464 = vmatpush1.bf16.msra.mxu0 0
        %1465 = vmatprep.subr.bf16.mxu0 0
        %1466 = vmatpush1.bf16.msra.mxu0 0
        %1467 = vmatprep.subr.bf16.mxu0 0
        %1468 = vmatpush1.bf16.msra.mxu0 0
        %1469 = vmatprep.subr.bf16.mxu0 0
        %1470 = vmatpush1.bf16.msra.mxu0 0
        %1471 = vmatprep.subr.bf16.mxu0 0
        %1472 = vmatpush1.bf16.msra.mxu0 0
        %1473 = vmatprep.subr.bf16.mxu0 0
        %1474 = vmatpush1.bf16.msra.mxu0 0
        %1475 = vmatprep.subr.bf16.mxu0 0
        %1476 = vmatpush1.bf16.msra.mxu0 0
        %1477 = vmatprep.subr.bf16.mxu0 0
        %1478 = vmatpush1.bf16.msra.mxu0 0
        %1479 = vmatprep.subr.bf16.mxu0 0
        %1480 = vmatpush1.bf16.msra.mxu0 0
        %1481 = vmatprep.subr.bf16.mxu0 0
        %1482 = vmatpush1.bf16.msra.mxu0 0
        %1483 = vmatprep.mubr.bf16.mxu0 0
        %1484 = vmatmul.mubr.bf16.gmra.mrb[0].mxu0 %v1449
        %v1485 = vpop.f32.mrb[0].mxu0
        %v1486 = vadd.f32 0.0, %v1485
        %v1487 = vpop.f32.mrb[0].mxu0
        %v1488 = vpop.f32.mrb[0].mxu0
        %v1489 = vpop.f32.mrb[0].mxu0
        %1490 = vdwg.mxu0
        %v1491 = vadd.f32 %v726, %v1101
        %v1492 = vadd.f32 %v769, %v1156
        %v1493 = vadd.f32 %v812, %v1211
        %v1494 = vadd.f32 %v855, %v1266
        %v1495 = vadd.f32 %v898, %v1321
        %v1496 = vadd.f32 %v941, %v1376
        %v1497 = vadd.f32 %v984, %v1431
        %v1498 = vadd.f32 %v1027, %v1486
        %v1499 = vld [vmem:[%s304] sm:$0xf]
        %v1500 = vld [vmem:[%s304 + $0x8] sm:$0xf]
        %v1501 = vld [vmem:[%s304 + $0x10] sm:$0xf]
        %v1502 = vld [vmem:[%s304 + $0x18] sm:$0xf]
        %v1503 = vld [vmem:[%s304 + $0x20] sm:$0xf]
        %v1504 = vld [vmem:[%s304 + $0x28] sm:$0xf]
        %v1505 = vld [vmem:[%s304 + $0x30] sm:$0xf]
        %v1506 = vld [vmem:[%s304 + $0x38] sm:$0xf]
        %v1508 = vsel %vm336, %v1499, 0
        %v1511 = vsel %vm340, %v314, 0
        %1513 = vmatprep.subr.bf16.mxu0 0
        %1514 = vmatpush1.bf16.msra.mxu0 %v1511
        %1515 = vmatprep.subr.bf16.mxu0 0
        %1516 = vmatpush1.bf16.msra.mxu0 0
        %1517 = vmatprep.subr.bf16.mxu0 0
        %1518 = vmatpush1.bf16.msra.mxu0 0
        %1519 = vmatprep.subr.bf16.mxu0 0
        %1520 = vmatpush1.bf16.msra.mxu0 0
        %1521 = vmatprep.subr.bf16.mxu0 0
        %1522 = vmatpush1.bf16.msra.mxu0 0
        %1523 = vmatprep.subr.bf16.mxu0 0
        %1524 = vmatpush1.bf16.msra.mxu0 0
        %1525 = vmatprep.subr.bf16.mxu0 0
        %1526 = vmatpush1.bf16.msra.mxu0 0
        %1527 = vmatprep.subr.bf16.mxu0 0
        %1528 = vmatpush1.bf16.msra.mxu0 0
        %1529 = vmatprep.subr.bf16.mxu0 0
        %1530 = vmatpush1.bf16.msra.mxu0 0
        %1531 = vmatprep.subr.bf16.mxu0 0
        %1532 = vmatpush1.bf16.msra.mxu0 0
        %1533 = vmatprep.subr.bf16.mxu0 0
        %1534 = vmatpush1.bf16.msra.mxu0 0
        %1535 = vmatprep.subr.bf16.mxu0 0
        %1536 = vmatpush1.bf16.msra.mxu0 0
        %1537 = vmatprep.subr.bf16.mxu0 0
        %1538 = vmatpush1.bf16.msra.mxu0 0
        %1539 = vmatprep.subr.bf16.mxu0 0
        %1540 = vmatpush1.bf16.msra.mxu0 0
        %1541 = vmatprep.subr.bf16.mxu0 0
        %1542 = vmatpush1.bf16.msra.mxu0 0
        %1543 = vmatprep.subr.bf16.mxu0 0
        %1544 = vmatpush1.bf16.msra.mxu0 0
        %1545 = vmatprep.mubr.bf16.mxu0 0
        %1546 = vmatmul.mubr.bf16.gmra.mrb[0].mxu0 %v1508
        %v1547 = vpop.f32.mrb[0].mxu0
        %v1548 = vadd.f32 0.0, %v1547
        %v1549 = vpop.f32.mrb[0].mxu0
        %v1550 = vpop.f32.mrb[0].mxu0
        %v1551 = vpop.f32.mrb[0].mxu0
        %1552 = vdwg.mxu0
        %v1554 = vsel %vm336, %v1500, 0
        %1556 = vmatprep.subr.bf16.mxu0 0
        %1557 = vmatpush1.bf16.msra.mxu0 %v1511
        %1558 = vmatprep.subr.bf16.mxu0 0
        %1559 = vmatpush1.bf16.msra.mxu0 0
        %1560 = vmatprep.subr.bf16.mxu0 0
        %1561 = vmatpush1.bf16.msra.mxu0 0
        %1562 = vmatprep.subr.bf16.mxu0 0
        %1563 = vmatpush1.bf16.msra.mxu0 0
        %1564 = vmatprep.subr.bf16.mxu0 0
        %1565 = vmatpush1.bf16.msra.mxu0 0
        %1566 = vmatprep.subr.bf16.mxu0 0
        %1567 = vmatpush1.bf16.msra.mxu0 0
        %1568 = vmatprep.subr.bf16.mxu0 0
        %1569 = vmatpush1.bf16.msra.mxu0 0
        %1570 = vmatprep.subr.bf16.mxu0 0
        %1571 = vmatpush1.bf16.msra.mxu0 0
        %1572 = vmatprep.subr.bf16.mxu0 0
        %1573 = vmatpush1.bf16.msra.mxu0 0
        %1574 = vmatprep.subr.bf16.mxu0 0
        %1575 = vmatpush1.bf16.msra.mxu0 0
        %1576 = vmatprep.subr.bf16.mxu0 0
        %1577 = vmatpush1.bf16.msra.mxu0 0
        %1578 = vmatprep.subr.bf16.mxu0 0
        %1579 = vmatpush1.bf16.msra.mxu0 0
        %1580 = vmatprep.subr.bf16.mxu0 0
        %1581 = vmatpush1.bf16.msra.mxu0 0
        %1582 = vmatprep.subr.bf16.mxu0 0
        %1583 = vmatpush1.bf16.msra.mxu0 0
        %1584 = vmatprep.subr.bf16.mxu0 0
        %1585 = vmatpush1.bf16.msra.mxu0 0
        %1586 = vmatprep.subr.bf16.mxu0 0
        %1587 = vmatpush1.bf16.msra.mxu0 0
        %1588 = vmatprep.mubr.bf16.mxu0 0
        %1589 = vmatmul.mubr.bf16.gmra.mrb[0].mxu0 %v1554
        %v1590 = vpop.f32.mrb[0].mxu0
        %v1591 = vadd.f32 0.0, %v1590
        %v1592 = vpop.f32.mrb[0].mxu0
        %v1593 = vpop.f32.mrb[0].mxu0
        %v1594 = vpop.f32.mrb[0].mxu0
        %1595 = vdwg.mxu0
        %v1597 = vsel %vm336, %v1501, 0
        %1599 = vmatprep.subr.bf16.mxu0 0
        %1600 = vmatpush1.bf16.msra.mxu0 %v1511
        %1601 = vmatprep.subr.bf16.mxu0 0
        %1602 = vmatpush1.bf16.msra.mxu0 0
        %1603 = vmatprep.subr.bf16.mxu0 0
        %1604 = vmatpush1.bf16.msra.mxu0 0
        %1605 = vmatprep.subr.bf16.mxu0 0
        %1606 = vmatpush1.bf16.msra.mxu0 0
        %1607 = vmatprep.subr.bf16.mxu0 0
        %1608 = vmatpush1.bf16.msra.mxu0 0
        %1609 = vmatprep.subr.bf16.mxu0 0
        %1610 = vmatpush1.bf16.msra.mxu0 0
        %1611 = vmatprep.subr.bf16.mxu0 0
        %1612 = vmatpush1.bf16.msra.mxu0 0
        %1613 = vmatprep.subr.bf16.mxu0 0
        %1614 = vmatpush1.bf16.msra.mxu0 0
        %1615 = vmatprep.subr.bf16.mxu0 0
        %1616 = vmatpush1.bf16.msra.mxu0 0
        %1617 = vmatprep.subr.bf16.mxu0 0
        %1618 = vmatpush1.bf16.msra.mxu0 0
        %1619 = vmatprep.subr.bf16.mxu0 0
        %1620 = vmatpush1.bf16.msra.mxu0 0
        %1621 = vmatprep.subr.bf16.mxu0 0
        %1622 = vmatpush1.bf16.msra.mxu0 0
        %1623 = vmatprep.subr.bf16.mxu0 0
        %1624 = vmatpush1.bf16.msra.mxu0 0
        %1625 = vmatprep.subr.bf16.mxu0 0
        %1626 = vmatpush1.bf16.msra.mxu0 0
        %1627 = vmatprep.subr.bf16.mxu0 0
        %1628 = vmatpush1.bf16.msra.mxu0 0
        %1629 = vmatprep.subr.bf16.mxu0 0
        %1630 = vmatpush1.bf16.msra.mxu0 0
        %1631 = vmatprep.mubr.bf16.mxu0 0
        %1632 = vmatmul.mubr.bf16.gmra.mrb[0].mxu0 %v1597
        %v1633 = vpop.f32.mrb[0].mxu0
        %v1634 = vadd.f32 0.0, %v1633
        %v1635 = vpop.f32.mrb[0].mxu0
        %v1636 = vpop.f32.mrb[0].mxu0
        %v1637 = vpop.f32.mrb[0].mxu0
        %1638 = vdwg.mxu0
        %v1640 = vsel %vm336, %v1502, 0
        %1642 = vmatprep.subr.bf16.mxu0 0
        %1643 = vmatpush1.bf16.msra.mxu0 %v1511
        %1644 = vmatprep.subr.bf16.mxu0 0
        %1645 = vmatpush1.bf16.msra.mxu0 0
        %1646 = vmatprep.subr.bf16.mxu0 0
        %1647 = vmatpush1.bf16.msra.mxu0 0
        %1648 = vmatprep.subr.bf16.mxu0 0
        %1649 = vmatpush1.bf16.msra.mxu0 0
        %1650 = vmatprep.subr.bf16.mxu0 0
        %1651 = vmatpush1.bf16.msra.mxu0 0
        %1652 = vmatprep.subr.bf16.mxu0 0
        %1653 = vmatpush1.bf16.msra.mxu0 0
        %1654 = vmatprep.subr.bf16.mxu0 0
        %1655 = vmatpush1.bf16.msra.mxu0 0
        %1656 = vmatprep.subr.bf16.mxu0 0
        %1657 = vmatpush1.bf16.msra.mxu0 0
        %1658 = vmatprep.subr.bf16.mxu0 0
        %1659 = vmatpush1.bf16.msra.mxu0 0
        %1660 = vmatprep.subr.bf16.mxu0 0
        %1661 = vmatpush1.bf16.msra.mxu0 0
        %1662 = vmatprep.subr.bf16.mxu0 0
        %1663 = vmatpush1.bf16.msra.mxu0 0
        %1664 = vmatprep.subr.bf16.mxu0 0
        %1665 = vmatpush1.bf16.msra.mxu0 0
        %1666 = vmatprep.subr.bf16.mxu0 0
        %1667 = vmatpush1.bf16.msra.mxu0 0
        %1668 = vmatprep.subr.bf16.mxu0 0
        %1669 = vmatpush1.bf16.msra.mxu0 0
        %1670 = vmatprep.subr.bf16.mxu0 0
        %1671 = vmatpush1.bf16.msra.mxu0 0
        %1672 = vmatprep.subr.bf16.mxu0 0
        %1673 = vmatpush1.bf16.msra.mxu0 0
        %1674 = vmatprep.mubr.bf16.mxu0 0
        %1675 = vmatmul.mubr.bf16.gmra.mrb[0].mxu0 %v1640
        %v1676 = vpop.f32.mrb[0].mxu0
        %v1677 = vadd.f32 0.0, %v1676
        %v1678 = vpop.f32.mrb[0].mxu0
        %v1679 = vpop.f32.mrb[0].mxu0
        %v1680 = vpop.f32.mrb[0].mxu0
        %1681 = vdwg.mxu0
        %v1683 = vsel %vm336, %v1503, 0
        %1685 = vmatprep.subr.bf16.mxu0 0
        %1686 = vmatpush1.bf16.msra.mxu0 %v1511
        %1687 = vmatprep.subr.bf16.mxu0 0
        %1688 = vmatpush1.bf16.msra.mxu0 0
        %1689 = vmatprep.subr.bf16.mxu0 0
        %1690 = vmatpush1.bf16.msra.mxu0 0
        %1691 = vmatprep.subr.bf16.mxu0 0
        %1692 = vmatpush1.bf16.msra.mxu0 0
        %1693 = vmatprep.subr.bf16.mxu0 0
        %1694 = vmatpush1.bf16.msra.mxu0 0
        %1695 = vmatprep.subr.bf16.mxu0 0
        %1696 = vmatpush1.bf16.msra.mxu0 0
        %1697 = vmatprep.subr.bf16.mxu0 0
        %1698 = vmatpush1.bf16.msra.mxu0 0
        %1699 = vmatprep.subr.bf16.mxu0 0
        %1700 = vmatpush1.bf16.msra.mxu0 0
        %1701 = vmatprep.subr.bf16.mxu0 0
        %1702 = vmatpush1.bf16.msra.mxu0 0
        %1703 = vmatprep.subr.bf16.mxu0 0
        %1704 = vmatpush1.bf16.msra.mxu0 0
        %1705 = vmatprep.subr.bf16.mxu0 0
        %1706 = vmatpush1.bf16.msra.mxu0 0
        %1707 = vmatprep.subr.bf16.mxu0 0
        %1708 = vmatpush1.bf16.msra.mxu0 0
        %1709 = vmatprep.subr.bf16.mxu0 0
        %1710 = vmatpush1.bf16.msra.mxu0 0
        %1711 = vmatprep.subr.bf16.mxu0 0
        %1712 = vmatpush1.bf16.msra.mxu0 0
        %1713 = vmatprep.subr.bf16.mxu0 0
        %1714 = vmatpush1.bf16.msra.mxu0 0
        %1715 = vmatprep.subr.bf16.mxu0 0
        %1716 = vmatpush1.bf16.msra.mxu0 0
        %1717 = vmatprep.mubr.bf16.mxu0 0
        %1718 = vmatmul.mubr.bf16.gmra.mrb[0].mxu0 %v1683
        %v1719 = vpop.f32.mrb[0].mxu0
        %v1720 = vadd.f32 0.0, %v1719
        %v1721 = vpop.f32.mrb[0].mxu0
        %v1722 = vpop.f32.mrb[0].mxu0
        %v1723 = vpop.f32.mrb[0].mxu0
        %1724 = vdwg.mxu0
        %v1726 = vsel %vm336, %v1504, 0
        %1728 = vmatprep.subr.bf16.mxu0 0
        %1729 = vmatpush1.bf16.msra.mxu0 %v1511
        %1730 = vmatprep.subr.bf16.mxu0 0
        %1731 = vmatpush1.bf16.msra.mxu0 0
        %1732 = vmatprep.subr.bf16.mxu0 0
        %1733 = vmatpush1.bf16.msra.mxu0 0
        %1734 = vmatprep.subr.bf16.mxu0 0
        %1735 = vmatpush1.bf16.msra.mxu0 0
        %1736 = vmatprep.subr.bf16.mxu0 0
        %1737 = vmatpush1.bf16.msra.mxu0 0
        %1738 = vmatprep.subr.bf16.mxu0 0
        %1739 = vmatpush1.bf16.msra.mxu0 0
        %1740 = vmatprep.subr.bf16.mxu0 0
        %1741 = vmatpush1.bf16.msra.mxu0 0
        %1742 = vmatprep.subr.bf16.mxu0 0
        %1743 = vmatpush1.bf16.msra.mxu0 0
        %1744 = vmatprep.subr.bf16.mxu0 0
        %1745 = vmatpush1.bf16.msra.mxu0 0
        %1746 = vmatprep.subr.bf16.mxu0 0
        %1747 = vmatpush1.bf16.msra.mxu0 0
        %1748 = vmatprep.subr.bf16.mxu0 0
        %1749 = vmatpush1.bf16.msra.mxu0 0
        %1750 = vmatprep.subr.bf16.mxu0 0
        %1751 = vmatpush1.bf16.msra.mxu0 0
        %1752 = vmatprep.subr.bf16.mxu0 0
        %1753 = vmatpush1.bf16.msra.mxu0 0
        %1754 = vmatprep.subr.bf16.mxu0 0
        %1755 = vmatpush1.bf16.msra.mxu0 0
        %1756 = vmatprep.subr.bf16.mxu0 0
        %1757 = vmatpush1.bf16.msra.mxu0 0
        %1758 = vmatprep.subr.bf16.mxu0 0
        %1759 = vmatpush1.bf16.msra.mxu0 0
        %1760 = vmatprep.mubr.bf16.mxu0 0
        %1761 = vmatmul.mubr.bf16.gmra.mrb[0].mxu0 %v1726
        %v1762 = vpop.f32.mrb[0].mxu0
        %v1763 = vadd.f32 0.0, %v1762
        %v1764 = vpop.f32.mrb[0].mxu0
        %v1765 = vpop.f32.mrb[0].mxu0
        %v1766 = vpop.f32.mrb[0].mxu0
        %1767 = vdwg.mxu0
        %v1769 = vsel %vm336, %v1505, 0
        %1771 = vmatprep.subr.bf16.mxu0 0
        %1772 = vmatpush1.bf16.msra.mxu0 %v1511
        %1773 = vmatprep.subr.bf16.mxu0 0
        %1774 = vmatpush1.bf16.msra.mxu0 0
        %1775 = vmatprep.subr.bf16.mxu0 0
        %1776 = vmatpush1.bf16.msra.mxu0 0
        %1777 = vmatprep.subr.bf16.mxu0 0
        %1778 = vmatpush1.bf16.msra.mxu0 0
        %1779 = vmatprep.subr.bf16.mxu0 0
        %1780 = vmatpush1.bf16.msra.mxu0 0
        %1781 = vmatprep.subr.bf16.mxu0 0
        %1782 = vmatpush1.bf16.msra.mxu0 0
        %1783 = vmatprep.subr.bf16.mxu0 0
        %1784 = vmatpush1.bf16.msra.mxu0 0
        %1785 = vmatprep.subr.bf16.mxu0 0
        %1786 = vmatpush1.bf16.msra.mxu0 0
        %1787 = vmatprep.subr.bf16.mxu0 0
        %1788 = vmatpush1.bf16.msra.mxu0 0
        %1789 = vmatprep.subr.bf16.mxu0 0
        %1790 = vmatpush1.bf16.msra.mxu0 0
        %1791 = vmatprep.subr.bf16.mxu0 0
        %1792 = vmatpush1.bf16.msra.mxu0 0
        %1793 = vmatprep.subr.bf16.mxu0 0
        %1794 = vmatpush1.bf16.msra.mxu0 0
        %1795 = vmatprep.subr.bf16.mxu0 0
        %1796 = vmatpush1.bf16.msra.mxu0 0
        %1797 = vmatprep.subr.bf16.mxu0 0
        %1798 = vmatpush1.bf16.msra.mxu0 0
        %1799 = vmatprep.subr.bf16.mxu0 0
        %1800 = vmatpush1.bf16.msra.mxu0 0
        %1801 = vmatprep.subr.bf16.mxu0 0
        %1802 = vmatpush1.bf16.msra.mxu0 0
        %1803 = vmatprep.mubr.bf16.mxu0 0
        %1804 = vmatmul.mubr.bf16.gmra.mrb[0].mxu0 %v1769
        %v1805 = vpop.f32.mrb[0].mxu0
        %v1806 = vadd.f32 0.0, %v1805
        %v1807 = vpop.f32.mrb[0].mxu0
        %v1808 = vpop.f32.mrb[0].mxu0
        %v1809 = vpop.f32.mrb[0].mxu0
        %1810 = vdwg.mxu0
        %v1812 = vsel %vm336, %v1506, 0
        %1814 = vmatprep.subr.bf16.mxu0 0
        %1815 = vmatpush1.bf16.msra.mxu0 %v1511
        %1816 = vmatprep.subr.bf16.mxu0 0
        %1817 = vmatpush1.bf16.msra.mxu0 0
        %1818 = vmatprep.subr.bf16.mxu0 0
        %1819 = vmatpush1.bf16.msra.mxu0 0
        %1820 = vmatprep.subr.bf16.mxu0 0
        %1821 = vmatpush1.bf16.msra.mxu0 0
        %1822 = vmatprep.subr.bf16.mxu0 0
        %1823 = vmatpush1.bf16.msra.mxu0 0
        %1824 = vmatprep.subr.bf16.mxu0 0
        %1825 = vmatpush1.bf16.msra.mxu0 0
        %1826 = vmatprep.subr.bf16.mxu0 0
        %1827 = vmatpush1.bf16.msra.mxu0 0
        %1828 = vmatprep.subr.bf16.mxu0 0
        %1829 = vmatpush1.bf16.msra.mxu0 0
        %1830 = vmatprep.subr.bf16.mxu0 0
        %1831 = vmatpush1.bf16.msra.mxu0 0
        %1832 = vmatprep.subr.bf16.mxu0 0
        %1833 = vmatpush1.bf16.msra.mxu0 0
        %1834 = vmatprep.subr.bf16.mxu0 0
        %1835 = vmatpush1.bf16.msra.mxu0 0
        %1836 = vmatprep.subr.bf16.mxu0 0
        %1837 = vmatpush1.bf16.msra.mxu0 0
        %1838 = vmatprep.subr.bf16.mxu0 0
        %1839 = vmatpush1.bf16.msra.mxu0 0
        %1840 = vmatprep.subr.bf16.mxu0 0
        %1841 = vmatpush1.bf16.msra.mxu0 0
        %1842 = vmatprep.subr.bf16.mxu0 0
        %1843 = vmatpush1.bf16.msra.mxu0 0
        %1844 = vmatprep.subr.bf16.mxu0 0
        %1845 = vmatpush1.bf16.msra.mxu0 0
        %1846 = vmatprep.mubr.bf16.mxu0 0
        %1847 = vmatmul.mubr.bf16.gmra.mrb[0].mxu0 %v1812
        %v1848 = vpop.f32.mrb[0].mxu0
        %v1849 = vadd.f32 0.0, %v1848
        %v1850 = vpop.f32.mrb[0].mxu0
        %v1851 = vpop.f32.mrb[0].mxu0
        %v1852 = vpop.f32.mrb[0].mxu0
        %1853 = vdwg.mxu0
        %v1854 = vadd.f32 %v1491, %v1548
        %v1855 = vadd.f32 %v1492, %v1591
        %v1856 = vadd.f32 %v1493, %v1634
        %v1857 = vadd.f32 %v1494, %v1677
        %v1858 = vadd.f32 %v1495, %v1720
        %v1859 = vadd.f32 %v1496, %v1763
        %v1860 = vadd.f32 %v1497, %v1806
        %v1861 = vadd.f32 %v1498, %v1849
        %v1862 = vld [vmem:[%s309] sm:$0xf]
        %v1863 = vld [vmem:[%s309 + $0x8] sm:$0xf]
        %v1864 = vld [vmem:[%s309 + $0x10] sm:$0xf]
        %v1865 = vld [vmem:[%s309 + $0x18] sm:$0xf]
        %v1866 = vld [vmem:[%s309 + $0x20] sm:$0xf]
        %v1867 = vld [vmem:[%s309 + $0x28] sm:$0xf]
        %v1868 = vld [vmem:[%s309 + $0x30] sm:$0xf]
        %v1869 = vld [vmem:[%s309 + $0x38] sm:$0xf]
        %v1871 = vsel %vm336, %v1862, 0
        %v1874 = vsel %vm340, %v315, 0
        %1876 = vmatprep.subr.bf16.mxu0 0
        %1877 = vmatpush1.bf16.msra.mxu0 %v1874
        %1878 = vmatprep.subr.bf16.mxu0 0
        %1879 = vmatpush1.bf16.msra.mxu0 0
        %1880 = vmatprep.subr.bf16.mxu0 0
        %1881 = vmatpush1.bf16.msra.mxu0 0
        %1882 = vmatprep.subr.bf16.mxu0 0
        %1883 = vmatpush1.bf16.msra.mxu0 0
        %1884 = vmatprep.subr.bf16.mxu0 0
        %1885 = vmatpush1.bf16.msra.mxu0 0
        %1886 = vmatprep.subr.bf16.mxu0 0
        %1887 = vmatpush1.bf16.msra.mxu0 0
        %1888 = vmatprep.subr.bf16.mxu0 0
        %1889 = vmatpush1.bf16.msra.mxu0 0
        %1890 = vmatprep.subr.bf16.mxu0 0
        %1891 = vmatpush1.bf16.msra.mxu0 0
        %1892 = vmatprep.subr.bf16.mxu0 0
        %1893 = vmatpush1.bf16.msra.mxu0 0
        %1894 = vmatprep.subr.bf16.mxu0 0
        %1895 = vmatpush1.bf16.msra.mxu0 0
        %1896 = vmatprep.subr.bf16.mxu0 0
        %1897 = vmatpush1.bf16.msra.mxu0 0
        %1898 = vmatprep.subr.bf16.mxu0 0
        %1899 = vmatpush1.bf16.msra.mxu0 0
        %1900 = vmatprep.subr.bf16.mxu0 0
        %1901 = vmatpush1.bf16.msra.mxu0 0
        %1902 = vmatprep.subr.bf16.mxu0 0
        %1903 = vmatpush1.bf16.msra.mxu0 0
        %1904 = vmatprep.subr.bf16.mxu0 0
        %1905 = vmatpush1.bf16.msra.mxu0 0
        %1906 = vmatprep.subr.bf16.mxu0 0
        %1907 = vmatpush1.bf16.msra.mxu0 0
        %1908 = vmatprep.mubr.bf16.mxu0 0
        %1909 = vmatmul.mubr.bf16.gmra.mrb[0].mxu0 %v1871
        %v1910 = vpop.f32.mrb[0].mxu0
        %v1911 = vadd.f32 0.0, %v1910
        %v1912 = vpop.f32.mrb[0].mxu0
        %v1913 = vpop.f32.mrb[0].mxu0
        %v1914 = vpop.f32.mrb[0].mxu0
        %1915 = vdwg.mxu0
        %v1917 = vsel %vm336, %v1863, 0
        %1919 = vmatprep.subr.bf16.mxu0 0
        %1920 = vmatpush1.bf16.msra.mxu0 %v1874
        %1921 = vmatprep.subr.bf16.mxu0 0
        %1922 = vmatpush1.bf16.msra.mxu0 0
        %1923 = vmatprep.subr.bf16.mxu0 0
        %1924 = vmatpush1.bf16.msra.mxu0 0
        %1925 = vmatprep.subr.bf16.mxu0 0
        %1926 = vmatpush1.bf16.msra.mxu0 0
        %1927 = vmatprep.subr.bf16.mxu0 0
        %1928 = vmatpush1.bf16.msra.mxu0 0
        %1929 = vmatprep.subr.bf16.mxu0 0
        %1930 = vmatpush1.bf16.msra.mxu0 0
        %1931 = vmatprep.subr.bf16.mxu0 0
        %1932 = vmatpush1.bf16.msra.mxu0 0
        %1933 = vmatprep.subr.bf16.mxu0 0
        %1934 = vmatpush1.bf16.msra.mxu0 0
        %1935 = vmatprep.subr.bf16.mxu0 0
        %1936 = vmatpush1.bf16.msra.mxu0 0
        %1937 = vmatprep.subr.bf16.mxu0 0
        %1938 = vmatpush1.bf16.msra.mxu0 0
        %1939 = vmatprep.subr.bf16.mxu0 0
        %1940 = vmatpush1.bf16.msra.mxu0 0
        %1941 = vmatprep.subr.bf16.mxu0 0
        %1942 = vmatpush1.bf16.msra.mxu0 0
        %1943 = vmatprep.subr.bf16.mxu0 0
        %1944 = vmatpush1.bf16.msra.mxu0 0
        %1945 = vmatprep.subr.bf16.mxu0 0
        %1946 = vmatpush1.bf16.msra.mxu0 0
        %1947 = vmatprep.subr.bf16.mxu0 0
        %1948 = vmatpush1.bf16.msra.mxu0 0
        %1949 = vmatprep.subr.bf16.mxu0 0
        %1950 = vmatpush1.bf16.msra.mxu0 0
        %1951 = vmatprep.mubr.bf16.mxu0 0
        %1952 = vmatmul.mubr.bf16.gmra.mrb[0].mxu0 %v1917
        %v1953 = vpop.f32.mrb[0].mxu0
        %v1954 = vadd.f32 0.0, %v1953
        %v1955 = vpop.f32.mrb[0].mxu0
        %v1956 = vpop.f32.mrb[0].mxu0
        %v1957 = vpop.f32.mrb[0].mxu0
        %1958 = vdwg.mxu0
        %v1960 = vsel %vm336, %v1864, 0
        %1962 = vmatprep.subr.bf16.mxu0 0
        %1963 = vmatpush1.bf16.msra.mxu0 %v1874
        %1964 = vmatprep.subr.bf16.mxu0 0
        %1965 = vmatpush1.bf16.msra.mxu0 0
        %1966 = vmatprep.subr.bf16.mxu0 0
        %1967 = vmatpush1.bf16.msra.mxu0 0
        %1968 = vmatprep.subr.bf16.mxu0 0
        %1969 = vmatpush1.bf16.msra.mxu0 0
        %1970 = vmatprep.subr.bf16.mxu0 0
        %1971 = vmatpush1.bf16.msra.mxu0 0
        %1972 = vmatprep.subr.bf16.mxu0 0
        %1973 = vmatpush1.bf16.msra.mxu0 0
        %1974 = vmatprep.subr.bf16.mxu0 0
        %1975 = vmatpush1.bf16.msra.mxu0 0
        %1976 = vmatprep.subr.bf16.mxu0 0
        %1977 = vmatpush1.bf16.msra.mxu0 0
        %1978 = vmatprep.subr.bf16.mxu0 0
        %1979 = vmatpush1.bf16.msra.mxu0 0
        %1980 = vmatprep.subr.bf16.mxu0 0
        %1981 = vmatpush1.bf16.msra.mxu0 0
        %1982 = vmatprep.subr.bf16.mxu0 0
        %1983 = vmatpush1.bf16.msra.mxu0 0
        %1984 = vmatprep.subr.bf16.mxu0 0
        %1985 = vmatpush1.bf16.msra.mxu0 0
        %1986 = vmatprep.subr.bf16.mxu0 0
        %1987 = vmatpush1.bf16.msra.mxu0 0
        %1988 = vmatprep.subr.bf16.mxu0 0
        %1989 = vmatpush1.bf16.msra.mxu0 0
        %1990 = vmatprep.subr.bf16.mxu0 0
        %1991 = vmatpush1.bf16.msra.mxu0 0
        %1992 = vmatprep.subr.bf16.mxu0 0
        %1993 = vmatpush1.bf16.msra.mxu0 0
        %1994 = vmatprep.mubr.bf16.mxu0 0
        %1995 = vmatmul.mubr.bf16.gmra.mrb[0].mxu0 %v1960
        %v1996 = vpop.f32.mrb[0].mxu0
        %v1997 = vadd.f32 0.0, %v1996
        %v1998 = vpop.f32.mrb[0].mxu0
        %v1999 = vpop.f32.mrb[0].mxu0
        %v2000 = vpop.f32.mrb[0].mxu0
        %2001 = vdwg.mxu0
        %v2003 = vsel %vm336, %v1865, 0
        %2005 = vmatprep.subr.bf16.mxu0 0
        %2006 = vmatpush1.bf16.msra.mxu0 %v1874
        %2007 = vmatprep.subr.bf16.mxu0 0
        %2008 = vmatpush1.bf16.msra.mxu0 0
        %2009 = vmatprep.subr.bf16.mxu0 0
        %2010 = vmatpush1.bf16.msra.mxu0 0
        %2011 = vmatprep.subr.bf16.mxu0 0
        %2012 = vmatpush1.bf16.msra.mxu0 0
        %2013 = vmatprep.subr.bf16.mxu0 0
        %2014 = vmatpush1.bf16.msra.mxu0 0
        %2015 = vmatprep.subr.bf16.mxu0 0
        %2016 = vmatpush1.bf16.msra.mxu0 0
        %2017 = vmatprep.subr.bf16.mxu0 0
        %2018 = vmatpush1.bf16.msra.mxu0 0
        %2019 = vmatprep.subr.bf16.mxu0 0
        %2020 = vmatpush1.bf16.msra.mxu0 0
        %2021 = vmatprep.subr.bf16.mxu0 0
        %2022 = vmatpush1.bf16.msra.mxu0 0
        %2023 = vmatprep.subr.bf16.mxu0 0
        %2024 = vmatpush1.bf16.msra.mxu0 0
        %2025 = vmatprep.subr.bf16.mxu0 0
        %2026 = vmatpush1.bf16.msra.mxu0 0
        %2027 = vmatprep.subr.bf16.mxu0 0
        %2028 = vmatpush1.bf16.msra.mxu0 0
        %2029 = vmatprep.subr.bf16.mxu0 0
        %2030 = vmatpush1.bf16.msra.mxu0 0
        %2031 = vmatprep.subr.bf16.mxu0 0
        %2032 = vmatpush1.bf16.msra.mxu0 0
        %2033 = vmatprep.subr.bf16.mxu0 0
        %2034 = vmatpush1.bf16.msra.mxu0 0
        %2035 = vmatprep.subr.bf16.mxu0 0
        %2036 = vmatpush1.bf16.msra.mxu0 0
        %2037 = vmatprep.mubr.bf16.mxu0 0
        %2038 = vmatmul.mubr.bf16.gmra.mrb[0].mxu0 %v2003
        %v2039 = vpop.f32.mrb[0].mxu0
        %v2040 = vadd.f32 0.0, %v2039
        %v2041 = vpop.f32.mrb[0].mxu0
        %v2042 = vpop.f32.mrb[0].mxu0
        %v2043 = vpop.f32.mrb[0].mxu0
        %2044 = vdwg.mxu0
        %v2046 = vsel %vm336, %v1866, 0
        %2048 = vmatprep.subr.bf16.mxu0 0
        %2049 = vmatpush1.bf16.msra.mxu0 %v1874
        %2050 = vmatprep.subr.bf16.mxu0 0
        %2051 = vmatpush1.bf16.msra.mxu0 0
        %2052 = vmatprep.subr.bf16.mxu0 0
        %2053 = vmatpush1.bf16.msra.mxu0 0
        %2054 = vmatprep.subr.bf16.mxu0 0
        %2055 = vmatpush1.bf16.msra.mxu0 0
        %2056 = vmatprep.subr.bf16.mxu0 0
        %2057 = vmatpush1.bf16.msra.mxu0 0
        %2058 = vmatprep.subr.bf16.mxu0 0
        %2059 = vmatpush1.bf16.msra.mxu0 0
        %2060 = vmatprep.subr.bf16.mxu0 0
        %2061 = vmatpush1.bf16.msra.mxu0 0
        %2062 = vmatprep.subr.bf16.mxu0 0
        %2063 = vmatpush1.bf16.msra.mxu0 0
        %2064 = vmatprep.subr.bf16.mxu0 0
        %2065 = vmatpush1.bf16.msra.mxu0 0
        %2066 = vmatprep.subr.bf16.mxu0 0
        %2067 = vmatpush1.bf16.msra.mxu0 0
        %2068 = vmatprep.subr.bf16.mxu0 0
        %2069 = vmatpush1.bf16.msra.mxu0 0
        %2070 = vmatprep.subr.bf16.mxu0 0
        %2071 = vmatpush1.bf16.msra.mxu0 0
        %2072 = vmatprep.subr.bf16.mxu0 0
        %2073 = vmatpush1.bf16.msra.mxu0 0
        %2074 = vmatprep.subr.bf16.mxu0 0
        %2075 = vmatpush1.bf16.msra.mxu0 0
        %2076 = vmatprep.subr.bf16.mxu0 0
        %2077 = vmatpush1.bf16.msra.mxu0 0
        %2078 = vmatprep.subr.bf16.mxu0 0
        %2079 = vmatpush1.bf16.msra.mxu0 0
        %2080 = vmatprep.mubr.bf16.mxu0 0
        %2081 = vmatmul.mubr.bf16.gmra.mrb[0].mxu0 %v2046
        %v2082 = vpop.f32.mrb[0].mxu0
        %v2083 = vadd.f32 0.0, %v2082
        %v2084 = vpop.f32.mrb[0].mxu0
        %v2085 = vpop.f32.mrb[0].mxu0
        %v2086 = vpop.f32.mrb[0].mxu0
        %2087 = vdwg.mxu0
        %v2089 = vsel %vm336, %v1867, 0
        %2091 = vmatprep.subr.bf16.mxu0 0
        %2092 = vmatpush1.bf16.msra.mxu0 %v1874
        %2093 = vmatprep.subr.bf16.mxu0 0
        %2094 = vmatpush1.bf16.msra.mxu0 0
        %2095 = vmatprep.subr.bf16.mxu0 0
        %2096 = vmatpush1.bf16.msra.mxu0 0
        %2097 = vmatprep.subr.bf16.mxu0 0
        %2098 = vmatpush1.bf16.msra.mxu0 0
        %2099 = vmatprep.subr.bf16.mxu0 0
        %2100 = vmatpush1.bf16.msra.mxu0 0
        %2101 = vmatprep.subr.bf16.mxu0 0
        %2102 = vmatpush1.bf16.msra.mxu0 0
        %2103 = vmatprep.subr.bf16.mxu0 0
        %2104 = vmatpush1.bf16.msra.mxu0 0
        %2105 = vmatprep.subr.bf16.mxu0 0
        %2106 = vmatpush1.bf16.msra.mxu0 0
        %2107 = vmatprep.subr.bf16.mxu0 0
        %2108 = vmatpush1.bf16.msra.mxu0 0
        %2109 = vmatprep.subr.bf16.mxu0 0
        %2110 = vmatpush1.bf16.msra.mxu0 0
        %2111 = vmatprep.subr.bf16.mxu0 0
        %2112 = vmatpush1.bf16.msra.mxu0 0
        %2113 = vmatprep.subr.bf16.mxu0 0
        %2114 = vmatpush1.bf16.msra.mxu0 0
        %2115 = vmatprep.subr.bf16.mxu0 0
        %2116 = vmatpush1.bf16.msra.mxu0 0
        %2117 = vmatprep.subr.bf16.mxu0 0
        %2118 = vmatpush1.bf16.msra.mxu0 0
        %2119 = vmatprep.subr.bf16.mxu0 0
        %2120 = vmatpush1.bf16.msra.mxu0 0
        %2121 = vmatprep.subr.bf16.mxu0 0
        %2122 = vmatpush1.bf16.msra.mxu0 0
        %2123 = vmatprep.mubr.bf16.mxu0 0
        %2124 = vmatmul.mubr.bf16.gmra.mrb[0].mxu0 %v2089
        %v2125 = vpop.f32.mrb[0].mxu0
        %v2126 = vadd.f32 0.0, %v2125
        %v2127 = vpop.f32.mrb[0].mxu0
        %v2128 = vpop.f32.mrb[0].mxu0
        %v2129 = vpop.f32.mrb[0].mxu0
        %2130 = vdwg.mxu0
        %v2132 = vsel %vm336, %v1868, 0
        %2134 = vmatprep.subr.bf16.mxu0 0
        %2135 = vmatpush1.bf16.msra.mxu0 %v1874
        %2136 = vmatprep.subr.bf16.mxu0 0
        %2137 = vmatpush1.bf16.msra.mxu0 0
        %2138 = vmatprep.subr.bf16.mxu0 0
        %2139 = vmatpush1.bf16.msra.mxu0 0
        %2140 = vmatprep.subr.bf16.mxu0 0
        %2141 = vmatpush1.bf16.msra.mxu0 0
        %2142 = vmatprep.subr.bf16.mxu0 0
        %2143 = vmatpush1.bf16.msra.mxu0 0
        %2144 = vmatprep.subr.bf16.mxu0 0
        %2145 = vmatpush1.bf16.msra.mxu0 0
        %2146 = vmatprep.subr.bf16.mxu0 0
        %2147 = vmatpush1.bf16.msra.mxu0 0
        %2148 = vmatprep.subr.bf16.mxu0 0
        %2149 = vmatpush1.bf16.msra.mxu0 0
        %2150 = vmatprep.subr.bf16.mxu0 0
        %2151 = vmatpush1.bf16.msra.mxu0 0
        %2152 = vmatprep.subr.bf16.mxu0 0
        %2153 = vmatpush1.bf16.msra.mxu0 0
        %2154 = vmatprep.subr.bf16.mxu0 0
        %2155 = vmatpush1.bf16.msra.mxu0 0
        %2156 = vmatprep.subr.bf16.mxu0 0
        %2157 = vmatpush1.bf16.msra.mxu0 0
        %2158 = vmatprep.subr.bf16.mxu0 0
        %2159 = vmatpush1.bf16.msra.mxu0 0
        %2160 = vmatprep.subr.bf16.mxu0 0
        %2161 = vmatpush1.bf16.msra.mxu0 0
        %2162 = vmatprep.subr.bf16.mxu0 0
        %2163 = vmatpush1.bf16.msra.mxu0 0
        %2164 = vmatprep.subr.bf16.mxu0 0
        %2165 = vmatpush1.bf16.msra.mxu0 0
        %2166 = vmatprep.mubr.bf16.mxu0 0
        %2167 = vmatmul.mubr.bf16.gmra.mrb[0].mxu0 %v2132
        %v2168 = vpop.f32.mrb[0].mxu0
        %v2169 = vadd.f32 0.0, %v2168
        %v2170 = vpop.f32.mrb[0].mxu0
        %v2171 = vpop.f32.mrb[0].mxu0
        %v2172 = vpop.f32.mrb[0].mxu0
        %2173 = vdwg.mxu0
        %v2175 = vsel %vm336, %v1869, 0
        %2177 = vmatprep.subr.bf16.mxu0 0
        %2178 = vmatpush1.bf16.msra.mxu0 %v1874
        %2179 = vmatprep.subr.bf16.mxu0 0
        %2180 = vmatpush1.bf16.msra.mxu0 0
        %2181 = vmatprep.subr.bf16.mxu0 0
        %2182 = vmatpush1.bf16.msra.mxu0 0
        %2183 = vmatprep.subr.bf16.mxu0 0
        %2184 = vmatpush1.bf16.msra.mxu0 0
        %2185 = vmatprep.subr.bf16.mxu0 0
        %2186 = vmatpush1.bf16.msra.mxu0 0
        %2187 = vmatprep.subr.bf16.mxu0 0
        %2188 = vmatpush1.bf16.msra.mxu0 0
        %2189 = vmatprep.subr.bf16.mxu0 0
        %2190 = vmatpush1.bf16.msra.mxu0 0
        %2191 = vmatprep.subr.bf16.mxu0 0
        %2192 = vmatpush1.bf16.msra.mxu0 0
        %2193 = vmatprep.subr.bf16.mxu0 0
        %2194 = vmatpush1.bf16.msra.mxu0 0
        %2195 = vmatprep.subr.bf16.mxu0 0
        %2196 = vmatpush1.bf16.msra.mxu0 0
        %2197 = vmatprep.subr.bf16.mxu0 0
        %2198 = vmatpush1.bf16.msra.mxu0 0
        %2199 = vmatprep.subr.bf16.mxu0 0
        %2200 = vmatpush1.bf16.msra.mxu0 0
        %2201 = vmatprep.subr.bf16.mxu0 0
        %2202 = vmatpush1.bf16.msra.mxu0 0
        %2203 = vmatprep.subr.bf16.mxu0 0
        %2204 = vmatpush1.bf16.msra.mxu0 0
        %2205 = vmatprep.subr.bf16.mxu0 0
        %2206 = vmatpush1.bf16.msra.mxu0 0
        %2207 = vmatprep.subr.bf16.mxu0 0
        %2208 = vmatpush1.bf16.msra.mxu0 0
        %2209 = vmatprep.mubr.bf16.mxu0 0
        %2210 = vmatmul.mubr.bf16.gmra.mrb[0].mxu0 %v2175
        %v2211 = vpop.f32.mrb[0].mxu0
        %v2212 = vadd.f32 0.0, %v2211
        %v2213 = vpop.f32.mrb[0].mxu0
        %v2214 = vpop.f32.mrb[0].mxu0
        %v2215 = vpop.f32.mrb[0].mxu0
        %2216 = vdwg.mxu0
        %v2217 = vadd.f32 %v1854, %v1911
        %v2218 = vadd.f32 %v1855, %v1954
        %v2219 = vadd.f32 %v1856, %v1997
        %v2220 = vadd.f32 %v1857, %v2040
        %v2221 = vadd.f32 %v1858, %v2083
        %v2222 = vadd.f32 %v1859, %v2126
        %v2223 = vadd.f32 %v1860, %v2169
        %v2224 = vadd.f32 %v1861, %v2212
        %v2225 = vld [vmem:[%s304] sm:$0xf]
        %v2226 = vld [vmem:[%s304 + $0x4] sm:$0x1]
        %v2227 = vld [vmem:[%s304 + $0x8] sm:$0xf]
        %v2228 = vld [vmem:[%s304 + $0xc] sm:$0x1]
        %v2229 = vld [vmem:[%s304 + $0x10] sm:$0xf]
        %v2230 = vld [vmem:[%s304 + $0x14] sm:$0x1]
        %v2231 = vld [vmem:[%s304 + $0x18] sm:$0xf]
        %v2232 = vld [vmem:[%s304 + $0x1c] sm:$0x1]
        %v2233 = vld [vmem:[%s304 + $0x20] sm:$0xf]
        %v2234 = vld [vmem:[%s304 + $0x24] sm:$0x1]
        %v2235 = vld [vmem:[%s304 + $0x28] sm:$0xf]
        %v2236 = vld [vmem:[%s304 + $0x2c] sm:$0x1]
        %v2237 = vld [vmem:[%s304 + $0x30] sm:$0xf]
        %v2238 = vld [vmem:[%s304 + $0x34] sm:$0x1]
        %v2239 = vld [vmem:[%s304 + $0x38] sm:$0xf]
        %v2240 = vld [vmem:[%s304 + $0x3c] sm:$0x1]
        %v2243 = vunpack.c.l.b16 %v2225
        %v2244 = vunpack.c.l.b16 %v2226
        %v2245 = vpack.c.b16 %v2244, %v2243
        %v2247 = vshrl.u32 %v2245, 16
        %v2249 = vshll.u32 %v2245, 16
        %v2251 = vrot.slane %v2249, 1
        %v2252 = vor.u32 %v2247, %v2251
        %v2254 = vsel %vm336, %v2252, 0
        %v2257 = vsel %vm340, %v316, 0
        %2259 = vmatprep.subr.bf16.mxu0 0
        %2260 = vmatpush1.bf16.msra.mxu0 %v2257
        %2261 = vmatprep.subr.bf16.mxu0 0
        %2262 = vmatpush1.bf16.msra.mxu0 0
        %2263 = vmatprep.subr.bf16.mxu0 0
        %2264 = vmatpush1.bf16.msra.mxu0 0
        %2265 = vmatprep.subr.bf16.mxu0 0
        %2266 = vmatpush1.bf16.msra.mxu0 0
        %2267 = vmatprep.subr.bf16.mxu0 0
        %2268 = vmatpush1.bf16.msra.mxu0 0
        %2269 = vmatprep.subr.bf16.mxu0 0
        %2270 = vmatpush1.bf16.msra.mxu0 0
        %2271 = vmatprep.subr.bf16.mxu0 0
        %2272 = vmatpush1.bf16.msra.mxu0 0
        %2273 = vmatprep.subr.bf16.mxu0 0
        %2274 = vmatpush1.bf16.msra.mxu0 0
        %2275 = vmatprep.subr.bf16.mxu0 0
        %2276 = vmatpush1.bf16.msra.mxu0 0
        %2277 = vmatprep.subr.bf16.mxu0 0
        %2278 = vmatpush1.bf16.msra.mxu0 0
        %2279 = vmatprep.subr.bf16.mxu0 0
        %2280 = vmatpush1.bf16.msra.mxu0 0
        %2281 = vmatprep.subr.bf16.mxu0 0
        %2282 = vmatpush1.bf16.msra.mxu0 0
        %2283 = vmatprep.subr.bf16.mxu0 0
        %2284 = vmatpush1.bf16.msra.mxu0 0
        %2285 = vmatprep.subr.bf16.mxu0 0
        %2286 = vmatpush1.bf16.msra.mxu0 0
        %2287 = vmatprep.subr.bf16.mxu0 0
        %2288 = vmatpush1.bf16.msra.mxu0 0
        %2289 = vmatprep.subr.bf16.mxu0 0
        %2290 = vmatpush1.bf16.msra.mxu0 0
        %2291 = vmatprep.mubr.bf16.mxu0 0
        %2292 = vmatmul.mubr.bf16.gmra.mrb[0].mxu0 %v2254
        %v2293 = vpop.f32.mrb[0].mxu0
        %v2294 = vadd.f32 0.0, %v2293
        %v2295 = vpop.f32.mrb[0].mxu0
        %v2296 = vpop.f32.mrb[0].mxu0
        %v2297 = vpop.f32.mrb[0].mxu0
        %2298 = vdwg.mxu0
        %v2301 = vunpack.c.l.b16 %v2227
        %v2302 = vunpack.c.l.b16 %v2228
        %v2303 = vpack.c.b16 %v2302, %v2301
        %v2305 = vshrl.u32 %v2303, 16
        %v2307 = vshll.u32 %v2303, 16
        %v2309 = vrot.slane %v2307, 1
        %v2310 = vor.u32 %v2305, %v2309
        %v2312 = vsel %vm336, %v2310, 0
        %2314 = vmatprep.subr.bf16.mxu0 0
        %2315 = vmatpush1.bf16.msra.mxu0 %v2257
        %2316 = vmatprep.subr.bf16.mxu0 0
        %2317 = vmatpush1.bf16.msra.mxu0 0
        %2318 = vmatprep.subr.bf16.mxu0 0
        %2319 = vmatpush1.bf16.msra.mxu0 0
        %2320 = vmatprep.subr.bf16.mxu0 0
        %2321 = vmatpush1.bf16.msra.mxu0 0
        %2322 = vmatprep.subr.bf16.mxu0 0
        %2323 = vmatpush1.bf16.msra.mxu0 0
        %2324 = vmatprep.subr.bf16.mxu0 0
        %2325 = vmatpush1.bf16.msra.mxu0 0
        %2326 = vmatprep.subr.bf16.mxu0 0
        %2327 = vmatpush1.bf16.msra.mxu0 0
        %2328 = vmatprep.subr.bf16.mxu0 0
        %2329 = vmatpush1.bf16.msra.mxu0 0
        %2330 = vmatprep.subr.bf16.mxu0 0
        %2331 = vmatpush1.bf16.msra.mxu0 0
        %2332 = vmatprep.subr.bf16.mxu0 0
        %2333 = vmatpush1.bf16.msra.mxu0 0
        %2334 = vmatprep.subr.bf16.mxu0 0
        %2335 = vmatpush1.bf16.msra.mxu0 0
        %2336 = vmatprep.subr.bf16.mxu0 0
        %2337 = vmatpush1.bf16.msra.mxu0 0
        %2338 = vmatprep.subr.bf16.mxu0 0
        %2339 = vmatpush1.bf16.msra.mxu0 0
        %2340 = vmatprep.subr.bf16.mxu0 0
        %2341 = vmatpush1.bf16.msra.mxu0 0
        %2342 = vmatprep.subr.bf16.mxu0 0
        %2343 = vmatpush1.bf16.msra.mxu0 0
        %2344 = vmatprep.subr.bf16.mxu0 0
        %2345 = vmatpush1.bf16.msra.mxu0 0
        %2346 = vmatprep.mubr.bf16.mxu0 0
        %2347 = vmatmul.mubr.bf16.gmra.mrb[0].mxu0 %v2312
        %v2348 = vpop.f32.mrb[0].mxu0
        %v2349 = vadd.f32 0.0, %v2348
        %v2350 = vpop.f32.mrb[0].mxu0
        %v2351 = vpop.f32.mrb[0].mxu0
        %v2352 = vpop.f32.mrb[0].mxu0
        %2353 = vdwg.mxu0
        %v2356 = vunpack.c.l.b16 %v2229
        %v2357 = vunpack.c.l.b16 %v2230
        %v2358 = vpack.c.b16 %v2357, %v2356
        %v2360 = vshrl.u32 %v2358, 16
        %v2362 = vshll.u32 %v2358, 16
        %v2364 = vrot.slane %v2362, 1
        %v2365 = vor.u32 %v2360, %v2364
        %v2367 = vsel %vm336, %v2365, 0
        %2369 = vmatprep.subr.bf16.mxu0 0
        %2370 = vmatpush1.bf16.msra.mxu0 %v2257
        %2371 = vmatprep.subr.bf16.mxu0 0
        %2372 = vmatpush1.bf16.msra.mxu0 0
        %2373 = vmatprep.subr.bf16.mxu0 0
        %2374 = vmatpush1.bf16.msra.mxu0 0
        %2375 = vmatprep.subr.bf16.mxu0 0
        %2376 = vmatpush1.bf16.msra.mxu0 0
        %2377 = vmatprep.subr.bf16.mxu0 0
        %2378 = vmatpush1.bf16.msra.mxu0 0
        %2379 = vmatprep.subr.bf16.mxu0 0
        %2380 = vmatpush1.bf16.msra.mxu0 0
        %2381 = vmatprep.subr.bf16.mxu0 0
        %2382 = vmatpush1.bf16.msra.mxu0 0
        %2383 = vmatprep.subr.bf16.mxu0 0
        %2384 = vmatpush1.bf16.msra.mxu0 0
        %2385 = vmatprep.subr.bf16.mxu0 0
        %2386 = vmatpush1.bf16.msra.mxu0 0
        %2387 = vmatprep.subr.bf16.mxu0 0
        %2388 = vmatpush1.bf16.msra.mxu0 0
        %2389 = vmatprep.subr.bf16.mxu0 0
        %2390 = vmatpush1.bf16.msra.mxu0 0
        %2391 = vmatprep.subr.bf16.mxu0 0
        %2392 = vmatpush1.bf16.msra.mxu0 0
        %2393 = vmatprep.subr.bf16.mxu0 0
        %2394 = vmatpush1.bf16.msra.mxu0 0
        %2395 = vmatprep.subr.bf16.mxu0 0
        %2396 = vmatpush1.bf16.msra.mxu0 0
        %2397 = vmatprep.subr.bf16.mxu0 0
        %2398 = vmatpush1.bf16.msra.mxu0 0
        %2399 = vmatprep.subr.bf16.mxu0 0
        %2400 = vmatpush1.bf16.msra.mxu0 0
        %2401 = vmatprep.mubr.bf16.mxu0 0
        %2402 = vmatmul.mubr.bf16.gmra.mrb[0].mxu0 %v2367
        %v2403 = vpop.f32.mrb[0].mxu0
        %v2404 = vadd.f32 0.0, %v2403
        %v2405 = vpop.f32.mrb[0].mxu0
        %v2406 = vpop.f32.mrb[0].mxu0
        %v2407 = vpop.f32.mrb[0].mxu0
        %2408 = vdwg.mxu0
        %v2411 = vunpack.c.l.b16 %v2231
        %v2412 = vunpack.c.l.b16 %v2232
        %v2413 = vpack.c.b16 %v2412, %v2411
        %v2415 = vshrl.u32 %v2413, 16
        %v2417 = vshll.u32 %v2413, 16
        %v2419 = vrot.slane %v2417, 1
        %v2420 = vor.u32 %v2415, %v2419
        %v2422 = vsel %vm336, %v2420, 0
        %2424 = vmatprep.subr.bf16.mxu0 0
        %2425 = vmatpush1.bf16.msra.mxu0 %v2257
        %2426 = vmatprep.subr.bf16.mxu0 0
        %2427 = vmatpush1.bf16.msra.mxu0 0
        %2428 = vmatprep.subr.bf16.mxu0 0
        %2429 = vmatpush1.bf16.msra.mxu0 0
        %2430 = vmatprep.subr.bf16.mxu0 0
        %2431 = vmatpush1.bf16.msra.mxu0 0
        %2432 = vmatprep.subr.bf16.mxu0 0
        %2433 = vmatpush1.bf16.msra.mxu0 0
        %2434 = vmatprep.subr.bf16.mxu0 0
        %2435 = vmatpush1.bf16.msra.mxu0 0
        %2436 = vmatprep.subr.bf16.mxu0 0
        %2437 = vmatpush1.bf16.msra.mxu0 0
        %2438 = vmatprep.subr.bf16.mxu0 0
        %2439 = vmatpush1.bf16.msra.mxu0 0
        %2440 = vmatprep.subr.bf16.mxu0 0
        %2441 = vmatpush1.bf16.msra.mxu0 0
        %2442 = vmatprep.subr.bf16.mxu0 0
        %2443 = vmatpush1.bf16.msra.mxu0 0
        %2444 = vmatprep.subr.bf16.mxu0 0
        %2445 = vmatpush1.bf16.msra.mxu0 0
        %2446 = vmatprep.subr.bf16.mxu0 0
        %2447 = vmatpush1.bf16.msra.mxu0 0
        %2448 = vmatprep.subr.bf16.mxu0 0
        %2449 = vmatpush1.bf16.msra.mxu0 0
        %2450 = vmatprep.subr.bf16.mxu0 0
        %2451 = vmatpush1.bf16.msra.mxu0 0
        %2452 = vmatprep.subr.bf16.mxu0 0
        %2453 = vmatpush1.bf16.msra.mxu0 0
        %2454 = vmatprep.subr.bf16.mxu0 0
        %2455 = vmatpush1.bf16.msra.mxu0 0
        %2456 = vmatprep.mubr.bf16.mxu0 0
        %2457 = vmatmul.mubr.bf16.gmra.mrb[0].mxu0 %v2422
        %v2458 = vpop.f32.mrb[0].mxu0
        %v2459 = vadd.f32 0.0, %v2458
        %v2460 = vpop.f32.mrb[0].mxu0
        %v2461 = vpop.f32.mrb[0].mxu0
        %v2462 = vpop.f32.mrb[0].mxu0
        %2463 = vdwg.mxu0
        %v2466 = vunpack.c.l.b16 %v2233
        %v2467 = vunpack.c.l.b16 %v2234
        %v2468 = vpack.c.b16 %v2467, %v2466
        %v2470 = vshrl.u32 %v2468, 16
        %v2472 = vshll.u32 %v2468, 16
        %v2474 = vrot.slane %v2472, 1
        %v2475 = vor.u32 %v2470, %v2474
        %v2477 = vsel %vm336, %v2475, 0
        %2479 = vmatprep.subr.bf16.mxu0 0
        %2480 = vmatpush1.bf16.msra.mxu0 %v2257
        %2481 = vmatprep.subr.bf16.mxu0 0
        %2482 = vmatpush1.bf16.msra.mxu0 0
        %2483 = vmatprep.subr.bf16.mxu0 0
        %2484 = vmatpush1.bf16.msra.mxu0 0
        %2485 = vmatprep.subr.bf16.mxu0 0
        %2486 = vmatpush1.bf16.msra.mxu0 0
        %2487 = vmatprep.subr.bf16.mxu0 0
        %2488 = vmatpush1.bf16.msra.mxu0 0
        %2489 = vmatprep.subr.bf16.mxu0 0
        %2490 = vmatpush1.bf16.msra.mxu0 0
        %2491 = vmatprep.subr.bf16.mxu0 0
        %2492 = vmatpush1.bf16.msra.mxu0 0
        %2493 = vmatprep.subr.bf16.mxu0 0
        %2494 = vmatpush1.bf16.msra.mxu0 0
        %2495 = vmatprep.subr.bf16.mxu0 0
        %2496 = vmatpush1.bf16.msra.mxu0 0
        %2497 = vmatprep.subr.bf16.mxu0 0
        %2498 = vmatpush1.bf16.msra.mxu0 0
        %2499 = vmatprep.subr.bf16.mxu0 0
        %2500 = vmatpush1.bf16.msra.mxu0 0
        %2501 = vmatprep.subr.bf16.mxu0 0
        %2502 = vmatpush1.bf16.msra.mxu0 0
        %2503 = vmatprep.subr.bf16.mxu0 0
        %2504 = vmatpush1.bf16.msra.mxu0 0
        %2505 = vmatprep.subr.bf16.mxu0 0
        %2506 = vmatpush1.bf16.msra.mxu0 0
        %2507 = vmatprep.subr.bf16.mxu0 0
        %2508 = vmatpush1.bf16.msra.mxu0 0
        %2509 = vmatprep.subr.bf16.mxu0 0
        %2510 = vmatpush1.bf16.msra.mxu0 0
        %2511 = vmatprep.mubr.bf16.mxu0 0
        %2512 = vmatmul.mubr.bf16.gmra.mrb[0].mxu0 %v2477
        %v2513 = vpop.f32.mrb[0].mxu0
        %v2514 = vadd.f32 0.0, %v2513
        %v2515 = vpop.f32.mrb[0].mxu0
        %v2516 = vpop.f32.mrb[0].mxu0
        %v2517 = vpop.f32.mrb[0].mxu0
        %2518 = vdwg.mxu0
        %v2521 = vunpack.c.l.b16 %v2235
        %v2522 = vunpack.c.l.b16 %v2236
        %v2523 = vpack.c.b16 %v2522, %v2521
        %v2525 = vshrl.u32 %v2523, 16
        %v2527 = vshll.u32 %v2523, 16
        %v2529 = vrot.slane %v2527, 1
        %v2530 = vor.u32 %v2525, %v2529
        %v2532 = vsel %vm336, %v2530, 0
        %2534 = vmatprep.subr.bf16.mxu0 0
        %2535 = vmatpush1.bf16.msra.mxu0 %v2257
        %2536 = vmatprep.subr.bf16.mxu0 0
        %2537 = vmatpush1.bf16.msra.mxu0 0
        %2538 = vmatprep.subr.bf16.mxu0 0
        %2539 = vmatpush1.bf16.msra.mxu0 0
        %2540 = vmatprep.subr.bf16.mxu0 0
        %2541 = vmatpush1.bf16.msra.mxu0 0
        %2542 = vmatprep.subr.bf16.mxu0 0
        %2543 = vmatpush1.bf16.msra.mxu0 0
        %2544 = vmatprep.subr.bf16.mxu0 0
        %2545 = vmatpush1.bf16.msra.mxu0 0
        %2546 = vmatprep.subr.bf16.mxu0 0
        %2547 = vmatpush1.bf16.msra.mxu0 0
        %2548 = vmatprep.subr.bf16.mxu0 0
        %2549 = vmatpush1.bf16.msra.mxu0 0
        %2550 = vmatprep.subr.bf16.mxu0 0
        %2551 = vmatpush1.bf16.msra.mxu0 0
        %2552 = vmatprep.subr.bf16.mxu0 0
        %2553 = vmatpush1.bf16.msra.mxu0 0
        %2554 = vmatprep.subr.bf16.mxu0 0
        %2555 = vmatpush1.bf16.msra.mxu0 0
        %2556 = vmatprep.subr.bf16.mxu0 0
        %2557 = vmatpush1.bf16.msra.mxu0 0
        %2558 = vmatprep.subr.bf16.mxu0 0
        %2559 = vmatpush1.bf16.msra.mxu0 0
        %2560 = vmatprep.subr.bf16.mxu0 0
        %2561 = vmatpush1.bf16.msra.mxu0 0
        %2562 = vmatprep.subr.bf16.mxu0 0
        %2563 = vmatpush1.bf16.msra.mxu0 0
        %2564 = vmatprep.subr.bf16.mxu0 0
        %2565 = vmatpush1.bf16.msra.mxu0 0
        %2566 = vmatprep.mubr.bf16.mxu0 0
        %2567 = vmatmul.mubr.bf16.gmra.mrb[0].mxu0 %v2532
        %v2568 = vpop.f32.mrb[0].mxu0
        %v2569 = vadd.f32 0.0, %v2568
        %v2570 = vpop.f32.mrb[0].mxu0
        %v2571 = vpop.f32.mrb[0].mxu0
        %v2572 = vpop.f32.mrb[0].mxu0
        %2573 = vdwg.mxu0
        %v2576 = vunpack.c.l.b16 %v2237
        %v2577 = vunpack.c.l.b16 %v2238
        %v2578 = vpack.c.b16 %v2577, %v2576
        %v2580 = vshrl.u32 %v2578, 16
        %v2582 = vshll.u32 %v2578, 16
        %v2584 = vrot.slane %v2582, 1
        %v2585 = vor.u32 %v2580, %v2584
        %v2587 = vsel %vm336, %v2585, 0
        %2589 = vmatprep.subr.bf16.mxu0 0
        %2590 = vmatpush1.bf16.msra.mxu0 %v2257
        %2591 = vmatprep.subr.bf16.mxu0 0
        %2592 = vmatpush1.bf16.msra.mxu0 0
        %2593 = vmatprep.subr.bf16.mxu0 0
        %2594 = vmatpush1.bf16.msra.mxu0 0
        %2595 = vmatprep.subr.bf16.mxu0 0
        %2596 = vmatpush1.bf16.msra.mxu0 0
        %2597 = vmatprep.subr.bf16.mxu0 0
        %2598 = vmatpush1.bf16.msra.mxu0 0
        %2599 = vmatprep.subr.bf16.mxu0 0
        %2600 = vmatpush1.bf16.msra.mxu0 0
        %2601 = vmatprep.subr.bf16.mxu0 0
        %2602 = vmatpush1.bf16.msra.mxu0 0
        %2603 = vmatprep.subr.bf16.mxu0 0
        %2604 = vmatpush1.bf16.msra.mxu0 0
        %2605 = vmatprep.subr.bf16.mxu0 0
        %2606 = vmatpush1.bf16.msra.mxu0 0
        %2607 = vmatprep.subr.bf16.mxu0 0
        %2608 = vmatpush1.bf16.msra.mxu0 0
        %2609 = vmatprep.subr.bf16.mxu0 0
        %2610 = vmatpush1.bf16.msra.mxu0 0
        %2611 = vmatprep.subr.bf16.mxu0 0
        %2612 = vmatpush1.bf16.msra.mxu0 0
        %2613 = vmatprep.subr.bf16.mxu0 0
        %2614 = vmatpush1.bf16.msra.mxu0 0
        %2615 = vmatprep.subr.bf16.mxu0 0
        %2616 = vmatpush1.bf16.msra.mxu0 0
        %2617 = vmatprep.subr.bf16.mxu0 0
        %2618 = vmatpush1.bf16.msra.mxu0 0
        %2619 = vmatprep.subr.bf16.mxu0 0
        %2620 = vmatpush1.bf16.msra.mxu0 0
        %2621 = vmatprep.mubr.bf16.mxu0 0
        %2622 = vmatmul.mubr.bf16.gmra.mrb[0].mxu0 %v2587
        %v2623 = vpop.f32.mrb[0].mxu0
        %v2624 = vadd.f32 0.0, %v2623
        %v2625 = vpop.f32.mrb[0].mxu0
        %v2626 = vpop.f32.mrb[0].mxu0
        %v2627 = vpop.f32.mrb[0].mxu0
        %2628 = vdwg.mxu0
        %v2631 = vunpack.c.l.b16 %v2239
        %v2632 = vunpack.c.l.b16 %v2240
        %v2633 = vpack.c.b16 %v2632, %v2631
        %v2635 = vshrl.u32 %v2633, 16
        %v2637 = vshll.u32 %v2633, 16
        %v2639 = vrot.slane %v2637, 1
        %v2640 = vor.u32 %v2635, %v2639
        %v2642 = vsel %vm336, %v2640, 0
        %2644 = vmatprep.subr.bf16.mxu0 0
        %2645 = vmatpush1.bf16.msra.mxu0 %v2257
        %2646 = vmatprep.subr.bf16.mxu0 0
        %2647 = vmatpush1.bf16.msra.mxu0 0
        %2648 = vmatprep.subr.bf16.mxu0 0
        %2649 = vmatpush1.bf16.msra.mxu0 0
        %2650 = vmatprep.subr.bf16.mxu0 0
        %2651 = vmatpush1.bf16.msra.mxu0 0
        %2652 = vmatprep.subr.bf16.mxu0 0
        %2653 = vmatpush1.bf16.msra.mxu0 0
        %2654 = vmatprep.subr.bf16.mxu0 0
        %2655 = vmatpush1.bf16.msra.mxu0 0
        %2656 = vmatprep.subr.bf16.mxu0 0
        %2657 = vmatpush1.bf16.msra.mxu0 0
        %2658 = vmatprep.subr.bf16.mxu0 0
        %2659 = vmatpush1.bf16.msra.mxu0 0
        %2660 = vmatprep.subr.bf16.mxu0 0
        %2661 = vmatpush1.bf16.msra.mxu0 0
        %2662 = vmatprep.subr.bf16.mxu0 0
        %2663 = vmatpush1.bf16.msra.mxu0 0
        %2664 = vmatprep.subr.bf16.mxu0 0
        %2665 = vmatpush1.bf16.msra.mxu0 0
        %2666 = vmatprep.subr.bf16.mxu0 0
        %2667 = vmatpush1.bf16.msra.mxu0 0
        %2668 = vmatprep.subr.bf16.mxu0 0
        %2669 = vmatpush1.bf16.msra.mxu0 0
        %2670 = vmatprep.subr.bf16.mxu0 0
        %2671 = vmatpush1.bf16.msra.mxu0 0
        %2672 = vmatprep.subr.bf16.mxu0 0
        %2673 = vmatpush1.bf16.msra.mxu0 0
        %2674 = vmatprep.subr.bf16.mxu0 0
        %2675 = vmatpush1.bf16.msra.mxu0 0
        %2676 = vmatprep.mubr.bf16.mxu0 0
        %2677 = vmatmul.mubr.bf16.gmra.mrb[0].mxu0 %v2642
        %v2678 = vpop.f32.mrb[0].mxu0
        %v2679 = vadd.f32 0.0, %v2678
        %v2680 = vpop.f32.mrb[0].mxu0
        %v2681 = vpop.f32.mrb[0].mxu0
        %v2682 = vpop.f32.mrb[0].mxu0
        %2683 = vdwg.mxu0
        %v2684 = vadd.f32 %v2217, %v2294
        %v2685 = vadd.f32 %v2218, %v2349
        %v2686 = vadd.f32 %v2219, %v2404
        %v2687 = vadd.f32 %v2220, %v2459
        %v2688 = vadd.f32 %v2221, %v2514
        %v2689 = vadd.f32 %v2222, %v2569
        %v2690 = vadd.f32 %v2223, %v2624
        %v2691 = vadd.f32 %v2224, %v2679
        %s2692 = scalar_lea.vmem %s294, 8
        %v2693 = vld [vmem:[%s2692] sm:$0xf]
        %v2694 = vld [vmem:[%s2692 + $0x8] sm:$0xf]
        %v2695 = vld [vmem:[%s2692 + $0x10] sm:$0xf]
        %v2696 = vld [vmem:[%s2692 + $0x18] sm:$0xf]
        %v2697 = vld [vmem:[%s2692 + $0x20] sm:$0xf]
        %v2698 = vld [vmem:[%s2692 + $0x28] sm:$0xf]
        %v2699 = vld [vmem:[%s2692 + $0x30] sm:$0xf]
        %v2700 = vld [vmem:[%s2692 + $0x38] sm:$0xf]
        %v2702 = vsel %vm336, %v2693, 0
        %v2705 = vsel %vm340, %v317, 0
        %2707 = vmatprep.subr.bf16.mxu0 0
        %2708 = vmatpush1.bf16.msra.mxu0 %v2705
        %2709 = vmatprep.subr.bf16.mxu0 0
        %2710 = vmatpush1.bf16.msra.mxu0 0
        %2711 = vmatprep.subr.bf16.mxu0 0
        %2712 = vmatpush1.bf16.msra.mxu0 0
        %2713 = vmatprep.subr.bf16.mxu0 0
        %2714 = vmatpush1.bf16.msra.mxu0 0
        %2715 = vmatprep.subr.bf16.mxu0 0
        %2716 = vmatpush1.bf16.msra.mxu0 0
        %2717 = vmatprep.subr.bf16.mxu0 0
        %2718 = vmatpush1.bf16.msra.mxu0 0
        %2719 = vmatprep.subr.bf16.mxu0 0
        %2720 = vmatpush1.bf16.msra.mxu0 0
        %2721 = vmatprep.subr.bf16.mxu0 0
        %2722 = vmatpush1.bf16.msra.mxu0 0
        %2723 = vmatprep.subr.bf16.mxu0 0
        %2724 = vmatpush1.bf16.msra.mxu0 0
        %2725 = vmatprep.subr.bf16.mxu0 0
        %2726 = vmatpush1.bf16.msra.mxu0 0
        %2727 = vmatprep.subr.bf16.mxu0 0
        %2728 = vmatpush1.bf16.msra.mxu0 0
        %2729 = vmatprep.subr.bf16.mxu0 0
        %2730 = vmatpush1.bf16.msra.mxu0 0
        %2731 = vmatprep.subr.bf16.mxu0 0
        %2732 = vmatpush1.bf16.msra.mxu0 0
        %2733 = vmatprep.subr.bf16.mxu0 0
        %2734 = vmatpush1.bf16.msra.mxu0 0
        %2735 = vmatprep.subr.bf16.mxu0 0
        %2736 = vmatpush1.bf16.msra.mxu0 0
        %2737 = vmatprep.subr.bf16.mxu0 0
        %2738 = vmatpush1.bf16.msra.mxu0 0
        %2739 = vmatprep.mubr.bf16.mxu0 0
        %2740 = vmatmul.mubr.bf16.gmra.mrb[0].mxu0 %v2702
        %v2741 = vpop.f32.mrb[0].mxu0
        %v2742 = vadd.f32 0.0, %v2741
        %v2743 = vpop.f32.mrb[0].mxu0
        %v2744 = vpop.f32.mrb[0].mxu0
        %v2745 = vpop.f32.mrb[0].mxu0
        %2746 = vdwg.mxu0
        %v2748 = vsel %vm336, %v2694, 0
        %2750 = vmatprep.subr.bf16.mxu0 0
        %2751 = vmatpush1.bf16.msra.mxu0 %v2705
        %2752 = vmatprep.subr.bf16.mxu0 0
        %2753 = vmatpush1.bf16.msra.mxu0 0
        %2754 = vmatprep.subr.bf16.mxu0 0
        %2755 = vmatpush1.bf16.msra.mxu0 0
        %2756 = vmatprep.subr.bf16.mxu0 0
        %2757 = vmatpush1.bf16.msra.mxu0 0
        %2758 = vmatprep.subr.bf16.mxu0 0
        %2759 = vmatpush1.bf16.msra.mxu0 0
        %2760 = vmatprep.subr.bf16.mxu0 0
        %2761 = vmatpush1.bf16.msra.mxu0 0
        %2762 = vmatprep.subr.bf16.mxu0 0
        %2763 = vmatpush1.bf16.msra.mxu0 0
        %2764 = vmatprep.subr.bf16.mxu0 0
        %2765 = vmatpush1.bf16.msra.mxu0 0
        %2766 = vmatprep.subr.bf16.mxu0 0
        %2767 = vmatpush1.bf16.msra.mxu0 0
        %2768 = vmatprep.subr.bf16.mxu0 0
        %2769 = vmatpush1.bf16.msra.mxu0 0
        %2770 = vmatprep.subr.bf16.mxu0 0
        %2771 = vmatpush1.bf16.msra.mxu0 0
        %2772 = vmatprep.subr.bf16.mxu0 0
        %2773 = vmatpush1.bf16.msra.mxu0 0
        %2774 = vmatprep.subr.bf16.mxu0 0
        %2775 = vmatpush1.bf16.msra.mxu0 0
        %2776 = vmatprep.subr.bf16.mxu0 0
        %2777 = vmatpush1.bf16.msra.mxu0 0
        %2778 = vmatprep.subr.bf16.mxu0 0
        %2779 = vmatpush1.bf16.msra.mxu0 0
        %2780 = vmatprep.subr.bf16.mxu0 0
        %2781 = vmatpush1.bf16.msra.mxu0 0
        %2782 = vmatprep.mubr.bf16.mxu0 0
        %2783 = vmatmul.mubr.bf16.gmra.mrb[0].mxu0 %v2748
        %v2784 = vpop.f32.mrb[0].mxu0
        %v2785 = vadd.f32 0.0, %v2784
        %v2786 = vpop.f32.mrb[0].mxu0
        %v2787 = vpop.f32.mrb[0].mxu0
        %v2788 = vpop.f32.mrb[0].mxu0
        %2789 = vdwg.mxu0
        %v2791 = vsel %vm336, %v2695, 0
        %2793 = vmatprep.subr.bf16.mxu0 0
        %2794 = vmatpush1.bf16.msra.mxu0 %v2705
        %2795 = vmatprep.subr.bf16.mxu0 0
        %2796 = vmatpush1.bf16.msra.mxu0 0
        %2797 = vmatprep.subr.bf16.mxu0 0
        %2798 = vmatpush1.bf16.msra.mxu0 0
        %2799 = vmatprep.subr.bf16.mxu0 0
        %2800 = vmatpush1.bf16.msra.mxu0 0
        %2801 = vmatprep.subr.bf16.mxu0 0
        %2802 = vmatpush1.bf16.msra.mxu0 0
        %2803 = vmatprep.subr.bf16.mxu0 0
        %2804 = vmatpush1.bf16.msra.mxu0 0
        %2805 = vmatprep.subr.bf16.mxu0 0
        %2806 = vmatpush1.bf16.msra.mxu0 0
        %2807 = vmatprep.subr.bf16.mxu0 0
        %2808 = vmatpush1.bf16.msra.mxu0 0
        %2809 = vmatprep.subr.bf16.mxu0 0
        %2810 = vmatpush1.bf16.msra.mxu0 0
        %2811 = vmatprep.subr.bf16.mxu0 0
        %2812 = vmatpush1.bf16.msra.mxu0 0
        %2813 = vmatprep.subr.bf16.mxu0 0
        %2814 = vmatpush1.bf16.msra.mxu0 0
        %2815 = vmatprep.subr.bf16.mxu0 0
        %2816 = vmatpush1.bf16.msra.mxu0 0
        %2817 = vmatprep.subr.bf16.mxu0 0
        %2818 = vmatpush1.bf16.msra.mxu0 0
        %2819 = vmatprep.subr.bf16.mxu0 0
        %2820 = vmatpush1.bf16.msra.mxu0 0
        %2821 = vmatprep.subr.bf16.mxu0 0
        %2822 = vmatpush1.bf16.msra.mxu0 0
        %2823 = vmatprep.subr.bf16.mxu0 0
        %2824 = vmatpush1.bf16.msra.mxu0 0
        %2825 = vmatprep.mubr.bf16.mxu0 0
        %2826 = vmatmul.mubr.bf16.gmra.mrb[0].mxu0 %v2791
        %v2827 = vpop.f32.mrb[0].mxu0
        %v2828 = vadd.f32 0.0, %v2827
        %v2829 = vpop.f32.mrb[0].mxu0
        %v2830 = vpop.f32.mrb[0].mxu0
        %v2831 = vpop.f32.mrb[0].mxu0
        %2832 = vdwg.mxu0
        %v2834 = vsel %vm336, %v2696, 0
        %2836 = vmatprep.subr.bf16.mxu0 0
        %2837 = vmatpush1.bf16.msra.mxu0 %v2705
        %2838 = vmatprep.subr.bf16.mxu0 0
        %2839 = vmatpush1.bf16.msra.mxu0 0
        %2840 = vmatprep.subr.bf16.mxu0 0
        %2841 = vmatpush1.bf16.msra.mxu0 0
        %2842 = vmatprep.subr.bf16.mxu0 0
        %2843 = vmatpush1.bf16.msra.mxu0 0
        %2844 = vmatprep.subr.bf16.mxu0 0
        %2845 = vmatpush1.bf16.msra.mxu0 0
        %2846 = vmatprep.subr.bf16.mxu0 0
        %2847 = vmatpush1.bf16.msra.mxu0 0
        %2848 = vmatprep.subr.bf16.mxu0 0
        %2849 = vmatpush1.bf16.msra.mxu0 0
        %2850 = vmatprep.subr.bf16.mxu0 0
        %2851 = vmatpush1.bf16.msra.mxu0 0
        %2852 = vmatprep.subr.bf16.mxu0 0
        %2853 = vmatpush1.bf16.msra.mxu0 0
        %2854 = vmatprep.subr.bf16.mxu0 0
        %2855 = vmatpush1.bf16.msra.mxu0 0
        %2856 = vmatprep.subr.bf16.mxu0 0
        %2857 = vmatpush1.bf16.msra.mxu0 0
        %2858 = vmatprep.subr.bf16.mxu0 0
        %2859 = vmatpush1.bf16.msra.mxu0 0
        %2860 = vmatprep.subr.bf16.mxu0 0
        %2861 = vmatpush1.bf16.msra.mxu0 0
        %2862 = vmatprep.subr.bf16.mxu0 0
        %2863 = vmatpush1.bf16.msra.mxu0 0
        %2864 = vmatprep.subr.bf16.mxu0 0
        %2865 = vmatpush1.bf16.msra.mxu0 0
        %2866 = vmatprep.subr.bf16.mxu0 0
        %2867 = vmatpush1.bf16.msra.mxu0 0
        %2868 = vmatprep.mubr.bf16.mxu0 0
        %2869 = vmatmul.mubr.bf16.gmra.mrb[0].mxu0 %v2834
        %v2870 = vpop.f32.mrb[0].mxu0
        %v2871 = vadd.f32 0.0, %v2870
        %v2872 = vpop.f32.mrb[0].mxu0
        %v2873 = vpop.f32.mrb[0].mxu0
        %v2874 = vpop.f32.mrb[0].mxu0
        %2875 = vdwg.mxu0
        %v2877 = vsel %vm336, %v2697, 0
        %2879 = vmatprep.subr.bf16.mxu0 0
        %2880 = vmatpush1.bf16.msra.mxu0 %v2705
        %2881 = vmatprep.subr.bf16.mxu0 0
        %2882 = vmatpush1.bf16.msra.mxu0 0
        %2883 = vmatprep.subr.bf16.mxu0 0
        %2884 = vmatpush1.bf16.msra.mxu0 0
        %2885 = vmatprep.subr.bf16.mxu0 0
        %2886 = vmatpush1.bf16.msra.mxu0 0
        %2887 = vmatprep.subr.bf16.mxu0 0
        %2888 = vmatpush1.bf16.msra.mxu0 0
        %2889 = vmatprep.subr.bf16.mxu0 0
        %2890 = vmatpush1.bf16.msra.mxu0 0
        %2891 = vmatprep.subr.bf16.mxu0 0
        %2892 = vmatpush1.bf16.msra.mxu0 0
        %2893 = vmatprep.subr.bf16.mxu0 0
        %2894 = vmatpush1.bf16.msra.mxu0 0
        %2895 = vmatprep.subr.bf16.mxu0 0
        %2896 = vmatpush1.bf16.msra.mxu0 0
        %2897 = vmatprep.subr.bf16.mxu0 0
        %2898 = vmatpush1.bf16.msra.mxu0 0
        %2899 = vmatprep.subr.bf16.mxu0 0
        %2900 = vmatpush1.bf16.msra.mxu0 0
        %2901 = vmatprep.subr.bf16.mxu0 0
        %2902 = vmatpush1.bf16.msra.mxu0 0
        %2903 = vmatprep.subr.bf16.mxu0 0
        %2904 = vmatpush1.bf16.msra.mxu0 0
        %2905 = vmatprep.subr.bf16.mxu0 0
        %2906 = vmatpush1.bf16.msra.mxu0 0
        %2907 = vmatprep.subr.bf16.mxu0 0
        %2908 = vmatpush1.bf16.msra.mxu0 0
        %2909 = vmatprep.subr.bf16.mxu0 0
        %2910 = vmatpush1.bf16.msra.mxu0 0
        %2911 = vmatprep.mubr.bf16.mxu0 0
        %2912 = vmatmul.mubr.bf16.gmra.mrb[0].mxu0 %v2877
        %v2913 = vpop.f32.mrb[0].mxu0
        %v2914 = vadd.f32 0.0, %v2913
        %v2915 = vpop.f32.mrb[0].mxu0
        %v2916 = vpop.f32.mrb[0].mxu0
        %v2917 = vpop.f32.mrb[0].mxu0
        %2918 = vdwg.mxu0
        %v2920 = vsel %vm336, %v2698, 0
        %2922 = vmatprep.subr.bf16.mxu0 0
        %2923 = vmatpush1.bf16.msra.mxu0 %v2705
        %2924 = vmatprep.subr.bf16.mxu0 0
        %2925 = vmatpush1.bf16.msra.mxu0 0
        %2926 = vmatprep.subr.bf16.mxu0 0
        %2927 = vmatpush1.bf16.msra.mxu0 0
        %2928 = vmatprep.subr.bf16.mxu0 0
        %2929 = vmatpush1.bf16.msra.mxu0 0
        %2930 = vmatprep.subr.bf16.mxu0 0
        %2931 = vmatpush1.bf16.msra.mxu0 0
        %2932 = vmatprep.subr.bf16.mxu0 0
        %2933 = vmatpush1.bf16.msra.mxu0 0
        %2934 = vmatprep.subr.bf16.mxu0 0
        %2935 = vmatpush1.bf16.msra.mxu0 0
        %2936 = vmatprep.subr.bf16.mxu0 0
        %2937 = vmatpush1.bf16.msra.mxu0 0
        %2938 = vmatprep.subr.bf16.mxu0 0
        %2939 = vmatpush1.bf16.msra.mxu0 0
        %2940 = vmatprep.subr.bf16.mxu0 0
        %2941 = vmatpush1.bf16.msra.mxu0 0
        %2942 = vmatprep.subr.bf16.mxu0 0
        %2943 = vmatpush1.bf16.msra.mxu0 0
        %2944 = vmatprep.subr.bf16.mxu0 0
        %2945 = vmatpush1.bf16.msra.mxu0 0
        %2946 = vmatprep.subr.bf16.mxu0 0
        %2947 = vmatpush1.bf16.msra.mxu0 0
        %2948 = vmatprep.subr.bf16.mxu0 0
        %2949 = vmatpush1.bf16.msra.mxu0 0
        %2950 = vmatprep.subr.bf16.mxu0 0
        %2951 = vmatpush1.bf16.msra.mxu0 0
        %2952 = vmatprep.subr.bf16.mxu0 0
        %2953 = vmatpush1.bf16.msra.mxu0 0
        %2954 = vmatprep.mubr.bf16.mxu0 0
        %2955 = vmatmul.mubr.bf16.gmra.mrb[0].mxu0 %v2920
        %v2956 = vpop.f32.mrb[0].mxu0
        %v2957 = vadd.f32 0.0, %v2956
        %v2958 = vpop.f32.mrb[0].mxu0
        %v2959 = vpop.f32.mrb[0].mxu0
        %v2960 = vpop.f32.mrb[0].mxu0
        %2961 = vdwg.mxu0
        %v2963 = vsel %vm336, %v2699, 0
        %2965 = vmatprep.subr.bf16.mxu0 0
        %2966 = vmatpush1.bf16.msra.mxu0 %v2705
        %2967 = vmatprep.subr.bf16.mxu0 0
        %2968 = vmatpush1.bf16.msra.mxu0 0
        %2969 = vmatprep.subr.bf16.mxu0 0
        %2970 = vmatpush1.bf16.msra.mxu0 0
        %2971 = vmatprep.subr.bf16.mxu0 0
        %2972 = vmatpush1.bf16.msra.mxu0 0
        %2973 = vmatprep.subr.bf16.mxu0 0
        %2974 = vmatpush1.bf16.msra.mxu0 0
        %2975 = vmatprep.subr.bf16.mxu0 0
        %2976 = vmatpush1.bf16.msra.mxu0 0
        %2977 = vmatprep.subr.bf16.mxu0 0
        %2978 = vmatpush1.bf16.msra.mxu0 0
        %2979 = vmatprep.subr.bf16.mxu0 0
        %2980 = vmatpush1.bf16.msra.mxu0 0
        %2981 = vmatprep.subr.bf16.mxu0 0
        %2982 = vmatpush1.bf16.msra.mxu0 0
        %2983 = vmatprep.subr.bf16.mxu0 0
        %2984 = vmatpush1.bf16.msra.mxu0 0
        %2985 = vmatprep.subr.bf16.mxu0 0
        %2986 = vmatpush1.bf16.msra.mxu0 0
        %2987 = vmatprep.subr.bf16.mxu0 0
        %2988 = vmatpush1.bf16.msra.mxu0 0
        %2989 = vmatprep.subr.bf16.mxu0 0
        %2990 = vmatpush1.bf16.msra.mxu0 0
        %2991 = vmatprep.subr.bf16.mxu0 0
        %2992 = vmatpush1.bf16.msra.mxu0 0
        %2993 = vmatprep.subr.bf16.mxu0 0
        %2994 = vmatpush1.bf16.msra.mxu0 0
        %2995 = vmatprep.subr.bf16.mxu0 0
        %2996 = vmatpush1.bf16.msra.mxu0 0
        %2997 = vmatprep.mubr.bf16.mxu0 0
        %2998 = vmatmul.mubr.bf16.gmra.mrb[0].mxu0 %v2963
        %v2999 = vpop.f32.mrb[0].mxu0
        %v3000 = vadd.f32 0.0, %v2999
        %v3001 = vpop.f32.mrb[0].mxu0
        %v3002 = vpop.f32.mrb[0].mxu0
        %v3003 = vpop.f32.mrb[0].mxu0
        %3004 = vdwg.mxu0
        %v3006 = vsel %vm336, %v2700, 0
        %3008 = vmatprep.subr.bf16.mxu0 0
        %3009 = vmatpush1.bf16.msra.mxu0 %v2705
        %3010 = vmatprep.subr.bf16.mxu0 0
        %3011 = vmatpush1.bf16.msra.mxu0 0
        %3012 = vmatprep.subr.bf16.mxu0 0
        %3013 = vmatpush1.bf16.msra.mxu0 0
        %3014 = vmatprep.subr.bf16.mxu0 0
        %3015 = vmatpush1.bf16.msra.mxu0 0
        %3016 = vmatprep.subr.bf16.mxu0 0
        %3017 = vmatpush1.bf16.msra.mxu0 0
        %3018 = vmatprep.subr.bf16.mxu0 0
        %3019 = vmatpush1.bf16.msra.mxu0 0
        %3020 = vmatprep.subr.bf16.mxu0 0
        %3021 = vmatpush1.bf16.msra.mxu0 0
        %3022 = vmatprep.subr.bf16.mxu0 0
        %3023 = vmatpush1.bf16.msra.mxu0 0
        %3024 = vmatprep.subr.bf16.mxu0 0
        %3025 = vmatpush1.bf16.msra.mxu0 0
        %3026 = vmatprep.subr.bf16.mxu0 0
        %3027 = vmatpush1.bf16.msra.mxu0 0
        %3028 = vmatprep.subr.bf16.mxu0 0
        %3029 = vmatpush1.bf16.msra.mxu0 0
        %3030 = vmatprep.subr.bf16.mxu0 0
        %3031 = vmatpush1.bf16.msra.mxu0 0
        %3032 = vmatprep.subr.bf16.mxu0 0
        %3033 = vmatpush1.bf16.msra.mxu0 0
        %3034 = vmatprep.subr.bf16.mxu0 0
        %3035 = vmatpush1.bf16.msra.mxu0 0
        %3036 = vmatprep.subr.bf16.mxu0 0
        %3037 = vmatpush1.bf16.msra.mxu0 0
        %3038 = vmatprep.subr.bf16.mxu0 0
        %3039 = vmatpush1.bf16.msra.mxu0 0
        %3040 = vmatprep.mubr.bf16.mxu0 0
        %3041 = vmatmul.mubr.bf16.gmra.mrb[0].mxu0 %v3006
        %v3042 = vpop.f32.mrb[0].mxu0
        %v3043 = vadd.f32 0.0, %v3042
        %v3044 = vpop.f32.mrb[0].mxu0
        %v3045 = vpop.f32.mrb[0].mxu0
        %v3046 = vpop.f32.mrb[0].mxu0
        %3047 = vdwg.mxu0
        %v3048 = vadd.f32 %v2684, %v2742
        %v3049 = vadd.f32 %v2685, %v2785
        %v3050 = vadd.f32 %v2686, %v2828
        %v3051 = vadd.f32 %v2687, %v2871
        %v3052 = vadd.f32 %v2688, %v2914
        %v3053 = vadd.f32 %v2689, %v2957
        %v3054 = vadd.f32 %v2690, %v3000
        %v3055 = vadd.f32 %v2691, %v3043
        %s3056 = scalar_lea.vmem %s299, 8
        %v3057 = vld [vmem:[%s3056] sm:$0xf]
        %v3058 = vld [vmem:[%s3056 + $0x8] sm:$0xf]
        %v3059 = vld [vmem:[%s3056 + $0x10] sm:$0xf]
        %v3060 = vld [vmem:[%s3056 + $0x18] sm:$0xf]
        %v3061 = vld [vmem:[%s3056 + $0x20] sm:$0xf]
        %v3062 = vld [vmem:[%s3056 + $0x28] sm:$0xf]
        %v3063 = vld [vmem:[%s3056 + $0x30] sm:$0xf]
        %v3064 = vld [vmem:[%s3056 + $0x38] sm:$0xf]
        %v3066 = vsel %vm336, %v3057, 0
        %v3069 = vsel %vm340, %v318, 0
        %3071 = vmatprep.subr.bf16.mxu0 0
        %3072 = vmatpush1.bf16.msra.mxu0 %v3069
        %3073 = vmatprep.subr.bf16.mxu0 0
        %3074 = vmatpush1.bf16.msra.mxu0 0
        %3075 = vmatprep.subr.bf16.mxu0 0
        %3076 = vmatpush1.bf16.msra.mxu0 0
        %3077 = vmatprep.subr.bf16.mxu0 0
        %3078 = vmatpush1.bf16.msra.mxu0 0
        %3079 = vmatprep.subr.bf16.mxu0 0
        %3080 = vmatpush1.bf16.msra.mxu0 0
        %3081 = vmatprep.subr.bf16.mxu0 0
        %3082 = vmatpush1.bf16.msra.mxu0 0
        %3083 = vmatprep.subr.bf16.mxu0 0
        %3084 = vmatpush1.bf16.msra.mxu0 0
        %3085 = vmatprep.subr.bf16.mxu0 0
        %3086 = vmatpush1.bf16.msra.mxu0 0
        %3087 = vmatprep.subr.bf16.mxu0 0
        %3088 = vmatpush1.bf16.msra.mxu0 0
        %3089 = vmatprep.subr.bf16.mxu0 0
        %3090 = vmatpush1.bf16.msra.mxu0 0
        %3091 = vmatprep.subr.bf16.mxu0 0
        %3092 = vmatpush1.bf16.msra.mxu0 0
        %3093 = vmatprep.subr.bf16.mxu0 0
        %3094 = vmatpush1.bf16.msra.mxu0 0
        %3095 = vmatprep.subr.bf16.mxu0 0
        %3096 = vmatpush1.bf16.msra.mxu0 0
        %3097 = vmatprep.subr.bf16.mxu0 0
        %3098 = vmatpush1.bf16.msra.mxu0 0
        %3099 = vmatprep.subr.bf16.mxu0 0
        %3100 = vmatpush1.bf16.msra.mxu0 0
        %3101 = vmatprep.subr.bf16.mxu0 0
        %3102 = vmatpush1.bf16.msra.mxu0 0
        %3103 = vmatprep.mubr.bf16.mxu0 0
        %3104 = vmatmul.mubr.bf16.gmra.mrb[0].mxu0 %v3066
        %v3105 = vpop.f32.mrb[0].mxu0
        %v3106 = vadd.f32 0.0, %v3105
        %v3107 = vpop.f32.mrb[0].mxu0
        %v3108 = vpop.f32.mrb[0].mxu0
        %v3109 = vpop.f32.mrb[0].mxu0
        %3110 = vdwg.mxu0
        %v3112 = vsel %vm336, %v3058, 0
        %3114 = vmatprep.subr.bf16.mxu0 0
        %3115 = vmatpush1.bf16.msra.mxu0 %v3069
        %3116 = vmatprep.subr.bf16.mxu0 0
        %3117 = vmatpush1.bf16.msra.mxu0 0
        %3118 = vmatprep.subr.bf16.mxu0 0
        %3119 = vmatpush1.bf16.msra.mxu0 0
        %3120 = vmatprep.subr.bf16.mxu0 0
        %3121 = vmatpush1.bf16.msra.mxu0 0
        %3122 = vmatprep.subr.bf16.mxu0 0
        %3123 = vmatpush1.bf16.msra.mxu0 0
        %3124 = vmatprep.subr.bf16.mxu0 0
        %3125 = vmatpush1.bf16.msra.mxu0 0
        %3126 = vmatprep.subr.bf16.mxu0 0
        %3127 = vmatpush1.bf16.msra.mxu0 0
        %3128 = vmatprep.subr.bf16.mxu0 0
        %3129 = vmatpush1.bf16.msra.mxu0 0
        %3130 = vmatprep.subr.bf16.mxu0 0
        %3131 = vmatpush1.bf16.msra.mxu0 0
        %3132 = vmatprep.subr.bf16.mxu0 0
        %3133 = vmatpush1.bf16.msra.mxu0 0
        %3134 = vmatprep.subr.bf16.mxu0 0
        %3135 = vmatpush1.bf16.msra.mxu0 0
        %3136 = vmatprep.subr.bf16.mxu0 0
        %3137 = vmatpush1.bf16.msra.mxu0 0
        %3138 = vmatprep.subr.bf16.mxu0 0
        %3139 = vmatpush1.bf16.msra.mxu0 0
        %3140 = vmatprep.subr.bf16.mxu0 0
        %3141 = vmatpush1.bf16.msra.mxu0 0
        %3142 = vmatprep.subr.bf16.mxu0 0
        %3143 = vmatpush1.bf16.msra.mxu0 0
        %3144 = vmatprep.subr.bf16.mxu0 0
        %3145 = vmatpush1.bf16.msra.mxu0 0
        %3146 = vmatprep.mubr.bf16.mxu0 0
        %3147 = vmatmul.mubr.bf16.gmra.mrb[0].mxu0 %v3112
        %v3148 = vpop.f32.mrb[0].mxu0
        %v3149 = vadd.f32 0.0, %v3148
        %v3150 = vpop.f32.mrb[0].mxu0
        %v3151 = vpop.f32.mrb[0].mxu0
        %v3152 = vpop.f32.mrb[0].mxu0
        %3153 = vdwg.mxu0
        %v3155 = vsel %vm336, %v3059, 0
        %3157 = vmatprep.subr.bf16.mxu0 0
        %3158 = vmatpush1.bf16.msra.mxu0 %v3069
        %3159 = vmatprep.subr.bf16.mxu0 0
        %3160 = vmatpush1.bf16.msra.mxu0 0
        %3161 = vmatprep.subr.bf16.mxu0 0
        %3162 = vmatpush1.bf16.msra.mxu0 0
        %3163 = vmatprep.subr.bf16.mxu0 0
        %3164 = vmatpush1.bf16.msra.mxu0 0
        %3165 = vmatprep.subr.bf16.mxu0 0
        %3166 = vmatpush1.bf16.msra.mxu0 0
        %3167 = vmatprep.subr.bf16.mxu0 0
        %3168 = vmatpush1.bf16.msra.mxu0 0
        %3169 = vmatprep.subr.bf16.mxu0 0
        %3170 = vmatpush1.bf16.msra.mxu0 0
        %3171 = vmatprep.subr.bf16.mxu0 0
        %3172 = vmatpush1.bf16.msra.mxu0 0
        %3173 = vmatprep.subr.bf16.mxu0 0
        %3174 = vmatpush1.bf16.msra.mxu0 0
        %3175 = vmatprep.subr.bf16.mxu0 0
        %3176 = vmatpush1.bf16.msra.mxu0 0
        %3177 = vmatprep.subr.bf16.mxu0 0
        %3178 = vmatpush1.bf16.msra.mxu0 0
        %3179 = vmatprep.subr.bf16.mxu0 0
        %3180 = vmatpush1.bf16.msra.mxu0 0
        %3181 = vmatprep.subr.bf16.mxu0 0
        %3182 = vmatpush1.bf16.msra.mxu0 0
        %3183 = vmatprep.subr.bf16.mxu0 0
        %3184 = vmatpush1.bf16.msra.mxu0 0
        %3185 = vmatprep.subr.bf16.mxu0 0
        %3186 = vmatpush1.bf16.msra.mxu0 0
        %3187 = vmatprep.subr.bf16.mxu0 0
        %3188 = vmatpush1.bf16.msra.mxu0 0
        %3189 = vmatprep.mubr.bf16.mxu0 0
        %3190 = vmatmul.mubr.bf16.gmra.mrb[0].mxu0 %v3155
        %v3191 = vpop.f32.mrb[0].mxu0
        %v3192 = vadd.f32 0.0, %v3191
        %v3193 = vpop.f32.mrb[0].mxu0
        %v3194 = vpop.f32.mrb[0].mxu0
        %v3195 = vpop.f32.mrb[0].mxu0
        %3196 = vdwg.mxu0
        %v3198 = vsel %vm336, %v3060, 0
        %3200 = vmatprep.subr.bf16.mxu0 0
        %3201 = vmatpush1.bf16.msra.mxu0 %v3069
        %3202 = vmatprep.subr.bf16.mxu0 0
        %3203 = vmatpush1.bf16.msra.mxu0 0
        %3204 = vmatprep.subr.bf16.mxu0 0
        %3205 = vmatpush1.bf16.msra.mxu0 0
        %3206 = vmatprep.subr.bf16.mxu0 0
        %3207 = vmatpush1.bf16.msra.mxu0 0
        %3208 = vmatprep.subr.bf16.mxu0 0
        %3209 = vmatpush1.bf16.msra.mxu0 0
        %3210 = vmatprep.subr.bf16.mxu0 0
        %3211 = vmatpush1.bf16.msra.mxu0 0
        %3212 = vmatprep.subr.bf16.mxu0 0
        %3213 = vmatpush1.bf16.msra.mxu0 0
        %3214 = vmatprep.subr.bf16.mxu0 0
        %3215 = vmatpush1.bf16.msra.mxu0 0
        %3216 = vmatprep.subr.bf16.mxu0 0
        %3217 = vmatpush1.bf16.msra.mxu0 0
        %3218 = vmatprep.subr.bf16.mxu0 0
        %3219 = vmatpush1.bf16.msra.mxu0 0
        %3220 = vmatprep.subr.bf16.mxu0 0
        %3221 = vmatpush1.bf16.msra.mxu0 0
        %3222 = vmatprep.subr.bf16.mxu0 0
        %3223 = vmatpush1.bf16.msra.mxu0 0
        %3224 = vmatprep.subr.bf16.mxu0 0
        %3225 = vmatpush1.bf16.msra.mxu0 0
        %3226 = vmatprep.subr.bf16.mxu0 0
        %3227 = vmatpush1.bf16.msra.mxu0 0
        %3228 = vmatprep.subr.bf16.mxu0 0
        %3229 = vmatpush1.bf16.msra.mxu0 0
        %3230 = vmatprep.subr.bf16.mxu0 0
        %3231 = vmatpush1.bf16.msra.mxu0 0
        %3232 = vmatprep.mubr.bf16.mxu0 0
        %3233 = vmatmul.mubr.bf16.gmra.mrb[0].mxu0 %v3198
        %v3234 = vpop.f32.mrb[0].mxu0
        %v3235 = vadd.f32 0.0, %v3234
        %v3236 = vpop.f32.mrb[0].mxu0
        %v3237 = vpop.f32.mrb[0].mxu0
        %v3238 = vpop.f32.mrb[0].mxu0
        %3239 = vdwg.mxu0
        %v3241 = vsel %vm336, %v3061, 0
        %3243 = vmatprep.subr.bf16.mxu0 0
        %3244 = vmatpush1.bf16.msra.mxu0 %v3069
        %3245 = vmatprep.subr.bf16.mxu0 0
        %3246 = vmatpush1.bf16.msra.mxu0 0
        %3247 = vmatprep.subr.bf16.mxu0 0
        %3248 = vmatpush1.bf16.msra.mxu0 0
        %3249 = vmatprep.subr.bf16.mxu0 0
        %3250 = vmatpush1.bf16.msra.mxu0 0
        %3251 = vmatprep.subr.bf16.mxu0 0
        %3252 = vmatpush1.bf16.msra.mxu0 0
        %3253 = vmatprep.subr.bf16.mxu0 0
        %3254 = vmatpush1.bf16.msra.mxu0 0
        %3255 = vmatprep.subr.bf16.mxu0 0
        %3256 = vmatpush1.bf16.msra.mxu0 0
        %3257 = vmatprep.subr.bf16.mxu0 0
        %3258 = vmatpush1.bf16.msra.mxu0 0
        %3259 = vmatprep.subr.bf16.mxu0 0
        %3260 = vmatpush1.bf16.msra.mxu0 0
        %3261 = vmatprep.subr.bf16.mxu0 0
        %3262 = vmatpush1.bf16.msra.mxu0 0
        %3263 = vmatprep.subr.bf16.mxu0 0
        %3264 = vmatpush1.bf16.msra.mxu0 0
        %3265 = vmatprep.subr.bf16.mxu0 0
        %3266 = vmatpush1.bf16.msra.mxu0 0
        %3267 = vmatprep.subr.bf16.mxu0 0
        %3268 = vmatpush1.bf16.msra.mxu0 0
        %3269 = vmatprep.subr.bf16.mxu0 0
        %3270 = vmatpush1.bf16.msra.mxu0 0
        %3271 = vmatprep.subr.bf16.mxu0 0
        %3272 = vmatpush1.bf16.msra.mxu0 0
        %3273 = vmatprep.subr.bf16.mxu0 0
        %3274 = vmatpush1.bf16.msra.mxu0 0
        %3275 = vmatprep.mubr.bf16.mxu0 0
        %3276 = vmatmul.mubr.bf16.gmra.mrb[0].mxu0 %v3241
        %v3277 = vpop.f32.mrb[0].mxu0
        %v3278 = vadd.f32 0.0, %v3277
        %v3279 = vpop.f32.mrb[0].mxu0
        %v3280 = vpop.f32.mrb[0].mxu0
        %v3281 = vpop.f32.mrb[0].mxu0
        %3282 = vdwg.mxu0
        %v3284 = vsel %vm336, %v3062, 0
        %3286 = vmatprep.subr.bf16.mxu0 0
        %3287 = vmatpush1.bf16.msra.mxu0 %v3069
        %3288 = vmatprep.subr.bf16.mxu0 0
        %3289 = vmatpush1.bf16.msra.mxu0 0
        %3290 = vmatprep.subr.bf16.mxu0 0
        %3291 = vmatpush1.bf16.msra.mxu0 0
        %3292 = vmatprep.subr.bf16.mxu0 0
        %3293 = vmatpush1.bf16.msra.mxu0 0
        %3294 = vmatprep.subr.bf16.mxu0 0
        %3295 = vmatpush1.bf16.msra.mxu0 0
        %3296 = vmatprep.subr.bf16.mxu0 0
        %3297 = vmatpush1.bf16.msra.mxu0 0
        %3298 = vmatprep.subr.bf16.mxu0 0
        %3299 = vmatpush1.bf16.msra.mxu0 0
        %3300 = vmatprep.subr.bf16.mxu0 0
        %3301 = vmatpush1.bf16.msra.mxu0 0
        %3302 = vmatprep.subr.bf16.mxu0 0
        %3303 = vmatpush1.bf16.msra.mxu0 0
        %3304 = vmatprep.subr.bf16.mxu0 0
        %3305 = vmatpush1.bf16.msra.mxu0 0
        %3306 = vmatprep.subr.bf16.mxu0 0
        %3307 = vmatpush1.bf16.msra.mxu0 0
        %3308 = vmatprep.subr.bf16.mxu0 0
        %3309 = vmatpush1.bf16.msra.mxu0 0
        %3310 = vmatprep.subr.bf16.mxu0 0
        %3311 = vmatpush1.bf16.msra.mxu0 0
        %3312 = vmatprep.subr.bf16.mxu0 0
        %3313 = vmatpush1.bf16.msra.mxu0 0
        %3314 = vmatprep.subr.bf16.mxu0 0
        %3315 = vmatpush1.bf16.msra.mxu0 0
        %3316 = vmatprep.subr.bf16.mxu0 0
        %3317 = vmatpush1.bf16.msra.mxu0 0
        %3318 = vmatprep.mubr.bf16.mxu0 0
        %3319 = vmatmul.mubr.bf16.gmra.mrb[0].mxu0 %v3284
        %v3320 = vpop.f32.mrb[0].mxu0
        %v3321 = vadd.f32 0.0, %v3320
        %v3322 = vpop.f32.mrb[0].mxu0
        %v3323 = vpop.f32.mrb[0].mxu0
        %v3324 = vpop.f32.mrb[0].mxu0
        %3325 = vdwg.mxu0
        %v3327 = vsel %vm336, %v3063, 0
        %3329 = vmatprep.subr.bf16.mxu0 0
        %3330 = vmatpush1.bf16.msra.mxu0 %v3069
        %3331 = vmatprep.subr.bf16.mxu0 0
        %3332 = vmatpush1.bf16.msra.mxu0 0
        %3333 = vmatprep.subr.bf16.mxu0 0
        %3334 = vmatpush1.bf16.msra.mxu0 0
        %3335 = vmatprep.subr.bf16.mxu0 0
        %3336 = vmatpush1.bf16.msra.mxu0 0
        %3337 = vmatprep.subr.bf16.mxu0 0
        %3338 = vmatpush1.bf16.msra.mxu0 0
        %3339 = vmatprep.subr.bf16.mxu0 0
        %3340 = vmatpush1.bf16.msra.mxu0 0
        %3341 = vmatprep.subr.bf16.mxu0 0
        %3342 = vmatpush1.bf16.msra.mxu0 0
        %3343 = vmatprep.subr.bf16.mxu0 0
        %3344 = vmatpush1.bf16.msra.mxu0 0
        %3345 = vmatprep.subr.bf16.mxu0 0
        %3346 = vmatpush1.bf16.msra.mxu0 0
        %3347 = vmatprep.subr.bf16.mxu0 0
        %3348 = vmatpush1.bf16.msra.mxu0 0
        %3349 = vmatprep.subr.bf16.mxu0 0
        %3350 = vmatpush1.bf16.msra.mxu0 0
        %3351 = vmatprep.subr.bf16.mxu0 0
        %3352 = vmatpush1.bf16.msra.mxu0 0
        %3353 = vmatprep.subr.bf16.mxu0 0
        %3354 = vmatpush1.bf16.msra.mxu0 0
        %3355 = vmatprep.subr.bf16.mxu0 0
        %3356 = vmatpush1.bf16.msra.mxu0 0
        %3357 = vmatprep.subr.bf16.mxu0 0
        %3358 = vmatpush1.bf16.msra.mxu0 0
        %3359 = vmatprep.subr.bf16.mxu0 0
        %3360 = vmatpush1.bf16.msra.mxu0 0
        %3361 = vmatprep.mubr.bf16.mxu0 0
        %3362 = vmatmul.mubr.bf16.gmra.mrb[0].mxu0 %v3327
        %v3363 = vpop.f32.mrb[0].mxu0
        %v3364 = vadd.f32 0.0, %v3363
        %v3365 = vpop.f32.mrb[0].mxu0
        %v3366 = vpop.f32.mrb[0].mxu0
        %v3367 = vpop.f32.mrb[0].mxu0
        %3368 = vdwg.mxu0
        %v3370 = vsel %vm336, %v3064, 0
        %3372 = vmatprep.subr.bf16.mxu0 0
        %3373 = vmatpush1.bf16.msra.mxu0 %v3069
        %3374 = vmatprep.subr.bf16.mxu0 0
        %3375 = vmatpush1.bf16.msra.mxu0 0
        %3376 = vmatprep.subr.bf16.mxu0 0
        %3377 = vmatpush1.bf16.msra.mxu0 0
        %3378 = vmatprep.subr.bf16.mxu0 0
        %3379 = vmatpush1.bf16.msra.mxu0 0
        %3380 = vmatprep.subr.bf16.mxu0 0
        %3381 = vmatpush1.bf16.msra.mxu0 0
        %3382 = vmatprep.subr.bf16.mxu0 0
        %3383 = vmatpush1.bf16.msra.mxu0 0
        %3384 = vmatprep.subr.bf16.mxu0 0
        %3385 = vmatpush1.bf16.msra.mxu0 0
        %3386 = vmatprep.subr.bf16.mxu0 0
        %3387 = vmatpush1.bf16.msra.mxu0 0
        %3388 = vmatprep.subr.bf16.mxu0 0
        %3389 = vmatpush1.bf16.msra.mxu0 0
        %3390 = vmatprep.subr.bf16.mxu0 0
        %3391 = vmatpush1.bf16.msra.mxu0 0
        %3392 = vmatprep.subr.bf16.mxu0 0
        %3393 = vmatpush1.bf16.msra.mxu0 0
        %3394 = vmatprep.subr.bf16.mxu0 0
        %3395 = vmatpush1.bf16.msra.mxu0 0
        %3396 = vmatprep.subr.bf16.mxu0 0
        %3397 = vmatpush1.bf16.msra.mxu0 0
        %3398 = vmatprep.subr.bf16.mxu0 0
        %3399 = vmatpush1.bf16.msra.mxu0 0
        %3400 = vmatprep.subr.bf16.mxu0 0
        %3401 = vmatpush1.bf16.msra.mxu0 0
        %3402 = vmatprep.subr.bf16.mxu0 0
        %3403 = vmatpush1.bf16.msra.mxu0 0
        %3404 = vmatprep.mubr.bf16.mxu0 0
        %3405 = vmatmul.mubr.bf16.gmra.mrb[0].mxu0 %v3370
        %v3406 = vpop.f32.mrb[0].mxu0
        %v3407 = vadd.f32 0.0, %v3406
        %v3408 = vpop.f32.mrb[0].mxu0
        %v3409 = vpop.f32.mrb[0].mxu0
        %v3410 = vpop.f32.mrb[0].mxu0
        %3411 = vdwg.mxu0
        %v3412 = vadd.f32 %v3048, %v3106
        %v3413 = vadd.f32 %v3049, %v3149
        %v3414 = vadd.f32 %v3050, %v3192
        %v3415 = vadd.f32 %v3051, %v3235
        %v3416 = vadd.f32 %v3052, %v3278
        %v3417 = vadd.f32 %v3053, %v3321
        %v3418 = vadd.f32 %v3054, %v3364
        %v3419 = vadd.f32 %v3055, %v3407
        %v3420 = vld [vmem:[%s2692] sm:$0xf]
        %v3421 = vld [vmem:[%s2692 + $0x4] sm:$0x1]
        %v3422 = vld [vmem:[%s2692 + $0x8] sm:$0xf]
        %v3423 = vld [vmem:[%s2692 + $0xc] sm:$0x1]
        %v3424 = vld [vmem:[%s2692 + $0x10] sm:$0xf]
        %v3425 = vld [vmem:[%s2692 + $0x14] sm:$0x1]
        %v3426 = vld [vmem:[%s2692 + $0x18] sm:$0xf]
        %v3427 = vld [vmem:[%s2692 + $0x1c] sm:$0x1]
        %v3428 = vld [vmem:[%s2692 + $0x20] sm:$0xf]
        %v3429 = vld [vmem:[%s2692 + $0x24] sm:$0x1]
        %v3430 = vld [vmem:[%s2692 + $0x28] sm:$0xf]
        %v3431 = vld [vmem:[%s2692 + $0x2c] sm:$0x1]
        %v3432 = vld [vmem:[%s2692 + $0x30] sm:$0xf]
        %v3433 = vld [vmem:[%s2692 + $0x34] sm:$0x1]
        %v3434 = vld [vmem:[%s2692 + $0x38] sm:$0xf]
        %v3435 = vld [vmem:[%s2692 + $0x3c] sm:$0x1]
        %v3438 = vunpack.c.l.b16 %v3420
        %v3439 = vunpack.c.l.b16 %v3421
        %v3440 = vpack.c.b16 %v3439, %v3438
        %v3442 = vshrl.u32 %v3440, 16
        %v3444 = vshll.u32 %v3440, 16
        %v3446 = vrot.slane %v3444, 1
        %v3447 = vor.u32 %v3442, %v3446
        %v3449 = vsel %vm336, %v3447, 0
        %v3452 = vsel %vm340, %v319, 0
        %3454 = vmatprep.subr.bf16.mxu0 0
        %3455 = vmatpush1.bf16.msra.mxu0 %v3452
        %3456 = vmatprep.subr.bf16.mxu0 0
        %3457 = vmatpush1.bf16.msra.mxu0 0
        %3458 = vmatprep.subr.bf16.mxu0 0
        %3459 = vmatpush1.bf16.msra.mxu0 0
        %3460 = vmatprep.subr.bf16.mxu0 0
        %3461 = vmatpush1.bf16.msra.mxu0 0
        %3462 = vmatprep.subr.bf16.mxu0 0
        %3463 = vmatpush1.bf16.msra.mxu0 0
        %3464 = vmatprep.subr.bf16.mxu0 0
        %3465 = vmatpush1.bf16.msra.mxu0 0
        %3466 = vmatprep.subr.bf16.mxu0 0
        %3467 = vmatpush1.bf16.msra.mxu0 0
        %3468 = vmatprep.subr.bf16.mxu0 0
        %3469 = vmatpush1.bf16.msra.mxu0 0
        %3470 = vmatprep.subr.bf16.mxu0 0
        %3471 = vmatpush1.bf16.msra.mxu0 0
        %3472 = vmatprep.subr.bf16.mxu0 0
        %3473 = vmatpush1.bf16.msra.mxu0 0
        %3474 = vmatprep.subr.bf16.mxu0 0
        %3475 = vmatpush1.bf16.msra.mxu0 0
        %3476 = vmatprep.subr.bf16.mxu0 0
        %3477 = vmatpush1.bf16.msra.mxu0 0
        %3478 = vmatprep.subr.bf16.mxu0 0
        %3479 = vmatpush1.bf16.msra.mxu0 0
        %3480 = vmatprep.subr.bf16.mxu0 0
        %3481 = vmatpush1.bf16.msra.mxu0 0
        %3482 = vmatprep.subr.bf16.mxu0 0
        %3483 = vmatpush1.bf16.msra.mxu0 0
        %3484 = vmatprep.subr.bf16.mxu0 0
        %3485 = vmatpush1.bf16.msra.mxu0 0
        %3486 = vmatprep.mubr.bf16.mxu0 0
        %3487 = vmatmul.mubr.bf16.gmra.mrb[0].mxu0 %v3449
        %v3488 = vpop.f32.mrb[0].mxu0
        %v3489 = vadd.f32 0.0, %v3488
        %v3490 = vpop.f32.mrb[0].mxu0
        %v3491 = vpop.f32.mrb[0].mxu0
        %v3492 = vpop.f32.mrb[0].mxu0
        %3493 = vdwg.mxu0
        %v3496 = vunpack.c.l.b16 %v3422
        %v3497 = vunpack.c.l.b16 %v3423
        %v3498 = vpack.c.b16 %v3497, %v3496
        %v3500 = vshrl.u32 %v3498, 16
        %v3502 = vshll.u32 %v3498, 16
        %v3504 = vrot.slane %v3502, 1
        %v3505 = vor.u32 %v3500, %v3504
        %v3507 = vsel %vm336, %v3505, 0
        %3509 = vmatprep.subr.bf16.mxu0 0
        %3510 = vmatpush1.bf16.msra.mxu0 %v3452
        %3511 = vmatprep.subr.bf16.mxu0 0
        %3512 = vmatpush1.bf16.msra.mxu0 0
        %3513 = vmatprep.subr.bf16.mxu0 0
        %3514 = vmatpush1.bf16.msra.mxu0 0
        %3515 = vmatprep.subr.bf16.mxu0 0
        %3516 = vmatpush1.bf16.msra.mxu0 0
        %3517 = vmatprep.subr.bf16.mxu0 0
        %3518 = vmatpush1.bf16.msra.mxu0 0
        %3519 = vmatprep.subr.bf16.mxu0 0
        %3520 = vmatpush1.bf16.msra.mxu0 0
        %3521 = vmatprep.subr.bf16.mxu0 0
        %3522 = vmatpush1.bf16.msra.mxu0 0
        %3523 = vmatprep.subr.bf16.mxu0 0
        %3524 = vmatpush1.bf16.msra.mxu0 0
        %3525 = vmatprep.subr.bf16.mxu0 0
        %3526 = vmatpush1.bf16.msra.mxu0 0
        %3527 = vmatprep.subr.bf16.mxu0 0
        %3528 = vmatpush1.bf16.msra.mxu0 0
        %3529 = vmatprep.subr.bf16.mxu0 0
        %3530 = vmatpush1.bf16.msra.mxu0 0
        %3531 = vmatprep.subr.bf16.mxu0 0
        %3532 = vmatpush1.bf16.msra.mxu0 0
        %3533 = vmatprep.subr.bf16.mxu0 0
        %3534 = vmatpush1.bf16.msra.mxu0 0
        %3535 = vmatprep.subr.bf16.mxu0 0
        %3536 = vmatpush1.bf16.msra.mxu0 0
        %3537 = vmatprep.subr.bf16.mxu0 0
        %3538 = vmatpush1.bf16.msra.mxu0 0
        %3539 = vmatprep.subr.bf16.mxu0 0
        %3540 = vmatpush1.bf16.msra.mxu0 0
        %3541 = vmatprep.mubr.bf16.mxu0 0
        %3542 = vmatmul.mubr.bf16.gmra.mrb[0].mxu0 %v3507
        %v3543 = vpop.f32.mrb[0].mxu0
        %v3544 = vadd.f32 0.0, %v3543
        %v3545 = vpop.f32.mrb[0].mxu0
        %v3546 = vpop.f32.mrb[0].mxu0
        %v3547 = vpop.f32.mrb[0].mxu0
        %3548 = vdwg.mxu0
        %v3551 = vunpack.c.l.b16 %v3424
        %v3552 = vunpack.c.l.b16 %v3425
        %v3553 = vpack.c.b16 %v3552, %v3551
        %v3555 = vshrl.u32 %v3553, 16
        %v3557 = vshll.u32 %v3553, 16
        %v3559 = vrot.slane %v3557, 1
        %v3560 = vor.u32 %v3555, %v3559
        %v3562 = vsel %vm336, %v3560, 0
        %3564 = vmatprep.subr.bf16.mxu0 0
        %3565 = vmatpush1.bf16.msra.mxu0 %v3452
        %3566 = vmatprep.subr.bf16.mxu0 0
        %3567 = vmatpush1.bf16.msra.mxu0 0
        %3568 = vmatprep.subr.bf16.mxu0 0
        %3569 = vmatpush1.bf16.msra.mxu0 0
        %3570 = vmatprep.subr.bf16.mxu0 0
        %3571 = vmatpush1.bf16.msra.mxu0 0
        %3572 = vmatprep.subr.bf16.mxu0 0
        %3573 = vmatpush1.bf16.msra.mxu0 0
        %3574 = vmatprep.subr.bf16.mxu0 0
        %3575 = vmatpush1.bf16.msra.mxu0 0
        %3576 = vmatprep.subr.bf16.mxu0 0
        %3577 = vmatpush1.bf16.msra.mxu0 0
        %3578 = vmatprep.subr.bf16.mxu0 0
        %3579 = vmatpush1.bf16.msra.mxu0 0
        %3580 = vmatprep.subr.bf16.mxu0 0
        %3581 = vmatpush1.bf16.msra.mxu0 0
        %3582 = vmatprep.subr.bf16.mxu0 0
        %3583 = vmatpush1.bf16.msra.mxu0 0
        %3584 = vmatprep.subr.bf16.mxu0 0
        %3585 = vmatpush1.bf16.msra.mxu0 0
        %3586 = vmatprep.subr.bf16.mxu0 0
        %3587 = vmatpush1.bf16.msra.mxu0 0
        %3588 = vmatprep.subr.bf16.mxu0 0
        %3589 = vmatpush1.bf16.msra.mxu0 0
        %3590 = vmatprep.subr.bf16.mxu0 0
        %3591 = vmatpush1.bf16.msra.mxu0 0
        %3592 = vmatprep.subr.bf16.mxu0 0
        %3593 = vmatpush1.bf16.msra.mxu0 0
        %3594 = vmatprep.subr.bf16.mxu0 0
        %3595 = vmatpush1.bf16.msra.mxu0 0
        %3596 = vmatprep.mubr.bf16.mxu0 0
        %3597 = vmatmul.mubr.bf16.gmra.mrb[0].mxu0 %v3562
        %v3598 = vpop.f32.mrb[0].mxu0
        %v3599 = vadd.f32 0.0, %v3598
        %v3600 = vpop.f32.mrb[0].mxu0
        %v3601 = vpop.f32.mrb[0].mxu0
        %v3602 = vpop.f32.mrb[0].mxu0
        %3603 = vdwg.mxu0
        %v3606 = vunpack.c.l.b16 %v3426
        %v3607 = vunpack.c.l.b16 %v3427
        %v3608 = vpack.c.b16 %v3607, %v3606
        %v3610 = vshrl.u32 %v3608, 16
        %v3612 = vshll.u32 %v3608, 16
        %v3614 = vrot.slane %v3612, 1
        %v3615 = vor.u32 %v3610, %v3614
        %v3617 = vsel %vm336, %v3615, 0
        %3619 = vmatprep.subr.bf16.mxu0 0
        %3620 = vmatpush1.bf16.msra.mxu0 %v3452
        %3621 = vmatprep.subr.bf16.mxu0 0
        %3622 = vmatpush1.bf16.msra.mxu0 0
        %3623 = vmatprep.subr.bf16.mxu0 0
        %3624 = vmatpush1.bf16.msra.mxu0 0
        %3625 = vmatprep.subr.bf16.mxu0 0
        %3626 = vmatpush1.bf16.msra.mxu0 0
        %3627 = vmatprep.subr.bf16.mxu0 0
        %3628 = vmatpush1.bf16.msra.mxu0 0
        %3629 = vmatprep.subr.bf16.mxu0 0
        %3630 = vmatpush1.bf16.msra.mxu0 0
        %3631 = vmatprep.subr.bf16.mxu0 0
        %3632 = vmatpush1.bf16.msra.mxu0 0
        %3633 = vmatprep.subr.bf16.mxu0 0
        %3634 = vmatpush1.bf16.msra.mxu0 0
        %3635 = vmatprep.subr.bf16.mxu0 0
        %3636 = vmatpush1.bf16.msra.mxu0 0
        %3637 = vmatprep.subr.bf16.mxu0 0
        %3638 = vmatpush1.bf16.msra.mxu0 0
        %3639 = vmatprep.subr.bf16.mxu0 0
        %3640 = vmatpush1.bf16.msra.mxu0 0
        %3641 = vmatprep.subr.bf16.mxu0 0
        %3642 = vmatpush1.bf16.msra.mxu0 0
        %3643 = vmatprep.subr.bf16.mxu0 0
        %3644 = vmatpush1.bf16.msra.mxu0 0
        %3645 = vmatprep.subr.bf16.mxu0 0
        %3646 = vmatpush1.bf16.msra.mxu0 0
        %3647 = vmatprep.subr.bf16.mxu0 0
        %3648 = vmatpush1.bf16.msra.mxu0 0
        %3649 = vmatprep.subr.bf16.mxu0 0
        %3650 = vmatpush1.bf16.msra.mxu0 0
        %3651 = vmatprep.mubr.bf16.mxu0 0
        %3652 = vmatmul.mubr.bf16.gmra.mrb[0].mxu0 %v3617
        %v3653 = vpop.f32.mrb[0].mxu0
        %v3654 = vadd.f32 0.0, %v3653
        %v3655 = vpop.f32.mrb[0].mxu0
        %v3656 = vpop.f32.mrb[0].mxu0
        %v3657 = vpop.f32.mrb[0].mxu0
        %3658 = vdwg.mxu0
        %v3661 = vunpack.c.l.b16 %v3428
        %v3662 = vunpack.c.l.b16 %v3429
        %v3663 = vpack.c.b16 %v3662, %v3661
        %v3665 = vshrl.u32 %v3663, 16
        %v3667 = vshll.u32 %v3663, 16
        %v3669 = vrot.slane %v3667, 1
        %v3670 = vor.u32 %v3665, %v3669
        %v3672 = vsel %vm336, %v3670, 0
        %3674 = vmatprep.subr.bf16.mxu0 0
        %3675 = vmatpush1.bf16.msra.mxu0 %v3452
        %3676 = vmatprep.subr.bf16.mxu0 0
        %3677 = vmatpush1.bf16.msra.mxu0 0
        %3678 = vmatprep.subr.bf16.mxu0 0
        %3679 = vmatpush1.bf16.msra.mxu0 0
        %3680 = vmatprep.subr.bf16.mxu0 0
        %3681 = vmatpush1.bf16.msra.mxu0 0
        %3682 = vmatprep.subr.bf16.mxu0 0
        %3683 = vmatpush1.bf16.msra.mxu0 0
        %3684 = vmatprep.subr.bf16.mxu0 0
        %3685 = vmatpush1.bf16.msra.mxu0 0
        %3686 = vmatprep.subr.bf16.mxu0 0
        %3687 = vmatpush1.bf16.msra.mxu0 0
        %3688 = vmatprep.subr.bf16.mxu0 0
        %3689 = vmatpush1.bf16.msra.mxu0 0
        %3690 = vmatprep.subr.bf16.mxu0 0
        %3691 = vmatpush1.bf16.msra.mxu0 0
        %3692 = vmatprep.subr.bf16.mxu0 0
        %3693 = vmatpush1.bf16.msra.mxu0 0
        %3694 = vmatprep.subr.bf16.mxu0 0
        %3695 = vmatpush1.bf16.msra.mxu0 0
        %3696 = vmatprep.subr.bf16.mxu0 0
        %3697 = vmatpush1.bf16.msra.mxu0 0
        %3698 = vmatprep.subr.bf16.mxu0 0
        %3699 = vmatpush1.bf16.msra.mxu0 0
        %3700 = vmatprep.subr.bf16.mxu0 0
        %3701 = vmatpush1.bf16.msra.mxu0 0
        %3702 = vmatprep.subr.bf16.mxu0 0
        %3703 = vmatpush1.bf16.msra.mxu0 0
        %3704 = vmatprep.subr.bf16.mxu0 0
        %3705 = vmatpush1.bf16.msra.mxu0 0
        %3706 = vmatprep.mubr.bf16.mxu0 0
        %3707 = vmatmul.mubr.bf16.gmra.mrb[0].mxu0 %v3672
        %v3708 = vpop.f32.mrb[0].mxu0
        %v3709 = vadd.f32 0.0, %v3708
        %v3710 = vpop.f32.mrb[0].mxu0
        %v3711 = vpop.f32.mrb[0].mxu0
        %v3712 = vpop.f32.mrb[0].mxu0
        %3713 = vdwg.mxu0
        %v3716 = vunpack.c.l.b16 %v3430
        %v3717 = vunpack.c.l.b16 %v3431
        %v3718 = vpack.c.b16 %v3717, %v3716
        %v3720 = vshrl.u32 %v3718, 16
        %v3722 = vshll.u32 %v3718, 16
        %v3724 = vrot.slane %v3722, 1
        %v3725 = vor.u32 %v3720, %v3724
        %v3727 = vsel %vm336, %v3725, 0
        %3729 = vmatprep.subr.bf16.mxu0 0
        %3730 = vmatpush1.bf16.msra.mxu0 %v3452
        %3731 = vmatprep.subr.bf16.mxu0 0
        %3732 = vmatpush1.bf16.msra.mxu0 0
        %3733 = vmatprep.subr.bf16.mxu0 0
        %3734 = vmatpush1.bf16.msra.mxu0 0
        %3735 = vmatprep.subr.bf16.mxu0 0
        %3736 = vmatpush1.bf16.msra.mxu0 0
        %3737 = vmatprep.subr.bf16.mxu0 0
        %3738 = vmatpush1.bf16.msra.mxu0 0
        %3739 = vmatprep.subr.bf16.mxu0 0
        %3740 = vmatpush1.bf16.msra.mxu0 0
        %3741 = vmatprep.subr.bf16.mxu0 0
        %3742 = vmatpush1.bf16.msra.mxu0 0
        %3743 = vmatprep.subr.bf16.mxu0 0
        %3744 = vmatpush1.bf16.msra.mxu0 0
        %3745 = vmatprep.subr.bf16.mxu0 0
        %3746 = vmatpush1.bf16.msra.mxu0 0
        %3747 = vmatprep.subr.bf16.mxu0 0
        %3748 = vmatpush1.bf16.msra.mxu0 0
        %3749 = vmatprep.subr.bf16.mxu0 0
        %3750 = vmatpush1.bf16.msra.mxu0 0
        %3751 = vmatprep.subr.bf16.mxu0 0
        %3752 = vmatpush1.bf16.msra.mxu0 0
        %3753 = vmatprep.subr.bf16.mxu0 0
        %3754 = vmatpush1.bf16.msra.mxu0 0
        %3755 = vmatprep.subr.bf16.mxu0 0
        %3756 = vmatpush1.bf16.msra.mxu0 0
        %3757 = vmatprep.subr.bf16.mxu0 0
        %3758 = vmatpush1.bf16.msra.mxu0 0
        %3759 = vmatprep.subr.bf16.mxu0 0
        %3760 = vmatpush1.bf16.msra.mxu0 0
        %3761 = vmatprep.mubr.bf16.mxu0 0
        %3762 = vmatmul.mubr.bf16.gmra.mrb[0].mxu0 %v3727
        %v3763 = vpop.f32.mrb[0].mxu0
        %v3764 = vadd.f32 0.0, %v3763
        %v3765 = vpop.f32.mrb[0].mxu0
        %v3766 = vpop.f32.mrb[0].mxu0
        %v3767 = vpop.f32.mrb[0].mxu0
        %3768 = vdwg.mxu0
        %v3771 = vunpack.c.l.b16 %v3432
        %v3772 = vunpack.c.l.b16 %v3433
        %v3773 = vpack.c.b16 %v3772, %v3771
        %v3775 = vshrl.u32 %v3773, 16
        %v3777 = vshll.u32 %v3773, 16
        %v3779 = vrot.slane %v3777, 1
        %v3780 = vor.u32 %v3775, %v3779
        %v3782 = vsel %vm336, %v3780, 0
        %3784 = vmatprep.subr.bf16.mxu0 0
        %3785 = vmatpush1.bf16.msra.mxu0 %v3452
        %3786 = vmatprep.subr.bf16.mxu0 0
        %3787 = vmatpush1.bf16.msra.mxu0 0
        %3788 = vmatprep.subr.bf16.mxu0 0
        %3789 = vmatpush1.bf16.msra.mxu0 0
        %3790 = vmatprep.subr.bf16.mxu0 0
        %3791 = vmatpush1.bf16.msra.mxu0 0
        %3792 = vmatprep.subr.bf16.mxu0 0
        %3793 = vmatpush1.bf16.msra.mxu0 0
        %3794 = vmatprep.subr.bf16.mxu0 0
        %3795 = vmatpush1.bf16.msra.mxu0 0
        %3796 = vmatprep.subr.bf16.mxu0 0
        %3797 = vmatpush1.bf16.msra.mxu0 0
        %3798 = vmatprep.subr.bf16.mxu0 0
        %3799 = vmatpush1.bf16.msra.mxu0 0
        %3800 = vmatprep.subr.bf16.mxu0 0
        %3801 = vmatpush1.bf16.msra.mxu0 0
        %3802 = vmatprep.subr.bf16.mxu0 0
        %3803 = vmatpush1.bf16.msra.mxu0 0
        %3804 = vmatprep.subr.bf16.mxu0 0
        %3805 = vmatpush1.bf16.msra.mxu0 0
        %3806 = vmatprep.subr.bf16.mxu0 0
        %3807 = vmatpush1.bf16.msra.mxu0 0
        %3808 = vmatprep.subr.bf16.mxu0 0
        %3809 = vmatpush1.bf16.msra.mxu0 0
        %3810 = vmatprep.subr.bf16.mxu0 0
        %3811 = vmatpush1.bf16.msra.mxu0 0
        %3812 = vmatprep.subr.bf16.mxu0 0
        %3813 = vmatpush1.bf16.msra.mxu0 0
        %3814 = vmatprep.subr.bf16.mxu0 0
        %3815 = vmatpush1.bf16.msra.mxu0 0
        %3816 = vmatprep.mubr.bf16.mxu0 0
        %3817 = vmatmul.mubr.bf16.gmra.mrb[0].mxu0 %v3782
        %v3818 = vpop.f32.mrb[0].mxu0
        %v3819 = vadd.f32 0.0, %v3818
        %v3820 = vpop.f32.mrb[0].mxu0
        %v3821 = vpop.f32.mrb[0].mxu0
        %v3822 = vpop.f32.mrb[0].mxu0
        %3823 = vdwg.mxu0
        %v3826 = vunpack.c.l.b16 %v3434
        %v3827 = vunpack.c.l.b16 %v3435
        %v3828 = vpack.c.b16 %v3827, %v3826
        %v3830 = vshrl.u32 %v3828, 16
        %v3832 = vshll.u32 %v3828, 16
        %v3834 = vrot.slane %v3832, 1
        %v3835 = vor.u32 %v3830, %v3834
        %v3837 = vsel %vm336, %v3835, 0
        %3839 = vmatprep.subr.bf16.mxu0 0
        %3840 = vmatpush1.bf16.msra.mxu0 %v3452
        %3841 = vmatprep.subr.bf16.mxu0 0
        %3842 = vmatpush1.bf16.msra.mxu0 0
        %3843 = vmatprep.subr.bf16.mxu0 0
        %3844 = vmatpush1.bf16.msra.mxu0 0
        %3845 = vmatprep.subr.bf16.mxu0 0
        %3846 = vmatpush1.bf16.msra.mxu0 0
        %3847 = vmatprep.subr.bf16.mxu0 0
        %3848 = vmatpush1.bf16.msra.mxu0 0
        %3849 = vmatprep.subr.bf16.mxu0 0
        %3850 = vmatpush1.bf16.msra.mxu0 0
        %3851 = vmatprep.subr.bf16.mxu0 0
        %3852 = vmatpush1.bf16.msra.mxu0 0
        %3853 = vmatprep.subr.bf16.mxu0 0
        %3854 = vmatpush1.bf16.msra.mxu0 0
        %3855 = vmatprep.subr.bf16.mxu0 0
        %3856 = vmatpush1.bf16.msra.mxu0 0
        %3857 = vmatprep.subr.bf16.mxu0 0
        %3858 = vmatpush1.bf16.msra.mxu0 0
        %3859 = vmatprep.subr.bf16.mxu0 0
        %3860 = vmatpush1.bf16.msra.mxu0 0
        %3861 = vmatprep.subr.bf16.mxu0 0
        %3862 = vmatpush1.bf16.msra.mxu0 0
        %3863 = vmatprep.subr.bf16.mxu0 0
        %3864 = vmatpush1.bf16.msra.mxu0 0
        %3865 = vmatprep.subr.bf16.mxu0 0
        %3866 = vmatpush1.bf16.msra.mxu0 0
        %3867 = vmatprep.subr.bf16.mxu0 0
        %3868 = vmatpush1.bf16.msra.mxu0 0
        %3869 = vmatprep.subr.bf16.mxu0 0
        %3870 = vmatpush1.bf16.msra.mxu0 0
        %3871 = vmatprep.mubr.bf16.mxu0 0
        %3872 = vmatmul.mubr.bf16.gmra.mrb[0].mxu0 %v3837
        %v3873 = vpop.f32.mrb[0].mxu0
        %v3874 = vadd.f32 0.0, %v3873
        %v3875 = vpop.f32.mrb[0].mxu0
        %v3876 = vpop.f32.mrb[0].mxu0
        %v3877 = vpop.f32.mrb[0].mxu0
        %3878 = vdwg.mxu0
        %v3879 = vadd.f32 %v3412, %v3489
        %v3880 = vadd.f32 %v3413, %v3544
        %v3881 = vadd.f32 %v3414, %v3599
        %v3882 = vadd.f32 %v3415, %v3654
        %v3883 = vadd.f32 %v3416, %v3709
        %v3884 = vadd.f32 %v3417, %v3764
        %v3885 = vadd.f32 %v3418, %v3819
        %v3886 = vadd.f32 %v3419, %v3874
        %v3887 = vld [vmem:[%s5] sm:$0x1]
        %v3888 = vld [vmem:[%s5 + $0x1] sm:$0x1]
        %v3889 = vlaneseq
        %v3890 = vshrl.u32 %v3889, 7
        %v3891 = vsub.s32 0, %v3890
        %v3892 = vrot.slane %v3887, %v3891
        %v3893 = vmul.f32 %v3879, %v3892
        %v3894 = vmul.f32 %v3880, %v3892
        %v3895 = vmul.f32 %v3881, %v3892
        %v3896 = vmul.f32 %v3882, %v3892
        %v3897 = vmul.f32 %v3883, %v3892
        %v3898 = vmul.f32 %v3884, %v3892
        %v3899 = vmul.f32 %v3885, %v3892
        %v3900 = vmul.f32 %v3886, %v3892
        %v3901 = vlaneseq
        %v3902 = vshrl.u32 %v3901, 7
        %v3903 = vsub.s32 0, %v3902
        %v3904 = vrot.slane %v3888, %v3903
        %v3905 = vadd.f32 %v3893, %v3904
        %v3906 = vadd.f32 %v3894, %v3904
        %v3907 = vadd.f32 %v3895, %v3904
        %v3908 = vadd.f32 %v3896, %v3904
        %v3909 = vadd.f32 %v3897, %v3904
        %v3910 = vadd.f32 %v3898, %v3904
        %v3911 = vadd.f32 %v3899, %v3904
        %v3912 = vadd.f32 %v3900, %v3904
        %v3913 = vmax.f32 %v3905, 0.0
        %v3914 = vmax.f32 %v3906, 0.0
        %v3915 = vmax.f32 %v3907, 0.0
        %v3916 = vmax.f32 %v3908, 0.0
        %v3917 = vmax.f32 %v3909, 0.0
        %v3918 = vmax.f32 %v3910, 0.0
        %v3919 = vmax.f32 %v3911, 0.0
        %v3920 = vmax.f32 %v3912, 0.0
        %v3921 = vpack.c.bf16 %v3913, %v3913
        %v3922 = vpack.c.bf16 %v3914, %v3914
        %v3923 = vpack.c.bf16 %v3915, %v3915
        %v3924 = vpack.c.bf16 %v3916, %v3916
        %v3925 = vpack.c.bf16 %v3917, %v3917
        %v3926 = vpack.c.bf16 %v3918, %v3918
        %v3927 = vpack.c.bf16 %v3919, %v3919
        %v3928 = vpack.c.bf16 %v3920, %v3920
        %3929 = vst [vmem:[%s289] sm:$0xf] %v3921
        %3930 = vst [vmem:[%s289 + $0x4] sm:$0xf] %v3922
        %3931 = vst [vmem:[%s289 + $0x8] sm:$0xf] %v3923
        %3932 = vst [vmem:[%s289 + $0xc] sm:$0xf] %v3924
        %3933 = vst [vmem:[%s289 + $0x10] sm:$0xf] %v3925
        %3934 = vst [vmem:[%s289 + $0x14] sm:$0xf] %v3926
        %3935 = vst [vmem:[%s289 + $0x18] sm:$0xf] %v3927
        %3936 = vst [vmem:[%s289 + $0x1c] sm:$0xf] %v3928
        %s3937 = sand.u32 %s174, 1
        %s3938 = scalar_lea.sflag [#allocation3], %s3937
        %s3939 = sand.u32 %s174, 1
        %s3940 = smul.addr %s3939, 32
        %s3941 = scalar_lea.vmem [#allocation2], %s3940
        // Predicated region
        $region45: #{tpu_custom_call.1} parent=43 // pred_check
          %p3942 = pneg %p184
        $region46: #{tpu_custom_call.1} parent=43 // pred_check_branch
          %3944 = sbr.rel (%p3942) target = $region48
        $region47: #{tpu_custom_call.1} parent=43 // pred_region
          %s3946 = ssub.s32 512, 512
          %3947 = vsyncadd %s3938, %s3946
          %s3948 = smul.addr %s20, 8
          %s3949 = smul.addr %s3948, 64
          %s3950 = scalar_lea.hbm %s6, %s3949
          %s3951 = sshll.u32 %s3941, 4
          %s3952 = int_to_ptr.vmem [resolvable:$true] %s3951
          %3957 = dma.vmem_to_hbm [thread:$0]  %s3952, 512, %s3950, %s3938, 64, 64, 4
        $region48: #{tpu_custom_call.1} parent=43 // pred_fallthru
          _
      $region44: #{tpu_custom_call.1} parent=5 // pred_fallthru
        _
      %p3958 = scmp.le.s32.totalorder 2, %s15
      // Predicated region
      $region49: #{tpu_custom_call.1} parent=5 // pred_check
        %p3959 = pneg %p3958
      $region50: #{tpu_custom_call.1} parent=5 // pred_check_branch
        %3961 = sbr.rel (%p3959) target = $region52
      $region51: #{tpu_custom_call.1} parent=5 // pred_region
        %s3962 = ssub.s32 %s15, 2
        // Predicated region
        $region53: #{tpu_custom_call.1} parent=51 // pred_check
          %p3963 = pneg %p190
        $region54: #{tpu_custom_call.1} parent=51 // pred_check_branch
          %3965 = sbr.rel (%p3963) target = $region56
        $region55: #{tpu_custom_call.1} parent=51 // pred_region
          %s3966 = sand.u32 %s175, 1
          %s3967 = scalar_lea.sflag [#allocation3], %s3966
          %s3968 = sand.u32 %s175, 1
          %s3969 = smul.addr %s3968, 32
          %s3970 = scalar_lea.vmem [#allocation2], %s3969
          %3971 = dma.done %s3967, 512
        $region56: #{tpu_custom_call.1} parent=51 // pred_fallthru
          _
      $region52: #{tpu_custom_call.1} parent=5 // pred_fallthru
        _
    $region6: #{tpu_custom_call.1} parent=1 // loop_footer
      %s19 = sadd.s32 1, %s15
    $region7: #{tpu_custom_call.1} parent=1 // loop_footer_branch
      %14 = sbr.rel target = $region3
    $region8: #{tpu_custom_call.1} parent=1 // loop_exit
      _
    %3972 = vsyncpa [#allocation3], 1
    %s3973 = scalar_lea.sflag [#allocation3], 1
    %3974 = vsyncpa %s3973, 1

</llo_original>
